<compile_context>
chip_gen: v7x
topology: tpu7x:2x2x1
jax: 0.10.0
libtpu: 0.0.40
codegen_flags: <defaults>
</compile_context>

<pallas_src>
import functools

import jax
import jax.numpy as jnp
from jax.experimental import pallas as pl
from jax.experimental.pallas import tpu as pltpu

BN_EPS = 1e-5
INV_SQRT2 = 0.7071067811865476
LANE = 128


def _round_up(x, m):
    return (x + m - 1) // m * m


# ---------------------------------------------------------------------------
# Fused Pallas kernel: 4 x (conv3x3 s2 p1 [BN folded] (+ exact GELU)).
#   refs = [x_tok, S_0..S_{L-1}, W_0..W_{L-1}, shift_0..shift_{L-1}, out]
#   x_tok : (M_in0, CPAD)  activation tokens, channels on lanes (padded to 128)
#   S_l   : (9, M_out_l, M_in_l)  0/1 gather matrices (one per 3x3 tap,
#           padding locations = all-zero rows) -> im2col done on the MXU
#   W_l   : (9, CPAD, CPAD)  per-tap conv weight with BN scale folded in
#   shift : (1, CPAD)        folded BN shift
# ---------------------------------------------------------------------------
def fused_patch_embed_kernel(*refs, n_layers):
    x_ref = refs[0]
    s_refs = refs[1:1 + n_layers]
    w_refs = refs[1 + n_layers:1 + 2 * n_layers]
    b_refs = refs[1 + 2 * n_layers:1 + 3 * n_layers]
    o_ref = refs[1 + 3 * n_layers]

    t = x_ref[...]                                     # (M_in0, CPAD) f32
    for l in range(n_layers):
        m_out = s_refs[l].shape[1]
        cpad = w_refs[l].shape[2]
        acc = jnp.zeros((m_out, cpad), jnp.float32)
        for tap in range(9):                           # unrolled 3x3 taps
            # gather the tap's input rows (incl. zero padding) via MXU matmul
            g = jnp.dot(s_refs[l][tap], t, preferred_element_type=jnp.float32)
            acc = acc + jnp.dot(g, w_refs[l][tap],
                                preferred_element_type=jnp.float32)
        y = acc + b_refs[l][...]                       # folded BN shift
        if l < n_layers - 1:
            # exact erf GELU (matches torch.nn.GELU default)
            y = 0.5 * y * (1.0 + jax.lax.erf(y * INV_SQRT2))
        t = y
    o_ref[...] = t.astype(o_ref.dtype)                 # lane-dense (M, 128k) store


# ---------------------------------------------------------------------------
# Wrapper-side (one-time, outside hot path) parameter / index preparation
# ---------------------------------------------------------------------------
def selection_matrices(B, H, W, Ho, Wo):
    """(9, B*Ho*Wo, B*H*W) 0/1 gather matrices for a 3x3 / stride-2 / pad-1 conv."""
    b = jnp.arange(B)[:, None, None]
    oy = jnp.arange(Ho)[None, :, None]
    ox = jnp.arange(Wo)[None, None, :]
    mats = []
    for ky in range(3):
        for kx in range(3):
            iy = 2 * oy + ky - 1
            ix = 2 * ox + kx - 1
            valid = (iy >= 0) & (iy < H) & (ix >= 0) & (ix < W)        # (1,Ho,Wo)
            col = (b * (H * W)
                   + jnp.clip(iy, 0, H - 1) * W
                   + jnp.clip(ix, 0, W - 1))                           # (B,Ho,Wo)
            oh = jax.nn.one_hot(col, B * H * W, dtype=jnp.float32)     # (B,Ho,Wo,BHW)
            oh = oh * valid[..., None].astype(jnp.float32)
            mats.append(oh.reshape(B * Ho * Wo, B * H * W))
    return jnp.stack(mats, axis=0)


def prep_layer(w, gamma, beta, mean, var, cpad):
    """Fold BN scale into conv weight; pad channels to cpad (lane-dense)."""
    cout, cin = w.shape[0], w.shape[1]
    scale = gamma / jnp.sqrt(var + BN_EPS)
    shift = beta - mean * scale
    wt = jnp.transpose(w, (2, 3, 1, 0)).reshape(9, cin, cout)  # [tap, ci, co]
    wt = wt * scale[None, None, :]
    wt = jnp.pad(wt, ((0, 0), (0, cpad - cin), (0, cpad - cout)))
    sh = jnp.pad(shift, (0, cpad - cout)).reshape(1, cpad)
    return wt, sh


# ---------------------------------------------------------------------------
# PatchEmbed forward (single fused pallas_call)
# ---------------------------------------------------------------------------
def patch_embed_forward(x_nchw, params):
    B, cin, H, W = x_nchw.shape
    n_layers = len(params)
    embed_dim = params[-1][0].shape[0]
    cpad = max(LANE, _round_up(embed_dim, LANE))

    # NCHW -> NHWC -> token layout (rows = (b, y, x), lanes = channels)
    x_tok = jnp.transpose(x_nchw, (0, 2, 3, 1)).reshape(B * H * W, cin)
    x_tok = jnp.pad(x_tok, ((0, 0), (0, cpad - cin)))

    S_list, W_list, b_list, m_outs, m_ins = [], [], [], [], []
    h, w = H, W
    for (wgt, gamma, beta, mean, var) in params:
        ho, wo = (h - 1) // 2 + 1, (w - 1) // 2 + 1
        S_list.append(selection_matrices(B, h, w, ho, wo))
        wt, sh = prep_layer(wgt, gamma, beta, mean, var, cpad)
        W_list.append(wt)
        b_list.append(sh)
        m_ins.append(B * h * w)
        m_outs.append(B * ho * wo)
        h, w = ho, wo

    in_arrays = [x_tok] + S_list + W_list + b_list
    in_specs = [pl.BlockSpec(a.shape, lambda i, _n=a.ndim: (0,) * _n)
                for a in in_arrays]
    m_out_last = m_outs[-1]
    out_spec = pl.BlockSpec((m_out_last, cpad), lambda i: (0, 0))

    flops = 0
    trans = 0
    for l in range(n_layers):
        flops += 9 * 2 * (m_outs[l] * m_ins[l] * cpad + m_outs[l] * cpad * cpad)
        if l < n_layers - 1:
            trans += m_outs[l] * cpad
    bytes_accessed = 4 * (sum(int(a.size) for a in in_arrays) + m_out_last * cpad)

    out = pl.pallas_call(
        functools.partial(fused_patch_embed_kernel, n_layers=n_layers),
        out_shape=jax.ShapeDtypeStruct((m_out_last, cpad), jnp.float32),
        grid=(1,),
        in_specs=in_specs,
        out_specs=out_spec,
        compiler_params=pltpu.CompilerParams(
            dimension_semantics=("arbitrary",),
            vmem_limit_bytes=32 * 1024 * 1024),
        cost_estimate=pl.CostEstimate(flops=flops, transcendentals=trans,
                                      bytes_accessed=bytes_accessed),
    )(*in_arrays)

    tokens = out[:, :embed_dim].reshape(B, h * w, embed_dim)  # == flatten(2).T
    return tokens, (h, w)


# ---------------------------------------------------------------------------
# Pure-JAX reference (correctness check only)
# ---------------------------------------------------------------------------
def patch_embed_reference(x_nchw, params):
    x = jnp.transpose(x_nchw, (0, 2, 3, 1))
    n_layers = len(params)
    for l, (w, gamma, beta, mean, var) in enumerate(params):
        w_hwio = jnp.transpose(w, (2, 3, 1, 0))
        y = jax.lax.conv_general_dilated(
            x, w_hwio, window_strides=(2, 2), padding=((1, 1), (1, 1)),
            dimension_numbers=("NHWC", "HWIO", "NHWC"))
        scale = gamma / jnp.sqrt(var + BN_EPS)
        y = y * scale + (beta - mean * scale)
        if l < n_layers - 1:
            y = 0.5 * y * (1.0 + jax.lax.erf(y * INV_SQRT2))
        x = y
    B, H, W, C = x.shape
    return x.reshape(B, H * W, C), (H, W)


# ---------------------------------------------------------------------------
# Deterministic parameter init (BatchNorm treated in eval mode, stats folded)
# ---------------------------------------------------------------------------
def init_params(key, embed_dim):
    dims = [3, embed_dim // 8, embed_dim // 4, embed_dim // 2, embed_dim]
    params = []
    for l in range(4):
        cin, cout = dims[l], dims[l + 1]
        key, k1, k2, k3, k4, k5 = jax.random.split(key, 6)
        fan_in = cin * 9
        w = jax.random.normal(k1, (cout, cin, 3, 3), jnp.float32) * (2.0 / fan_in) ** 0.5
        gamma = 1.0 + 0.1 * jax.random.normal(k2, (cout,), jnp.float32)
        beta = 0.1 * jax.random.normal(k3, (cout,), jnp.float32)
        mean = 0.1 * jax.random.normal(k4, (cout,), jnp.float32)
        var = jax.random.uniform(k5, (cout,), jnp.float32, minval=0.5, maxval=1.5)
        params.append((w, gamma, beta, mean, var))
    return params


if __name__ == "__main__":
    key = jax.random.PRNGKey(0)
    k_x, k_p = jax.random.split(key)

    embed_dim = 64                      # channel path 3 -> 8 -> 16 -> 32 -> 64
    x = jax.random.normal(k_x, (2, 3, 16, 16), jnp.float32)   # NCHW, like torch
    params = init_params(k_p, embed_dim)

    tokens, (H, W) = patch_embed_forward(x, params)
    tokens = jax.block_until_ready(tokens)

    ref_tokens, (Hr, Wr) = patch_embed_reference(x, params)
    assert tokens.shape == (2, H * W, embed_dim)
    assert (H, W) == (Hr, Wr) == (1, 1)
    assert jnp.allclose(tokens, ref_tokens, atol=1e-4, rtol=1e-4), \
        float(jnp.max(jnp.abs(tokens - ref_tokens)))

    print("KERNEL_OK")
</pallas_src>

<mosaic_0001>
module attributes {stable_mosaic.version = 11 : i64} {
  func.func @fused_patch_embed_kernel(%arg0: i32, %arg1: memref<512x128xf32, #tpu.memory_space<vmem>>, %arg2: memref<9x128x512xf32, #tpu.memory_space<vmem>>, %arg3: memref<9x32x128xf32, #tpu.memory_space<vmem>>, %arg4: memref<9x8x32xf32, #tpu.memory_space<vmem>>, %arg5: memref<9x2x8xf32, #tpu.memory_space<vmem>>, %arg6: memref<9x128x128xf32, #tpu.memory_space<vmem>>, %arg7: memref<9x128x128xf32, #tpu.memory_space<vmem>>, %arg8: memref<9x128x128xf32, #tpu.memory_space<vmem>>, %arg9: memref<9x128x128xf32, #tpu.memory_space<vmem>>, %arg10: memref<1x128xf32, #tpu.memory_space<vmem>>, %arg11: memref<1x128xf32, #tpu.memory_space<vmem>>, %arg12: memref<1x128xf32, #tpu.memory_space<vmem>>, %arg13: memref<1x128xf32, #tpu.memory_space<vmem>>, %arg14: memref<2x128xf32, #tpu.memory_space<vmem>>) attributes {dimension_semantics = [#tpu.dimension_semantics<arbitrary>], iteration_bounds = array<i64: 1>, scalar_prefetch = 0 : i64, scratch_operands = 0 : i64, tpu.core_type = #tpu.core_type<tc>, window_params = [{pipeline_mode = #tpu.pipeline_mode<synchronous>, transform_indices = @transform_0, window_bounds = array<i64: 512, 128>}, {pipeline_mode = #tpu.pipeline_mode<synchronous>, transform_indices = @transform_1, window_bounds = array<i64: 9, 128, 512>}, {pipeline_mode = #tpu.pipeline_mode<synchronous>, transform_indices = @transform_2, window_bounds = array<i64: 9, 32, 128>}, {pipeline_mode = #tpu.pipeline_mode<synchronous>, transform_indices = @transform_3, window_bounds = array<i64: 9, 8, 32>}, {pipeline_mode = #tpu.pipeline_mode<synchronous>, transform_indices = @transform_4, window_bounds = array<i64: 9, 2, 8>}, {pipeline_mode = #tpu.pipeline_mode<synchronous>, transform_indices = @transform_5, window_bounds = array<i64: 9, 128, 128>}, {pipeline_mode = #tpu.pipeline_mode<synchronous>, transform_indices = @transform_6, window_bounds = array<i64: 9, 128, 128>}, {pipeline_mode = #tpu.pipeline_mode<synchronous>, transform_indices = @transform_7, window_bounds = array<i64: 9, 128, 128>}, {pipeline_mode = #tpu.pipeline_mode<synchronous>, transform_indices = @transform_8, window_bounds = array<i64: 9, 128, 128>}, {pipeline_mode = #tpu.pipeline_mode<synchronous>, transform_indices = @transform_9, window_bounds = array<i64: 1, 128>}, {pipeline_mode = #tpu.pipeline_mode<synchronous>, transform_indices = @transform_10, window_bounds = array<i64: 1, 128>}, {pipeline_mode = #tpu.pipeline_mode<synchronous>, transform_indices = @transform_11, window_bounds = array<i64: 1, 128>}, {pipeline_mode = #tpu.pipeline_mode<synchronous>, transform_indices = @transform_12, window_bounds = array<i64: 1, 128>}, {pipeline_mode = #tpu.pipeline_mode<synchronous>, transform_indices = @transform_13, window_bounds = array<i64: 2, 128>}]} {
    %c0 = arith.constant 0 : index
    %c0_0 = arith.constant 0 : index
    %0 = vector.load %arg1[%c0, %c0_0] : memref<512x128xf32, #tpu.memory_space<vmem>>, vector<512x128xf32>
    %cst = arith.constant 0.000000e+00 : f32
    %1 = vector.broadcast %cst : f32 to vector<128x128xf32>
    %c0_1 = arith.constant 0 : index
    %c0_2 = arith.constant 0 : index
    %c0_3 = arith.constant 0 : index
    %2 = vector.load %arg2[%c0_1, %c0_2, %c0_3] : memref<9x128x512xf32, #tpu.memory_space<vmem>>, vector<1x128x512xf32>
    %3 = vector.shape_cast %2 : vector<1x128x512xf32> to vector<128x512xf32>
    %cst_4 = arith.constant dense<0.000000e+00> : vector<128x128xf32>
    %4 = tpu.matmul %3, %0, %cst_4 {dimension_numbers = #tpu.dot_dimension_numbers<[1], [0], [0], [1], [0, 0, 1, 1], [], []>} : vector<128x512xf32>, vector<512x128xf32>, vector<128x128xf32> -> vector<128x128xf32>
    %c0_5 = arith.constant 0 : index
    %c0_6 = arith.constant 0 : index
    %c0_7 = arith.constant 0 : index
    %5 = vector.load %arg6[%c0_5, %c0_6, %c0_7] : memref<9x128x128xf32, #tpu.memory_space<vmem>>, vector<1x128x128xf32>
    %6 = vector.shape_cast %5 : vector<1x128x128xf32> to vector<128x128xf32>
    %cst_8 = arith.constant dense<0.000000e+00> : vector<128x128xf32>
    %7 = tpu.matmul %4, %6, %cst_8 {dimension_numbers = #tpu.dot_dimension_numbers<[1], [0], [0], [1], [0, 0, 1, 1], [], []>} : vector<128x128xf32>, vector<128x128xf32>, vector<128x128xf32> -> vector<128x128xf32>
    %8 = arith.addf %1, %7 : vector<128x128xf32>
    %c1 = arith.constant 1 : index
    %c0_9 = arith.constant 0 : index
    %c0_10 = arith.constant 0 : index
    %9 = vector.load %arg2[%c1, %c0_9, %c0_10] : memref<9x128x512xf32, #tpu.memory_space<vmem>>, vector<1x128x512xf32>
    %10 = vector.shape_cast %9 : vector<1x128x512xf32> to vector<128x512xf32>
    %cst_11 = arith.constant dense<0.000000e+00> : vector<128x128xf32>
    %11 = tpu.matmul %10, %0, %cst_11 {dimension_numbers = #tpu.dot_dimension_numbers<[1], [0], [0], [1], [0, 0, 1, 1], [], []>} : vector<128x512xf32>, vector<512x128xf32>, vector<128x128xf32> -> vector<128x128xf32>
    %c1_12 = arith.constant 1 : index
    %c0_13 = arith.constant 0 : index
    %c0_14 = arith.constant 0 : index
    %12 = vector.load %arg6[%c1_12, %c0_13, %c0_14] : memref<9x128x128xf32, #tpu.memory_space<vmem>>, vector<1x128x128xf32>
    %13 = vector.shape_cast %12 : vector<1x128x128xf32> to vector<128x128xf32>
    %cst_15 = arith.constant dense<0.000000e+00> : vector<128x128xf32>
    %14 = tpu.matmul %11, %13, %cst_15 {dimension_numbers = #tpu.dot_dimension_numbers<[1], [0], [0], [1], [0, 0, 1, 1], [], []>} : vector<128x128xf32>, vector<128x128xf32>, vector<128x128xf32> -> vector<128x128xf32>
    %15 = arith.addf %8, %14 : vector<128x128xf32>
    %c2 = arith.constant 2 : index
    %c0_16 = arith.constant 0 : index
    %c0_17 = arith.constant 0 : index
    %16 = vector.load %arg2[%c2, %c0_16, %c0_17] : memref<9x128x512xf32, #tpu.memory_space<vmem>>, vector<1x128x512xf32>
    %17 = vector.shape_cast %16 : vector<1x128x512xf32> to vector<128x512xf32>
    %cst_18 = arith.constant dense<0.000000e+00> : vector<128x128xf32>
    %18 = tpu.matmul %17, %0, %cst_18 {dimension_numbers = #tpu.dot_dimension_numbers<[1], [0], [0], [1], [0, 0, 1, 1], [], []>} : vector<128x512xf32>, vector<512x128xf32>, vector<128x128xf32> -> vector<128x128xf32>
    %c2_19 = arith.constant 2 : index
    %c0_20 = arith.constant 0 : index
    %c0_21 = arith.constant 0 : index
    %19 = vector.load %arg6[%c2_19, %c0_20, %c0_21] : memref<9x128x128xf32, #tpu.memory_space<vmem>>, vector<1x128x128xf32>
    %20 = vector.shape_cast %19 : vector<1x128x128xf32> to vector<128x128xf32>
    %cst_22 = arith.constant dense<0.000000e+00> : vector<128x128xf32>
    %21 = tpu.matmul %18, %20, %cst_22 {dimension_numbers = #tpu.dot_dimension_numbers<[1], [0], [0], [1], [0, 0, 1, 1], [], []>} : vector<128x128xf32>, vector<128x128xf32>, vector<128x128xf32> -> vector<128x128xf32>
    %22 = arith.addf %15, %21 : vector<128x128xf32>
    %c3 = arith.constant 3 : index
    %c0_23 = arith.constant 0 : index
    %c0_24 = arith.constant 0 : index
    %23 = vector.load %arg2[%c3, %c0_23, %c0_24] : memref<9x128x512xf32, #tpu.memory_space<vmem>>, vector<1x128x512xf32>
    %24 = vector.shape_cast %23 : vector<1x128x512xf32> to vector<128x512xf32>
    %cst_25 = arith.constant dense<0.000000e+00> : vector<128x128xf32>
    %25 = tpu.matmul %24, %0, %cst_25 {dimension_numbers = #tpu.dot_dimension_numbers<[1], [0], [0], [1], [0, 0, 1, 1], [], []>} : vector<128x512xf32>, vector<512x128xf32>, vector<128x128xf32> -> vector<128x128xf32>
    %c3_26 = arith.constant 3 : index
    %c0_27 = arith.constant 0 : index
    %c0_28 = arith.constant 0 : index
    %26 = vector.load %arg6[%c3_26, %c0_27, %c0_28] : memref<9x128x128xf32, #tpu.memory_space<vmem>>, vector<1x128x128xf32>
    %27 = vector.shape_cast %26 : vector<1x128x128xf32> to vector<128x128xf32>
    %cst_29 = arith.constant dense<0.000000e+00> : vector<128x128xf32>
    %28 = tpu.matmul %25, %27, %cst_29 {dimension_numbers = #tpu.dot_dimension_numbers<[1], [0], [0], [1], [0, 0, 1, 1], [], []>} : vector<128x128xf32>, vector<128x128xf32>, vector<128x128xf32> -> vector<128x128xf32>
    %29 = arith.addf %22, %28 : vector<128x128xf32>
    %c4 = arith.constant 4 : index
    %c0_30 = arith.constant 0 : index
    %c0_31 = arith.constant 0 : index
    %30 = vector.load %arg2[%c4, %c0_30, %c0_31] : memref<9x128x512xf32, #tpu.memory_space<vmem>>, vector<1x128x512xf32>
    %31 = vector.shape_cast %30 : vector<1x128x512xf32> to vector<128x512xf32>
    %cst_32 = arith.constant dense<0.000000e+00> : vector<128x128xf32>
    %32 = tpu.matmul %31, %0, %cst_32 {dimension_numbers = #tpu.dot_dimension_numbers<[1], [0], [0], [1], [0, 0, 1, 1], [], []>} : vector<128x512xf32>, vector<512x128xf32>, vector<128x128xf32> -> vector<128x128xf32>
    %c4_33 = arith.constant 4 : index
    %c0_34 = arith.constant 0 : index
    %c0_35 = arith.constant 0 : index
    %33 = vector.load %arg6[%c4_33, %c0_34, %c0_35] : memref<9x128x128xf32, #tpu.memory_space<vmem>>, vector<1x128x128xf32>
    %34 = vector.shape_cast %33 : vector<1x128x128xf32> to vector<128x128xf32>
    %cst_36 = arith.constant dense<0.000000e+00> : vector<128x128xf32>
    %35 = tpu.matmul %32, %34, %cst_36 {dimension_numbers = #tpu.dot_dimension_numbers<[1], [0], [0], [1], [0, 0, 1, 1], [], []>} : vector<128x128xf32>, vector<128x128xf32>, vector<128x128xf32> -> vector<128x128xf32>
    %36 = arith.addf %29, %35 : vector<128x128xf32>
    %c5 = arith.constant 5 : index
    %c0_37 = arith.constant 0 : index
    %c0_38 = arith.constant 0 : index
    %37 = vector.load %arg2[%c5, %c0_37, %c0_38] : memref<9x128x512xf32, #tpu.memory_space<vmem>>, vector<1x128x512xf32>
    %38 = vector.shape_cast %37 : vector<1x128x512xf32> to vector<128x512xf32>
    %cst_39 = arith.constant dense<0.000000e+00> : vector<128x128xf32>
    %39 = tpu.matmul %38, %0, %cst_39 {dimension_numbers = #tpu.dot_dimension_numbers<[1], [0], [0], [1], [0, 0, 1, 1], [], []>} : vector<128x512xf32>, vector<512x128xf32>, vector<128x128xf32> -> vector<128x128xf32>
    %c5_40 = arith.constant 5 : index
    %c0_41 = arith.constant 0 : index
    %c0_42 = arith.constant 0 : index
    %40 = vector.load %arg6[%c5_40, %c0_41, %c0_42] : memref<9x128x128xf32, #tpu.memory_space<vmem>>, vector<1x128x128xf32>
    %41 = vector.shape_cast %40 : vector<1x128x128xf32> to vector<128x128xf32>
    %cst_43 = arith.constant dense<0.000000e+00> : vector<128x128xf32>
    %42 = tpu.matmul %39, %41, %cst_43 {dimension_numbers = #tpu.dot_dimension_numbers<[1], [0], [0], [1], [0, 0, 1, 1], [], []>} : vector<128x128xf32>, vector<128x128xf32>, vector<128x128xf32> -> vector<128x128xf32>
    %43 = arith.addf %36, %42 : vector<128x128xf32>
    %c6 = arith.constant 6 : index
    %c0_44 = arith.constant 0 : index
    %c0_45 = arith.constant 0 : index
    %44 = vector.load %arg2[%c6, %c0_44, %c0_45] : memref<9x128x512xf32, #tpu.memory_space<vmem>>, vector<1x128x512xf32>
    %45 = vector.shape_cast %44 : vector<1x128x512xf32> to vector<128x512xf32>
    %cst_46 = arith.constant dense<0.000000e+00> : vector<128x128xf32>
    %46 = tpu.matmul %45, %0, %cst_46 {dimension_numbers = #tpu.dot_dimension_numbers<[1], [0], [0], [1], [0, 0, 1, 1], [], []>} : vector<128x512xf32>, vector<512x128xf32>, vector<128x128xf32> -> vector<128x128xf32>
    %c6_47 = arith.constant 6 : index
    %c0_48 = arith.constant 0 : index
    %c0_49 = arith.constant 0 : index
    %47 = vector.load %arg6[%c6_47, %c0_48, %c0_49] : memref<9x128x128xf32, #tpu.memory_space<vmem>>, vector<1x128x128xf32>
    %48 = vector.shape_cast %47 : vector<1x128x128xf32> to vector<128x128xf32>
    %cst_50 = arith.constant dense<0.000000e+00> : vector<128x128xf32>
    %49 = tpu.matmul %46, %48, %cst_50 {dimension_numbers = #tpu.dot_dimension_numbers<[1], [0], [0], [1], [0, 0, 1, 1], [], []>} : vector<128x128xf32>, vector<128x128xf32>, vector<128x128xf32> -> vector<128x128xf32>
    %50 = arith.addf %43, %49 : vector<128x128xf32>
    %c7 = arith.constant 7 : index
    %c0_51 = arith.constant 0 : index
    %c0_52 = arith.constant 0 : index
    %51 = vector.load %arg2[%c7, %c0_51, %c0_52] : memref<9x128x512xf32, #tpu.memory_space<vmem>>, vector<1x128x512xf32>
    %52 = vector.shape_cast %51 : vector<1x128x512xf32> to vector<128x512xf32>
    %cst_53 = arith.constant dense<0.000000e+00> : vector<128x128xf32>
    %53 = tpu.matmul %52, %0, %cst_53 {dimension_numbers = #tpu.dot_dimension_numbers<[1], [0], [0], [1], [0, 0, 1, 1], [], []>} : vector<128x512xf32>, vector<512x128xf32>, vector<128x128xf32> -> vector<128x128xf32>
    %c7_54 = arith.constant 7 : index
    %c0_55 = arith.constant 0 : index
    %c0_56 = arith.constant 0 : index
    %54 = vector.load %arg6[%c7_54, %c0_55, %c0_56] : memref<9x128x128xf32, #tpu.memory_space<vmem>>, vector<1x128x128xf32>
    %55 = vector.shape_cast %54 : vector<1x128x128xf32> to vector<128x128xf32>
    %cst_57 = arith.constant dense<0.000000e+00> : vector<128x128xf32>
    %56 = tpu.matmul %53, %55, %cst_57 {dimension_numbers = #tpu.dot_dimension_numbers<[1], [0], [0], [1], [0, 0, 1, 1], [], []>} : vector<128x128xf32>, vector<128x128xf32>, vector<128x128xf32> -> vector<128x128xf32>
    %57 = arith.addf %50, %56 : vector<128x128xf32>
    %c8 = arith.constant 8 : index
    %c0_58 = arith.constant 0 : index
    %c0_59 = arith.constant 0 : index
    %58 = vector.load %arg2[%c8, %c0_58, %c0_59] : memref<9x128x512xf32, #tpu.memory_space<vmem>>, vector<1x128x512xf32>
    %59 = vector.shape_cast %58 : vector<1x128x512xf32> to vector<128x512xf32>
    %cst_60 = arith.constant dense<0.000000e+00> : vector<128x128xf32>
    %60 = tpu.matmul %59, %0, %cst_60 {dimension_numbers = #tpu.dot_dimension_numbers<[1], [0], [0], [1], [0, 0, 1, 1], [], []>} : vector<128x512xf32>, vector<512x128xf32>, vector<128x128xf32> -> vector<128x128xf32>
    %c8_61 = arith.constant 8 : index
    %c0_62 = arith.constant 0 : index
    %c0_63 = arith.constant 0 : index
    %61 = vector.load %arg6[%c8_61, %c0_62, %c0_63] : memref<9x128x128xf32, #tpu.memory_space<vmem>>, vector<1x128x128xf32>
    %62 = vector.shape_cast %61 : vector<1x128x128xf32> to vector<128x128xf32>
    %cst_64 = arith.constant dense<0.000000e+00> : vector<128x128xf32>
    %63 = tpu.matmul %60, %62, %cst_64 {dimension_numbers = #tpu.dot_dimension_numbers<[1], [0], [0], [1], [0, 0, 1, 1], [], []>} : vector<128x128xf32>, vector<128x128xf32>, vector<128x128xf32> -> vector<128x128xf32>
    %64 = arith.addf %57, %63 : vector<128x128xf32>
    %c0_65 = arith.constant 0 : index
    %c0_66 = arith.constant 0 : index
    %65 = vector.load %arg10[%c0_65, %c0_66] : memref<1x128xf32, #tpu.memory_space<vmem>>, vector<1x128xf32>
    %66 = vector.broadcast %65 : vector<1x128xf32> to vector<128x128xf32>
    %67 = arith.addf %64, %66 : vector<128x128xf32>
    %cst_67 = arith.constant 5.000000e-01 : f32
    %68 = vector.broadcast %cst_67 : f32 to vector<128x128xf32>
    %69 = arith.mulf %68, %67 : vector<128x128xf32>
    %cst_68 = arith.constant 0.707106769 : f32
    %70 = vector.broadcast %cst_68 : f32 to vector<128x128xf32>
    %71 = arith.mulf %67, %70 : vector<128x128xf32>
    %72 = math.erf %71 : vector<128x128xf32>
    %cst_69 = arith.constant 1.000000e+00 : f32
    %73 = vector.broadcast %cst_69 : f32 to vector<128x128xf32>
    %74 = arith.addf %73, %72 : vector<128x128xf32>
    %75 = arith.mulf %69, %74 : vector<128x128xf32>
    %cst_70 = arith.constant 0.000000e+00 : f32
    %76 = vector.broadcast %cst_70 : f32 to vector<32x128xf32>
    %c0_71 = arith.constant 0 : index
    %c0_72 = arith.constant 0 : index
    %c0_73 = arith.constant 0 : index
    %77 = vector.load %arg3[%c0_71, %c0_72, %c0_73] : memref<9x32x128xf32, #tpu.memory_space<vmem>>, vector<1x32x128xf32>
    %78 = vector.shape_cast %77 : vector<1x32x128xf32> to vector<32x128xf32>
    %cst_74 = arith.constant dense<0.000000e+00> : vector<32x128xf32>
    %79 = tpu.matmul %78, %75, %cst_74 {dimension_numbers = #tpu.dot_dimension_numbers<[1], [0], [0], [1], [0, 0, 1, 1], [], []>} : vector<32x128xf32>, vector<128x128xf32>, vector<32x128xf32> -> vector<32x128xf32>
    %c0_75 = arith.constant 0 : index
    %c0_76 = arith.constant 0 : index
    %c0_77 = arith.constant 0 : index
    %80 = vector.load %arg7[%c0_75, %c0_76, %c0_77] : memref<9x128x128xf32, #tpu.memory_space<vmem>>, vector<1x128x128xf32>
    %81 = vector.shape_cast %80 : vector<1x128x128xf32> to vector<128x128xf32>
    %cst_78 = arith.constant dense<0.000000e+00> : vector<32x128xf32>
    %82 = tpu.matmul %79, %81, %cst_78 {dimension_numbers = #tpu.dot_dimension_numbers<[1], [0], [0], [1], [0, 0, 1, 1], [], []>} : vector<32x128xf32>, vector<128x128xf32>, vector<32x128xf32> -> vector<32x128xf32>
    %83 = arith.addf %76, %82 : vector<32x128xf32>
    %c1_79 = arith.constant 1 : index
    %c0_80 = arith.constant 0 : index
    %c0_81 = arith.constant 0 : index
    %84 = vector.load %arg3[%c1_79, %c0_80, %c0_81] : memref<9x32x128xf32, #tpu.memory_space<vmem>>, vector<1x32x128xf32>
    %85 = vector.shape_cast %84 : vector<1x32x128xf32> to vector<32x128xf32>
    %cst_82 = arith.constant dense<0.000000e+00> : vector<32x128xf32>
    %86 = tpu.matmul %85, %75, %cst_82 {dimension_numbers = #tpu.dot_dimension_numbers<[1], [0], [0], [1], [0, 0, 1, 1], [], []>} : vector<32x128xf32>, vector<128x128xf32>, vector<32x128xf32> -> vector<32x128xf32>
    %c1_83 = arith.constant 1 : index
    %c0_84 = arith.constant 0 : index
    %c0_85 = arith.constant 0 : index
    %87 = vector.load %arg7[%c1_83, %c0_84, %c0_85] : memref<9x128x128xf32, #tpu.memory_space<vmem>>, vector<1x128x128xf32>
    %88 = vector.shape_cast %87 : vector<1x128x128xf32> to vector<128x128xf32>
    %cst_86 = arith.constant dense<0.000000e+00> : vector<32x128xf32>
    %89 = tpu.matmul %86, %88, %cst_86 {dimension_numbers = #tpu.dot_dimension_numbers<[1], [0], [0], [1], [0, 0, 1, 1], [], []>} : vector<32x128xf32>, vector<128x128xf32>, vector<32x128xf32> -> vector<32x128xf32>
    %90 = arith.addf %83, %89 : vector<32x128xf32>
    %c2_87 = arith.constant 2 : index
    %c0_88 = arith.constant 0 : index
    %c0_89 = arith.constant 0 : index
    %91 = vector.load %arg3[%c2_87, %c0_88, %c0_89] : memref<9x32x128xf32, #tpu.memory_space<vmem>>, vector<1x32x128xf32>
    %92 = vector.shape_cast %91 : vector<1x32x128xf32> to vector<32x128xf32>
    %cst_90 = arith.constant dense<0.000000e+00> : vector<32x128xf32>
    %93 = tpu.matmul %92, %75, %cst_90 {dimension_numbers = #tpu.dot_dimension_numbers<[1], [0], [0], [1], [0, 0, 1, 1], [], []>} : vector<32x128xf32>, vector<128x128xf32>, vector<32x128xf32> -> vector<32x128xf32>
    %c2_91 = arith.constant 2 : index
    %c0_92 = arith.constant 0 : index
    %c0_93 = arith.constant 0 : index
    %94 = vector.load %arg7[%c2_91, %c0_92, %c0_93] : memref<9x128x128xf32, #tpu.memory_space<vmem>>, vector<1x128x128xf32>
    %95 = vector.shape_cast %94 : vector<1x128x128xf32> to vector<128x128xf32>
    %cst_94 = arith.constant dense<0.000000e+00> : vector<32x128xf32>
    %96 = tpu.matmul %93, %95, %cst_94 {dimension_numbers = #tpu.dot_dimension_numbers<[1], [0], [0], [1], [0, 0, 1, 1], [], []>} : vector<32x128xf32>, vector<128x128xf32>, vector<32x128xf32> -> vector<32x128xf32>
    %97 = arith.addf %90, %96 : vector<32x128xf32>
    %c3_95 = arith.constant 3 : index
    %c0_96 = arith.constant 0 : index
    %c0_97 = arith.constant 0 : index
    %98 = vector.load %arg3[%c3_95, %c0_96, %c0_97] : memref<9x32x128xf32, #tpu.memory_space<vmem>>, vector<1x32x128xf32>
    %99 = vector.shape_cast %98 : vector<1x32x128xf32> to vector<32x128xf32>
    %cst_98 = arith.constant dense<0.000000e+00> : vector<32x128xf32>
    %100 = tpu.matmul %99, %75, %cst_98 {dimension_numbers = #tpu.dot_dimension_numbers<[1], [0], [0], [1], [0, 0, 1, 1], [], []>} : vector<32x128xf32>, vector<128x128xf32>, vector<32x128xf32> -> vector<32x128xf32>
    %c3_99 = arith.constant 3 : index
    %c0_100 = arith.constant 0 : index
    %c0_101 = arith.constant 0 : index
    %101 = vector.load %arg7[%c3_99, %c0_100, %c0_101] : memref<9x128x128xf32, #tpu.memory_space<vmem>>, vector<1x128x128xf32>
    %102 = vector.shape_cast %101 : vector<1x128x128xf32> to vector<128x128xf32>
    %cst_102 = arith.constant dense<0.000000e+00> : vector<32x128xf32>
    %103 = tpu.matmul %100, %102, %cst_102 {dimension_numbers = #tpu.dot_dimension_numbers<[1], [0], [0], [1], [0, 0, 1, 1], [], []>} : vector<32x128xf32>, vector<128x128xf32>, vector<32x128xf32> -> vector<32x128xf32>
    %104 = arith.addf %97, %103 : vector<32x128xf32>
    %c4_103 = arith.constant 4 : index
    %c0_104 = arith.constant 0 : index
    %c0_105 = arith.constant 0 : index
    %105 = vector.load %arg3[%c4_103, %c0_104, %c0_105] : memref<9x32x128xf32, #tpu.memory_space<vmem>>, vector<1x32x128xf32>
    %106 = vector.shape_cast %105 : vector<1x32x128xf32> to vector<32x128xf32>
    %cst_106 = arith.constant dense<0.000000e+00> : vector<32x128xf32>
    %107 = tpu.matmul %106, %75, %cst_106 {dimension_numbers = #tpu.dot_dimension_numbers<[1], [0], [0], [1], [0, 0, 1, 1], [], []>} : vector<32x128xf32>, vector<128x128xf32>, vector<32x128xf32> -> vector<32x128xf32>
    %c4_107 = arith.constant 4 : index
    %c0_108 = arith.constant 0 : index
    %c0_109 = arith.constant 0 : index
    %108 = vector.load %arg7[%c4_107, %c0_108, %c0_109] : memref<9x128x128xf32, #tpu.memory_space<vmem>>, vector<1x128x128xf32>
    %109 = vector.shape_cast %108 : vector<1x128x128xf32> to vector<128x128xf32>
    %cst_110 = arith.constant dense<0.000000e+00> : vector<32x128xf32>
    %110 = tpu.matmul %107, %109, %cst_110 {dimension_numbers = #tpu.dot_dimension_numbers<[1], [0], [0], [1], [0, 0, 1, 1], [], []>} : vector<32x128xf32>, vector<128x128xf32>, vector<32x128xf32> -> vector<32x128xf32>
    %111 = arith.addf %104, %110 : vector<32x128xf32>
    %c5_111 = arith.constant 5 : index
    %c0_112 = arith.constant 0 : index
    %c0_113 = arith.constant 0 : index
    %112 = vector.load %arg3[%c5_111, %c0_112, %c0_113] : memref<9x32x128xf32, #tpu.memory_space<vmem>>, vector<1x32x128xf32>
    %113 = vector.shape_cast %112 : vector<1x32x128xf32> to vector<32x128xf32>
    %cst_114 = arith.constant dense<0.000000e+00> : vector<32x128xf32>
    %114 = tpu.matmul %113, %75, %cst_114 {dimension_numbers = #tpu.dot_dimension_numbers<[1], [0], [0], [1], [0, 0, 1, 1], [], []>} : vector<32x128xf32>, vector<128x128xf32>, vector<32x128xf32> -> vector<32x128xf32>
    %c5_115 = arith.constant 5 : index
    %c0_116 = arith.constant 0 : index
    %c0_117 = arith.constant 0 : index
    %115 = vector.load %arg7[%c5_115, %c0_116, %c0_117] : memref<9x128x128xf32, #tpu.memory_space<vmem>>, vector<1x128x128xf32>
    %116 = vector.shape_cast %115 : vector<1x128x128xf32> to vector<128x128xf32>
    %cst_118 = arith.constant dense<0.000000e+00> : vector<32x128xf32>
    %117 = tpu.matmul %114, %116, %cst_118 {dimension_numbers = #tpu.dot_dimension_numbers<[1], [0], [0], [1], [0, 0, 1, 1], [], []>} : vector<32x128xf32>, vector<128x128xf32>, vector<32x128xf32> -> vector<32x128xf32>
    %118 = arith.addf %111, %117 : vector<32x128xf32>
    %c6_119 = arith.constant 6 : index
    %c0_120 = arith.constant 0 : index
    %c0_121 = arith.constant 0 : index
    %119 = vector.load %arg3[%c6_119, %c0_120, %c0_121] : memref<9x32x128xf32, #tpu.memory_space<vmem>>, vector<1x32x128xf32>
    %120 = vector.shape_cast %119 : vector<1x32x128xf32> to vector<32x128xf32>
    %cst_122 = arith.constant dense<0.000000e+00> : vector<32x128xf32>
    %121 = tpu.matmul %120, %75, %cst_122 {dimension_numbers = #tpu.dot_dimension_numbers<[1], [0], [0], [1], [0, 0, 1, 1], [], []>} : vector<32x128xf32>, vector<128x128xf32>, vector<32x128xf32> -> vector<32x128xf32>
    %c6_123 = arith.constant 6 : index
    %c0_124 = arith.constant 0 : index
    %c0_125 = arith.constant 0 : index
    %122 = vector.load %arg7[%c6_123, %c0_124, %c0_125] : memref<9x128x128xf32, #tpu.memory_space<vmem>>, vector<1x128x128xf32>
    %123 = vector.shape_cast %122 : vector<1x128x128xf32> to vector<128x128xf32>
    %cst_126 = arith.constant dense<0.000000e+00> : vector<32x128xf32>
    %124 = tpu.matmul %121, %123, %cst_126 {dimension_numbers = #tpu.dot_dimension_numbers<[1], [0], [0], [1], [0, 0, 1, 1], [], []>} : vector<32x128xf32>, vector<128x128xf32>, vector<32x128xf32> -> vector<32x128xf32>
    %125 = arith.addf %118, %124 : vector<32x128xf32>
    %c7_127 = arith.constant 7 : index
    %c0_128 = arith.constant 0 : index
    %c0_129 = arith.constant 0 : index
    %126 = vector.load %arg3[%c7_127, %c0_128, %c0_129] : memref<9x32x128xf32, #tpu.memory_space<vmem>>, vector<1x32x128xf32>
    %127 = vector.shape_cast %126 : vector<1x32x128xf32> to vector<32x128xf32>
    %cst_130 = arith.constant dense<0.000000e+00> : vector<32x128xf32>
    %128 = tpu.matmul %127, %75, %cst_130 {dimension_numbers = #tpu.dot_dimension_numbers<[1], [0], [0], [1], [0, 0, 1, 1], [], []>} : vector<32x128xf32>, vector<128x128xf32>, vector<32x128xf32> -> vector<32x128xf32>
    %c7_131 = arith.constant 7 : index
    %c0_132 = arith.constant 0 : index
    %c0_133 = arith.constant 0 : index
    %129 = vector.load %arg7[%c7_131, %c0_132, %c0_133] : memref<9x128x128xf32, #tpu.memory_space<vmem>>, vector<1x128x128xf32>
    %130 = vector.shape_cast %129 : vector<1x128x128xf32> to vector<128x128xf32>
    %cst_134 = arith.constant dense<0.000000e+00> : vector<32x128xf32>
    %131 = tpu.matmul %128, %130, %cst_134 {dimension_numbers = #tpu.dot_dimension_numbers<[1], [0], [0], [1], [0, 0, 1, 1], [], []>} : vector<32x128xf32>, vector<128x128xf32>, vector<32x128xf32> -> vector<32x128xf32>
    %132 = arith.addf %125, %131 : vector<32x128xf32>
    %c8_135 = arith.constant 8 : index
    %c0_136 = arith.constant 0 : index
    %c0_137 = arith.constant 0 : index
    %133 = vector.load %arg3[%c8_135, %c0_136, %c0_137] : memref<9x32x128xf32, #tpu.memory_space<vmem>>, vector<1x32x128xf32>
    %134 = vector.shape_cast %133 : vector<1x32x128xf32> to vector<32x128xf32>
    %cst_138 = arith.constant dense<0.000000e+00> : vector<32x128xf32>
    %135 = tpu.matmul %134, %75, %cst_138 {dimension_numbers = #tpu.dot_dimension_numbers<[1], [0], [0], [1], [0, 0, 1, 1], [], []>} : vector<32x128xf32>, vector<128x128xf32>, vector<32x128xf32> -> vector<32x128xf32>
    %c8_139 = arith.constant 8 : index
    %c0_140 = arith.constant 0 : index
    %c0_141 = arith.constant 0 : index
    %136 = vector.load %arg7[%c8_139, %c0_140, %c0_141] : memref<9x128x128xf32, #tpu.memory_space<vmem>>, vector<1x128x128xf32>
    %137 = vector.shape_cast %136 : vector<1x128x128xf32> to vector<128x128xf32>
    %cst_142 = arith.constant dense<0.000000e+00> : vector<32x128xf32>
    %138 = tpu.matmul %135, %137, %cst_142 {dimension_numbers = #tpu.dot_dimension_numbers<[1], [0], [0], [1], [0, 0, 1, 1], [], []>} : vector<32x128xf32>, vector<128x128xf32>, vector<32x128xf32> -> vector<32x128xf32>
    %139 = arith.addf %132, %138 : vector<32x128xf32>
    %c0_143 = arith.constant 0 : index
    %c0_144 = arith.constant 0 : index
    %140 = vector.load %arg11[%c0_143, %c0_144] : memref<1x128xf32, #tpu.memory_space<vmem>>, vector<1x128xf32>
    %141 = vector.broadcast %140 : vector<1x128xf32> to vector<32x128xf32>
    %142 = arith.addf %139, %141 : vector<32x128xf32>
    %cst_145 = arith.constant 5.000000e-01 : f32
    %143 = vector.broadcast %cst_145 : f32 to vector<32x128xf32>
    %144 = arith.mulf %143, %142 : vector<32x128xf32>
    %cst_146 = arith.constant 0.707106769 : f32
    %145 = vector.broadcast %cst_146 : f32 to vector<32x128xf32>
    %146 = arith.mulf %142, %145 : vector<32x128xf32>
    %147 = math.erf %146 : vector<32x128xf32>
    %cst_147 = arith.constant 1.000000e+00 : f32
    %148 = vector.broadcast %cst_147 : f32 to vector<32x128xf32>
    %149 = arith.addf %148, %147 : vector<32x128xf32>
    %150 = arith.mulf %144, %149 : vector<32x128xf32>
    %cst_148 = arith.constant 0.000000e+00 : f32
    %151 = vector.broadcast %cst_148 : f32 to vector<8x128xf32>
    %c0_149 = arith.constant 0 : index
    %c0_150 = arith.constant 0 : index
    %c0_151 = arith.constant 0 : index
    %152 = vector.load %arg4[%c0_149, %c0_150, %c0_151] : memref<9x8x32xf32, #tpu.memory_space<vmem>>, vector<1x8x32xf32>
    %153 = vector.shape_cast %152 : vector<1x8x32xf32> to vector<8x32xf32>
    %cst_152 = arith.constant dense<0.000000e+00> : vector<8x128xf32>
    %154 = tpu.matmul %153, %150, %cst_152 {dimension_numbers = #tpu.dot_dimension_numbers<[1], [0], [0], [1], [0, 0, 1, 1], [], []>} : vector<8x32xf32>, vector<32x128xf32>, vector<8x128xf32> -> vector<8x128xf32>
    %c0_153 = arith.constant 0 : index
    %c0_154 = arith.constant 0 : index
    %c0_155 = arith.constant 0 : index
    %155 = vector.load %arg8[%c0_153, %c0_154, %c0_155] : memref<9x128x128xf32, #tpu.memory_space<vmem>>, vector<1x128x128xf32>
    %156 = vector.shape_cast %155 : vector<1x128x128xf32> to vector<128x128xf32>
    %cst_156 = arith.constant dense<0.000000e+00> : vector<8x128xf32>
    %157 = tpu.matmul %154, %156, %cst_156 {dimension_numbers = #tpu.dot_dimension_numbers<[1], [0], [0], [1], [0, 0, 1, 1], [], []>} : vector<8x128xf32>, vector<128x128xf32>, vector<8x128xf32> -> vector<8x128xf32>
    %158 = arith.addf %151, %157 : vector<8x128xf32>
    %c1_157 = arith.constant 1 : index
    %c0_158 = arith.constant 0 : index
    %c0_159 = arith.constant 0 : index
    %159 = vector.load %arg4[%c1_157, %c0_158, %c0_159] : memref<9x8x32xf32, #tpu.memory_space<vmem>>, vector<1x8x32xf32>
    %160 = vector.shape_cast %159 : vector<1x8x32xf32> to vector<8x32xf32>
    %cst_160 = arith.constant dense<0.000000e+00> : vector<8x128xf32>
    %161 = tpu.matmul %160, %150, %cst_160 {dimension_numbers = #tpu.dot_dimension_numbers<[1], [0], [0], [1], [0, 0, 1, 1], [], []>} : vector<8x32xf32>, vector<32x128xf32>, vector<8x128xf32> -> vector<8x128xf32>
    %c1_161 = arith.constant 1 : index
    %c0_162 = arith.constant 0 : index
    %c0_163 = arith.constant 0 : index
    %162 = vector.load %arg8[%c1_161, %c0_162, %c0_163] : memref<9x128x128xf32, #tpu.memory_space<vmem>>, vector<1x128x128xf32>
    %163 = vector.shape_cast %162 : vector<1x128x128xf32> to vector<128x128xf32>
    %cst_164 = arith.constant dense<0.000000e+00> : vector<8x128xf32>
    %164 = tpu.matmul %161, %163, %cst_164 {dimension_numbers = #tpu.dot_dimension_numbers<[1], [0], [0], [1], [0, 0, 1, 1], [], []>} : vector<8x128xf32>, vector<128x128xf32>, vector<8x128xf32> -> vector<8x128xf32>
    %165 = arith.addf %158, %164 : vector<8x128xf32>
    %c2_165 = arith.constant 2 : index
    %c0_166 = arith.constant 0 : index
    %c0_167 = arith.constant 0 : index
    %166 = vector.load %arg4[%c2_165, %c0_166, %c0_167] : memref<9x8x32xf32, #tpu.memory_space<vmem>>, vector<1x8x32xf32>
    %167 = vector.shape_cast %166 : vector<1x8x32xf32> to vector<8x32xf32>
    %cst_168 = arith.constant dense<0.000000e+00> : vector<8x128xf32>
    %168 = tpu.matmul %167, %150, %cst_168 {dimension_numbers = #tpu.dot_dimension_numbers<[1], [0], [0], [1], [0, 0, 1, 1], [], []>} : vector<8x32xf32>, vector<32x128xf32>, vector<8x128xf32> -> vector<8x128xf32>
    %c2_169 = arith.constant 2 : index
    %c0_170 = arith.constant 0 : index
    %c0_171 = arith.constant 0 : index
    %169 = vector.load %arg8[%c2_169, %c0_170, %c0_171] : memref<9x128x128xf32, #tpu.memory_space<vmem>>, vector<1x128x128xf32>
    %170 = vector.shape_cast %169 : vector<1x128x128xf32> to vector<128x128xf32>
    %cst_172 = arith.constant dense<0.000000e+00> : vector<8x128xf32>
    %171 = tpu.matmul %168, %170, %cst_172 {dimension_numbers = #tpu.dot_dimension_numbers<[1], [0], [0], [1], [0, 0, 1, 1], [], []>} : vector<8x128xf32>, vector<128x128xf32>, vector<8x128xf32> -> vector<8x128xf32>
    %172 = arith.addf %165, %171 : vector<8x128xf32>
    %c3_173 = arith.constant 3 : index
    %c0_174 = arith.constant 0 : index
    %c0_175 = arith.constant 0 : index
    %173 = vector.load %arg4[%c3_173, %c0_174, %c0_175] : memref<9x8x32xf32, #tpu.memory_space<vmem>>, vector<1x8x32xf32>
    %174 = vector.shape_cast %173 : vector<1x8x32xf32> to vector<8x32xf32>
    %cst_176 = arith.constant dense<0.000000e+00> : vector<8x128xf32>
    %175 = tpu.matmul %174, %150, %cst_176 {dimension_numbers = #tpu.dot_dimension_numbers<[1], [0], [0], [1], [0, 0, 1, 1], [], []>} : vector<8x32xf32>, vector<32x128xf32>, vector<8x128xf32> -> vector<8x128xf32>
    %c3_177 = arith.constant 3 : index
    %c0_178 = arith.constant 0 : index
    %c0_179 = arith.constant 0 : index
    %176 = vector.load %arg8[%c3_177, %c0_178, %c0_179] : memref<9x128x128xf32, #tpu.memory_space<vmem>>, vector<1x128x128xf32>
    %177 = vector.shape_cast %176 : vector<1x128x128xf32> to vector<128x128xf32>
    %cst_180 = arith.constant dense<0.000000e+00> : vector<8x128xf32>
    %178 = tpu.matmul %175, %177, %cst_180 {dimension_numbers = #tpu.dot_dimension_numbers<[1], [0], [0], [1], [0, 0, 1, 1], [], []>} : vector<8x128xf32>, vector<128x128xf32>, vector<8x128xf32> -> vector<8x128xf32>
    %179 = arith.addf %172, %178 : vector<8x128xf32>
    %c4_181 = arith.constant 4 : index
    %c0_182 = arith.constant 0 : index
    %c0_183 = arith.constant 0 : index
    %180 = vector.load %arg4[%c4_181, %c0_182, %c0_183] : memref<9x8x32xf32, #tpu.memory_space<vmem>>, vector<1x8x32xf32>
    %181 = vector.shape_cast %180 : vector<1x8x32xf32> to vector<8x32xf32>
    %cst_184 = arith.constant dense<0.000000e+00> : vector<8x128xf32>
    %182 = tpu.matmul %181, %150, %cst_184 {dimension_numbers = #tpu.dot_dimension_numbers<[1], [0], [0], [1], [0, 0, 1, 1], [], []>} : vector<8x32xf32>, vector<32x128xf32>, vector<8x128xf32> -> vector<8x128xf32>
    %c4_185 = arith.constant 4 : index
    %c0_186 = arith.constant 0 : index
    %c0_187 = arith.constant 0 : index
    %183 = vector.load %arg8[%c4_185, %c0_186, %c0_187] : memref<9x128x128xf32, #tpu.memory_space<vmem>>, vector<1x128x128xf32>
    %184 = vector.shape_cast %183 : vector<1x128x128xf32> to vector<128x128xf32>
    %cst_188 = arith.constant dense<0.000000e+00> : vector<8x128xf32>
    %185 = tpu.matmul %182, %184, %cst_188 {dimension_numbers = #tpu.dot_dimension_numbers<[1], [0], [0], [1], [0, 0, 1, 1], [], []>} : vector<8x128xf32>, vector<128x128xf32>, vector<8x128xf32> -> vector<8x128xf32>
    %186 = arith.addf %179, %185 : vector<8x128xf32>
    %c5_189 = arith.constant 5 : index
    %c0_190 = arith.constant 0 : index
    %c0_191 = arith.constant 0 : index
    %187 = vector.load %arg4[%c5_189, %c0_190, %c0_191] : memref<9x8x32xf32, #tpu.memory_space<vmem>>, vector<1x8x32xf32>
    %188 = vector.shape_cast %187 : vector<1x8x32xf32> to vector<8x32xf32>
    %cst_192 = arith.constant dense<0.000000e+00> : vector<8x128xf32>
    %189 = tpu.matmul %188, %150, %cst_192 {dimension_numbers = #tpu.dot_dimension_numbers<[1], [0], [0], [1], [0, 0, 1, 1], [], []>} : vector<8x32xf32>, vector<32x128xf32>, vector<8x128xf32> -> vector<8x128xf32>
    %c5_193 = arith.constant 5 : index
    %c0_194 = arith.constant 0 : index
    %c0_195 = arith.constant 0 : index
    %190 = vector.load %arg8[%c5_193, %c0_194, %c0_195] : memref<9x128x128xf32, #tpu.memory_space<vmem>>, vector<1x128x128xf32>
    %191 = vector.shape_cast %190 : vector<1x128x128xf32> to vector<128x128xf32>
    %cst_196 = arith.constant dense<0.000000e+00> : vector<8x128xf32>
    %192 = tpu.matmul %189, %191, %cst_196 {dimension_numbers = #tpu.dot_dimension_numbers<[1], [0], [0], [1], [0, 0, 1, 1], [], []>} : vector<8x128xf32>, vector<128x128xf32>, vector<8x128xf32> -> vector<8x128xf32>
    %193 = arith.addf %186, %192 : vector<8x128xf32>
    %c6_197 = arith.constant 6 : index
    %c0_198 = arith.constant 0 : index
    %c0_199 = arith.constant 0 : index
    %194 = vector.load %arg4[%c6_197, %c0_198, %c0_199] : memref<9x8x32xf32, #tpu.memory_space<vmem>>, vector<1x8x32xf32>
    %195 = vector.shape_cast %194 : vector<1x8x32xf32> to vector<8x32xf32>
    %cst_200 = arith.constant dense<0.000000e+00> : vector<8x128xf32>
    %196 = tpu.matmul %195, %150, %cst_200 {dimension_numbers = #tpu.dot_dimension_numbers<[1], [0], [0], [1], [0, 0, 1, 1], [], []>} : vector<8x32xf32>, vector<32x128xf32>, vector<8x128xf32> -> vector<8x128xf32>
    %c6_201 = arith.constant 6 : index
    %c0_202 = arith.constant 0 : index
    %c0_203 = arith.constant 0 : index
    %197 = vector.load %arg8[%c6_201, %c0_202, %c0_203] : memref<9x128x128xf32, #tpu.memory_space<vmem>>, vector<1x128x128xf32>
    %198 = vector.shape_cast %197 : vector<1x128x128xf32> to vector<128x128xf32>
    %cst_204 = arith.constant dense<0.000000e+00> : vector<8x128xf32>
    %199 = tpu.matmul %196, %198, %cst_204 {dimension_numbers = #tpu.dot_dimension_numbers<[1], [0], [0], [1], [0, 0, 1, 1], [], []>} : vector<8x128xf32>, vector<128x128xf32>, vector<8x128xf32> -> vector<8x128xf32>
    %200 = arith.addf %193, %199 : vector<8x128xf32>
    %c7_205 = arith.constant 7 : index
    %c0_206 = arith.constant 0 : index
    %c0_207 = arith.constant 0 : index
    %201 = vector.load %arg4[%c7_205, %c0_206, %c0_207] : memref<9x8x32xf32, #tpu.memory_space<vmem>>, vector<1x8x32xf32>
    %202 = vector.shape_cast %201 : vector<1x8x32xf32> to vector<8x32xf32>
    %cst_208 = arith.constant dense<0.000000e+00> : vector<8x128xf32>
    %203 = tpu.matmul %202, %150, %cst_208 {dimension_numbers = #tpu.dot_dimension_numbers<[1], [0], [0], [1], [0, 0, 1, 1], [], []>} : vector<8x32xf32>, vector<32x128xf32>, vector<8x128xf32> -> vector<8x128xf32>
    %c7_209 = arith.constant 7 : index
    %c0_210 = arith.constant 0 : index
    %c0_211 = arith.constant 0 : index
    %204 = vector.load %arg8[%c7_209, %c0_210, %c0_211] : memref<9x128x128xf32, #tpu.memory_space<vmem>>, vector<1x128x128xf32>
    %205 = vector.shape_cast %204 : vector<1x128x128xf32> to vector<128x128xf32>
    %cst_212 = arith.constant dense<0.000000e+00> : vector<8x128xf32>
    %206 = tpu.matmul %203, %205, %cst_212 {dimension_numbers = #tpu.dot_dimension_numbers<[1], [0], [0], [1], [0, 0, 1, 1], [], []>} : vector<8x128xf32>, vector<128x128xf32>, vector<8x128xf32> -> vector<8x128xf32>
    %207 = arith.addf %200, %206 : vector<8x128xf32>
    %c8_213 = arith.constant 8 : index
    %c0_214 = arith.constant 0 : index
    %c0_215 = arith.constant 0 : index
    %208 = vector.load %arg4[%c8_213, %c0_214, %c0_215] : memref<9x8x32xf32, #tpu.memory_space<vmem>>, vector<1x8x32xf32>
    %209 = vector.shape_cast %208 : vector<1x8x32xf32> to vector<8x32xf32>
    %cst_216 = arith.constant dense<0.000000e+00> : vector<8x128xf32>
    %210 = tpu.matmul %209, %150, %cst_216 {dimension_numbers = #tpu.dot_dimension_numbers<[1], [0], [0], [1], [0, 0, 1, 1], [], []>} : vector<8x32xf32>, vector<32x128xf32>, vector<8x128xf32> -> vector<8x128xf32>
    %c8_217 = arith.constant 8 : index
    %c0_218 = arith.constant 0 : index
    %c0_219 = arith.constant 0 : index
    %211 = vector.load %arg8[%c8_217, %c0_218, %c0_219] : memref<9x128x128xf32, #tpu.memory_space<vmem>>, vector<1x128x128xf32>
    %212 = vector.shape_cast %211 : vector<1x128x128xf32> to vector<128x128xf32>
    %cst_220 = arith.constant dense<0.000000e+00> : vector<8x128xf32>
    %213 = tpu.matmul %210, %212, %cst_220 {dimension_numbers = #tpu.dot_dimension_numbers<[1], [0], [0], [1], [0, 0, 1, 1], [], []>} : vector<8x128xf32>, vector<128x128xf32>, vector<8x128xf32> -> vector<8x128xf32>
    %214 = arith.addf %207, %213 : vector<8x128xf32>
    %c0_221 = arith.constant 0 : index
    %c0_222 = arith.constant 0 : index
    %215 = vector.load %arg12[%c0_221, %c0_222] : memref<1x128xf32, #tpu.memory_space<vmem>>, vector<1x128xf32>
    %216 = vector.broadcast %215 : vector<1x128xf32> to vector<8x128xf32>
    %217 = arith.addf %214, %216 : vector<8x128xf32>
    %cst_223 = arith.constant 5.000000e-01 : f32
    %218 = vector.broadcast %cst_223 : f32 to vector<8x128xf32>
    %219 = arith.mulf %218, %217 : vector<8x128xf32>
    %cst_224 = arith.constant 0.707106769 : f32
    %220 = vector.broadcast %cst_224 : f32 to vector<8x128xf32>
    %221 = arith.mulf %217, %220 : vector<8x128xf32>
    %222 = math.erf %221 : vector<8x128xf32>
    %cst_225 = arith.constant 1.000000e+00 : f32
    %223 = vector.broadcast %cst_225 : f32 to vector<8x128xf32>
    %224 = arith.addf %223, %222 : vector<8x128xf32>
    %225 = arith.mulf %219, %224 : vector<8x128xf32>
    %cst_226 = arith.constant 0.000000e+00 : f32
    %226 = vector.broadcast %cst_226 : f32 to vector<2x128xf32>
    %c0_227 = arith.constant 0 : index
    %c0_228 = arith.constant 0 : index
    %c0_229 = arith.constant 0 : index
    %227 = vector.load %arg5[%c0_227, %c0_228, %c0_229] : memref<9x2x8xf32, #tpu.memory_space<vmem>>, vector<1x2x8xf32>
    %228 = vector.shape_cast %227 : vector<1x2x8xf32> to vector<2x8xf32>
    %cst_230 = arith.constant dense<0.000000e+00> : vector<2x128xf32>
    %229 = tpu.matmul %228, %225, %cst_230 {dimension_numbers = #tpu.dot_dimension_numbers<[1], [0], [0], [1], [0, 0, 1, 1], [], []>} : vector<2x8xf32>, vector<8x128xf32>, vector<2x128xf32> -> vector<2x128xf32>
    %c0_231 = arith.constant 0 : index
    %c0_232 = arith.constant 0 : index
    %c0_233 = arith.constant 0 : index
    %230 = vector.load %arg9[%c0_231, %c0_232, %c0_233] : memref<9x128x128xf32, #tpu.memory_space<vmem>>, vector<1x128x128xf32>
    %231 = vector.shape_cast %230 : vector<1x128x128xf32> to vector<128x128xf32>
    %cst_234 = arith.constant dense<0.000000e+00> : vector<2x128xf32>
    %232 = tpu.matmul %229, %231, %cst_234 {dimension_numbers = #tpu.dot_dimension_numbers<[1], [0], [0], [1], [0, 0, 1, 1], [], []>} : vector<2x128xf32>, vector<128x128xf32>, vector<2x128xf32> -> vector<2x128xf32>
    %233 = arith.addf %226, %232 : vector<2x128xf32>
    %c1_235 = arith.constant 1 : index
    %c0_236 = arith.constant 0 : index
    %c0_237 = arith.constant 0 : index
    %234 = vector.load %arg5[%c1_235, %c0_236, %c0_237] : memref<9x2x8xf32, #tpu.memory_space<vmem>>, vector<1x2x8xf32>
    %235 = vector.shape_cast %234 : vector<1x2x8xf32> to vector<2x8xf32>
    %cst_238 = arith.constant dense<0.000000e+00> : vector<2x128xf32>
    %236 = tpu.matmul %235, %225, %cst_238 {dimension_numbers = #tpu.dot_dimension_numbers<[1], [0], [0], [1], [0, 0, 1, 1], [], []>} : vector<2x8xf32>, vector<8x128xf32>, vector<2x128xf32> -> vector<2x128xf32>
    %c1_239 = arith.constant 1 : index
    %c0_240 = arith.constant 0 : index
    %c0_241 = arith.constant 0 : index
    %237 = vector.load %arg9[%c1_239, %c0_240, %c0_241] : memref<9x128x128xf32, #tpu.memory_space<vmem>>, vector<1x128x128xf32>
    %238 = vector.shape_cast %237 : vector<1x128x128xf32> to vector<128x128xf32>
    %cst_242 = arith.constant dense<0.000000e+00> : vector<2x128xf32>
    %239 = tpu.matmul %236, %238, %cst_242 {dimension_numbers = #tpu.dot_dimension_numbers<[1], [0], [0], [1], [0, 0, 1, 1], [], []>} : vector<2x128xf32>, vector<128x128xf32>, vector<2x128xf32> -> vector<2x128xf32>
    %240 = arith.addf %233, %239 : vector<2x128xf32>
    %c2_243 = arith.constant 2 : index
    %c0_244 = arith.constant 0 : index
    %c0_245 = arith.constant 0 : index
    %241 = vector.load %arg5[%c2_243, %c0_244, %c0_245] : memref<9x2x8xf32, #tpu.memory_space<vmem>>, vector<1x2x8xf32>
    %242 = vector.shape_cast %241 : vector<1x2x8xf32> to vector<2x8xf32>
    %cst_246 = arith.constant dense<0.000000e+00> : vector<2x128xf32>
    %243 = tpu.matmul %242, %225, %cst_246 {dimension_numbers = #tpu.dot_dimension_numbers<[1], [0], [0], [1], [0, 0, 1, 1], [], []>} : vector<2x8xf32>, vector<8x128xf32>, vector<2x128xf32> -> vector<2x128xf32>
    %c2_247 = arith.constant 2 : index
    %c0_248 = arith.constant 0 : index
    %c0_249 = arith.constant 0 : index
    %244 = vector.load %arg9[%c2_247, %c0_248, %c0_249] : memref<9x128x128xf32, #tpu.memory_space<vmem>>, vector<1x128x128xf32>
    %245 = vector.shape_cast %244 : vector<1x128x128xf32> to vector<128x128xf32>
    %cst_250 = arith.constant dense<0.000000e+00> : vector<2x128xf32>
    %246 = tpu.matmul %243, %245, %cst_250 {dimension_numbers = #tpu.dot_dimension_numbers<[1], [0], [0], [1], [0, 0, 1, 1], [], []>} : vector<2x128xf32>, vector<128x128xf32>, vector<2x128xf32> -> vector<2x128xf32>
    %247 = arith.addf %240, %246 : vector<2x128xf32>
    %c3_251 = arith.constant 3 : index
    %c0_252 = arith.constant 0 : index
    %c0_253 = arith.constant 0 : index
    %248 = vector.load %arg5[%c3_251, %c0_252, %c0_253] : memref<9x2x8xf32, #tpu.memory_space<vmem>>, vector<1x2x8xf32>
    %249 = vector.shape_cast %248 : vector<1x2x8xf32> to vector<2x8xf32>
    %cst_254 = arith.constant dense<0.000000e+00> : vector<2x128xf32>
    %250 = tpu.matmul %249, %225, %cst_254 {dimension_numbers = #tpu.dot_dimension_numbers<[1], [0], [0], [1], [0, 0, 1, 1], [], []>} : vector<2x8xf32>, vector<8x128xf32>, vector<2x128xf32> -> vector<2x128xf32>
    %c3_255 = arith.constant 3 : index
    %c0_256 = arith.constant 0 : index
    %c0_257 = arith.constant 0 : index
    %251 = vector.load %arg9[%c3_255, %c0_256, %c0_257] : memref<9x128x128xf32, #tpu.memory_space<vmem>>, vector<1x128x128xf32>
    %252 = vector.shape_cast %251 : vector<1x128x128xf32> to vector<128x128xf32>
    %cst_258 = arith.constant dense<0.000000e+00> : vector<2x128xf32>
    %253 = tpu.matmul %250, %252, %cst_258 {dimension_numbers = #tpu.dot_dimension_numbers<[1], [0], [0], [1], [0, 0, 1, 1], [], []>} : vector<2x128xf32>, vector<128x128xf32>, vector<2x128xf32> -> vector<2x128xf32>
    %254 = arith.addf %247, %253 : vector<2x128xf32>
    %c4_259 = arith.constant 4 : index
    %c0_260 = arith.constant 0 : index
    %c0_261 = arith.constant 0 : index
    %255 = vector.load %arg5[%c4_259, %c0_260, %c0_261] : memref<9x2x8xf32, #tpu.memory_space<vmem>>, vector<1x2x8xf32>
    %256 = vector.shape_cast %255 : vector<1x2x8xf32> to vector<2x8xf32>
    %cst_262 = arith.constant dense<0.000000e+00> : vector<2x128xf32>
    %257 = tpu.matmul %256, %225, %cst_262 {dimension_numbers = #tpu.dot_dimension_numbers<[1], [0], [0], [1], [0, 0, 1, 1], [], []>} : vector<2x8xf32>, vector<8x128xf32>, vector<2x128xf32> -> vector<2x128xf32>
    %c4_263 = arith.constant 4 : index
    %c0_264 = arith.constant 0 : index
    %c0_265 = arith.constant 0 : index
    %258 = vector.load %arg9[%c4_263, %c0_264, %c0_265] : memref<9x128x128xf32, #tpu.memory_space<vmem>>, vector<1x128x128xf32>
    %259 = vector.shape_cast %258 : vector<1x128x128xf32> to vector<128x128xf32>
    %cst_266 = arith.constant dense<0.000000e+00> : vector<2x128xf32>
    %260 = tpu.matmul %257, %259, %cst_266 {dimension_numbers = #tpu.dot_dimension_numbers<[1], [0], [0], [1], [0, 0, 1, 1], [], []>} : vector<2x128xf32>, vector<128x128xf32>, vector<2x128xf32> -> vector<2x128xf32>
    %261 = arith.addf %254, %260 : vector<2x128xf32>
    %c5_267 = arith.constant 5 : index
    %c0_268 = arith.constant 0 : index
    %c0_269 = arith.constant 0 : index
    %262 = vector.load %arg5[%c5_267, %c0_268, %c0_269] : memref<9x2x8xf32, #tpu.memory_space<vmem>>, vector<1x2x8xf32>
    %263 = vector.shape_cast %262 : vector<1x2x8xf32> to vector<2x8xf32>
    %cst_270 = arith.constant dense<0.000000e+00> : vector<2x128xf32>
    %264 = tpu.matmul %263, %225, %cst_270 {dimension_numbers = #tpu.dot_dimension_numbers<[1], [0], [0], [1], [0, 0, 1, 1], [], []>} : vector<2x8xf32>, vector<8x128xf32>, vector<2x128xf32> -> vector<2x128xf32>
    %c5_271 = arith.constant 5 : index
    %c0_272 = arith.constant 0 : index
    %c0_273 = arith.constant 0 : index
    %265 = vector.load %arg9[%c5_271, %c0_272, %c0_273] : memref<9x128x128xf32, #tpu.memory_space<vmem>>, vector<1x128x128xf32>
    %266 = vector.shape_cast %265 : vector<1x128x128xf32> to vector<128x128xf32>
    %cst_274 = arith.constant dense<0.000000e+00> : vector<2x128xf32>
    %267 = tpu.matmul %264, %266, %cst_274 {dimension_numbers = #tpu.dot_dimension_numbers<[1], [0], [0], [1], [0, 0, 1, 1], [], []>} : vector<2x128xf32>, vector<128x128xf32>, vector<2x128xf32> -> vector<2x128xf32>
    %268 = arith.addf %261, %267 : vector<2x128xf32>
    %c6_275 = arith.constant 6 : index
    %c0_276 = arith.constant 0 : index
    %c0_277 = arith.constant 0 : index
    %269 = vector.load %arg5[%c6_275, %c0_276, %c0_277] : memref<9x2x8xf32, #tpu.memory_space<vmem>>, vector<1x2x8xf32>
    %270 = vector.shape_cast %269 : vector<1x2x8xf32> to vector<2x8xf32>
    %cst_278 = arith.constant dense<0.000000e+00> : vector<2x128xf32>
    %271 = tpu.matmul %270, %225, %cst_278 {dimension_numbers = #tpu.dot_dimension_numbers<[1], [0], [0], [1], [0, 0, 1, 1], [], []>} : vector<2x8xf32>, vector<8x128xf32>, vector<2x128xf32> -> vector<2x128xf32>
    %c6_279 = arith.constant 6 : index
    %c0_280 = arith.constant 0 : index
    %c0_281 = arith.constant 0 : index
    %272 = vector.load %arg9[%c6_279, %c0_280, %c0_281] : memref<9x128x128xf32, #tpu.memory_space<vmem>>, vector<1x128x128xf32>
    %273 = vector.shape_cast %272 : vector<1x128x128xf32> to vector<128x128xf32>
    %cst_282 = arith.constant dense<0.000000e+00> : vector<2x128xf32>
    %274 = tpu.matmul %271, %273, %cst_282 {dimension_numbers = #tpu.dot_dimension_numbers<[1], [0], [0], [1], [0, 0, 1, 1], [], []>} : vector<2x128xf32>, vector<128x128xf32>, vector<2x128xf32> -> vector<2x128xf32>
    %275 = arith.addf %268, %274 : vector<2x128xf32>
    %c7_283 = arith.constant 7 : index
    %c0_284 = arith.constant 0 : index
    %c0_285 = arith.constant 0 : index
    %276 = vector.load %arg5[%c7_283, %c0_284, %c0_285] : memref<9x2x8xf32, #tpu.memory_space<vmem>>, vector<1x2x8xf32>
    %277 = vector.shape_cast %276 : vector<1x2x8xf32> to vector<2x8xf32>
    %cst_286 = arith.constant dense<0.000000e+00> : vector<2x128xf32>
    %278 = tpu.matmul %277, %225, %cst_286 {dimension_numbers = #tpu.dot_dimension_numbers<[1], [0], [0], [1], [0, 0, 1, 1], [], []>} : vector<2x8xf32>, vector<8x128xf32>, vector<2x128xf32> -> vector<2x128xf32>
    %c7_287 = arith.constant 7 : index
    %c0_288 = arith.constant 0 : index
    %c0_289 = arith.constant 0 : index
    %279 = vector.load %arg9[%c7_287, %c0_288, %c0_289] : memref<9x128x128xf32, #tpu.memory_space<vmem>>, vector<1x128x128xf32>
    %280 = vector.shape_cast %279 : vector<1x128x128xf32> to vector<128x128xf32>
    %cst_290 = arith.constant dense<0.000000e+00> : vector<2x128xf32>
    %281 = tpu.matmul %278, %280, %cst_290 {dimension_numbers = #tpu.dot_dimension_numbers<[1], [0], [0], [1], [0, 0, 1, 1], [], []>} : vector<2x128xf32>, vector<128x128xf32>, vector<2x128xf32> -> vector<2x128xf32>
    %282 = arith.addf %275, %281 : vector<2x128xf32>
    %c8_291 = arith.constant 8 : index
    %c0_292 = arith.constant 0 : index
    %c0_293 = arith.constant 0 : index
    %283 = vector.load %arg5[%c8_291, %c0_292, %c0_293] : memref<9x2x8xf32, #tpu.memory_space<vmem>>, vector<1x2x8xf32>
    %284 = vector.shape_cast %283 : vector<1x2x8xf32> to vector<2x8xf32>
    %cst_294 = arith.constant dense<0.000000e+00> : vector<2x128xf32>
    %285 = tpu.matmul %284, %225, %cst_294 {dimension_numbers = #tpu.dot_dimension_numbers<[1], [0], [0], [1], [0, 0, 1, 1], [], []>} : vector<2x8xf32>, vector<8x128xf32>, vector<2x128xf32> -> vector<2x128xf32>
    %c8_295 = arith.constant 8 : index
    %c0_296 = arith.constant 0 : index
    %c0_297 = arith.constant 0 : index
    %286 = vector.load %arg9[%c8_295, %c0_296, %c0_297] : memref<9x128x128xf32, #tpu.memory_space<vmem>>, vector<1x128x128xf32>
    %287 = vector.shape_cast %286 : vector<1x128x128xf32> to vector<128x128xf32>
    %cst_298 = arith.constant dense<0.000000e+00> : vector<2x128xf32>
    %288 = tpu.matmul %285, %287, %cst_298 {dimension_numbers = #tpu.dot_dimension_numbers<[1], [0], [0], [1], [0, 0, 1, 1], [], []>} : vector<2x128xf32>, vector<128x128xf32>, vector<2x128xf32> -> vector<2x128xf32>
    %289 = arith.addf %282, %288 : vector<2x128xf32>
    %c0_299 = arith.constant 0 : index
    %c0_300 = arith.constant 0 : index
    %290 = vector.load %arg13[%c0_299, %c0_300] : memref<1x128xf32, #tpu.memory_space<vmem>>, vector<1x128xf32>
    %291 = vector.broadcast %290 : vector<1x128xf32> to vector<2x128xf32>
    %292 = arith.addf %289, %291 : vector<2x128xf32>
    %c0_301 = arith.constant 0 : index
    %c0_302 = arith.constant 0 : index
    %293 = vector.load %arg14[%c0_301, %c0_302] : memref<2x128xf32, #tpu.memory_space<vmem>>, vector<2x128xf32>
    tpu.vector_store %arg14[%c0_301, %c0_302], %292 {strides = array<i32>} : memref<2x128xf32, #tpu.memory_space<vmem>>, vector<2x128xf32>,
    return
  }
  func.func @transform_0(%arg0: i32) -> (i32, i32) {
    %c0_i32 = arith.constant 0 : i32
    %c0_i32_0 = arith.constant 0 : i32
    %c0_i32_1 = arith.constant 0 : i32
    return %c0_i32, %c0_i32_0 : i32, i32
  }
  func.func @transform_1(%arg0: i32) -> (i32, i32, i32) {
    %c0_i32 = arith.constant 0 : i32
    %c0_i32_0 = arith.constant 0 : i32
    %c0_i32_1 = arith.constant 0 : i32
    %c0_i32_2 = arith.constant 0 : i32
    return %c0_i32, %c0_i32_0, %c0_i32_1 : i32, i32, i32
  }
  func.func @transform_2(%arg0: i32) -> (i32, i32, i32) {
    %c0_i32 = arith.constant 0 : i32
    %c0_i32_0 = arith.constant 0 : i32
    %c0_i32_1 = arith.constant 0 : i32
    %c0_i32_2 = arith.constant 0 : i32
    return %c0_i32, %c0_i32_0, %c0_i32_1 : i32, i32, i32
  }
  func.func @transform_3(%arg0: i32) -> (i32, i32, i32) {
    %c0_i32 = arith.constant 0 : i32
    %c0_i32_0 = arith.constant 0 : i32
    %c0_i32_1 = arith.constant 0 : i32
    %c0_i32_2 = arith.constant 0 : i32
    return %c0_i32, %c0_i32_0, %c0_i32_1 : i32, i32, i32
  }
  func.func @transform_4(%arg0: i32) -> (i32, i32, i32) {
    %c0_i32 = arith.constant 0 : i32
    %c0_i32_0 = arith.constant 0 : i32
    %c0_i32_1 = arith.constant 0 : i32
    %c0_i32_2 = arith.constant 0 : i32
    return %c0_i32, %c0_i32_0, %c0_i32_1 : i32, i32, i32
  }
  func.func @transform_5(%arg0: i32) -> (i32, i32, i32) {
    %c0_i32 = arith.constant 0 : i32
    %c0_i32_0 = arith.constant 0 : i32
    %c0_i32_1 = arith.constant 0 : i32
    %c0_i32_2 = arith.constant 0 : i32
    return %c0_i32, %c0_i32_0, %c0_i32_1 : i32, i32, i32
  }
  func.func @transform_6(%arg0: i32) -> (i32, i32, i32) {
    %c0_i32 = arith.constant 0 : i32
    %c0_i32_0 = arith.constant 0 : i32
    %c0_i32_1 = arith.constant 0 : i32
    %c0_i32_2 = arith.constant 0 : i32
    return %c0_i32, %c0_i32_0, %c0_i32_1 : i32, i32, i32
  }
  func.func @transform_7(%arg0: i32) -> (i32, i32, i32) {
    %c0_i32 = arith.constant 0 : i32
    %c0_i32_0 = arith.constant 0 : i32
    %c0_i32_1 = arith.constant 0 : i32
    %c0_i32_2 = arith.constant 0 : i32
    return %c0_i32, %c0_i32_0, %c0_i32_1 : i32, i32, i32
  }
  func.func @transform_8(%arg0: i32) -> (i32, i32, i32) {
    %c0_i32 = arith.constant 0 : i32
    %c0_i32_0 = arith.constant 0 : i32
    %c0_i32_1 = arith.constant 0 : i32
    %c0_i32_2 = arith.constant 0 : i32
    return %c0_i32, %c0_i32_0, %c0_i32_1 : i32, i32, i32
  }
  func.func @transform_9(%arg0: i32) -> (i32, i32) {
    %c0_i32 = arith.constant 0 : i32
    %c0_i32_0 = arith.constant 0 : i32
    %c0_i32_1 = arith.constant 0 : i32
    return %c0_i32, %c0_i32_0 : i32, i32
  }
  func.func @transform_10(%arg0: i32) -> (i32, i32) {
    %c0_i32 = arith.constant 0 : i32
    %c0_i32_0 = arith.constant 0 : i32
    %c0_i32_1 = arith.constant 0 : i32
    return %c0_i32, %c0_i32_0 : i32, i32
  }
  func.func @transform_11(%arg0: i32) -> (i32, i32) {
    %c0_i32 = arith.constant 0 : i32
    %c0_i32_0 = arith.constant 0 : i32
    %c0_i32_1 = arith.constant 0 : i32
    return %c0_i32, %c0_i32_0 : i32, i32
  }
  func.func @transform_12(%arg0: i32) -> (i32, i32) {
    %c0_i32 = arith.constant 0 : i32
    %c0_i32_0 = arith.constant 0 : i32
    %c0_i32_1 = arith.constant 0 : i32
    return %c0_i32, %c0_i32_0 : i32, i32
  }
  func.func @transform_13(%arg0: i32) -> (i32, i32) {
    %c0_i32 = arith.constant 0 : i32
    %c0_i32_0 = arith.constant 0 : i32
    %c0_i32_1 = arith.constant 0 : i32
    return %c0_i32, %c0_i32_0 : i32, i32
  }
}

</mosaic_0001>

<llo_original>
// kernel: tpu_custom_call.1
$region0: #{tpu_custom_call.1}
  #allocation0 [shape = 'u32[]', space=smem, size = 0x4, offset = 0x4, fixed_abs, tag = 'smem constant byte address 0x4 - core index']
  #allocation1 [shape = 'u32[144,128]{1,0:T(1,128)}', space=vmem, size = 0x12000, scoped, tag = 'internal scratch']
  %s0 = inlined_call_operand.hbm [shape: f32[512,128], index: 0, kind: input, shape index: {}]
  %s1 = inlined_call_operand.hbm [shape: f32[9,128,512], index: 1, kind: input, shape index: {}]
  %s2 = inlined_call_operand.hbm [shape: f32[9,32,128], index: 2, kind: input, shape index: {}]
  %s3 = inlined_call_operand.hbm [shape: f32[9,8,32], index: 3, kind: input, shape index: {}]
  %s4 = inlined_call_operand.vmem [shape: f32[9,2,8], index: 4, kind: input, shape index: {}]
  %s5 = inlined_call_operand.hbm [shape: f32[9,128,128], index: 5, kind: input, shape index: {}]
  %s6 = inlined_call_operand.hbm [shape: f32[9,128,128], index: 6, kind: input, shape index: {}]
  %s7 = inlined_call_operand.hbm [shape: f32[9,128,128], index: 7, kind: input, shape index: {}]
  %s8 = inlined_call_operand.hbm [shape: f32[9,128,128], index: 8, kind: input, shape index: {}]
  %s9 = inlined_call_operand.hbm [shape: f32[1,128], index: 9, kind: input, shape index: {}]
  %s10 = inlined_call_operand.hbm [shape: f32[1,128], index: 10, kind: input, shape index: {}]
  %s11 = inlined_call_operand.hbm [shape: f32[1,128], index: 11, kind: input, shape index: {}]
  %s12 = inlined_call_operand.hbm [shape: f32[1,128], index: 12, kind: input, shape index: {}]
  %s13 = inlined_call_operand.hbm [shape: f32[2,128], index: 13, kind: output, shape index: {}]
  %s14 = sld [smem:[#allocation0]]
  $region110: #{tpu_custom_call.1} parent=0
    _
  %s16 = ssub.s32 1, %s14
  %s17 = scalar_select 0, %s16, %s14
  $region1: #{tpu_custom_call.1} parent=0
    #allocation2 [shape = 'u8[262144]{0}', space=vmem, size = 0x40000, scoped, tag = 'input window, operand 0, single buffered']
    #allocation3 [shape = 's32[1]{0}', space=sflag, size = 0x4, scoped, tag = 'scoped memory for tpu_custom_call.1']
    #allocation4 [shape = 's32[1]{0}', space=sflag, size = 0x4, scoped, tag = 'scoped memory for tpu_custom_call.1']
    #allocation5 [shape = 'u8[2359296]{0}', space=vmem, size = 0x240000, scoped, tag = 'input window, operand 1, single buffered']
    #allocation6 [shape = 's32[1]{0}', space=sflag, size = 0x4, scoped, tag = 'scoped memory for tpu_custom_call.1']
    #allocation7 [shape = 'u8[147456]{0}', space=vmem, size = 0x24000, scoped, tag = 'input window, operand 2, single buffered']
    #allocation8 [shape = 'u8[36864]{0}', space=vmem, size = 0x9000, scoped, tag = 'input window, operand 3, single buffered']
    #allocation9 [shape = 's32[1]{0}', space=sflag, size = 0x4, scoped, tag = 'scoped memory for tpu_custom_call.1']
    #allocation10 [shape = 'u8[589824]{0}', space=vmem, size = 0x90000, scoped, tag = 'input window, operand 5, single buffered']
    #allocation11 [shape = 'u8[589824]{0}', space=vmem, size = 0x90000, scoped, tag = 'input window, operand 6, single buffered']
    #allocation12 [shape = 's32[1]{0}', space=sflag, size = 0x4, scoped, tag = 'scoped memory for tpu_custom_call.1']
    #allocation13 [shape = 'u8[589824]{0}', space=vmem, size = 0x90000, scoped, tag = 'input window, operand 7, single buffered']
    #allocation14 [shape = 'u8[589824]{0}', space=vmem, size = 0x90000, scoped, tag = 'input window, operand 8, single buffered']
    #allocation15 [shape = 's32[1]{0}', space=sflag, size = 0x4, scoped, tag = 'scoped memory for tpu_custom_call.1']
    #allocation16 [shape = 'u8[512]{0}', space=vmem, size = 0x400, scoped, tag = 'input window, operand 9, single buffered']
    #allocation17 [shape = 'u8[512]{0}', space=vmem, size = 0x400, scoped, tag = 'input window, operand 10, single buffered']
    #allocation18 [shape = 's32[1]{0}', space=sflag, size = 0x4, scoped, tag = 'scoped memory for tpu_custom_call.1']
    #allocation19 [shape = 'u8[512]{0}', space=vmem, size = 0x400, scoped, tag = 'input window, operand 11, single buffered']
    #allocation20 [shape = 'u8[512]{0}', space=vmem, size = 0x400, scoped, tag = 'input window, operand 12, single buffered']
    #allocation21 [shape = 's32[1]{0}', space=sflag, size = 0x4, scoped, tag = 'scoped memory for tpu_custom_call.1']
    #allocation22 [shape = 'u8[1024]{0}', space=vmem, size = 0x400, scoped, tag = 'output window, operand 0, single buffered']
    %18 = vsyncpa [#allocation3], 0
    %19 = vsyncpa [#allocation6], 0
    %20 = vsyncpa [#allocation9], 0
    %21 = vsyncpa [#allocation12], 0
    %22 = vsyncpa [#allocation15], 0
    %23 = vsyncpa [#allocation18], 0
    %24 = vsyncpa [#allocation21], 0
    %25 = vsyncpa [#allocation4], 0
    // Predicated region
    $region2: #{tpu_custom_call.1} parent=1 // pred_check
      _
    $region3: #{tpu_custom_call.1} parent=1 // pred_check_branch
      %27 = sbr.rel (0) target = $region5
    $region4: #{tpu_custom_call.1} parent=1 // pred_region
      %s29 = ssub.s32 8192, 8192
      %30 = vsyncadd [#allocation3], %s29
      %s31 = sshll.u32 [#allocation2], 4
      %s32 = int_to_ptr.vmem [resolvable:$true] %s31
      %37 = dma.hbm_to_vmem [thread:$0]  %s0, 8192, %s32, [#allocation3], 128, 128, 8
    $region5: #{tpu_custom_call.1} parent=1 // pred_fallthru
      _
    // Predicated region
    $region6: #{tpu_custom_call.1} parent=1 // pred_check
      _
    $region7: #{tpu_custom_call.1} parent=1 // pred_check_branch
      %39 = sbr.rel (0) target = $region9
    $region8: #{tpu_custom_call.1} parent=1 // pred_region
      %s41 = ssub.s32 73728, 73728
      %42 = vsyncadd [#allocation6], %s41
      %s43 = sshll.u32 [#allocation5], 4
      %s44 = int_to_ptr.vmem [resolvable:$true] %s43
      %49 = dma.hbm_to_vmem [thread:$0]  %s1, 73728, %s44, [#allocation6], 512, 512, 32
    $region9: #{tpu_custom_call.1} parent=1 // pred_fallthru
      _
    // Predicated region
    $region10: #{tpu_custom_call.1} parent=1 // pred_check
      _
    $region11: #{tpu_custom_call.1} parent=1 // pred_check_branch
      %51 = sbr.rel (0) target = $region13
    $region12: #{tpu_custom_call.1} parent=1 // pred_region
      %s53 = ssub.s32 4608, 4608
      %54 = vsyncadd [#allocation6], %s53
      %s55 = sshll.u32 [#allocation7], 4
      %s56 = int_to_ptr.vmem [resolvable:$true] %s55
      %61 = dma.hbm_to_vmem [thread:$0]  %s2, 4608, %s56, [#allocation6], 128, 128, 8
    $region13: #{tpu_custom_call.1} parent=1 // pred_fallthru
      _
    // Predicated region
    $region14: #{tpu_custom_call.1} parent=1 // pred_check
      _
    $region15: #{tpu_custom_call.1} parent=1 // pred_check_branch
      %63 = sbr.rel (0) target = $region17
    $region16: #{tpu_custom_call.1} parent=1 // pred_region
      %s65 = ssub.s32 1152, 1152
      %66 = vsyncadd [#allocation9], %s65
      %s67 = sshll.u32 [#allocation8], 4
      %s68 = int_to_ptr.vmem [resolvable:$true] %s67
      %73 = dma.hbm_to_vmem [thread:$0]  %s3, 1152, %s68, [#allocation9], 128, 128, 8
    $region17: #{tpu_custom_call.1} parent=1 // pred_fallthru
      _
    // Predicated region
    $region18: #{tpu_custom_call.1} parent=1 // pred_check
      _
    $region19: #{tpu_custom_call.1} parent=1 // pred_check_branch
      %75 = sbr.rel (0) target = $region21
    $region20: #{tpu_custom_call.1} parent=1 // pred_region
      _
    $region21: #{tpu_custom_call.1} parent=1 // pred_fallthru
      _
    // Predicated region
    $region22: #{tpu_custom_call.1} parent=1 // pred_check
      _
    $region23: #{tpu_custom_call.1} parent=1 // pred_check_branch
      %77 = sbr.rel (0) target = $region25
    $region24: #{tpu_custom_call.1} parent=1 // pred_region
      %s79 = ssub.s32 18432, 18432
      %80 = vsyncadd [#allocation9], %s79
      %s81 = sshll.u32 [#allocation10], 4
      %s82 = int_to_ptr.vmem [resolvable:$true] %s81
      %87 = dma.hbm_to_vmem [thread:$0]  %s5, 18432, %s82, [#allocation9], 128, 128, 8
    $region25: #{tpu_custom_call.1} parent=1 // pred_fallthru
      _
    // Predicated region
    $region26: #{tpu_custom_call.1} parent=1 // pred_check
      _
    $region27: #{tpu_custom_call.1} parent=1 // pred_check_branch
      %89 = sbr.rel (0) target = $region29
    $region28: #{tpu_custom_call.1} parent=1 // pred_region
      %s91 = ssub.s32 18432, 18432
      %92 = vsyncadd [#allocation12], %s91
      %s93 = sshll.u32 [#allocation11], 4
      %s94 = int_to_ptr.vmem [resolvable:$true] %s93
      %99 = dma.hbm_to_vmem [thread:$0]  %s6, 18432, %s94, [#allocation12], 128, 128, 8
    $region29: #{tpu_custom_call.1} parent=1 // pred_fallthru
      _
    // Predicated region
    $region30: #{tpu_custom_call.1} parent=1 // pred_check
      _
    $region31: #{tpu_custom_call.1} parent=1 // pred_check_branch
      %101 = sbr.rel (0) target = $region33
    $region32: #{tpu_custom_call.1} parent=1 // pred_region
      %s103 = ssub.s32 18432, 18432
      %104 = vsyncadd [#allocation12], %s103
      %s105 = sshll.u32 [#allocation13], 4
      %s106 = int_to_ptr.vmem [resolvable:$true] %s105
      %111 = dma.hbm_to_vmem [thread:$0]  %s7, 18432, %s106, [#allocation12], 128, 128, 8
    $region33: #{tpu_custom_call.1} parent=1 // pred_fallthru
      _
    // Predicated region
    $region34: #{tpu_custom_call.1} parent=1 // pred_check
      _
    $region35: #{tpu_custom_call.1} parent=1 // pred_check_branch
      %113 = sbr.rel (0) target = $region37
    $region36: #{tpu_custom_call.1} parent=1 // pred_region
      %s115 = ssub.s32 18432, 18432
      %116 = vsyncadd [#allocation15], %s115
      %s117 = sshll.u32 [#allocation14], 4
      %s118 = int_to_ptr.vmem [resolvable:$true] %s117
      %123 = dma.hbm_to_vmem [thread:$0]  %s8, 18432, %s118, [#allocation15], 128, 128, 8
    $region37: #{tpu_custom_call.1} parent=1 // pred_fallthru
      _
    // Predicated region
    $region38: #{tpu_custom_call.1} parent=1 // pred_check
      _
    $region39: #{tpu_custom_call.1} parent=1 // pred_check_branch
      %125 = sbr.rel (0) target = $region41
    $region40: #{tpu_custom_call.1} parent=1 // pred_region
      %s127 = ssub.s32 16, 16
      %128 = vsyncadd [#allocation15], %s127
      %s130 = sshll.u32 [#allocation16], 4
      %s131 = int_to_ptr.vmem [resolvable:$true] %s130
      %133 = dma.hbm_to_vmem [thread:$0]  %s9, 16, %s131, [#allocation15]
    $region41: #{tpu_custom_call.1} parent=1 // pred_fallthru
      _
    // Predicated region
    $region42: #{tpu_custom_call.1} parent=1 // pred_check
      _
    $region43: #{tpu_custom_call.1} parent=1 // pred_check_branch
      %135 = sbr.rel (0) target = $region45
    $region44: #{tpu_custom_call.1} parent=1 // pred_region
      %s137 = ssub.s32 16, 16
      %138 = vsyncadd [#allocation18], %s137
      %s140 = sshll.u32 [#allocation17], 4
      %s141 = int_to_ptr.vmem [resolvable:$true] %s140
      %143 = dma.hbm_to_vmem [thread:$0]  %s10, 16, %s141, [#allocation18]
    $region45: #{tpu_custom_call.1} parent=1 // pred_fallthru
      _
    // Predicated region
    $region46: #{tpu_custom_call.1} parent=1 // pred_check
      _
    $region47: #{tpu_custom_call.1} parent=1 // pred_check_branch
      %145 = sbr.rel (0) target = $region49
    $region48: #{tpu_custom_call.1} parent=1 // pred_region
      %s147 = ssub.s32 16, 16
      %148 = vsyncadd [#allocation18], %s147
      %s150 = sshll.u32 [#allocation19], 4
      %s151 = int_to_ptr.vmem [resolvable:$true] %s150
      %153 = dma.hbm_to_vmem [thread:$0]  %s11, 16, %s151, [#allocation18]
    $region49: #{tpu_custom_call.1} parent=1 // pred_fallthru
      _
    // Predicated region
    $region50: #{tpu_custom_call.1} parent=1 // pred_check
      _
    $region51: #{tpu_custom_call.1} parent=1 // pred_check_branch
      %155 = sbr.rel (0) target = $region53
    $region52: #{tpu_custom_call.1} parent=1 // pred_region
      %s157 = ssub.s32 16, 16
      %158 = vsyncadd [#allocation21], %s157
      %s160 = sshll.u32 [#allocation20], 4
      %s161 = int_to_ptr.vmem [resolvable:$true] %s160
      %163 = dma.hbm_to_vmem [thread:$0]  %s12, 16, %s161, [#allocation21]
    $region53: #{tpu_custom_call.1} parent=1 // pred_fallthru
      _
    // Predicated region
    $region54: #{tpu_custom_call.1} parent=1 // pred_check
      _
    $region55: #{tpu_custom_call.1} parent=1 // pred_check_branch
      %165 = sbr.rel (0) target = $region57
    $region56: #{tpu_custom_call.1} parent=1 // pred_region
      %166 = dma.done [#allocation3], 8192
    $region57: #{tpu_custom_call.1} parent=1 // pred_fallthru
      _
    // Predicated region
    $region58: #{tpu_custom_call.1} parent=1 // pred_check
      _
    $region59: #{tpu_custom_call.1} parent=1 // pred_check_branch
      %168 = sbr.rel (0) target = $region61
    $region60: #{tpu_custom_call.1} parent=1 // pred_region
      %169 = dma.done [#allocation6], 73728
    $region61: #{tpu_custom_call.1} parent=1 // pred_fallthru
      _
    // Predicated region
    $region62: #{tpu_custom_call.1} parent=1 // pred_check
      _
    $region63: #{tpu_custom_call.1} parent=1 // pred_check_branch
      %171 = sbr.rel (0) target = $region65
    $region64: #{tpu_custom_call.1} parent=1 // pred_region
      %172 = dma.done [#allocation6], 4608
    $region65: #{tpu_custom_call.1} parent=1 // pred_fallthru
      _
    // Predicated region
    $region66: #{tpu_custom_call.1} parent=1 // pred_check
      _
    $region67: #{tpu_custom_call.1} parent=1 // pred_check_branch
      %174 = sbr.rel (0) target = $region69
    $region68: #{tpu_custom_call.1} parent=1 // pred_region
      %175 = dma.done [#allocation9], 1152
    $region69: #{tpu_custom_call.1} parent=1 // pred_fallthru
      _
    // Predicated region
    $region70: #{tpu_custom_call.1} parent=1 // pred_check
      _
    $region71: #{tpu_custom_call.1} parent=1 // pred_check_branch
      %177 = sbr.rel (0) target = $region73
    $region72: #{tpu_custom_call.1} parent=1 // pred_region
      %178 = dma.done [#allocation9], 18432
    $region73: #{tpu_custom_call.1} parent=1 // pred_fallthru
      _
    // Predicated region
    $region74: #{tpu_custom_call.1} parent=1 // pred_check
      _
    $region75: #{tpu_custom_call.1} parent=1 // pred_check_branch
      %180 = sbr.rel (0) target = $region77
    $region76: #{tpu_custom_call.1} parent=1 // pred_region
      %181 = dma.done [#allocation12], 18432
    $region77: #{tpu_custom_call.1} parent=1 // pred_fallthru
      _
    // Predicated region
    $region78: #{tpu_custom_call.1} parent=1 // pred_check
      _
    $region79: #{tpu_custom_call.1} parent=1 // pred_check_branch
      %183 = sbr.rel (0) target = $region81
    $region80: #{tpu_custom_call.1} parent=1 // pred_region
      %184 = dma.done [#allocation12], 18432
    $region81: #{tpu_custom_call.1} parent=1 // pred_fallthru
      _
    // Predicated region
    $region82: #{tpu_custom_call.1} parent=1 // pred_check
      _
    $region83: #{tpu_custom_call.1} parent=1 // pred_check_branch
      %186 = sbr.rel (0) target = $region85
    $region84: #{tpu_custom_call.1} parent=1 // pred_region
      %187 = dma.done [#allocation15], 18432
    $region85: #{tpu_custom_call.1} parent=1 // pred_fallthru
      _
    // Predicated region
    $region86: #{tpu_custom_call.1} parent=1 // pred_check
      _
    $region87: #{tpu_custom_call.1} parent=1 // pred_check_branch
      %189 = sbr.rel (0) target = $region89
    $region88: #{tpu_custom_call.1} parent=1 // pred_region
      %190 = dma.done [#allocation15], 16
    $region89: #{tpu_custom_call.1} parent=1 // pred_fallthru
      _
    // Predicated region
    $region90: #{tpu_custom_call.1} parent=1 // pred_check
      _
    $region91: #{tpu_custom_call.1} parent=1 // pred_check_branch
      %192 = sbr.rel (0) target = $region93
    $region92: #{tpu_custom_call.1} parent=1 // pred_region
      %193 = dma.done [#allocation18], 16
    $region93: #{tpu_custom_call.1} parent=1 // pred_fallthru
      _
    // Predicated region
    $region94: #{tpu_custom_call.1} parent=1 // pred_check
      _
    $region95: #{tpu_custom_call.1} parent=1 // pred_check_branch
      %195 = sbr.rel (0) target = $region97
    $region96: #{tpu_custom_call.1} parent=1 // pred_region
      %196 = dma.done [#allocation18], 16
    $region97: #{tpu_custom_call.1} parent=1 // pred_fallthru
      _
    // Predicated region
    $region98: #{tpu_custom_call.1} parent=1 // pred_check
      _
    $region99: #{tpu_custom_call.1} parent=1 // pred_check_branch
      %198 = sbr.rel (0) target = $region101
    $region100: #{tpu_custom_call.1} parent=1 // pred_region
      %199 = dma.done [#allocation21], 16
    $region101: #{tpu_custom_call.1} parent=1 // pred_fallthru
      _
    %v200 = vld [vmem:[#allocation2] sm:$0xff]
    %v201 = vld [vmem:[#allocation2 + $0x8] sm:$0xff]
    %v202 = vld [vmem:[#allocation2 + $0x10] sm:$0xff]
    %v203 = vld [vmem:[#allocation2 + $0x18] sm:$0xff]
    %v204 = vld [vmem:[#allocation2 + $0x20] sm:$0xff]
    %v205 = vld [vmem:[#allocation2 + $0x28] sm:$0xff]
    %v206 = vld [vmem:[#allocation2 + $0x30] sm:$0xff]
    %v207 = vld [vmem:[#allocation2 + $0x38] sm:$0xff]
    %v208 = vld [vmem:[#allocation2 + $0x40] sm:$0xff]
    %v209 = vld [vmem:[#allocation2 + $0x48] sm:$0xff]
    %v210 = vld [vmem:[#allocation2 + $0x50] sm:$0xff]
    %v211 = vld [vmem:[#allocation2 + $0x58] sm:$0xff]
    %v212 = vld [vmem:[#allocation2 + $0x60] sm:$0xff]
    %v213 = vld [vmem:[#allocation2 + $0x68] sm:$0xff]
    %v214 = vld [vmem:[#allocation2 + $0x70] sm:$0xff]
    %v215 = vld [vmem:[#allocation2 + $0x78] sm:$0xff]
    %v216 = vld [vmem:[#allocation2 + $0x80] sm:$0xff]
    %v217 = vld [vmem:[#allocation2 + $0x88] sm:$0xff]
    %v218 = vld [vmem:[#allocation2 + $0x90] sm:$0xff]
    %v219 = vld [vmem:[#allocation2 + $0x98] sm:$0xff]
    %v220 = vld [vmem:[#allocation2 + $0xa0] sm:$0xff]
    %v221 = vld [vmem:[#allocation2 + $0xa8] sm:$0xff]
    %v222 = vld [vmem:[#allocation2 + $0xb0] sm:$0xff]
    %v223 = vld [vmem:[#allocation2 + $0xb8] sm:$0xff]
    %v224 = vld [vmem:[#allocation2 + $0xc0] sm:$0xff]
    %v225 = vld [vmem:[#allocation2 + $0xc8] sm:$0xff]
    %v226 = vld [vmem:[#allocation2 + $0xd0] sm:$0xff]
    %v227 = vld [vmem:[#allocation2 + $0xd8] sm:$0xff]
    %v228 = vld [vmem:[#allocation2 + $0xe0] sm:$0xff]
    %v229 = vld [vmem:[#allocation2 + $0xe8] sm:$0xff]
    %v230 = vld [vmem:[#allocation2 + $0xf0] sm:$0xff]
    %v231 = vld [vmem:[#allocation2 + $0xf8] sm:$0xff]
    %v232 = vld [vmem:[#allocation2 + $0x100] sm:$0xff]
    %v233 = vld [vmem:[#allocation2 + $0x108] sm:$0xff]
    %v234 = vld [vmem:[#allocation2 + $0x110] sm:$0xff]
    %v235 = vld [vmem:[#allocation2 + $0x118] sm:$0xff]
    %v236 = vld [vmem:[#allocation2 + $0x120] sm:$0xff]
    %v237 = vld [vmem:[#allocation2 + $0x128] sm:$0xff]
    %v238 = vld [vmem:[#allocation2 + $0x130] sm:$0xff]
    %v239 = vld [vmem:[#allocation2 + $0x138] sm:$0xff]
    %v240 = vld [vmem:[#allocation2 + $0x140] sm:$0xff]
    %v241 = vld [vmem:[#allocation2 + $0x148] sm:$0xff]
    %v242 = vld [vmem:[#allocation2 + $0x150] sm:$0xff]
    %v243 = vld [vmem:[#allocation2 + $0x158] sm:$0xff]
    %v244 = vld [vmem:[#allocation2 + $0x160] sm:$0xff]
    %v245 = vld [vmem:[#allocation2 + $0x168] sm:$0xff]
    %v246 = vld [vmem:[#allocation2 + $0x170] sm:$0xff]
    %v247 = vld [vmem:[#allocation2 + $0x178] sm:$0xff]
    %v248 = vld [vmem:[#allocation2 + $0x180] sm:$0xff]
    %v249 = vld [vmem:[#allocation2 + $0x188] sm:$0xff]
    %v250 = vld [vmem:[#allocation2 + $0x190] sm:$0xff]
    %v251 = vld [vmem:[#allocation2 + $0x198] sm:$0xff]
    %v252 = vld [vmem:[#allocation2 + $0x1a0] sm:$0xff]
    %v253 = vld [vmem:[#allocation2 + $0x1a8] sm:$0xff]
    %v254 = vld [vmem:[#allocation2 + $0x1b0] sm:$0xff]
    %v255 = vld [vmem:[#allocation2 + $0x1b8] sm:$0xff]
    %v256 = vld [vmem:[#allocation2 + $0x1c0] sm:$0xff]
    %v257 = vld [vmem:[#allocation2 + $0x1c8] sm:$0xff]
    %v258 = vld [vmem:[#allocation2 + $0x1d0] sm:$0xff]
    %v259 = vld [vmem:[#allocation2 + $0x1d8] sm:$0xff]
    %v260 = vld [vmem:[#allocation2 + $0x1e0] sm:$0xff]
    %v261 = vld [vmem:[#allocation2 + $0x1e8] sm:$0xff]
    %v262 = vld [vmem:[#allocation2 + $0x1f0] sm:$0xff]
    %v263 = vld [vmem:[#allocation2 + $0x1f8] sm:$0xff]
    %v264 = vld [vmem:[#allocation5] sm:$0xff]
    %v265 = vld [vmem:[#allocation5 + $0x8] sm:$0xff]
    %v266 = vld [vmem:[#allocation5 + $0x10] sm:$0xff]
    %v267 = vld [vmem:[#allocation5 + $0x18] sm:$0xff]
    %v268 = vld [vmem:[#allocation5 + $0x20] sm:$0xff]
    %v269 = vld [vmem:[#allocation5 + $0x28] sm:$0xff]
    %v270 = vld [vmem:[#allocation5 + $0x30] sm:$0xff]
    %v271 = vld [vmem:[#allocation5 + $0x38] sm:$0xff]
    %v272 = vld [vmem:[#allocation5 + $0x40] sm:$0xff]
    %v273 = vld [vmem:[#allocation5 + $0x48] sm:$0xff]
    %v274 = vld [vmem:[#allocation5 + $0x50] sm:$0xff]
    %v275 = vld [vmem:[#allocation5 + $0x58] sm:$0xff]
    %v276 = vld [vmem:[#allocation5 + $0x60] sm:$0xff]
    %v277 = vld [vmem:[#allocation5 + $0x68] sm:$0xff]
    %v278 = vld [vmem:[#allocation5 + $0x70] sm:$0xff]
    %v279 = vld [vmem:[#allocation5 + $0x78] sm:$0xff]
    %v280 = vld [vmem:[#allocation5 + $0x80] sm:$0xff]
    %v281 = vld [vmem:[#allocation5 + $0x88] sm:$0xff]
    %v282 = vld [vmem:[#allocation5 + $0x90] sm:$0xff]
    %v283 = vld [vmem:[#allocation5 + $0x98] sm:$0xff]
    %v284 = vld [vmem:[#allocation5 + $0xa0] sm:$0xff]
    %v285 = vld [vmem:[#allocation5 + $0xa8] sm:$0xff]
    %v286 = vld [vmem:[#allocation5 + $0xb0] sm:$0xff]
    %v287 = vld [vmem:[#allocation5 + $0xb8] sm:$0xff]
    %v288 = vld [vmem:[#allocation5 + $0xc0] sm:$0xff]
    %v289 = vld [vmem:[#allocation5 + $0xc8] sm:$0xff]
    %v290 = vld [vmem:[#allocation5 + $0xd0] sm:$0xff]
    %v291 = vld [vmem:[#allocation5 + $0xd8] sm:$0xff]
    %v292 = vld [vmem:[#allocation5 + $0xe0] sm:$0xff]
    %v293 = vld [vmem:[#allocation5 + $0xe8] sm:$0xff]
    %v294 = vld [vmem:[#allocation5 + $0xf0] sm:$0xff]
    %v295 = vld [vmem:[#allocation5 + $0xf8] sm:$0xff]
    %v296 = vld [vmem:[#allocation5 + $0x100] sm:$0xff]
    %v297 = vld [vmem:[#allocation5 + $0x108] sm:$0xff]
    %v298 = vld [vmem:[#allocation5 + $0x110] sm:$0xff]
    %v299 = vld [vmem:[#allocation5 + $0x118] sm:$0xff]
    %v300 = vld [vmem:[#allocation5 + $0x120] sm:$0xff]
    %v301 = vld [vmem:[#allocation5 + $0x128] sm:$0xff]
    %v302 = vld [vmem:[#allocation5 + $0x130] sm:$0xff]
    %v303 = vld [vmem:[#allocation5 + $0x138] sm:$0xff]
    %v304 = vld [vmem:[#allocation5 + $0x140] sm:$0xff]
    %v305 = vld [vmem:[#allocation5 + $0x148] sm:$0xff]
    %v306 = vld [vmem:[#allocation5 + $0x150] sm:$0xff]
    %v307 = vld [vmem:[#allocation5 + $0x158] sm:$0xff]
    %v308 = vld [vmem:[#allocation5 + $0x160] sm:$0xff]
    %v309 = vld [vmem:[#allocation5 + $0x168] sm:$0xff]
    %v310 = vld [vmem:[#allocation5 + $0x170] sm:$0xff]
    %v311 = vld [vmem:[#allocation5 + $0x178] sm:$0xff]
    %v312 = vld [vmem:[#allocation5 + $0x180] sm:$0xff]
    %v313 = vld [vmem:[#allocation5 + $0x188] sm:$0xff]
    %v314 = vld [vmem:[#allocation5 + $0x190] sm:$0xff]
    %v315 = vld [vmem:[#allocation5 + $0x198] sm:$0xff]
    %v316 = vld [vmem:[#allocation5 + $0x1a0] sm:$0xff]
    %v317 = vld [vmem:[#allocation5 + $0x1a8] sm:$0xff]
    %v318 = vld [vmem:[#allocation5 + $0x1b0] sm:$0xff]
    %v319 = vld [vmem:[#allocation5 + $0x1b8] sm:$0xff]
    %v320 = vld [vmem:[#allocation5 + $0x1c0] sm:$0xff]
    %v321 = vld [vmem:[#allocation5 + $0x1c8] sm:$0xff]
    %v322 = vld [vmem:[#allocation5 + $0x1d0] sm:$0xff]
    %v323 = vld [vmem:[#allocation5 + $0x1d8] sm:$0xff]
    %v324 = vld [vmem:[#allocation5 + $0x1e0] sm:$0xff]
    %v325 = vld [vmem:[#allocation5 + $0x1e8] sm:$0xff]
    %v326 = vld [vmem:[#allocation5 + $0x1f0] sm:$0xff]
    %v327 = vld [vmem:[#allocation5 + $0x1f8] sm:$0xff]
    %328 = vmatprep.subr.mxu0 0.0
    %329 = vmatpush1.msra.mxu0 %v200
    %330 = vmatprep.subr.mxu0 0.0
    %331 = vmatpush1.msra.mxu0 %v201
    %332 = vmatprep.subr.mxu0 0.0
    %333 = vmatpush1.msra.mxu0 %v202
    %334 = vmatprep.subr.mxu0 0.0
    %335 = vmatpush1.msra.mxu0 %v203
    %336 = vmatprep.subr.mxu0 0.0
    %337 = vmatpush1.msra.mxu0 %v204
    %338 = vmatprep.subr.mxu0 0.0
    %339 = vmatpush1.msra.mxu0 %v205
    %340 = vmatprep.subr.mxu0 0.0
    %341 = vmatpush1.msra.mxu0 %v206
    %342 = vmatprep.subr.mxu0 0.0
    %343 = vmatpush1.msra.mxu0 %v207
    %344 = vmatprep.subr.mxu0 0.0
    %345 = vmatpush1.msra.mxu0 %v208
    %346 = vmatprep.subr.mxu0 0.0
    %347 = vmatpush1.msra.mxu0 %v209
    %348 = vmatprep.subr.mxu0 0.0
    %349 = vmatpush1.msra.mxu0 %v210
    %350 = vmatprep.subr.mxu0 0.0
    %351 = vmatpush1.msra.mxu0 %v211
    %352 = vmatprep.subr.mxu0 0.0
    %353 = vmatpush1.msra.mxu0 %v212
    %354 = vmatprep.subr.mxu0 0.0
    %355 = vmatpush1.msra.mxu0 %v213
    %356 = vmatprep.subr.mxu0 0.0
    %357 = vmatpush1.msra.mxu0 %v214
    %358 = vmatprep.subr.mxu0 0.0
    %359 = vmatpush1.msra.mxu0 %v215
    %360 = vmatprep.subr.mxu0 0.0
    %361 = vmatpush1.msra.mxu0 %v216
    %362 = vmatprep.subr.mxu0 0.0
    %363 = vmatpush1.msra.mxu0 %v217
    %364 = vmatprep.subr.mxu0 0.0
    %365 = vmatpush1.msra.mxu0 %v218
    %366 = vmatprep.subr.mxu0 0.0
    %367 = vmatpush1.msra.mxu0 %v219
    %368 = vmatprep.subr.mxu0 0.0
    %369 = vmatpush1.msra.mxu0 %v220
    %370 = vmatprep.subr.mxu0 0.0
    %371 = vmatpush1.msra.mxu0 %v221
    %372 = vmatprep.subr.mxu0 0.0
    %373 = vmatpush1.msra.mxu0 %v222
    %374 = vmatprep.subr.mxu0 0.0
    %375 = vmatpush1.msra.mxu0 %v223
    %376 = vmatprep.subr.mxu0 0.0
    %377 = vmatpush1.msra.mxu0 %v224
    %378 = vmatprep.subr.mxu0 0.0
    %379 = vmatpush1.msra.mxu0 %v225
    %380 = vmatprep.subr.mxu0 0.0
    %381 = vmatpush1.msra.mxu0 %v226
    %382 = vmatprep.subr.mxu0 0.0
    %383 = vmatpush1.msra.mxu0 %v227
    %384 = vmatprep.subr.mxu0 0.0
    %385 = vmatpush1.msra.mxu0 %v228
    %386 = vmatprep.subr.mxu0 0.0
    %387 = vmatpush1.msra.mxu0 %v229
    %388 = vmatprep.subr.mxu0 0.0
    %389 = vmatpush1.msra.mxu0 %v230
    %390 = vmatprep.subr.mxu0 0.0
    %391 = vmatpush1.msra.mxu0 %v231
    %392 = vmatprep.mubr.f32.mxu0 %v265
    %393 = vmatmul.mubr.f32.gmra.mrb[0].mxu0 %v264
    %v394 = vpop.f32.mrb[0].mxu0
    %v395 = vadd.f32 0.0, %v394
    %v396 = vpop.f32.mrb[0].mxu0
    %397 = vmatprep.mubr.f32.mxu0 %v269
    %398 = vmatmul.mubr.f32.gmra.mrb[0].mxu0 %v268
    %v399 = vpop.f32.mrb[0].mxu0
    %v400 = vadd.f32 0.0, %v399
    %v401 = vpop.f32.mrb[0].mxu0
    %402 = vmatprep.mubr.f32.mxu0 %v273
    %403 = vmatmul.mubr.f32.gmra.mrb[0].mxu0 %v272
    %v404 = vpop.f32.mrb[0].mxu0
    %v405 = vadd.f32 0.0, %v404
    %v406 = vpop.f32.mrb[0].mxu0
    %407 = vmatprep.mubr.f32.mxu0 %v277
    %408 = vmatmul.mubr.f32.gmra.mrb[0].mxu0 %v276
    %v409 = vpop.f32.mrb[0].mxu0
    %v410 = vadd.f32 0.0, %v409
    %v411 = vpop.f32.mrb[0].mxu0
    %412 = vmatprep.mubr.f32.mxu0 %v281
    %413 = vmatmul.mubr.f32.gmra.mrb[0].mxu0 %v280
    %v414 = vpop.f32.mrb[0].mxu0
    %v415 = vadd.f32 0.0, %v414
    %v416 = vpop.f32.mrb[0].mxu0
    %417 = vmatprep.mubr.f32.mxu0 %v285
    %418 = vmatmul.mubr.f32.gmra.mrb[0].mxu0 %v284
    %v419 = vpop.f32.mrb[0].mxu0
    %v420 = vadd.f32 0.0, %v419
    %v421 = vpop.f32.mrb[0].mxu0
    %422 = vmatprep.mubr.f32.mxu0 %v289
    %423 = vmatmul.mubr.f32.gmra.mrb[0].mxu0 %v288
    %v424 = vpop.f32.mrb[0].mxu0
    %v425 = vadd.f32 0.0, %v424
    %v426 = vpop.f32.mrb[0].mxu0
    %427 = vmatprep.mubr.f32.mxu0 %v293
    %428 = vmatmul.mubr.f32.gmra.mrb[0].mxu0 %v292
    %v429 = vpop.f32.mrb[0].mxu0
    %v430 = vadd.f32 0.0, %v429
    %v431 = vpop.f32.mrb[0].mxu0
    %432 = vmatprep.mubr.f32.mxu0 %v297
    %433 = vmatmul.mubr.f32.gmra.mrb[0].mxu0 %v296
    %v434 = vpop.f32.mrb[0].mxu0
    %v435 = vadd.f32 0.0, %v434
    %v436 = vpop.f32.mrb[0].mxu0
    %437 = vmatprep.mubr.f32.mxu0 %v301
    %438 = vmatmul.mubr.f32.gmra.mrb[0].mxu0 %v300
    %v439 = vpop.f32.mrb[0].mxu0
    %v440 = vadd.f32 0.0, %v439
    %v441 = vpop.f32.mrb[0].mxu0
    %442 = vmatprep.mubr.f32.mxu0 %v305
    %443 = vmatmul.mubr.f32.gmra.mrb[0].mxu0 %v304
    %v444 = vpop.f32.mrb[0].mxu0
    %v445 = vadd.f32 0.0, %v444
    %v446 = vpop.f32.mrb[0].mxu0
    %447 = vmatprep.mubr.f32.mxu0 %v309
    %448 = vmatmul.mubr.f32.gmra.mrb[0].mxu0 %v308
    %v449 = vpop.f32.mrb[0].mxu0
    %v450 = vadd.f32 0.0, %v449
    %v451 = vpop.f32.mrb[0].mxu0
    %452 = vmatprep.mubr.f32.mxu0 %v313
    %453 = vmatmul.mubr.f32.gmra.mrb[0].mxu0 %v312
    %v454 = vpop.f32.mrb[0].mxu0
    %v455 = vadd.f32 0.0, %v454
    %v456 = vpop.f32.mrb[0].mxu0
    %457 = vmatprep.mubr.f32.mxu0 %v317
    %458 = vmatmul.mubr.f32.gmra.mrb[0].mxu0 %v316
    %v459 = vpop.f32.mrb[0].mxu0
    %v460 = vadd.f32 0.0, %v459
    %v461 = vpop.f32.mrb[0].mxu0
    %462 = vmatprep.mubr.f32.mxu0 %v321
    %463 = vmatmul.mubr.f32.gmra.mrb[0].mxu0 %v320
    %v464 = vpop.f32.mrb[0].mxu0
    %v465 = vadd.f32 0.0, %v464
    %v466 = vpop.f32.mrb[0].mxu0
    %467 = vmatprep.mubr.f32.mxu0 %v325
    %468 = vmatmul.mubr.f32.gmra.mrb[0].mxu0 %v324
    %v469 = vpop.f32.mrb[0].mxu0
    %v470 = vadd.f32 0.0, %v469
    %v471 = vpop.f32.mrb[0].mxu0
    %472 = vdwg.mxu0
    %473 = vmatprep.subr.mxu0 0.0
    %474 = vmatpush1.msra.mxu0 %v232
    %475 = vmatprep.subr.mxu0 0.0
    %476 = vmatpush1.msra.mxu0 %v233
    %477 = vmatprep.subr.mxu0 0.0
    %478 = vmatpush1.msra.mxu0 %v234
    %479 = vmatprep.subr.mxu0 0.0
    %480 = vmatpush1.msra.mxu0 %v235
    %481 = vmatprep.subr.mxu0 0.0
    %482 = vmatpush1.msra.mxu0 %v236
    %483 = vmatprep.subr.mxu0 0.0
    %484 = vmatpush1.msra.mxu0 %v237
    %485 = vmatprep.subr.mxu0 0.0
    %486 = vmatpush1.msra.mxu0 %v238
    %487 = vmatprep.subr.mxu0 0.0
    %488 = vmatpush1.msra.mxu0 %v239
    %489 = vmatprep.subr.mxu0 0.0
    %490 = vmatpush1.msra.mxu0 %v240
    %491 = vmatprep.subr.mxu0 0.0
    %492 = vmatpush1.msra.mxu0 %v241
    %493 = vmatprep.subr.mxu0 0.0
    %494 = vmatpush1.msra.mxu0 %v242
    %495 = vmatprep.subr.mxu0 0.0
    %496 = vmatpush1.msra.mxu0 %v243
    %497 = vmatprep.subr.mxu0 0.0
    %498 = vmatpush1.msra.mxu0 %v244
    %499 = vmatprep.subr.mxu0 0.0
    %500 = vmatpush1.msra.mxu0 %v245
    %501 = vmatprep.subr.mxu0 0.0
    %502 = vmatpush1.msra.mxu0 %v246
    %503 = vmatprep.subr.mxu0 0.0
    %504 = vmatpush1.msra.mxu0 %v247
    %505 = vmatprep.subr.mxu0 0.0
    %506 = vmatpush1.msra.mxu0 %v248
    %507 = vmatprep.subr.mxu0 0.0
    %508 = vmatpush1.msra.mxu0 %v249
    %509 = vmatprep.subr.mxu0 0.0
    %510 = vmatpush1.msra.mxu0 %v250
    %511 = vmatprep.subr.mxu0 0.0
    %512 = vmatpush1.msra.mxu0 %v251
    %513 = vmatprep.subr.mxu0 0.0
    %514 = vmatpush1.msra.mxu0 %v252
    %515 = vmatprep.subr.mxu0 0.0
    %516 = vmatpush1.msra.mxu0 %v253
    %517 = vmatprep.subr.mxu0 0.0
    %518 = vmatpush1.msra.mxu0 %v254
    %519 = vmatprep.subr.mxu0 0.0
    %520 = vmatpush1.msra.mxu0 %v255
    %521 = vmatprep.subr.mxu0 0.0
    %522 = vmatpush1.msra.mxu0 %v256
    %523 = vmatprep.subr.mxu0 0.0
    %524 = vmatpush1.msra.mxu0 %v257
    %525 = vmatprep.subr.mxu0 0.0
    %526 = vmatpush1.msra.mxu0 %v258
    %527 = vmatprep.subr.mxu0 0.0
    %528 = vmatpush1.msra.mxu0 %v259
    %529 = vmatprep.subr.mxu0 0.0
    %530 = vmatpush1.msra.mxu0 %v260
    %531 = vmatprep.subr.mxu0 0.0
    %532 = vmatpush1.msra.mxu0 %v261
    %533 = vmatprep.subr.mxu0 0.0
    %534 = vmatpush1.msra.mxu0 %v262
    %535 = vmatprep.subr.mxu0 0.0
    %536 = vmatpush1.msra.mxu0 %v263
    %537 = vmatprep.mubr.f32.mxu0 %v267
    %538 = vmatmul.mubr.f32.gmra.mrb[0].mxu0 %v266
    %v539 = vpop.f32.mrb[0].mxu0
    %v540 = vadd.f32 %v395, %v539
    %v541 = vpop.f32.mrb[0].mxu0
    %542 = vmatprep.mubr.f32.mxu0 %v271
    %543 = vmatmul.mubr.f32.gmra.mrb[0].mxu0 %v270
    %v544 = vpop.f32.mrb[0].mxu0
    %v545 = vadd.f32 %v400, %v544
    %v546 = vpop.f32.mrb[0].mxu0
    %547 = vmatprep.mubr.f32.mxu0 %v275
    %548 = vmatmul.mubr.f32.gmra.mrb[0].mxu0 %v274
    %v549 = vpop.f32.mrb[0].mxu0
    %v550 = vadd.f32 %v405, %v549
    %v551 = vpop.f32.mrb[0].mxu0
    %552 = vmatprep.mubr.f32.mxu0 %v279
    %553 = vmatmul.mubr.f32.gmra.mrb[0].mxu0 %v278
    %v554 = vpop.f32.mrb[0].mxu0
    %v555 = vadd.f32 %v410, %v554
    %v556 = vpop.f32.mrb[0].mxu0
    %557 = vmatprep.mubr.f32.mxu0 %v283
    %558 = vmatmul.mubr.f32.gmra.mrb[0].mxu0 %v282
    %v559 = vpop.f32.mrb[0].mxu0
    %v560 = vadd.f32 %v415, %v559
    %v561 = vpop.f32.mrb[0].mxu0
    %562 = vmatprep.mubr.f32.mxu0 %v287
    %563 = vmatmul.mubr.f32.gmra.mrb[0].mxu0 %v286
    %v564 = vpop.f32.mrb[0].mxu0
    %v565 = vadd.f32 %v420, %v564
    %v566 = vpop.f32.mrb[0].mxu0
    %567 = vmatprep.mubr.f32.mxu0 %v291
    %568 = vmatmul.mubr.f32.gmra.mrb[0].mxu0 %v290
    %v569 = vpop.f32.mrb[0].mxu0
    %v570 = vadd.f32 %v425, %v569
    %v571 = vpop.f32.mrb[0].mxu0
    %572 = vmatprep.mubr.f32.mxu0 %v295
    %573 = vmatmul.mubr.f32.gmra.mrb[0].mxu0 %v294
    %v574 = vpop.f32.mrb[0].mxu0
    %v575 = vadd.f32 %v430, %v574
    %v576 = vpop.f32.mrb[0].mxu0
    %577 = vmatprep.mubr.f32.mxu0 %v299
    %578 = vmatmul.mubr.f32.gmra.mrb[0].mxu0 %v298
    %v579 = vpop.f32.mrb[0].mxu0
    %v580 = vadd.f32 %v435, %v579
    %v581 = vpop.f32.mrb[0].mxu0
    %582 = vmatprep.mubr.f32.mxu0 %v303
    %583 = vmatmul.mubr.f32.gmra.mrb[0].mxu0 %v302
    %v584 = vpop.f32.mrb[0].mxu0
    %v585 = vadd.f32 %v440, %v584
    %v586 = vpop.f32.mrb[0].mxu0
    %587 = vmatprep.mubr.f32.mxu0 %v307
    %588 = vmatmul.mubr.f32.gmra.mrb[0].mxu0 %v306
    %v589 = vpop.f32.mrb[0].mxu0
    %v590 = vadd.f32 %v445, %v589
    %v591 = vpop.f32.mrb[0].mxu0
    %592 = vmatprep.mubr.f32.mxu0 %v311
    %593 = vmatmul.mubr.f32.gmra.mrb[0].mxu0 %v310
    %v594 = vpop.f32.mrb[0].mxu0
    %v595 = vadd.f32 %v450, %v594
    %v596 = vpop.f32.mrb[0].mxu0
    %597 = vmatprep.mubr.f32.mxu0 %v315
    %598 = vmatmul.mubr.f32.gmra.mrb[0].mxu0 %v314
    %v599 = vpop.f32.mrb[0].mxu0
    %v600 = vadd.f32 %v455, %v599
    %v601 = vpop.f32.mrb[0].mxu0
    %602 = vmatprep.mubr.f32.mxu0 %v319
    %603 = vmatmul.mubr.f32.gmra.mrb[0].mxu0 %v318
    %v604 = vpop.f32.mrb[0].mxu0
    %v605 = vadd.f32 %v460, %v604
    %v606 = vpop.f32.mrb[0].mxu0
    %607 = vmatprep.mubr.f32.mxu0 %v323
    %608 = vmatmul.mubr.f32.gmra.mrb[0].mxu0 %v322
    %v609 = vpop.f32.mrb[0].mxu0
    %v610 = vadd.f32 %v465, %v609
    %v611 = vpop.f32.mrb[0].mxu0
    %612 = vmatprep.mubr.f32.mxu0 %v327
    %613 = vmatmul.mubr.f32.gmra.mrb[0].mxu0 %v326
    %v614 = vpop.f32.mrb[0].mxu0
    %v615 = vadd.f32 %v470, %v614
    %v616 = vpop.f32.mrb[0].mxu0
    %617 = vdwg.mxu0
    %v618 = vld [vmem:[#allocation10] sm:$0xff]
    %v619 = vld [vmem:[#allocation10 + $0x8] sm:$0xff]
    %v620 = vld [vmem:[#allocation10 + $0x10] sm:$0xff]
    %v621 = vld [vmem:[#allocation10 + $0x18] sm:$0xff]
    %v622 = vld [vmem:[#allocation10 + $0x20] sm:$0xff]
    %v623 = vld [vmem:[#allocation10 + $0x28] sm:$0xff]
    %v624 = vld [vmem:[#allocation10 + $0x30] sm:$0xff]
    %v625 = vld [vmem:[#allocation10 + $0x38] sm:$0xff]
    %v626 = vld [vmem:[#allocation10 + $0x40] sm:$0xff]
    %v627 = vld [vmem:[#allocation10 + $0x48] sm:$0xff]
    %v628 = vld [vmem:[#allocation10 + $0x50] sm:$0xff]
    %v629 = vld [vmem:[#allocation10 + $0x58] sm:$0xff]
    %v630 = vld [vmem:[#allocation10 + $0x60] sm:$0xff]
    %v631 = vld [vmem:[#allocation10 + $0x68] sm:$0xff]
    %v632 = vld [vmem:[#allocation10 + $0x70] sm:$0xff]
    %v633 = vld [vmem:[#allocation10 + $0x78] sm:$0xff]
    %s634 = scalar_lea.vmem [#allocation5], 512
    %v635 = vld [vmem:[%s634] sm:$0xff]
    %v636 = vld [vmem:[%s634 + $0x8] sm:$0xff]
    %v637 = vld [vmem:[%s634 + $0x10] sm:$0xff]
    %v638 = vld [vmem:[%s634 + $0x18] sm:$0xff]
    %v639 = vld [vmem:[%s634 + $0x20] sm:$0xff]
    %v640 = vld [vmem:[%s634 + $0x28] sm:$0xff]
    %v641 = vld [vmem:[%s634 + $0x30] sm:$0xff]
    %v642 = vld [vmem:[%s634 + $0x38] sm:$0xff]
    %v643 = vld [vmem:[%s634 + $0x40] sm:$0xff]
    %v644 = vld [vmem:[%s634 + $0x48] sm:$0xff]
    %v645 = vld [vmem:[%s634 + $0x50] sm:$0xff]
    %v646 = vld [vmem:[%s634 + $0x58] sm:$0xff]
    %v647 = vld [vmem:[%s634 + $0x60] sm:$0xff]
    %v648 = vld [vmem:[%s634 + $0x68] sm:$0xff]
    %v649 = vld [vmem:[%s634 + $0x70] sm:$0xff]
    %v650 = vld [vmem:[%s634 + $0x78] sm:$0xff]
    %v651 = vld [vmem:[%s634 + $0x80] sm:$0xff]
    %v652 = vld [vmem:[%s634 + $0x88] sm:$0xff]
    %v653 = vld [vmem:[%s634 + $0x90] sm:$0xff]
    %v654 = vld [vmem:[%s634 + $0x98] sm:$0xff]
    %v655 = vld [vmem:[%s634 + $0xa0] sm:$0xff]
    %v656 = vld [vmem:[%s634 + $0xa8] sm:$0xff]
    %v657 = vld [vmem:[%s634 + $0xb0] sm:$0xff]
    %v658 = vld [vmem:[%s634 + $0xb8] sm:$0xff]
    %v659 = vld [vmem:[%s634 + $0xc0] sm:$0xff]
    %v660 = vld [vmem:[%s634 + $0xc8] sm:$0xff]
    %v661 = vld [vmem:[%s634 + $0xd0] sm:$0xff]
    %v662 = vld [vmem:[%s634 + $0xd8] sm:$0xff]
    %v663 = vld [vmem:[%s634 + $0xe0] sm:$0xff]
    %v664 = vld [vmem:[%s634 + $0xe8] sm:$0xff]
    %v665 = vld [vmem:[%s634 + $0xf0] sm:$0xff]
    %v666 = vld [vmem:[%s634 + $0xf8] sm:$0xff]
    %v667 = vld [vmem:[%s634 + $0x100] sm:$0xff]
    %v668 = vld [vmem:[%s634 + $0x108] sm:$0xff]
    %v669 = vld [vmem:[%s634 + $0x110] sm:$0xff]
    %v670 = vld [vmem:[%s634 + $0x118] sm:$0xff]
    %v671 = vld [vmem:[%s634 + $0x120] sm:$0xff]
    %v672 = vld [vmem:[%s634 + $0x128] sm:$0xff]
    %v673 = vld [vmem:[%s634 + $0x130] sm:$0xff]
    %v674 = vld [vmem:[%s634 + $0x138] sm:$0xff]
    %v675 = vld [vmem:[%s634 + $0x140] sm:$0xff]
    %v676 = vld [vmem:[%s634 + $0x148] sm:$0xff]
    %v677 = vld [vmem:[%s634 + $0x150] sm:$0xff]
    %v678 = vld [vmem:[%s634 + $0x158] sm:$0xff]
    %v679 = vld [vmem:[%s634 + $0x160] sm:$0xff]
    %v680 = vld [vmem:[%s634 + $0x168] sm:$0xff]
    %v681 = vld [vmem:[%s634 + $0x170] sm:$0xff]
    %v682 = vld [vmem:[%s634 + $0x178] sm:$0xff]
    %v683 = vld [vmem:[%s634 + $0x180] sm:$0xff]
    %v684 = vld [vmem:[%s634 + $0x188] sm:$0xff]
    %v685 = vld [vmem:[%s634 + $0x190] sm:$0xff]
    %v686 = vld [vmem:[%s634 + $0x198] sm:$0xff]
    %v687 = vld [vmem:[%s634 + $0x1a0] sm:$0xff]
    %v688 = vld [vmem:[%s634 + $0x1a8] sm:$0xff]
    %v689 = vld [vmem:[%s634 + $0x1b0] sm:$0xff]
    %v690 = vld [vmem:[%s634 + $0x1b8] sm:$0xff]
    %v691 = vld [vmem:[%s634 + $0x1c0] sm:$0xff]
    %v692 = vld [vmem:[%s634 + $0x1c8] sm:$0xff]
    %v693 = vld [vmem:[%s634 + $0x1d0] sm:$0xff]
    %v694 = vld [vmem:[%s634 + $0x1d8] sm:$0xff]
    %v695 = vld [vmem:[%s634 + $0x1e0] sm:$0xff]
    %v696 = vld [vmem:[%s634 + $0x1e8] sm:$0xff]
    %v697 = vld [vmem:[%s634 + $0x1f0] sm:$0xff]
    %v698 = vld [vmem:[%s634 + $0x1f8] sm:$0xff]
    %699 = vmatprep.subr.mxu0 0.0
    %700 = vmatpush1.msra.mxu0 %v200
    %701 = vmatprep.subr.mxu0 0.0
    %702 = vmatpush1.msra.mxu0 %v201
    %703 = vmatprep.subr.mxu0 0.0
    %704 = vmatpush1.msra.mxu0 %v202
    %705 = vmatprep.subr.mxu0 0.0
    %706 = vmatpush1.msra.mxu0 %v203
    %707 = vmatprep.subr.mxu0 0.0
    %708 = vmatpush1.msra.mxu0 %v204
    %709 = vmatprep.subr.mxu0 0.0
    %710 = vmatpush1.msra.mxu0 %v205
    %711 = vmatprep.subr.mxu0 0.0
    %712 = vmatpush1.msra.mxu0 %v206
    %713 = vmatprep.subr.mxu0 0.0
    %714 = vmatpush1.msra.mxu0 %v207
    %715 = vmatprep.subr.mxu0 0.0
    %716 = vmatpush1.msra.mxu0 %v208
    %717 = vmatprep.subr.mxu0 0.0
    %718 = vmatpush1.msra.mxu0 %v209
    %719 = vmatprep.subr.mxu0 0.0
    %720 = vmatpush1.msra.mxu0 %v210
    %721 = vmatprep.subr.mxu0 0.0
    %722 = vmatpush1.msra.mxu0 %v211
    %723 = vmatprep.subr.mxu0 0.0
    %724 = vmatpush1.msra.mxu0 %v212
    %725 = vmatprep.subr.mxu0 0.0
    %726 = vmatpush1.msra.mxu0 %v213
    %727 = vmatprep.subr.mxu0 0.0
    %728 = vmatpush1.msra.mxu0 %v214
    %729 = vmatprep.subr.mxu0 0.0
    %730 = vmatpush1.msra.mxu0 %v215
    %731 = vmatprep.subr.mxu0 0.0
    %732 = vmatpush1.msra.mxu0 %v216
    %733 = vmatprep.subr.mxu0 0.0
    %734 = vmatpush1.msra.mxu0 %v217
    %735 = vmatprep.subr.mxu0 0.0
    %736 = vmatpush1.msra.mxu0 %v218
    %737 = vmatprep.subr.mxu0 0.0
    %738 = vmatpush1.msra.mxu0 %v219
    %739 = vmatprep.subr.mxu0 0.0
    %740 = vmatpush1.msra.mxu0 %v220
    %741 = vmatprep.subr.mxu0 0.0
    %742 = vmatpush1.msra.mxu0 %v221
    %743 = vmatprep.subr.mxu0 0.0
    %744 = vmatpush1.msra.mxu0 %v222
    %745 = vmatprep.subr.mxu0 0.0
    %746 = vmatpush1.msra.mxu0 %v223
    %747 = vmatprep.subr.mxu0 0.0
    %748 = vmatpush1.msra.mxu0 %v224
    %749 = vmatprep.subr.mxu0 0.0
    %750 = vmatpush1.msra.mxu0 %v225
    %751 = vmatprep.subr.mxu0 0.0
    %752 = vmatpush1.msra.mxu0 %v226
    %753 = vmatprep.subr.mxu0 0.0
    %754 = vmatpush1.msra.mxu0 %v227
    %755 = vmatprep.subr.mxu0 0.0
    %756 = vmatpush1.msra.mxu0 %v228
    %757 = vmatprep.subr.mxu0 0.0
    %758 = vmatpush1.msra.mxu0 %v229
    %759 = vmatprep.subr.mxu0 0.0
    %760 = vmatpush1.msra.mxu0 %v230
    %761 = vmatprep.subr.mxu0 0.0
    %762 = vmatpush1.msra.mxu0 %v231
    %763 = vmatprep.mubr.f32.mxu0 %v636
    %764 = vmatmul.mubr.f32.gmra.mrb[0].mxu0 %v635
    %v765 = vpop.f32.mrb[0].mxu0
    %v766 = vadd.f32 0.0, %v765
    %v767 = vpop.f32.mrb[0].mxu0
    %768 = vmatprep.mubr.f32.mxu0 %v640
    %769 = vmatmul.mubr.f32.gmra.mrb[0].mxu0 %v639
    %v770 = vpop.f32.mrb[0].mxu0
    %v771 = vadd.f32 0.0, %v770
    %v772 = vpop.f32.mrb[0].mxu0
    %773 = vmatprep.mubr.f32.mxu0 %v644
    %774 = vmatmul.mubr.f32.gmra.mrb[0].mxu0 %v643
    %v775 = vpop.f32.mrb[0].mxu0
    %v776 = vadd.f32 0.0, %v775
    %v777 = vpop.f32.mrb[0].mxu0
    %778 = vmatprep.mubr.f32.mxu0 %v648
    %779 = vmatmul.mubr.f32.gmra.mrb[0].mxu0 %v647
    %v780 = vpop.f32.mrb[0].mxu0
    %v781 = vadd.f32 0.0, %v780
    %v782 = vpop.f32.mrb[0].mxu0
    %783 = vmatprep.mubr.f32.mxu0 %v652
    %784 = vmatmul.mubr.f32.gmra.mrb[0].mxu0 %v651
    %v785 = vpop.f32.mrb[0].mxu0
    %v786 = vadd.f32 0.0, %v785
    %v787 = vpop.f32.mrb[0].mxu0
    %788 = vmatprep.mubr.f32.mxu0 %v656
    %789 = vmatmul.mubr.f32.gmra.mrb[0].mxu0 %v655
    %v790 = vpop.f32.mrb[0].mxu0
    %v791 = vadd.f32 0.0, %v790
    %v792 = vpop.f32.mrb[0].mxu0
    %793 = vmatprep.mubr.f32.mxu0 %v660
    %794 = vmatmul.mubr.f32.gmra.mrb[0].mxu0 %v659
    %v795 = vpop.f32.mrb[0].mxu0
    %v796 = vadd.f32 0.0, %v795
    %v797 = vpop.f32.mrb[0].mxu0
    %798 = vmatprep.mubr.f32.mxu0 %v664
    %799 = vmatmul.mubr.f32.gmra.mrb[0].mxu0 %v663
    %v800 = vpop.f32.mrb[0].mxu0
    %v801 = vadd.f32 0.0, %v800
    %v802 = vpop.f32.mrb[0].mxu0
    %803 = vmatprep.mubr.f32.mxu0 %v668
    %804 = vmatmul.mubr.f32.gmra.mrb[0].mxu0 %v667
    %v805 = vpop.f32.mrb[0].mxu0
    %v806 = vadd.f32 0.0, %v805
    %v807 = vpop.f32.mrb[0].mxu0
    %808 = vmatprep.mubr.f32.mxu0 %v672
    %809 = vmatmul.mubr.f32.gmra.mrb[0].mxu0 %v671
    %v810 = vpop.f32.mrb[0].mxu0
    %v811 = vadd.f32 0.0, %v810
    %v812 = vpop.f32.mrb[0].mxu0
    %813 = vmatprep.mubr.f32.mxu0 %v676
    %814 = vmatmul.mubr.f32.gmra.mrb[0].mxu0 %v675
    %v815 = vpop.f32.mrb[0].mxu0
    %v816 = vadd.f32 0.0, %v815
    %v817 = vpop.f32.mrb[0].mxu0
    %818 = vmatprep.mubr.f32.mxu0 %v680
    %819 = vmatmul.mubr.f32.gmra.mrb[0].mxu0 %v679
    %v820 = vpop.f32.mrb[0].mxu0
    %v821 = vadd.f32 0.0, %v820
    %v822 = vpop.f32.mrb[0].mxu0
    %823 = vmatprep.mubr.f32.mxu0 %v684
    %824 = vmatmul.mubr.f32.gmra.mrb[0].mxu0 %v683
    %v825 = vpop.f32.mrb[0].mxu0
    %v826 = vadd.f32 0.0, %v825
    %v827 = vpop.f32.mrb[0].mxu0
    %828 = vmatprep.mubr.f32.mxu0 %v688
    %829 = vmatmul.mubr.f32.gmra.mrb[0].mxu0 %v687
    %v830 = vpop.f32.mrb[0].mxu0
    %v831 = vadd.f32 0.0, %v830
    %v832 = vpop.f32.mrb[0].mxu0
    %833 = vmatprep.mubr.f32.mxu0 %v692
    %834 = vmatmul.mubr.f32.gmra.mrb[0].mxu0 %v691
    %v835 = vpop.f32.mrb[0].mxu0
    %v836 = vadd.f32 0.0, %v835
    %v837 = vpop.f32.mrb[0].mxu0
    %838 = vmatprep.mubr.f32.mxu0 %v696
    %839 = vmatmul.mubr.f32.gmra.mrb[0].mxu0 %v695
    %v840 = vpop.f32.mrb[0].mxu0
    %v841 = vadd.f32 0.0, %v840
    %v842 = vpop.f32.mrb[0].mxu0
    %843 = vdwg.mxu0
    %844 = vmatprep.subr.mxu0 0.0
    %845 = vmatpush1.msra.mxu0 %v232
    %846 = vmatprep.subr.mxu0 0.0
    %847 = vmatpush1.msra.mxu0 %v233
    %848 = vmatprep.subr.mxu0 0.0
    %849 = vmatpush1.msra.mxu0 %v234
    %850 = vmatprep.subr.mxu0 0.0
    %851 = vmatpush1.msra.mxu0 %v235
    %852 = vmatprep.subr.mxu0 0.0
    %853 = vmatpush1.msra.mxu0 %v236
    %854 = vmatprep.subr.mxu0 0.0
    %855 = vmatpush1.msra.mxu0 %v237
    %856 = vmatprep.subr.mxu0 0.0
    %857 = vmatpush1.msra.mxu0 %v238
    %858 = vmatprep.subr.mxu0 0.0
    %859 = vmatpush1.msra.mxu0 %v239
    %860 = vmatprep.subr.mxu0 0.0
    %861 = vmatpush1.msra.mxu0 %v240
    %862 = vmatprep.subr.mxu0 0.0
    %863 = vmatpush1.msra.mxu0 %v241
    %864 = vmatprep.subr.mxu0 0.0
    %865 = vmatpush1.msra.mxu0 %v242
    %866 = vmatprep.subr.mxu0 0.0
    %867 = vmatpush1.msra.mxu0 %v243
    %868 = vmatprep.subr.mxu0 0.0
    %869 = vmatpush1.msra.mxu0 %v244
    %870 = vmatprep.subr.mxu0 0.0
    %871 = vmatpush1.msra.mxu0 %v245
    %872 = vmatprep.subr.mxu0 0.0
    %873 = vmatpush1.msra.mxu0 %v246
    %874 = vmatprep.subr.mxu0 0.0
    %875 = vmatpush1.msra.mxu0 %v247
    %876 = vmatprep.subr.mxu0 0.0
    %877 = vmatpush1.msra.mxu0 %v248
    %878 = vmatprep.subr.mxu0 0.0
    %879 = vmatpush1.msra.mxu0 %v249
    %880 = vmatprep.subr.mxu0 0.0
    %881 = vmatpush1.msra.mxu0 %v250
    %882 = vmatprep.subr.mxu0 0.0
    %883 = vmatpush1.msra.mxu0 %v251
    %884 = vmatprep.subr.mxu0 0.0
    %885 = vmatpush1.msra.mxu0 %v252
    %886 = vmatprep.subr.mxu0 0.0
    %887 = vmatpush1.msra.mxu0 %v253
    %888 = vmatprep.subr.mxu0 0.0
    %889 = vmatpush1.msra.mxu0 %v254
    %890 = vmatprep.subr.mxu0 0.0
    %891 = vmatpush1.msra.mxu0 %v255
    %892 = vmatprep.subr.mxu0 0.0
    %893 = vmatpush1.msra.mxu0 %v256
    %894 = vmatprep.subr.mxu0 0.0
    %895 = vmatpush1.msra.mxu0 %v257
    %896 = vmatprep.subr.mxu0 0.0
    %897 = vmatpush1.msra.mxu0 %v258
    %898 = vmatprep.subr.mxu0 0.0
    %899 = vmatpush1.msra.mxu0 %v259
    %900 = vmatprep.subr.mxu0 0.0
    %901 = vmatpush1.msra.mxu0 %v260
    %902 = vmatprep.subr.mxu0 0.0
    %903 = vmatpush1.msra.mxu0 %v261
    %904 = vmatprep.subr.mxu0 0.0
    %905 = vmatpush1.msra.mxu0 %v262
    %906 = vmatprep.subr.mxu0 0.0
    %907 = vmatpush1.msra.mxu0 %v263
    %908 = vmatprep.mubr.f32.mxu0 %v638
    %909 = vmatmul.mubr.f32.gmra.mrb[0].mxu0 %v637
    %v910 = vpop.f32.mrb[0].mxu0
    %v911 = vadd.f32 %v766, %v910
    %v912 = vpop.f32.mrb[0].mxu0
    %913 = vmatprep.mubr.f32.mxu0 %v642
    %914 = vmatmul.mubr.f32.gmra.mrb[0].mxu0 %v641
    %v915 = vpop.f32.mrb[0].mxu0
    %v916 = vadd.f32 %v771, %v915
    %v917 = vpop.f32.mrb[0].mxu0
    %918 = vmatprep.mubr.f32.mxu0 %v646
    %919 = vmatmul.mubr.f32.gmra.mrb[0].mxu0 %v645
    %v920 = vpop.f32.mrb[0].mxu0
    %v921 = vadd.f32 %v776, %v920
    %v922 = vpop.f32.mrb[0].mxu0
    %923 = vmatprep.mubr.f32.mxu0 %v650
    %924 = vmatmul.mubr.f32.gmra.mrb[0].mxu0 %v649
    %v925 = vpop.f32.mrb[0].mxu0
    %v926 = vadd.f32 %v781, %v925
    %v927 = vpop.f32.mrb[0].mxu0
    %928 = vmatprep.mubr.f32.mxu0 %v654
    %929 = vmatmul.mubr.f32.gmra.mrb[0].mxu0 %v653
    %v930 = vpop.f32.mrb[0].mxu0
    %v931 = vadd.f32 %v786, %v930
    %v932 = vpop.f32.mrb[0].mxu0
    %933 = vmatprep.mubr.f32.mxu0 %v658
    %934 = vmatmul.mubr.f32.gmra.mrb[0].mxu0 %v657
    %v935 = vpop.f32.mrb[0].mxu0
    %v936 = vadd.f32 %v791, %v935
    %v937 = vpop.f32.mrb[0].mxu0
    %938 = vmatprep.mubr.f32.mxu0 %v662
    %939 = vmatmul.mubr.f32.gmra.mrb[0].mxu0 %v661
    %v940 = vpop.f32.mrb[0].mxu0
    %v941 = vadd.f32 %v796, %v940
    %v942 = vpop.f32.mrb[0].mxu0
    %943 = vmatprep.mubr.f32.mxu0 %v666
    %944 = vmatmul.mubr.f32.gmra.mrb[0].mxu0 %v665
    %v945 = vpop.f32.mrb[0].mxu0
    %v946 = vadd.f32 %v801, %v945
    %v947 = vpop.f32.mrb[0].mxu0
    %948 = vmatprep.mubr.f32.mxu0 %v670
    %949 = vmatmul.mubr.f32.gmra.mrb[0].mxu0 %v669
    %v950 = vpop.f32.mrb[0].mxu0
    %v951 = vadd.f32 %v806, %v950
    %v952 = vpop.f32.mrb[0].mxu0
    %953 = vmatprep.mubr.f32.mxu0 %v674
    %954 = vmatmul.mubr.f32.gmra.mrb[0].mxu0 %v673
    %v955 = vpop.f32.mrb[0].mxu0
    %v956 = vadd.f32 %v811, %v955
    %v957 = vpop.f32.mrb[0].mxu0
    %958 = vmatprep.mubr.f32.mxu0 %v678
    %959 = vmatmul.mubr.f32.gmra.mrb[0].mxu0 %v677
    %v960 = vpop.f32.mrb[0].mxu0
    %v961 = vadd.f32 %v816, %v960
    %v962 = vpop.f32.mrb[0].mxu0
    %963 = vmatprep.mubr.f32.mxu0 %v682
    %964 = vmatmul.mubr.f32.gmra.mrb[0].mxu0 %v681
    %v965 = vpop.f32.mrb[0].mxu0
    %v966 = vadd.f32 %v821, %v965
    %v967 = vpop.f32.mrb[0].mxu0
    %968 = vmatprep.mubr.f32.mxu0 %v686
    %969 = vmatmul.mubr.f32.gmra.mrb[0].mxu0 %v685
    %v970 = vpop.f32.mrb[0].mxu0
    %v971 = vadd.f32 %v826, %v970
    %v972 = vpop.f32.mrb[0].mxu0
    %973 = vmatprep.mubr.f32.mxu0 %v690
    %974 = vmatmul.mubr.f32.gmra.mrb[0].mxu0 %v689
    %v975 = vpop.f32.mrb[0].mxu0
    %v976 = vadd.f32 %v831, %v975
    %v977 = vpop.f32.mrb[0].mxu0
    %978 = vmatprep.mubr.f32.mxu0 %v694
    %979 = vmatmul.mubr.f32.gmra.mrb[0].mxu0 %v693
    %v980 = vpop.f32.mrb[0].mxu0
    %v981 = vadd.f32 %v836, %v980
    %v982 = vpop.f32.mrb[0].mxu0
    %983 = vmatprep.mubr.f32.mxu0 %v698
    %984 = vmatmul.mubr.f32.gmra.mrb[0].mxu0 %v697
    %v985 = vpop.f32.mrb[0].mxu0
    %v986 = vadd.f32 %v841, %v985
    %v987 = vpop.f32.mrb[0].mxu0
    %988 = vdwg.mxu0
    %s989 = scalar_lea.vmem [#allocation10], 128
    %v990 = vld [vmem:[%s989] sm:$0xff]
    %v991 = vld [vmem:[%s989 + $0x8] sm:$0xff]
    %v992 = vld [vmem:[%s989 + $0x10] sm:$0xff]
    %v993 = vld [vmem:[%s989 + $0x18] sm:$0xff]
    %v994 = vld [vmem:[%s989 + $0x20] sm:$0xff]
    %v995 = vld [vmem:[%s989 + $0x28] sm:$0xff]
    %v996 = vld [vmem:[%s989 + $0x30] sm:$0xff]
    %v997 = vld [vmem:[%s989 + $0x38] sm:$0xff]
    %v998 = vld [vmem:[%s989 + $0x40] sm:$0xff]
    %v999 = vld [vmem:[%s989 + $0x48] sm:$0xff]
    %v1000 = vld [vmem:[%s989 + $0x50] sm:$0xff]
    %v1001 = vld [vmem:[%s989 + $0x58] sm:$0xff]
    %v1002 = vld [vmem:[%s989 + $0x60] sm:$0xff]
    %v1003 = vld [vmem:[%s989 + $0x68] sm:$0xff]
    %v1004 = vld [vmem:[%s989 + $0x70] sm:$0xff]
    %v1005 = vld [vmem:[%s989 + $0x78] sm:$0xff]
    %1006 = vmatprep.subr.mxu0 0.0
    %1007 = vmatpush1.msra.mxu0 %v990
    %1008 = vmatprep.subr.mxu0 0.0
    %1009 = vmatpush1.msra.mxu0 %v991
    %1010 = vmatprep.subr.mxu0 0.0
    %1011 = vmatpush1.msra.mxu0 %v992
    %1012 = vmatprep.subr.mxu0 0.0
    %1013 = vmatpush1.msra.mxu0 %v993
    %1014 = vmatprep.subr.mxu0 0.0
    %1015 = vmatpush1.msra.mxu0 %v994
    %1016 = vmatprep.subr.mxu0 0.0
    %1017 = vmatpush1.msra.mxu0 %v995
    %1018 = vmatprep.subr.mxu0 0.0
    %1019 = vmatpush1.msra.mxu0 %v996
    %1020 = vmatprep.subr.mxu0 0.0
    %1021 = vmatpush1.msra.mxu0 %v997
    %1022 = vmatprep.subr.mxu0 0.0
    %1023 = vmatpush1.msra.mxu0 %v998
    %1024 = vmatprep.subr.mxu0 0.0
    %1025 = vmatpush1.msra.mxu0 %v999
    %1026 = vmatprep.subr.mxu0 0.0
    %1027 = vmatpush1.msra.mxu0 %v1000
    %1028 = vmatprep.subr.mxu0 0.0
    %1029 = vmatpush1.msra.mxu0 %v1001
    %1030 = vmatprep.subr.mxu0 0.0
    %1031 = vmatpush1.msra.mxu0 %v1002
    %1032 = vmatprep.subr.mxu0 0.0
    %1033 = vmatpush1.msra.mxu0 %v1003
    %1034 = vmatprep.subr.mxu0 0.0
    %1035 = vmatpush1.msra.mxu0 %v1004
    %1036 = vmatprep.subr.mxu0 0.0
    %1037 = vmatpush1.msra.mxu0 %v1005
    %1038 = vmatprep.subr.mxu0 0.0
    %1039 = vmatpush1.msra.mxu0 0.0
    %1040 = vmatprep.subr.mxu0 0.0
    %1041 = vmatpush1.msra.mxu0 0.0
    %1042 = vmatprep.subr.mxu0 0.0
    %1043 = vmatpush1.msra.mxu0 0.0
    %1044 = vmatprep.subr.mxu0 0.0
    %1045 = vmatpush1.msra.mxu0 0.0
    %1046 = vmatprep.subr.mxu0 0.0
    %1047 = vmatpush1.msra.mxu0 0.0
    %1048 = vmatprep.subr.mxu0 0.0
    %1049 = vmatpush1.msra.mxu0 0.0
    %1050 = vmatprep.subr.mxu0 0.0
    %1051 = vmatpush1.msra.mxu0 0.0
    %1052 = vmatprep.subr.mxu0 0.0
    %1053 = vmatpush1.msra.mxu0 0.0
    %1054 = vmatprep.subr.mxu0 0.0
    %1055 = vmatpush1.msra.mxu0 0.0
    %1056 = vmatprep.subr.mxu0 0.0
    %1057 = vmatpush1.msra.mxu0 0.0
    %1058 = vmatprep.subr.mxu0 0.0
    %1059 = vmatpush1.msra.mxu0 0.0
    %1060 = vmatprep.subr.mxu0 0.0
    %1061 = vmatpush1.msra.mxu0 0.0
    %1062 = vmatprep.subr.mxu0 0.0
    %1063 = vmatpush1.msra.mxu0 0.0
    %1064 = vmatprep.subr.mxu0 0.0
    %1065 = vmatpush1.msra.mxu0 0.0
    %1066 = vmatprep.subr.mxu0 0.0
    %1067 = vmatpush1.msra.mxu0 0.0
    %1068 = vmatprep.subr.mxu0 0.0
    %1069 = vmatpush1.msra.mxu0 0.0
    %1070 = vmatprep.mubr.f32.mxu0 0.0
    %1071 = vmatmul.mubr.f32.gmra.mrb[0].mxu0 %v911
    %v1072 = vpop.f32.mrb[0].mxu0
    %v1073 = vadd.f32 0.0, %v1072
    %v1074 = vpop.f32.mrb[0].mxu0
    %1075 = vmatprep.mubr.f32.mxu0 0.0
    %1076 = vmatmul.mubr.f32.gmra.mrb[0].mxu0 %v916
    %v1077 = vpop.f32.mrb[0].mxu0
    %v1078 = vadd.f32 0.0, %v1077
    %v1079 = vpop.f32.mrb[0].mxu0
    %1080 = vmatprep.mubr.f32.mxu0 0.0
    %1081 = vmatmul.mubr.f32.gmra.mrb[0].mxu0 %v921
    %v1082 = vpop.f32.mrb[0].mxu0
    %v1083 = vadd.f32 0.0, %v1082
    %v1084 = vpop.f32.mrb[0].mxu0
    %1085 = vmatprep.mubr.f32.mxu0 0.0
    %1086 = vmatmul.mubr.f32.gmra.mrb[0].mxu0 %v926
    %v1087 = vpop.f32.mrb[0].mxu0
    %v1088 = vadd.f32 0.0, %v1087
    %v1089 = vpop.f32.mrb[0].mxu0
    %1090 = vmatprep.mubr.f32.mxu0 0.0
    %1091 = vmatmul.mubr.f32.gmra.mrb[0].mxu0 %v931
    %v1092 = vpop.f32.mrb[0].mxu0
    %v1093 = vadd.f32 0.0, %v1092
    %v1094 = vpop.f32.mrb[0].mxu0
    %1095 = vmatprep.mubr.f32.mxu0 0.0
    %1096 = vmatmul.mubr.f32.gmra.mrb[0].mxu0 %v936
    %v1097 = vpop.f32.mrb[0].mxu0
    %v1098 = vadd.f32 0.0, %v1097
    %v1099 = vpop.f32.mrb[0].mxu0
    %1100 = vmatprep.mubr.f32.mxu0 0.0
    %1101 = vmatmul.mubr.f32.gmra.mrb[0].mxu0 %v941
    %v1102 = vpop.f32.mrb[0].mxu0
    %v1103 = vadd.f32 0.0, %v1102
    %v1104 = vpop.f32.mrb[0].mxu0
    %1105 = vmatprep.mubr.f32.mxu0 0.0
    %1106 = vmatmul.mubr.f32.gmra.mrb[0].mxu0 %v946
    %v1107 = vpop.f32.mrb[0].mxu0
    %v1108 = vadd.f32 0.0, %v1107
    %v1109 = vpop.f32.mrb[0].mxu0
    %1110 = vmatprep.mubr.f32.mxu0 0.0
    %1111 = vmatmul.mubr.f32.gmra.mrb[0].mxu0 %v951
    %v1112 = vpop.f32.mrb[0].mxu0
    %v1113 = vadd.f32 0.0, %v1112
    %v1114 = vpop.f32.mrb[0].mxu0
    %1115 = vmatprep.mubr.f32.mxu0 0.0
    %1116 = vmatmul.mubr.f32.gmra.mrb[0].mxu0 %v956
    %v1117 = vpop.f32.mrb[0].mxu0
    %v1118 = vadd.f32 0.0, %v1117
    %v1119 = vpop.f32.mrb[0].mxu0
    %1120 = vmatprep.mubr.f32.mxu0 0.0
    %1121 = vmatmul.mubr.f32.gmra.mrb[0].mxu0 %v961
    %v1122 = vpop.f32.mrb[0].mxu0
    %v1123 = vadd.f32 0.0, %v1122
    %v1124 = vpop.f32.mrb[0].mxu0
    %1125 = vmatprep.mubr.f32.mxu0 0.0
    %1126 = vmatmul.mubr.f32.gmra.mrb[0].mxu0 %v966
    %v1127 = vpop.f32.mrb[0].mxu0
    %v1128 = vadd.f32 0.0, %v1127
    %v1129 = vpop.f32.mrb[0].mxu0
    %1130 = vmatprep.mubr.f32.mxu0 0.0
    %1131 = vmatmul.mubr.f32.gmra.mrb[0].mxu0 %v971
    %v1132 = vpop.f32.mrb[0].mxu0
    %v1133 = vadd.f32 0.0, %v1132
    %v1134 = vpop.f32.mrb[0].mxu0
    %1135 = vmatprep.mubr.f32.mxu0 0.0
    %1136 = vmatmul.mubr.f32.gmra.mrb[0].mxu0 %v976
    %v1137 = vpop.f32.mrb[0].mxu0
    %v1138 = vadd.f32 0.0, %v1137
    %v1139 = vpop.f32.mrb[0].mxu0
    %1140 = vmatprep.mubr.f32.mxu0 0.0
    %1141 = vmatmul.mubr.f32.gmra.mrb[0].mxu0 %v981
    %v1142 = vpop.f32.mrb[0].mxu0
    %v1143 = vadd.f32 0.0, %v1142
    %v1144 = vpop.f32.mrb[0].mxu0
    %1145 = vmatprep.mubr.f32.mxu0 0.0
    %1146 = vmatmul.mubr.f32.gmra.mrb[0].mxu0 %v986
    %v1147 = vpop.f32.mrb[0].mxu0
    %v1148 = vadd.f32 0.0, %v1147
    %v1149 = vpop.f32.mrb[0].mxu0
    %1150 = vdwg.mxu0
    %1151 = vmatprep.subr.mxu0 0.0
    %1152 = vmatpush1.msra.mxu0 %v618
    %1153 = vmatprep.subr.mxu0 0.0
    %1154 = vmatpush1.msra.mxu0 %v619
    %1155 = vmatprep.subr.mxu0 0.0
    %1156 = vmatpush1.msra.mxu0 %v620
    %1157 = vmatprep.subr.mxu0 0.0
    %1158 = vmatpush1.msra.mxu0 %v621
    %1159 = vmatprep.subr.mxu0 0.0
    %1160 = vmatpush1.msra.mxu0 %v622
    %1161 = vmatprep.subr.mxu0 0.0
    %1162 = vmatpush1.msra.mxu0 %v623
    %1163 = vmatprep.subr.mxu0 0.0
    %1164 = vmatpush1.msra.mxu0 %v624
    %1165 = vmatprep.subr.mxu0 0.0
    %1166 = vmatpush1.msra.mxu0 %v625
    %1167 = vmatprep.subr.mxu0 0.0
    %1168 = vmatpush1.msra.mxu0 %v626
    %1169 = vmatprep.subr.mxu0 0.0
    %1170 = vmatpush1.msra.mxu0 %v627
    %1171 = vmatprep.subr.mxu0 0.0
    %1172 = vmatpush1.msra.mxu0 %v628
    %1173 = vmatprep.subr.mxu0 0.0
    %1174 = vmatpush1.msra.mxu0 %v629
    %1175 = vmatprep.subr.mxu0 0.0
    %1176 = vmatpush1.msra.mxu0 %v630
    %1177 = vmatprep.subr.mxu0 0.0
    %1178 = vmatpush1.msra.mxu0 %v631
    %1179 = vmatprep.subr.mxu0 0.0
    %1180 = vmatpush1.msra.mxu0 %v632
    %1181 = vmatprep.subr.mxu0 0.0
    %1182 = vmatpush1.msra.mxu0 %v633
    %1183 = vmatprep.subr.mxu0 0.0
    %1184 = vmatpush1.msra.mxu0 0.0
    %1185 = vmatprep.subr.mxu0 0.0
    %1186 = vmatpush1.msra.mxu0 0.0
    %1187 = vmatprep.subr.mxu0 0.0
    %1188 = vmatpush1.msra.mxu0 0.0
    %1189 = vmatprep.subr.mxu0 0.0
    %1190 = vmatpush1.msra.mxu0 0.0
    %1191 = vmatprep.subr.mxu0 0.0
    %1192 = vmatpush1.msra.mxu0 0.0
    %1193 = vmatprep.subr.mxu0 0.0
    %1194 = vmatpush1.msra.mxu0 0.0
    %1195 = vmatprep.subr.mxu0 0.0
    %1196 = vmatpush1.msra.mxu0 0.0
    %1197 = vmatprep.subr.mxu0 0.0
    %1198 = vmatpush1.msra.mxu0 0.0
    %1199 = vmatprep.subr.mxu0 0.0
    %1200 = vmatpush1.msra.mxu0 0.0
    %1201 = vmatprep.subr.mxu0 0.0
    %1202 = vmatpush1.msra.mxu0 0.0
    %1203 = vmatprep.subr.mxu0 0.0
    %1204 = vmatpush1.msra.mxu0 0.0
    %1205 = vmatprep.subr.mxu0 0.0
    %1206 = vmatpush1.msra.mxu0 0.0
    %1207 = vmatprep.subr.mxu0 0.0
    %1208 = vmatpush1.msra.mxu0 0.0
    %1209 = vmatprep.subr.mxu0 0.0
    %1210 = vmatpush1.msra.mxu0 0.0
    %1211 = vmatprep.subr.mxu0 0.0
    %1212 = vmatpush1.msra.mxu0 0.0
    %1213 = vmatprep.subr.mxu0 0.0
    %1214 = vmatpush1.msra.mxu0 0.0
    %1215 = vmatprep.mubr.f32.mxu0 0.0
    %1216 = vmatmul.mubr.f32.gmra.mrb[0].mxu0 %v540
    %v1217 = vpop.f32.mrb[0].mxu0
    %v1218 = vadd.f32 %v1073, %v1217
    %v1219 = vpop.f32.mrb[0].mxu0
    %1220 = vmatprep.mubr.f32.mxu0 0.0
    %1221 = vmatmul.mubr.f32.gmra.mrb[0].mxu0 %v545
    %v1222 = vpop.f32.mrb[0].mxu0
    %v1223 = vadd.f32 %v1078, %v1222
    %v1224 = vpop.f32.mrb[0].mxu0
    %1225 = vmatprep.mubr.f32.mxu0 0.0
    %1226 = vmatmul.mubr.f32.gmra.mrb[0].mxu0 %v550
    %v1227 = vpop.f32.mrb[0].mxu0
    %v1228 = vadd.f32 %v1083, %v1227
    %v1229 = vpop.f32.mrb[0].mxu0
    %1230 = vmatprep.mubr.f32.mxu0 0.0
    %1231 = vmatmul.mubr.f32.gmra.mrb[0].mxu0 %v555
    %v1232 = vpop.f32.mrb[0].mxu0
    %v1233 = vadd.f32 %v1088, %v1232
    %v1234 = vpop.f32.mrb[0].mxu0
    %1235 = vmatprep.mubr.f32.mxu0 0.0
    %1236 = vmatmul.mubr.f32.gmra.mrb[0].mxu0 %v560
    %v1237 = vpop.f32.mrb[0].mxu0
    %v1238 = vadd.f32 %v1093, %v1237
    %v1239 = vpop.f32.mrb[0].mxu0
    %1240 = vmatprep.mubr.f32.mxu0 0.0
    %1241 = vmatmul.mubr.f32.gmra.mrb[0].mxu0 %v565
    %v1242 = vpop.f32.mrb[0].mxu0
    %v1243 = vadd.f32 %v1098, %v1242
    %v1244 = vpop.f32.mrb[0].mxu0
    %1245 = vmatprep.mubr.f32.mxu0 0.0
    %1246 = vmatmul.mubr.f32.gmra.mrb[0].mxu0 %v570
    %v1247 = vpop.f32.mrb[0].mxu0
    %v1248 = vadd.f32 %v1103, %v1247
    %v1249 = vpop.f32.mrb[0].mxu0
    %1250 = vmatprep.mubr.f32.mxu0 0.0
    %1251 = vmatmul.mubr.f32.gmra.mrb[0].mxu0 %v575
    %v1252 = vpop.f32.mrb[0].mxu0
    %v1253 = vadd.f32 %v1108, %v1252
    %v1254 = vpop.f32.mrb[0].mxu0
    %1255 = vmatprep.mubr.f32.mxu0 0.0
    %1256 = vmatmul.mubr.f32.gmra.mrb[0].mxu0 %v580
    %v1257 = vpop.f32.mrb[0].mxu0
    %v1258 = vadd.f32 %v1113, %v1257
    %v1259 = vpop.f32.mrb[0].mxu0
    %1260 = vmatprep.mubr.f32.mxu0 0.0
    %1261 = vmatmul.mubr.f32.gmra.mrb[0].mxu0 %v585
    %v1262 = vpop.f32.mrb[0].mxu0
    %v1263 = vadd.f32 %v1118, %v1262
    %v1264 = vpop.f32.mrb[0].mxu0
    %1265 = vmatprep.mubr.f32.mxu0 0.0
    %1266 = vmatmul.mubr.f32.gmra.mrb[0].mxu0 %v590
    %v1267 = vpop.f32.mrb[0].mxu0
    %v1268 = vadd.f32 %v1123, %v1267
    %v1269 = vpop.f32.mrb[0].mxu0
    %1270 = vmatprep.mubr.f32.mxu0 0.0
    %1271 = vmatmul.mubr.f32.gmra.mrb[0].mxu0 %v595
    %v1272 = vpop.f32.mrb[0].mxu0
    %v1273 = vadd.f32 %v1128, %v1272
    %v1274 = vpop.f32.mrb[0].mxu0
    %1275 = vmatprep.mubr.f32.mxu0 0.0
    %1276 = vmatmul.mubr.f32.gmra.mrb[0].mxu0 %v600
    %v1277 = vpop.f32.mrb[0].mxu0
    %v1278 = vadd.f32 %v1133, %v1277
    %v1279 = vpop.f32.mrb[0].mxu0
    %1280 = vmatprep.mubr.f32.mxu0 0.0
    %1281 = vmatmul.mubr.f32.gmra.mrb[0].mxu0 %v605
    %v1282 = vpop.f32.mrb[0].mxu0
    %v1283 = vadd.f32 %v1138, %v1282
    %v1284 = vpop.f32.mrb[0].mxu0
    %1285 = vmatprep.mubr.f32.mxu0 0.0
    %1286 = vmatmul.mubr.f32.gmra.mrb[0].mxu0 %v610
    %v1287 = vpop.f32.mrb[0].mxu0
    %v1288 = vadd.f32 %v1143, %v1287
    %v1289 = vpop.f32.mrb[0].mxu0
    %1290 = vmatprep.mubr.f32.mxu0 0.0
    %1291 = vmatmul.mubr.f32.gmra.mrb[0].mxu0 %v615
    %v1292 = vpop.f32.mrb[0].mxu0
    %v1293 = vadd.f32 %v1148, %v1292
    %v1294 = vpop.f32.mrb[0].mxu0
    %1295 = vdwg.mxu0
    %s1296 = scalar_lea.vmem [#allocation5], 1024
    %v1297 = vld [vmem:[%s1296] sm:$0xff]
    %v1298 = vld [vmem:[%s1296 + $0x8] sm:$0xff]
    %v1299 = vld [vmem:[%s1296 + $0x10] sm:$0xff]
    %v1300 = vld [vmem:[%s1296 + $0x18] sm:$0xff]
    %v1301 = vld [vmem:[%s1296 + $0x20] sm:$0xff]
    %v1302 = vld [vmem:[%s1296 + $0x28] sm:$0xff]
    %v1303 = vld [vmem:[%s1296 + $0x30] sm:$0xff]
    %v1304 = vld [vmem:[%s1296 + $0x38] sm:$0xff]
    %v1305 = vld [vmem:[%s1296 + $0x40] sm:$0xff]
    %v1306 = vld [vmem:[%s1296 + $0x48] sm:$0xff]
    %v1307 = vld [vmem:[%s1296 + $0x50] sm:$0xff]
    %v1308 = vld [vmem:[%s1296 + $0x58] sm:$0xff]
    %v1309 = vld [vmem:[%s1296 + $0x60] sm:$0xff]
    %v1310 = vld [vmem:[%s1296 + $0x68] sm:$0xff]
    %v1311 = vld [vmem:[%s1296 + $0x70] sm:$0xff]
    %v1312 = vld [vmem:[%s1296 + $0x78] sm:$0xff]
    %v1313 = vld [vmem:[%s1296 + $0x80] sm:$0xff]
    %v1314 = vld [vmem:[%s1296 + $0x88] sm:$0xff]
    %v1315 = vld [vmem:[%s1296 + $0x90] sm:$0xff]
    %v1316 = vld [vmem:[%s1296 + $0x98] sm:$0xff]
    %v1317 = vld [vmem:[%s1296 + $0xa0] sm:$0xff]
    %v1318 = vld [vmem:[%s1296 + $0xa8] sm:$0xff]
    %v1319 = vld [vmem:[%s1296 + $0xb0] sm:$0xff]
    %v1320 = vld [vmem:[%s1296 + $0xb8] sm:$0xff]
    %v1321 = vld [vmem:[%s1296 + $0xc0] sm:$0xff]
    %v1322 = vld [vmem:[%s1296 + $0xc8] sm:$0xff]
    %v1323 = vld [vmem:[%s1296 + $0xd0] sm:$0xff]
    %v1324 = vld [vmem:[%s1296 + $0xd8] sm:$0xff]
    %v1325 = vld [vmem:[%s1296 + $0xe0] sm:$0xff]
    %v1326 = vld [vmem:[%s1296 + $0xe8] sm:$0xff]
    %v1327 = vld [vmem:[%s1296 + $0xf0] sm:$0xff]
    %v1328 = vld [vmem:[%s1296 + $0xf8] sm:$0xff]
    %v1329 = vld [vmem:[%s1296 + $0x100] sm:$0xff]
    %v1330 = vld [vmem:[%s1296 + $0x108] sm:$0xff]
    %v1331 = vld [vmem:[%s1296 + $0x110] sm:$0xff]
    %v1332 = vld [vmem:[%s1296 + $0x118] sm:$0xff]
    %v1333 = vld [vmem:[%s1296 + $0x120] sm:$0xff]
    %v1334 = vld [vmem:[%s1296 + $0x128] sm:$0xff]
    %v1335 = vld [vmem:[%s1296 + $0x130] sm:$0xff]
    %v1336 = vld [vmem:[%s1296 + $0x138] sm:$0xff]
    %v1337 = vld [vmem:[%s1296 + $0x140] sm:$0xff]
    %v1338 = vld [vmem:[%s1296 + $0x148] sm:$0xff]
    %v1339 = vld [vmem:[%s1296 + $0x150] sm:$0xff]
    %v1340 = vld [vmem:[%s1296 + $0x158] sm:$0xff]
    %v1341 = vld [vmem:[%s1296 + $0x160] sm:$0xff]
    %v1342 = vld [vmem:[%s1296 + $0x168] sm:$0xff]
    %v1343 = vld [vmem:[%s1296 + $0x170] sm:$0xff]
    %v1344 = vld [vmem:[%s1296 + $0x178] sm:$0xff]
    %v1345 = vld [vmem:[%s1296 + $0x180] sm:$0xff]
    %v1346 = vld [vmem:[%s1296 + $0x188] sm:$0xff]
    %v1347 = vld [vmem:[%s1296 + $0x190] sm:$0xff]
    %v1348 = vld [vmem:[%s1296 + $0x198] sm:$0xff]
    %v1349 = vld [vmem:[%s1296 + $0x1a0] sm:$0xff]
    %v1350 = vld [vmem:[%s1296 + $0x1a8] sm:$0xff]
    %v1351 = vld [vmem:[%s1296 + $0x1b0] sm:$0xff]
    %v1352 = vld [vmem:[%s1296 + $0x1b8] sm:$0xff]
    %v1353 = vld [vmem:[%s1296 + $0x1c0] sm:$0xff]
    %v1354 = vld [vmem:[%s1296 + $0x1c8] sm:$0xff]
    %v1355 = vld [vmem:[%s1296 + $0x1d0] sm:$0xff]
    %v1356 = vld [vmem:[%s1296 + $0x1d8] sm:$0xff]
    %v1357 = vld [vmem:[%s1296 + $0x1e0] sm:$0xff]
    %v1358 = vld [vmem:[%s1296 + $0x1e8] sm:$0xff]
    %v1359 = vld [vmem:[%s1296 + $0x1f0] sm:$0xff]
    %v1360 = vld [vmem:[%s1296 + $0x1f8] sm:$0xff]
    %1361 = vmatprep.subr.mxu0 0.0
    %1362 = vmatpush1.msra.mxu0 %v200
    %1363 = vmatprep.subr.mxu0 0.0
    %1364 = vmatpush1.msra.mxu0 %v201
    %1365 = vmatprep.subr.mxu0 0.0
    %1366 = vmatpush1.msra.mxu0 %v202
    %1367 = vmatprep.subr.mxu0 0.0
    %1368 = vmatpush1.msra.mxu0 %v203
    %1369 = vmatprep.subr.mxu0 0.0
    %1370 = vmatpush1.msra.mxu0 %v204
    %1371 = vmatprep.subr.mxu0 0.0
    %1372 = vmatpush1.msra.mxu0 %v205
    %1373 = vmatprep.subr.mxu0 0.0
    %1374 = vmatpush1.msra.mxu0 %v206
    %1375 = vmatprep.subr.mxu0 0.0
    %1376 = vmatpush1.msra.mxu0 %v207
    %1377 = vmatprep.subr.mxu0 0.0
    %1378 = vmatpush1.msra.mxu0 %v208
    %1379 = vmatprep.subr.mxu0 0.0
    %1380 = vmatpush1.msra.mxu0 %v209
    %1381 = vmatprep.subr.mxu0 0.0
    %1382 = vmatpush1.msra.mxu0 %v210
    %1383 = vmatprep.subr.mxu0 0.0
    %1384 = vmatpush1.msra.mxu0 %v211
    %1385 = vmatprep.subr.mxu0 0.0
    %1386 = vmatpush1.msra.mxu0 %v212
    %1387 = vmatprep.subr.mxu0 0.0
    %1388 = vmatpush1.msra.mxu0 %v213
    %1389 = vmatprep.subr.mxu0 0.0
    %1390 = vmatpush1.msra.mxu0 %v214
    %1391 = vmatprep.subr.mxu0 0.0
    %1392 = vmatpush1.msra.mxu0 %v215
    %1393 = vmatprep.subr.mxu0 0.0
    %1394 = vmatpush1.msra.mxu0 %v216
    %1395 = vmatprep.subr.mxu0 0.0
    %1396 = vmatpush1.msra.mxu0 %v217
    %1397 = vmatprep.subr.mxu0 0.0
    %1398 = vmatpush1.msra.mxu0 %v218
    %1399 = vmatprep.subr.mxu0 0.0
    %1400 = vmatpush1.msra.mxu0 %v219
    %1401 = vmatprep.subr.mxu0 0.0
    %1402 = vmatpush1.msra.mxu0 %v220
    %1403 = vmatprep.subr.mxu0 0.0
    %1404 = vmatpush1.msra.mxu0 %v221
    %1405 = vmatprep.subr.mxu0 0.0
    %1406 = vmatpush1.msra.mxu0 %v222
    %1407 = vmatprep.subr.mxu0 0.0
    %1408 = vmatpush1.msra.mxu0 %v223
    %1409 = vmatprep.subr.mxu0 0.0
    %1410 = vmatpush1.msra.mxu0 %v224
    %1411 = vmatprep.subr.mxu0 0.0
    %1412 = vmatpush1.msra.mxu0 %v225
    %1413 = vmatprep.subr.mxu0 0.0
    %1414 = vmatpush1.msra.mxu0 %v226
    %1415 = vmatprep.subr.mxu0 0.0
    %1416 = vmatpush1.msra.mxu0 %v227
    %1417 = vmatprep.subr.mxu0 0.0
    %1418 = vmatpush1.msra.mxu0 %v228
    %1419 = vmatprep.subr.mxu0 0.0
    %1420 = vmatpush1.msra.mxu0 %v229
    %1421 = vmatprep.subr.mxu0 0.0
    %1422 = vmatpush1.msra.mxu0 %v230
    %1423 = vmatprep.subr.mxu0 0.0
    %1424 = vmatpush1.msra.mxu0 %v231
    %1425 = vmatprep.mubr.f32.mxu0 %v1298
    %1426 = vmatmul.mubr.f32.gmra.mrb[0].mxu0 %v1297
    %v1427 = vpop.f32.mrb[0].mxu0
    %v1428 = vadd.f32 0.0, %v1427
    %v1429 = vpop.f32.mrb[0].mxu0
    %1430 = vmatprep.mubr.f32.mxu0 %v1302
    %1431 = vmatmul.mubr.f32.gmra.mrb[0].mxu0 %v1301
    %v1432 = vpop.f32.mrb[0].mxu0
    %v1433 = vadd.f32 0.0, %v1432
    %v1434 = vpop.f32.mrb[0].mxu0
    %1435 = vmatprep.mubr.f32.mxu0 %v1306
    %1436 = vmatmul.mubr.f32.gmra.mrb[0].mxu0 %v1305
    %v1437 = vpop.f32.mrb[0].mxu0
    %v1438 = vadd.f32 0.0, %v1437
    %v1439 = vpop.f32.mrb[0].mxu0
    %1440 = vmatprep.mubr.f32.mxu0 %v1310
    %1441 = vmatmul.mubr.f32.gmra.mrb[0].mxu0 %v1309
    %v1442 = vpop.f32.mrb[0].mxu0
    %v1443 = vadd.f32 0.0, %v1442
    %v1444 = vpop.f32.mrb[0].mxu0
    %1445 = vmatprep.mubr.f32.mxu0 %v1314
    %1446 = vmatmul.mubr.f32.gmra.mrb[0].mxu0 %v1313
    %v1447 = vpop.f32.mrb[0].mxu0
    %v1448 = vadd.f32 0.0, %v1447
    %v1449 = vpop.f32.mrb[0].mxu0
    %1450 = vmatprep.mubr.f32.mxu0 %v1318
    %1451 = vmatmul.mubr.f32.gmra.mrb[0].mxu0 %v1317
    %v1452 = vpop.f32.mrb[0].mxu0
    %v1453 = vadd.f32 0.0, %v1452
    %v1454 = vpop.f32.mrb[0].mxu0
    %1455 = vmatprep.mubr.f32.mxu0 %v1322
    %1456 = vmatmul.mubr.f32.gmra.mrb[0].mxu0 %v1321
    %v1457 = vpop.f32.mrb[0].mxu0
    %v1458 = vadd.f32 0.0, %v1457
    %v1459 = vpop.f32.mrb[0].mxu0
    %1460 = vmatprep.mubr.f32.mxu0 %v1326
    %1461 = vmatmul.mubr.f32.gmra.mrb[0].mxu0 %v1325
    %v1462 = vpop.f32.mrb[0].mxu0
    %v1463 = vadd.f32 0.0, %v1462
    %v1464 = vpop.f32.mrb[0].mxu0
    %1465 = vmatprep.mubr.f32.mxu0 %v1330
    %1466 = vmatmul.mubr.f32.gmra.mrb[0].mxu0 %v1329
    %v1467 = vpop.f32.mrb[0].mxu0
    %v1468 = vadd.f32 0.0, %v1467
    %v1469 = vpop.f32.mrb[0].mxu0
    %1470 = vmatprep.mubr.f32.mxu0 %v1334
    %1471 = vmatmul.mubr.f32.gmra.mrb[0].mxu0 %v1333
    %v1472 = vpop.f32.mrb[0].mxu0
    %v1473 = vadd.f32 0.0, %v1472
    %v1474 = vpop.f32.mrb[0].mxu0
    %1475 = vmatprep.mubr.f32.mxu0 %v1338
    %1476 = vmatmul.mubr.f32.gmra.mrb[0].mxu0 %v1337
    %v1477 = vpop.f32.mrb[0].mxu0
    %v1478 = vadd.f32 0.0, %v1477
    %v1479 = vpop.f32.mrb[0].mxu0
    %1480 = vmatprep.mubr.f32.mxu0 %v1342
    %1481 = vmatmul.mubr.f32.gmra.mrb[0].mxu0 %v1341
    %v1482 = vpop.f32.mrb[0].mxu0
    %v1483 = vadd.f32 0.0, %v1482
    %v1484 = vpop.f32.mrb[0].mxu0
    %1485 = vmatprep.mubr.f32.mxu0 %v1346
    %1486 = vmatmul.mubr.f32.gmra.mrb[0].mxu0 %v1345
    %v1487 = vpop.f32.mrb[0].mxu0
    %v1488 = vadd.f32 0.0, %v1487
    %v1489 = vpop.f32.mrb[0].mxu0
    %1490 = vmatprep.mubr.f32.mxu0 %v1350
    %1491 = vmatmul.mubr.f32.gmra.mrb[0].mxu0 %v1349
    %v1492 = vpop.f32.mrb[0].mxu0
    %v1493 = vadd.f32 0.0, %v1492
    %v1494 = vpop.f32.mrb[0].mxu0
    %1495 = vmatprep.mubr.f32.mxu0 %v1354
    %1496 = vmatmul.mubr.f32.gmra.mrb[0].mxu0 %v1353
    %v1497 = vpop.f32.mrb[0].mxu0
    %v1498 = vadd.f32 0.0, %v1497
    %v1499 = vpop.f32.mrb[0].mxu0
    %1500 = vmatprep.mubr.f32.mxu0 %v1358
    %1501 = vmatmul.mubr.f32.gmra.mrb[0].mxu0 %v1357
    %v1502 = vpop.f32.mrb[0].mxu0
    %v1503 = vadd.f32 0.0, %v1502
    %v1504 = vpop.f32.mrb[0].mxu0
    %1505 = vdwg.mxu0
    %1506 = vmatprep.subr.mxu0 0.0
    %1507 = vmatpush1.msra.mxu0 %v232
    %1508 = vmatprep.subr.mxu0 0.0
    %1509 = vmatpush1.msra.mxu0 %v233
    %1510 = vmatprep.subr.mxu0 0.0
    %1511 = vmatpush1.msra.mxu0 %v234
    %1512 = vmatprep.subr.mxu0 0.0
    %1513 = vmatpush1.msra.mxu0 %v235
    %1514 = vmatprep.subr.mxu0 0.0
    %1515 = vmatpush1.msra.mxu0 %v236
    %1516 = vmatprep.subr.mxu0 0.0
    %1517 = vmatpush1.msra.mxu0 %v237
    %1518 = vmatprep.subr.mxu0 0.0
    %1519 = vmatpush1.msra.mxu0 %v238
    %1520 = vmatprep.subr.mxu0 0.0
    %1521 = vmatpush1.msra.mxu0 %v239
    %1522 = vmatprep.subr.mxu0 0.0
    %1523 = vmatpush1.msra.mxu0 %v240
    %1524 = vmatprep.subr.mxu0 0.0
    %1525 = vmatpush1.msra.mxu0 %v241
    %1526 = vmatprep.subr.mxu0 0.0
    %1527 = vmatpush1.msra.mxu0 %v242
    %1528 = vmatprep.subr.mxu0 0.0
    %1529 = vmatpush1.msra.mxu0 %v243
    %1530 = vmatprep.subr.mxu0 0.0
    %1531 = vmatpush1.msra.mxu0 %v244
    %1532 = vmatprep.subr.mxu0 0.0
    %1533 = vmatpush1.msra.mxu0 %v245
    %1534 = vmatprep.subr.mxu0 0.0
    %1535 = vmatpush1.msra.mxu0 %v246
    %1536 = vmatprep.subr.mxu0 0.0
    %1537 = vmatpush1.msra.mxu0 %v247
    %1538 = vmatprep.subr.mxu0 0.0
    %1539 = vmatpush1.msra.mxu0 %v248
    %1540 = vmatprep.subr.mxu0 0.0
    %1541 = vmatpush1.msra.mxu0 %v249
    %1542 = vmatprep.subr.mxu0 0.0
    %1543 = vmatpush1.msra.mxu0 %v250
    %1544 = vmatprep.subr.mxu0 0.0
    %1545 = vmatpush1.msra.mxu0 %v251
    %1546 = vmatprep.subr.mxu0 0.0
    %1547 = vmatpush1.msra.mxu0 %v252
    %1548 = vmatprep.subr.mxu0 0.0
    %1549 = vmatpush1.msra.mxu0 %v253
    %1550 = vmatprep.subr.mxu0 0.0
    %1551 = vmatpush1.msra.mxu0 %v254
    %1552 = vmatprep.subr.mxu0 0.0
    %1553 = vmatpush1.msra.mxu0 %v255
    %1554 = vmatprep.subr.mxu0 0.0
    %1555 = vmatpush1.msra.mxu0 %v256
    %1556 = vmatprep.subr.mxu0 0.0
    %1557 = vmatpush1.msra.mxu0 %v257
    %1558 = vmatprep.subr.mxu0 0.0
    %1559 = vmatpush1.msra.mxu0 %v258
    %1560 = vmatprep.subr.mxu0 0.0
    %1561 = vmatpush1.msra.mxu0 %v259
    %1562 = vmatprep.subr.mxu0 0.0
    %1563 = vmatpush1.msra.mxu0 %v260
    %1564 = vmatprep.subr.mxu0 0.0
    %1565 = vmatpush1.msra.mxu0 %v261
    %1566 = vmatprep.subr.mxu0 0.0
    %1567 = vmatpush1.msra.mxu0 %v262
    %1568 = vmatprep.subr.mxu0 0.0
    %1569 = vmatpush1.msra.mxu0 %v263
    %1570 = vmatprep.mubr.f32.mxu0 %v1300
    %1571 = vmatmul.mubr.f32.gmra.mrb[0].mxu0 %v1299
    %v1572 = vpop.f32.mrb[0].mxu0
    %v1573 = vadd.f32 %v1428, %v1572
    %v1574 = vpop.f32.mrb[0].mxu0
    %1575 = vmatprep.mubr.f32.mxu0 %v1304
    %1576 = vmatmul.mubr.f32.gmra.mrb[0].mxu0 %v1303
    %v1577 = vpop.f32.mrb[0].mxu0
    %v1578 = vadd.f32 %v1433, %v1577
    %v1579 = vpop.f32.mrb[0].mxu0
    %1580 = vmatprep.mubr.f32.mxu0 %v1308
    %1581 = vmatmul.mubr.f32.gmra.mrb[0].mxu0 %v1307
    %v1582 = vpop.f32.mrb[0].mxu0
    %v1583 = vadd.f32 %v1438, %v1582
    %v1584 = vpop.f32.mrb[0].mxu0
    %1585 = vmatprep.mubr.f32.mxu0 %v1312
    %1586 = vmatmul.mubr.f32.gmra.mrb[0].mxu0 %v1311
    %v1587 = vpop.f32.mrb[0].mxu0
    %v1588 = vadd.f32 %v1443, %v1587
    %v1589 = vpop.f32.mrb[0].mxu0
    %1590 = vmatprep.mubr.f32.mxu0 %v1316
    %1591 = vmatmul.mubr.f32.gmra.mrb[0].mxu0 %v1315
    %v1592 = vpop.f32.mrb[0].mxu0
    %v1593 = vadd.f32 %v1448, %v1592
    %v1594 = vpop.f32.mrb[0].mxu0
    %1595 = vmatprep.mubr.f32.mxu0 %v1320
    %1596 = vmatmul.mubr.f32.gmra.mrb[0].mxu0 %v1319
    %v1597 = vpop.f32.mrb[0].mxu0
    %v1598 = vadd.f32 %v1453, %v1597
    %v1599 = vpop.f32.mrb[0].mxu0
    %1600 = vmatprep.mubr.f32.mxu0 %v1324
    %1601 = vmatmul.mubr.f32.gmra.mrb[0].mxu0 %v1323
    %v1602 = vpop.f32.mrb[0].mxu0
    %v1603 = vadd.f32 %v1458, %v1602
    %v1604 = vpop.f32.mrb[0].mxu0
    %1605 = vmatprep.mubr.f32.mxu0 %v1328
    %1606 = vmatmul.mubr.f32.gmra.mrb[0].mxu0 %v1327
    %v1607 = vpop.f32.mrb[0].mxu0
    %v1608 = vadd.f32 %v1463, %v1607
    %v1609 = vpop.f32.mrb[0].mxu0
    %1610 = vmatprep.mubr.f32.mxu0 %v1332
    %1611 = vmatmul.mubr.f32.gmra.mrb[0].mxu0 %v1331
    %v1612 = vpop.f32.mrb[0].mxu0
    %v1613 = vadd.f32 %v1468, %v1612
    %v1614 = vpop.f32.mrb[0].mxu0
    %1615 = vmatprep.mubr.f32.mxu0 %v1336
    %1616 = vmatmul.mubr.f32.gmra.mrb[0].mxu0 %v1335
    %v1617 = vpop.f32.mrb[0].mxu0
    %v1618 = vadd.f32 %v1473, %v1617
    %v1619 = vpop.f32.mrb[0].mxu0
    %1620 = vmatprep.mubr.f32.mxu0 %v1340
    %1621 = vmatmul.mubr.f32.gmra.mrb[0].mxu0 %v1339
    %v1622 = vpop.f32.mrb[0].mxu0
    %v1623 = vadd.f32 %v1478, %v1622
    %v1624 = vpop.f32.mrb[0].mxu0
    %1625 = vmatprep.mubr.f32.mxu0 %v1344
    %1626 = vmatmul.mubr.f32.gmra.mrb[0].mxu0 %v1343
    %v1627 = vpop.f32.mrb[0].mxu0
    %v1628 = vadd.f32 %v1483, %v1627
    %v1629 = vpop.f32.mrb[0].mxu0
    %1630 = vmatprep.mubr.f32.mxu0 %v1348
    %1631 = vmatmul.mubr.f32.gmra.mrb[0].mxu0 %v1347
    %v1632 = vpop.f32.mrb[0].mxu0
    %v1633 = vadd.f32 %v1488, %v1632
    %v1634 = vpop.f32.mrb[0].mxu0
    %1635 = vmatprep.mubr.f32.mxu0 %v1352
    %1636 = vmatmul.mubr.f32.gmra.mrb[0].mxu0 %v1351
    %v1637 = vpop.f32.mrb[0].mxu0
    %v1638 = vadd.f32 %v1493, %v1637
    %v1639 = vpop.f32.mrb[0].mxu0
    %1640 = vmatprep.mubr.f32.mxu0 %v1356
    %1641 = vmatmul.mubr.f32.gmra.mrb[0].mxu0 %v1355
    %v1642 = vpop.f32.mrb[0].mxu0
    %v1643 = vadd.f32 %v1498, %v1642
    %v1644 = vpop.f32.mrb[0].mxu0
    %1645 = vmatprep.mubr.f32.mxu0 %v1360
    %1646 = vmatmul.mubr.f32.gmra.mrb[0].mxu0 %v1359
    %v1647 = vpop.f32.mrb[0].mxu0
    %v1648 = vadd.f32 %v1503, %v1647
    %v1649 = vpop.f32.mrb[0].mxu0
    %1650 = vdwg.mxu0
    %s1651 = scalar_lea.vmem [#allocation10], 256
    %v1652 = vld [vmem:[%s1651] sm:$0xff]
    %v1653 = vld [vmem:[%s1651 + $0x8] sm:$0xff]
    %v1654 = vld [vmem:[%s1651 + $0x10] sm:$0xff]
    %v1655 = vld [vmem:[%s1651 + $0x18] sm:$0xff]
    %v1656 = vld [vmem:[%s1651 + $0x20] sm:$0xff]
    %v1657 = vld [vmem:[%s1651 + $0x28] sm:$0xff]
    %v1658 = vld [vmem:[%s1651 + $0x30] sm:$0xff]
    %v1659 = vld [vmem:[%s1651 + $0x38] sm:$0xff]
    %v1660 = vld [vmem:[%s1651 + $0x40] sm:$0xff]
    %v1661 = vld [vmem:[%s1651 + $0x48] sm:$0xff]
    %v1662 = vld [vmem:[%s1651 + $0x50] sm:$0xff]
    %v1663 = vld [vmem:[%s1651 + $0x58] sm:$0xff]
    %v1664 = vld [vmem:[%s1651 + $0x60] sm:$0xff]
    %v1665 = vld [vmem:[%s1651 + $0x68] sm:$0xff]
    %v1666 = vld [vmem:[%s1651 + $0x70] sm:$0xff]
    %v1667 = vld [vmem:[%s1651 + $0x78] sm:$0xff]
    %1668 = vmatprep.subr.mxu0 0.0
    %1669 = vmatpush1.msra.mxu0 %v1652
    %1670 = vmatprep.subr.mxu0 0.0
    %1671 = vmatpush1.msra.mxu0 %v1653
    %1672 = vmatprep.subr.mxu0 0.0
    %1673 = vmatpush1.msra.mxu0 %v1654
    %1674 = vmatprep.subr.mxu0 0.0
    %1675 = vmatpush1.msra.mxu0 %v1655
    %1676 = vmatprep.subr.mxu0 0.0
    %1677 = vmatpush1.msra.mxu0 %v1656
    %1678 = vmatprep.subr.mxu0 0.0
    %1679 = vmatpush1.msra.mxu0 %v1657
    %1680 = vmatprep.subr.mxu0 0.0
    %1681 = vmatpush1.msra.mxu0 %v1658
    %1682 = vmatprep.subr.mxu0 0.0
    %1683 = vmatpush1.msra.mxu0 %v1659
    %1684 = vmatprep.subr.mxu0 0.0
    %1685 = vmatpush1.msra.mxu0 %v1660
    %1686 = vmatprep.subr.mxu0 0.0
    %1687 = vmatpush1.msra.mxu0 %v1661
    %1688 = vmatprep.subr.mxu0 0.0
    %1689 = vmatpush1.msra.mxu0 %v1662
    %1690 = vmatprep.subr.mxu0 0.0
    %1691 = vmatpush1.msra.mxu0 %v1663
    %1692 = vmatprep.subr.mxu0 0.0
    %1693 = vmatpush1.msra.mxu0 %v1664
    %1694 = vmatprep.subr.mxu0 0.0
    %1695 = vmatpush1.msra.mxu0 %v1665
    %1696 = vmatprep.subr.mxu0 0.0
    %1697 = vmatpush1.msra.mxu0 %v1666
    %1698 = vmatprep.subr.mxu0 0.0
    %1699 = vmatpush1.msra.mxu0 %v1667
    %1700 = vmatprep.subr.mxu0 0.0
    %1701 = vmatpush1.msra.mxu0 0.0
    %1702 = vmatprep.subr.mxu0 0.0
    %1703 = vmatpush1.msra.mxu0 0.0
    %1704 = vmatprep.subr.mxu0 0.0
    %1705 = vmatpush1.msra.mxu0 0.0
    %1706 = vmatprep.subr.mxu0 0.0
    %1707 = vmatpush1.msra.mxu0 0.0
    %1708 = vmatprep.subr.mxu0 0.0
    %1709 = vmatpush1.msra.mxu0 0.0
    %1710 = vmatprep.subr.mxu0 0.0
    %1711 = vmatpush1.msra.mxu0 0.0
    %1712 = vmatprep.subr.mxu0 0.0
    %1713 = vmatpush1.msra.mxu0 0.0
    %1714 = vmatprep.subr.mxu0 0.0
    %1715 = vmatpush1.msra.mxu0 0.0
    %1716 = vmatprep.subr.mxu0 0.0
    %1717 = vmatpush1.msra.mxu0 0.0
    %1718 = vmatprep.subr.mxu0 0.0
    %1719 = vmatpush1.msra.mxu0 0.0
    %1720 = vmatprep.subr.mxu0 0.0
    %1721 = vmatpush1.msra.mxu0 0.0
    %1722 = vmatprep.subr.mxu0 0.0
    %1723 = vmatpush1.msra.mxu0 0.0
    %1724 = vmatprep.subr.mxu0 0.0
    %1725 = vmatpush1.msra.mxu0 0.0
    %1726 = vmatprep.subr.mxu0 0.0
    %1727 = vmatpush1.msra.mxu0 0.0
    %1728 = vmatprep.subr.mxu0 0.0
    %1729 = vmatpush1.msra.mxu0 0.0
    %1730 = vmatprep.subr.mxu0 0.0
    %1731 = vmatpush1.msra.mxu0 0.0
    %1732 = vmatprep.mubr.f32.mxu0 0.0
    %1733 = vmatmul.mubr.f32.gmra.mrb[0].mxu0 %v1573
    %v1734 = vpop.f32.mrb[0].mxu0
    %v1735 = vadd.f32 0.0, %v1734
    %v1736 = vpop.f32.mrb[0].mxu0
    %1737 = vmatprep.mubr.f32.mxu0 0.0
    %1738 = vmatmul.mubr.f32.gmra.mrb[0].mxu0 %v1578
    %v1739 = vpop.f32.mrb[0].mxu0
    %v1740 = vadd.f32 0.0, %v1739
    %v1741 = vpop.f32.mrb[0].mxu0
    %1742 = vmatprep.mubr.f32.mxu0 0.0
    %1743 = vmatmul.mubr.f32.gmra.mrb[0].mxu0 %v1583
    %v1744 = vpop.f32.mrb[0].mxu0
    %v1745 = vadd.f32 0.0, %v1744
    %v1746 = vpop.f32.mrb[0].mxu0
    %1747 = vmatprep.mubr.f32.mxu0 0.0
    %1748 = vmatmul.mubr.f32.gmra.mrb[0].mxu0 %v1588
    %v1749 = vpop.f32.mrb[0].mxu0
    %v1750 = vadd.f32 0.0, %v1749
    %v1751 = vpop.f32.mrb[0].mxu0
    %1752 = vmatprep.mubr.f32.mxu0 0.0
    %1753 = vmatmul.mubr.f32.gmra.mrb[0].mxu0 %v1593
    %v1754 = vpop.f32.mrb[0].mxu0
    %v1755 = vadd.f32 0.0, %v1754
    %v1756 = vpop.f32.mrb[0].mxu0
    %1757 = vmatprep.mubr.f32.mxu0 0.0
    %1758 = vmatmul.mubr.f32.gmra.mrb[0].mxu0 %v1598
    %v1759 = vpop.f32.mrb[0].mxu0
    %v1760 = vadd.f32 0.0, %v1759
    %v1761 = vpop.f32.mrb[0].mxu0
    %1762 = vmatprep.mubr.f32.mxu0 0.0
    %1763 = vmatmul.mubr.f32.gmra.mrb[0].mxu0 %v1603
    %v1764 = vpop.f32.mrb[0].mxu0
    %v1765 = vadd.f32 0.0, %v1764
    %v1766 = vpop.f32.mrb[0].mxu0
    %1767 = vmatprep.mubr.f32.mxu0 0.0
    %1768 = vmatmul.mubr.f32.gmra.mrb[0].mxu0 %v1608
    %v1769 = vpop.f32.mrb[0].mxu0
    %v1770 = vadd.f32 0.0, %v1769
    %v1771 = vpop.f32.mrb[0].mxu0
    %1772 = vmatprep.mubr.f32.mxu0 0.0
    %1773 = vmatmul.mubr.f32.gmra.mrb[0].mxu0 %v1613
    %v1774 = vpop.f32.mrb[0].mxu0
    %v1775 = vadd.f32 0.0, %v1774
    %v1776 = vpop.f32.mrb[0].mxu0
    %1777 = vmatprep.mubr.f32.mxu0 0.0
    %1778 = vmatmul.mubr.f32.gmra.mrb[0].mxu0 %v1618
    %v1779 = vpop.f32.mrb[0].mxu0
    %v1780 = vadd.f32 0.0, %v1779
    %v1781 = vpop.f32.mrb[0].mxu0
    %1782 = vmatprep.mubr.f32.mxu0 0.0
    %1783 = vmatmul.mubr.f32.gmra.mrb[0].mxu0 %v1623
    %v1784 = vpop.f32.mrb[0].mxu0
    %v1785 = vadd.f32 0.0, %v1784
    %v1786 = vpop.f32.mrb[0].mxu0
    %1787 = vmatprep.mubr.f32.mxu0 0.0
    %1788 = vmatmul.mubr.f32.gmra.mrb[0].mxu0 %v1628
    %v1789 = vpop.f32.mrb[0].mxu0
    %v1790 = vadd.f32 0.0, %v1789
    %v1791 = vpop.f32.mrb[0].mxu0
    %1792 = vmatprep.mubr.f32.mxu0 0.0
    %1793 = vmatmul.mubr.f32.gmra.mrb[0].mxu0 %v1633
    %v1794 = vpop.f32.mrb[0].mxu0
    %v1795 = vadd.f32 0.0, %v1794
    %v1796 = vpop.f32.mrb[0].mxu0
    %1797 = vmatprep.mubr.f32.mxu0 0.0
    %1798 = vmatmul.mubr.f32.gmra.mrb[0].mxu0 %v1638
    %v1799 = vpop.f32.mrb[0].mxu0
    %v1800 = vadd.f32 0.0, %v1799
    %v1801 = vpop.f32.mrb[0].mxu0
    %1802 = vmatprep.mubr.f32.mxu0 0.0
    %1803 = vmatmul.mubr.f32.gmra.mrb[0].mxu0 %v1643
    %v1804 = vpop.f32.mrb[0].mxu0
    %v1805 = vadd.f32 0.0, %v1804
    %v1806 = vpop.f32.mrb[0].mxu0
    %1807 = vmatprep.mubr.f32.mxu0 0.0
    %1808 = vmatmul.mubr.f32.gmra.mrb[0].mxu0 %v1648
    %v1809 = vpop.f32.mrb[0].mxu0
    %v1810 = vadd.f32 0.0, %v1809
    %v1811 = vpop.f32.mrb[0].mxu0
    %1812 = vdwg.mxu0
    %v1813 = vadd.f32 %v1218, %v1735
    %v1814 = vadd.f32 %v1223, %v1740
    %v1815 = vadd.f32 %v1228, %v1745
    %v1816 = vadd.f32 %v1233, %v1750
    %v1817 = vadd.f32 %v1238, %v1755
    %v1818 = vadd.f32 %v1243, %v1760
    %v1819 = vadd.f32 %v1248, %v1765
    %v1820 = vadd.f32 %v1253, %v1770
    %v1821 = vadd.f32 %v1258, %v1775
    %v1822 = vadd.f32 %v1263, %v1780
    %v1823 = vadd.f32 %v1268, %v1785
    %v1824 = vadd.f32 %v1273, %v1790
    %v1825 = vadd.f32 %v1278, %v1795
    %v1826 = vadd.f32 %v1283, %v1800
    %v1827 = vadd.f32 %v1288, %v1805
    %v1828 = vadd.f32 %v1293, %v1810
    %s1829 = scalar_lea.vmem [#allocation5], 1536
    %v1830 = vld [vmem:[%s1829] sm:$0xff]
    %v1831 = vld [vmem:[%s1829 + $0x8] sm:$0xff]
    %v1832 = vld [vmem:[%s1829 + $0x10] sm:$0xff]
    %v1833 = vld [vmem:[%s1829 + $0x18] sm:$0xff]
    %v1834 = vld [vmem:[%s1829 + $0x20] sm:$0xff]
    %v1835 = vld [vmem:[%s1829 + $0x28] sm:$0xff]
    %v1836 = vld [vmem:[%s1829 + $0x30] sm:$0xff]
    %v1837 = vld [vmem:[%s1829 + $0x38] sm:$0xff]
    %v1838 = vld [vmem:[%s1829 + $0x40] sm:$0xff]
    %v1839 = vld [vmem:[%s1829 + $0x48] sm:$0xff]
    %v1840 = vld [vmem:[%s1829 + $0x50] sm:$0xff]
    %v1841 = vld [vmem:[%s1829 + $0x58] sm:$0xff]
    %v1842 = vld [vmem:[%s1829 + $0x60] sm:$0xff]
    %v1843 = vld [vmem:[%s1829 + $0x68] sm:$0xff]
    %v1844 = vld [vmem:[%s1829 + $0x70] sm:$0xff]
    %v1845 = vld [vmem:[%s1829 + $0x78] sm:$0xff]
    %v1846 = vld [vmem:[%s1829 + $0x80] sm:$0xff]
    %v1847 = vld [vmem:[%s1829 + $0x88] sm:$0xff]
    %v1848 = vld [vmem:[%s1829 + $0x90] sm:$0xff]
    %v1849 = vld [vmem:[%s1829 + $0x98] sm:$0xff]
    %v1850 = vld [vmem:[%s1829 + $0xa0] sm:$0xff]
    %v1851 = vld [vmem:[%s1829 + $0xa8] sm:$0xff]
    %v1852 = vld [vmem:[%s1829 + $0xb0] sm:$0xff]
    %v1853 = vld [vmem:[%s1829 + $0xb8] sm:$0xff]
    %v1854 = vld [vmem:[%s1829 + $0xc0] sm:$0xff]
    %v1855 = vld [vmem:[%s1829 + $0xc8] sm:$0xff]
    %v1856 = vld [vmem:[%s1829 + $0xd0] sm:$0xff]
    %v1857 = vld [vmem:[%s1829 + $0xd8] sm:$0xff]
    %v1858 = vld [vmem:[%s1829 + $0xe0] sm:$0xff]
    %v1859 = vld [vmem:[%s1829 + $0xe8] sm:$0xff]
    %v1860 = vld [vmem:[%s1829 + $0xf0] sm:$0xff]
    %v1861 = vld [vmem:[%s1829 + $0xf8] sm:$0xff]
    %v1862 = vld [vmem:[%s1829 + $0x100] sm:$0xff]
    %v1863 = vld [vmem:[%s1829 + $0x108] sm:$0xff]
    %v1864 = vld [vmem:[%s1829 + $0x110] sm:$0xff]
    %v1865 = vld [vmem:[%s1829 + $0x118] sm:$0xff]
    %v1866 = vld [vmem:[%s1829 + $0x120] sm:$0xff]
    %v1867 = vld [vmem:[%s1829 + $0x128] sm:$0xff]
    %v1868 = vld [vmem:[%s1829 + $0x130] sm:$0xff]
    %v1869 = vld [vmem:[%s1829 + $0x138] sm:$0xff]
    %v1870 = vld [vmem:[%s1829 + $0x140] sm:$0xff]
    %v1871 = vld [vmem:[%s1829 + $0x148] sm:$0xff]
    %v1872 = vld [vmem:[%s1829 + $0x150] sm:$0xff]
    %v1873 = vld [vmem:[%s1829 + $0x158] sm:$0xff]
    %v1874 = vld [vmem:[%s1829 + $0x160] sm:$0xff]
    %v1875 = vld [vmem:[%s1829 + $0x168] sm:$0xff]
    %v1876 = vld [vmem:[%s1829 + $0x170] sm:$0xff]
    %v1877 = vld [vmem:[%s1829 + $0x178] sm:$0xff]
    %v1878 = vld [vmem:[%s1829 + $0x180] sm:$0xff]
    %v1879 = vld [vmem:[%s1829 + $0x188] sm:$0xff]
    %v1880 = vld [vmem:[%s1829 + $0x190] sm:$0xff]
    %v1881 = vld [vmem:[%s1829 + $0x198] sm:$0xff]
    %v1882 = vld [vmem:[%s1829 + $0x1a0] sm:$0xff]
    %v1883 = vld [vmem:[%s1829 + $0x1a8] sm:$0xff]
    %v1884 = vld [vmem:[%s1829 + $0x1b0] sm:$0xff]
    %v1885 = vld [vmem:[%s1829 + $0x1b8] sm:$0xff]
    %v1886 = vld [vmem:[%s1829 + $0x1c0] sm:$0xff]
    %v1887 = vld [vmem:[%s1829 + $0x1c8] sm:$0xff]
    %v1888 = vld [vmem:[%s1829 + $0x1d0] sm:$0xff]
    %v1889 = vld [vmem:[%s1829 + $0x1d8] sm:$0xff]
    %v1890 = vld [vmem:[%s1829 + $0x1e0] sm:$0xff]
    %v1891 = vld [vmem:[%s1829 + $0x1e8] sm:$0xff]
    %v1892 = vld [vmem:[%s1829 + $0x1f0] sm:$0xff]
    %v1893 = vld [vmem:[%s1829 + $0x1f8] sm:$0xff]
    %1894 = vmatprep.subr.mxu0 0.0
    %1895 = vmatpush1.msra.mxu0 %v200
    %1896 = vmatprep.subr.mxu0 0.0
    %1897 = vmatpush1.msra.mxu0 %v201
    %1898 = vmatprep.subr.mxu0 0.0
    %1899 = vmatpush1.msra.mxu0 %v202
    %1900 = vmatprep.subr.mxu0 0.0
    %1901 = vmatpush1.msra.mxu0 %v203
    %1902 = vmatprep.subr.mxu0 0.0
    %1903 = vmatpush1.msra.mxu0 %v204
    %1904 = vmatprep.subr.mxu0 0.0
    %1905 = vmatpush1.msra.mxu0 %v205
    %1906 = vmatprep.subr.mxu0 0.0
    %1907 = vmatpush1.msra.mxu0 %v206
    %1908 = vmatprep.subr.mxu0 0.0
    %1909 = vmatpush1.msra.mxu0 %v207
    %1910 = vmatprep.subr.mxu0 0.0
    %1911 = vmatpush1.msra.mxu0 %v208
    %1912 = vmatprep.subr.mxu0 0.0
    %1913 = vmatpush1.msra.mxu0 %v209
    %1914 = vmatprep.subr.mxu0 0.0
    %1915 = vmatpush1.msra.mxu0 %v210
    %1916 = vmatprep.subr.mxu0 0.0
    %1917 = vmatpush1.msra.mxu0 %v211
    %1918 = vmatprep.subr.mxu0 0.0
    %1919 = vmatpush1.msra.mxu0 %v212
    %1920 = vmatprep.subr.mxu0 0.0
    %1921 = vmatpush1.msra.mxu0 %v213
    %1922 = vmatprep.subr.mxu0 0.0
    %1923 = vmatpush1.msra.mxu0 %v214
    %1924 = vmatprep.subr.mxu0 0.0
    %1925 = vmatpush1.msra.mxu0 %v215
    %1926 = vmatprep.subr.mxu0 0.0
    %1927 = vmatpush1.msra.mxu0 %v216
    %1928 = vmatprep.subr.mxu0 0.0
    %1929 = vmatpush1.msra.mxu0 %v217
    %1930 = vmatprep.subr.mxu0 0.0
    %1931 = vmatpush1.msra.mxu0 %v218
    %1932 = vmatprep.subr.mxu0 0.0
    %1933 = vmatpush1.msra.mxu0 %v219
    %1934 = vmatprep.subr.mxu0 0.0
    %1935 = vmatpush1.msra.mxu0 %v220
    %1936 = vmatprep.subr.mxu0 0.0
    %1937 = vmatpush1.msra.mxu0 %v221
    %1938 = vmatprep.subr.mxu0 0.0
    %1939 = vmatpush1.msra.mxu0 %v222
    %1940 = vmatprep.subr.mxu0 0.0
    %1941 = vmatpush1.msra.mxu0 %v223
    %1942 = vmatprep.subr.mxu0 0.0
    %1943 = vmatpush1.msra.mxu0 %v224
    %1944 = vmatprep.subr.mxu0 0.0
    %1945 = vmatpush1.msra.mxu0 %v225
    %1946 = vmatprep.subr.mxu0 0.0
    %1947 = vmatpush1.msra.mxu0 %v226
    %1948 = vmatprep.subr.mxu0 0.0
    %1949 = vmatpush1.msra.mxu0 %v227
    %1950 = vmatprep.subr.mxu0 0.0
    %1951 = vmatpush1.msra.mxu0 %v228
    %1952 = vmatprep.subr.mxu0 0.0
    %1953 = vmatpush1.msra.mxu0 %v229
    %1954 = vmatprep.subr.mxu0 0.0
    %1955 = vmatpush1.msra.mxu0 %v230
    %1956 = vmatprep.subr.mxu0 0.0
    %1957 = vmatpush1.msra.mxu0 %v231
    %1958 = vmatprep.mubr.f32.mxu0 %v1831
    %1959 = vmatmul.mubr.f32.gmra.mrb[0].mxu0 %v1830
    %v1960 = vpop.f32.mrb[0].mxu0
    %v1961 = vadd.f32 0.0, %v1960
    %v1962 = vpop.f32.mrb[0].mxu0
    %1963 = vmatprep.mubr.f32.mxu0 %v1835
    %1964 = vmatmul.mubr.f32.gmra.mrb[0].mxu0 %v1834
    %v1965 = vpop.f32.mrb[0].mxu0
    %v1966 = vadd.f32 0.0, %v1965
    %v1967 = vpop.f32.mrb[0].mxu0
    %1968 = vmatprep.mubr.f32.mxu0 %v1839
    %1969 = vmatmul.mubr.f32.gmra.mrb[0].mxu0 %v1838
    %v1970 = vpop.f32.mrb[0].mxu0
    %v1971 = vadd.f32 0.0, %v1970
    %v1972 = vpop.f32.mrb[0].mxu0
    %1973 = vmatprep.mubr.f32.mxu0 %v1843
    %1974 = vmatmul.mubr.f32.gmra.mrb[0].mxu0 %v1842
    %v1975 = vpop.f32.mrb[0].mxu0
    %v1976 = vadd.f32 0.0, %v1975
    %v1977 = vpop.f32.mrb[0].mxu0
    %1978 = vmatprep.mubr.f32.mxu0 %v1847
    %1979 = vmatmul.mubr.f32.gmra.mrb[0].mxu0 %v1846
    %v1980 = vpop.f32.mrb[0].mxu0
    %v1981 = vadd.f32 0.0, %v1980
    %v1982 = vpop.f32.mrb[0].mxu0
    %1983 = vmatprep.mubr.f32.mxu0 %v1851
    %1984 = vmatmul.mubr.f32.gmra.mrb[0].mxu0 %v1850
    %v1985 = vpop.f32.mrb[0].mxu0
    %v1986 = vadd.f32 0.0, %v1985
    %v1987 = vpop.f32.mrb[0].mxu0
    %1988 = vmatprep.mubr.f32.mxu0 %v1855
    %1989 = vmatmul.mubr.f32.gmra.mrb[0].mxu0 %v1854
    %v1990 = vpop.f32.mrb[0].mxu0
    %v1991 = vadd.f32 0.0, %v1990
    %v1992 = vpop.f32.mrb[0].mxu0
    %1993 = vmatprep.mubr.f32.mxu0 %v1859
    %1994 = vmatmul.mubr.f32.gmra.mrb[0].mxu0 %v1858
    %v1995 = vpop.f32.mrb[0].mxu0
    %v1996 = vadd.f32 0.0, %v1995
    %v1997 = vpop.f32.mrb[0].mxu0
    %1998 = vmatprep.mubr.f32.mxu0 %v1863
    %1999 = vmatmul.mubr.f32.gmra.mrb[0].mxu0 %v1862
    %v2000 = vpop.f32.mrb[0].mxu0
    %v2001 = vadd.f32 0.0, %v2000
    %v2002 = vpop.f32.mrb[0].mxu0
    %2003 = vmatprep.mubr.f32.mxu0 %v1867
    %2004 = vmatmul.mubr.f32.gmra.mrb[0].mxu0 %v1866
    %v2005 = vpop.f32.mrb[0].mxu0
    %v2006 = vadd.f32 0.0, %v2005
    %v2007 = vpop.f32.mrb[0].mxu0
    %2008 = vmatprep.mubr.f32.mxu0 %v1871
    %2009 = vmatmul.mubr.f32.gmra.mrb[0].mxu0 %v1870
    %v2010 = vpop.f32.mrb[0].mxu0
    %v2011 = vadd.f32 0.0, %v2010
    %v2012 = vpop.f32.mrb[0].mxu0
    %2013 = vmatprep.mubr.f32.mxu0 %v1875
    %2014 = vmatmul.mubr.f32.gmra.mrb[0].mxu0 %v1874
    %v2015 = vpop.f32.mrb[0].mxu0
    %v2016 = vadd.f32 0.0, %v2015
    %v2017 = vpop.f32.mrb[0].mxu0
    %2018 = vmatprep.mubr.f32.mxu0 %v1879
    %2019 = vmatmul.mubr.f32.gmra.mrb[0].mxu0 %v1878
    %v2020 = vpop.f32.mrb[0].mxu0
    %v2021 = vadd.f32 0.0, %v2020
    %v2022 = vpop.f32.mrb[0].mxu0
    %2023 = vmatprep.mubr.f32.mxu0 %v1883
    %2024 = vmatmul.mubr.f32.gmra.mrb[0].mxu0 %v1882
    %v2025 = vpop.f32.mrb[0].mxu0
    %v2026 = vadd.f32 0.0, %v2025
    %v2027 = vpop.f32.mrb[0].mxu0
    %2028 = vmatprep.mubr.f32.mxu0 %v1887
    %2029 = vmatmul.mubr.f32.gmra.mrb[0].mxu0 %v1886
    %v2030 = vpop.f32.mrb[0].mxu0
    %v2031 = vadd.f32 0.0, %v2030
    %v2032 = vpop.f32.mrb[0].mxu0
    %2033 = vmatprep.mubr.f32.mxu0 %v1891
    %2034 = vmatmul.mubr.f32.gmra.mrb[0].mxu0 %v1890
    %v2035 = vpop.f32.mrb[0].mxu0
    %v2036 = vadd.f32 0.0, %v2035
    %v2037 = vpop.f32.mrb[0].mxu0
    %2038 = vdwg.mxu0
    %2039 = vmatprep.subr.mxu0 0.0
    %2040 = vmatpush1.msra.mxu0 %v232
    %2041 = vmatprep.subr.mxu0 0.0
    %2042 = vmatpush1.msra.mxu0 %v233
    %2043 = vmatprep.subr.mxu0 0.0
    %2044 = vmatpush1.msra.mxu0 %v234
    %2045 = vmatprep.subr.mxu0 0.0
    %2046 = vmatpush1.msra.mxu0 %v235
    %2047 = vmatprep.subr.mxu0 0.0
    %2048 = vmatpush1.msra.mxu0 %v236
    %2049 = vmatprep.subr.mxu0 0.0
    %2050 = vmatpush1.msra.mxu0 %v237
    %2051 = vmatprep.subr.mxu0 0.0
    %2052 = vmatpush1.msra.mxu0 %v238
    %2053 = vmatprep.subr.mxu0 0.0
    %2054 = vmatpush1.msra.mxu0 %v239
    %2055 = vmatprep.subr.mxu0 0.0
    %2056 = vmatpush1.msra.mxu0 %v240
    %2057 = vmatprep.subr.mxu0 0.0
    %2058 = vmatpush1.msra.mxu0 %v241
    %2059 = vmatprep.subr.mxu0 0.0
    %2060 = vmatpush1.msra.mxu0 %v242
    %2061 = vmatprep.subr.mxu0 0.0
    %2062 = vmatpush1.msra.mxu0 %v243
    %2063 = vmatprep.subr.mxu0 0.0
    %2064 = vmatpush1.msra.mxu0 %v244
    %2065 = vmatprep.subr.mxu0 0.0
    %2066 = vmatpush1.msra.mxu0 %v245
    %2067 = vmatprep.subr.mxu0 0.0
    %2068 = vmatpush1.msra.mxu0 %v246
    %2069 = vmatprep.subr.mxu0 0.0
    %2070 = vmatpush1.msra.mxu0 %v247
    %2071 = vmatprep.subr.mxu0 0.0
    %2072 = vmatpush1.msra.mxu0 %v248
    %2073 = vmatprep.subr.mxu0 0.0
    %2074 = vmatpush1.msra.mxu0 %v249
    %2075 = vmatprep.subr.mxu0 0.0
    %2076 = vmatpush1.msra.mxu0 %v250
    %2077 = vmatprep.subr.mxu0 0.0
    %2078 = vmatpush1.msra.mxu0 %v251
    %2079 = vmatprep.subr.mxu0 0.0
    %2080 = vmatpush1.msra.mxu0 %v252
    %2081 = vmatprep.subr.mxu0 0.0
    %2082 = vmatpush1.msra.mxu0 %v253
    %2083 = vmatprep.subr.mxu0 0.0
    %2084 = vmatpush1.msra.mxu0 %v254
    %2085 = vmatprep.subr.mxu0 0.0
    %2086 = vmatpush1.msra.mxu0 %v255
    %2087 = vmatprep.subr.mxu0 0.0
    %2088 = vmatpush1.msra.mxu0 %v256
    %2089 = vmatprep.subr.mxu0 0.0
    %2090 = vmatpush1.msra.mxu0 %v257
    %2091 = vmatprep.subr.mxu0 0.0
    %2092 = vmatpush1.msra.mxu0 %v258
    %2093 = vmatprep.subr.mxu0 0.0
    %2094 = vmatpush1.msra.mxu0 %v259
    %2095 = vmatprep.subr.mxu0 0.0
    %2096 = vmatpush1.msra.mxu0 %v260
    %2097 = vmatprep.subr.mxu0 0.0
    %2098 = vmatpush1.msra.mxu0 %v261
    %2099 = vmatprep.subr.mxu0 0.0
    %2100 = vmatpush1.msra.mxu0 %v262
    %2101 = vmatprep.subr.mxu0 0.0
    %2102 = vmatpush1.msra.mxu0 %v263
    %2103 = vmatprep.mubr.f32.mxu0 %v1833
    %2104 = vmatmul.mubr.f32.gmra.mrb[0].mxu0 %v1832
    %v2105 = vpop.f32.mrb[0].mxu0
    %v2106 = vadd.f32 %v1961, %v2105
    %v2107 = vpop.f32.mrb[0].mxu0
    %2108 = vmatprep.mubr.f32.mxu0 %v1837
    %2109 = vmatmul.mubr.f32.gmra.mrb[0].mxu0 %v1836
    %v2110 = vpop.f32.mrb[0].mxu0
    %v2111 = vadd.f32 %v1966, %v2110
    %v2112 = vpop.f32.mrb[0].mxu0
    %2113 = vmatprep.mubr.f32.mxu0 %v1841
    %2114 = vmatmul.mubr.f32.gmra.mrb[0].mxu0 %v1840
    %v2115 = vpop.f32.mrb[0].mxu0
    %v2116 = vadd.f32 %v1971, %v2115
    %v2117 = vpop.f32.mrb[0].mxu0
    %2118 = vmatprep.mubr.f32.mxu0 %v1845
    %2119 = vmatmul.mubr.f32.gmra.mrb[0].mxu0 %v1844
    %v2120 = vpop.f32.mrb[0].mxu0
    %v2121 = vadd.f32 %v1976, %v2120
    %v2122 = vpop.f32.mrb[0].mxu0
    %2123 = vmatprep.mubr.f32.mxu0 %v1849
    %2124 = vmatmul.mubr.f32.gmra.mrb[0].mxu0 %v1848
    %v2125 = vpop.f32.mrb[0].mxu0
    %v2126 = vadd.f32 %v1981, %v2125
    %v2127 = vpop.f32.mrb[0].mxu0
    %2128 = vmatprep.mubr.f32.mxu0 %v1853
    %2129 = vmatmul.mubr.f32.gmra.mrb[0].mxu0 %v1852
    %v2130 = vpop.f32.mrb[0].mxu0
    %v2131 = vadd.f32 %v1986, %v2130
    %v2132 = vpop.f32.mrb[0].mxu0
    %2133 = vmatprep.mubr.f32.mxu0 %v1857
    %2134 = vmatmul.mubr.f32.gmra.mrb[0].mxu0 %v1856
    %v2135 = vpop.f32.mrb[0].mxu0
    %v2136 = vadd.f32 %v1991, %v2135
    %v2137 = vpop.f32.mrb[0].mxu0
    %2138 = vmatprep.mubr.f32.mxu0 %v1861
    %2139 = vmatmul.mubr.f32.gmra.mrb[0].mxu0 %v1860
    %v2140 = vpop.f32.mrb[0].mxu0
    %v2141 = vadd.f32 %v1996, %v2140
    %v2142 = vpop.f32.mrb[0].mxu0
    %2143 = vmatprep.mubr.f32.mxu0 %v1865
    %2144 = vmatmul.mubr.f32.gmra.mrb[0].mxu0 %v1864
    %v2145 = vpop.f32.mrb[0].mxu0
    %v2146 = vadd.f32 %v2001, %v2145
    %v2147 = vpop.f32.mrb[0].mxu0
    %2148 = vmatprep.mubr.f32.mxu0 %v1869
    %2149 = vmatmul.mubr.f32.gmra.mrb[0].mxu0 %v1868
    %v2150 = vpop.f32.mrb[0].mxu0
    %v2151 = vadd.f32 %v2006, %v2150
    %v2152 = vpop.f32.mrb[0].mxu0
    %2153 = vmatprep.mubr.f32.mxu0 %v1873
    %2154 = vmatmul.mubr.f32.gmra.mrb[0].mxu0 %v1872
    %v2155 = vpop.f32.mrb[0].mxu0
    %v2156 = vadd.f32 %v2011, %v2155
    %v2157 = vpop.f32.mrb[0].mxu0
    %2158 = vmatprep.mubr.f32.mxu0 %v1877
    %2159 = vmatmul.mubr.f32.gmra.mrb[0].mxu0 %v1876
    %v2160 = vpop.f32.mrb[0].mxu0
    %v2161 = vadd.f32 %v2016, %v2160
    %v2162 = vpop.f32.mrb[0].mxu0
    %2163 = vmatprep.mubr.f32.mxu0 %v1881
    %2164 = vmatmul.mubr.f32.gmra.mrb[0].mxu0 %v1880
    %v2165 = vpop.f32.mrb[0].mxu0
    %v2166 = vadd.f32 %v2021, %v2165
    %v2167 = vpop.f32.mrb[0].mxu0
    %2168 = vmatprep.mubr.f32.mxu0 %v1885
    %2169 = vmatmul.mubr.f32.gmra.mrb[0].mxu0 %v1884
    %v2170 = vpop.f32.mrb[0].mxu0
    %v2171 = vadd.f32 %v2026, %v2170
    %v2172 = vpop.f32.mrb[0].mxu0
    %2173 = vmatprep.mubr.f32.mxu0 %v1889
    %2174 = vmatmul.mubr.f32.gmra.mrb[0].mxu0 %v1888
    %v2175 = vpop.f32.mrb[0].mxu0
    %v2176 = vadd.f32 %v2031, %v2175
    %v2177 = vpop.f32.mrb[0].mxu0
    %2178 = vmatprep.mubr.f32.mxu0 %v1893
    %2179 = vmatmul.mubr.f32.gmra.mrb[0].mxu0 %v1892
    %v2180 = vpop.f32.mrb[0].mxu0
    %v2181 = vadd.f32 %v2036, %v2180
    %v2182 = vpop.f32.mrb[0].mxu0
    %2183 = vdwg.mxu0
    %s2184 = scalar_lea.vmem [#allocation10], 384
    %v2185 = vld [vmem:[%s2184] sm:$0xff]
    %v2186 = vld [vmem:[%s2184 + $0x8] sm:$0xff]
    %v2187 = vld [vmem:[%s2184 + $0x10] sm:$0xff]
    %v2188 = vld [vmem:[%s2184 + $0x18] sm:$0xff]
    %v2189 = vld [vmem:[%s2184 + $0x20] sm:$0xff]
    %v2190 = vld [vmem:[%s2184 + $0x28] sm:$0xff]
    %v2191 = vld [vmem:[%s2184 + $0x30] sm:$0xff]
    %v2192 = vld [vmem:[%s2184 + $0x38] sm:$0xff]
    %v2193 = vld [vmem:[%s2184 + $0x40] sm:$0xff]
    %v2194 = vld [vmem:[%s2184 + $0x48] sm:$0xff]
    %v2195 = vld [vmem:[%s2184 + $0x50] sm:$0xff]
    %v2196 = vld [vmem:[%s2184 + $0x58] sm:$0xff]
    %v2197 = vld [vmem:[%s2184 + $0x60] sm:$0xff]
    %v2198 = vld [vmem:[%s2184 + $0x68] sm:$0xff]
    %v2199 = vld [vmem:[%s2184 + $0x70] sm:$0xff]
    %v2200 = vld [vmem:[%s2184 + $0x78] sm:$0xff]
    %2201 = vmatprep.subr.mxu0 0.0
    %2202 = vmatpush1.msra.mxu0 %v2185
    %2203 = vmatprep.subr.mxu0 0.0
    %2204 = vmatpush1.msra.mxu0 %v2186
    %2205 = vmatprep.subr.mxu0 0.0
    %2206 = vmatpush1.msra.mxu0 %v2187
    %2207 = vmatprep.subr.mxu0 0.0
    %2208 = vmatpush1.msra.mxu0 %v2188
    %2209 = vmatprep.subr.mxu0 0.0
    %2210 = vmatpush1.msra.mxu0 %v2189
    %2211 = vmatprep.subr.mxu0 0.0
    %2212 = vmatpush1.msra.mxu0 %v2190
    %2213 = vmatprep.subr.mxu0 0.0
    %2214 = vmatpush1.msra.mxu0 %v2191
    %2215 = vmatprep.subr.mxu0 0.0
    %2216 = vmatpush1.msra.mxu0 %v2192
    %2217 = vmatprep.subr.mxu0 0.0
    %2218 = vmatpush1.msra.mxu0 %v2193
    %2219 = vmatprep.subr.mxu0 0.0
    %2220 = vmatpush1.msra.mxu0 %v2194
    %2221 = vmatprep.subr.mxu0 0.0
    %2222 = vmatpush1.msra.mxu0 %v2195
    %2223 = vmatprep.subr.mxu0 0.0
    %2224 = vmatpush1.msra.mxu0 %v2196
    %2225 = vmatprep.subr.mxu0 0.0
    %2226 = vmatpush1.msra.mxu0 %v2197
    %2227 = vmatprep.subr.mxu0 0.0
    %2228 = vmatpush1.msra.mxu0 %v2198
    %2229 = vmatprep.subr.mxu0 0.0
    %2230 = vmatpush1.msra.mxu0 %v2199
    %2231 = vmatprep.subr.mxu0 0.0
    %2232 = vmatpush1.msra.mxu0 %v2200
    %2233 = vmatprep.subr.mxu0 0.0
    %2234 = vmatpush1.msra.mxu0 0.0
    %2235 = vmatprep.subr.mxu0 0.0
    %2236 = vmatpush1.msra.mxu0 0.0
    %2237 = vmatprep.subr.mxu0 0.0
    %2238 = vmatpush1.msra.mxu0 0.0
    %2239 = vmatprep.subr.mxu0 0.0
    %2240 = vmatpush1.msra.mxu0 0.0
    %2241 = vmatprep.subr.mxu0 0.0
    %2242 = vmatpush1.msra.mxu0 0.0
    %2243 = vmatprep.subr.mxu0 0.0
    %2244 = vmatpush1.msra.mxu0 0.0
    %2245 = vmatprep.subr.mxu0 0.0
    %2246 = vmatpush1.msra.mxu0 0.0
    %2247 = vmatprep.subr.mxu0 0.0
    %2248 = vmatpush1.msra.mxu0 0.0
    %2249 = vmatprep.subr.mxu0 0.0
    %2250 = vmatpush1.msra.mxu0 0.0
    %2251 = vmatprep.subr.mxu0 0.0
    %2252 = vmatpush1.msra.mxu0 0.0
    %2253 = vmatprep.subr.mxu0 0.0
    %2254 = vmatpush1.msra.mxu0 0.0
    %2255 = vmatprep.subr.mxu0 0.0
    %2256 = vmatpush1.msra.mxu0 0.0
    %2257 = vmatprep.subr.mxu0 0.0
    %2258 = vmatpush1.msra.mxu0 0.0
    %2259 = vmatprep.subr.mxu0 0.0
    %2260 = vmatpush1.msra.mxu0 0.0
    %2261 = vmatprep.subr.mxu0 0.0
    %2262 = vmatpush1.msra.mxu0 0.0
    %2263 = vmatprep.subr.mxu0 0.0
    %2264 = vmatpush1.msra.mxu0 0.0
    %2265 = vmatprep.mubr.f32.mxu0 0.0
    %2266 = vmatmul.mubr.f32.gmra.mrb[0].mxu0 %v2106
    %v2267 = vpop.f32.mrb[0].mxu0
    %v2268 = vadd.f32 0.0, %v2267
    %v2269 = vpop.f32.mrb[0].mxu0
    %2270 = vmatprep.mubr.f32.mxu0 0.0
    %2271 = vmatmul.mubr.f32.gmra.mrb[0].mxu0 %v2111
    %v2272 = vpop.f32.mrb[0].mxu0
    %v2273 = vadd.f32 0.0, %v2272
    %v2274 = vpop.f32.mrb[0].mxu0
    %2275 = vmatprep.mubr.f32.mxu0 0.0
    %2276 = vmatmul.mubr.f32.gmra.mrb[0].mxu0 %v2116
    %v2277 = vpop.f32.mrb[0].mxu0
    %v2278 = vadd.f32 0.0, %v2277
    %v2279 = vpop.f32.mrb[0].mxu0
    %2280 = vmatprep.mubr.f32.mxu0 0.0
    %2281 = vmatmul.mubr.f32.gmra.mrb[0].mxu0 %v2121
    %v2282 = vpop.f32.mrb[0].mxu0
    %v2283 = vadd.f32 0.0, %v2282
    %v2284 = vpop.f32.mrb[0].mxu0
    %2285 = vmatprep.mubr.f32.mxu0 0.0
    %2286 = vmatmul.mubr.f32.gmra.mrb[0].mxu0 %v2126
    %v2287 = vpop.f32.mrb[0].mxu0
    %v2288 = vadd.f32 0.0, %v2287
    %v2289 = vpop.f32.mrb[0].mxu0
    %2290 = vmatprep.mubr.f32.mxu0 0.0
    %2291 = vmatmul.mubr.f32.gmra.mrb[0].mxu0 %v2131
    %v2292 = vpop.f32.mrb[0].mxu0
    %v2293 = vadd.f32 0.0, %v2292
    %v2294 = vpop.f32.mrb[0].mxu0
    %2295 = vmatprep.mubr.f32.mxu0 0.0
    %2296 = vmatmul.mubr.f32.gmra.mrb[0].mxu0 %v2136
    %v2297 = vpop.f32.mrb[0].mxu0
    %v2298 = vadd.f32 0.0, %v2297
    %v2299 = vpop.f32.mrb[0].mxu0
    %2300 = vmatprep.mubr.f32.mxu0 0.0
    %2301 = vmatmul.mubr.f32.gmra.mrb[0].mxu0 %v2141
    %v2302 = vpop.f32.mrb[0].mxu0
    %v2303 = vadd.f32 0.0, %v2302
    %v2304 = vpop.f32.mrb[0].mxu0
    %2305 = vmatprep.mubr.f32.mxu0 0.0
    %2306 = vmatmul.mubr.f32.gmra.mrb[0].mxu0 %v2146
    %v2307 = vpop.f32.mrb[0].mxu0
    %v2308 = vadd.f32 0.0, %v2307
    %v2309 = vpop.f32.mrb[0].mxu0
    %2310 = vmatprep.mubr.f32.mxu0 0.0
    %2311 = vmatmul.mubr.f32.gmra.mrb[0].mxu0 %v2151
    %v2312 = vpop.f32.mrb[0].mxu0
    %v2313 = vadd.f32 0.0, %v2312
    %v2314 = vpop.f32.mrb[0].mxu0
    %2315 = vmatprep.mubr.f32.mxu0 0.0
    %2316 = vmatmul.mubr.f32.gmra.mrb[0].mxu0 %v2156
    %v2317 = vpop.f32.mrb[0].mxu0
    %v2318 = vadd.f32 0.0, %v2317
    %v2319 = vpop.f32.mrb[0].mxu0
    %2320 = vmatprep.mubr.f32.mxu0 0.0
    %2321 = vmatmul.mubr.f32.gmra.mrb[0].mxu0 %v2161
    %v2322 = vpop.f32.mrb[0].mxu0
    %v2323 = vadd.f32 0.0, %v2322
    %v2324 = vpop.f32.mrb[0].mxu0
    %2325 = vmatprep.mubr.f32.mxu0 0.0
    %2326 = vmatmul.mubr.f32.gmra.mrb[0].mxu0 %v2166
    %v2327 = vpop.f32.mrb[0].mxu0
    %v2328 = vadd.f32 0.0, %v2327
    %v2329 = vpop.f32.mrb[0].mxu0
    %2330 = vmatprep.mubr.f32.mxu0 0.0
    %2331 = vmatmul.mubr.f32.gmra.mrb[0].mxu0 %v2171
    %v2332 = vpop.f32.mrb[0].mxu0
    %v2333 = vadd.f32 0.0, %v2332
    %v2334 = vpop.f32.mrb[0].mxu0
    %2335 = vmatprep.mubr.f32.mxu0 0.0
    %2336 = vmatmul.mubr.f32.gmra.mrb[0].mxu0 %v2176
    %v2337 = vpop.f32.mrb[0].mxu0
    %v2338 = vadd.f32 0.0, %v2337
    %v2339 = vpop.f32.mrb[0].mxu0
    %2340 = vmatprep.mubr.f32.mxu0 0.0
    %2341 = vmatmul.mubr.f32.gmra.mrb[0].mxu0 %v2181
    %v2342 = vpop.f32.mrb[0].mxu0
    %v2343 = vadd.f32 0.0, %v2342
    %v2344 = vpop.f32.mrb[0].mxu0
    %2345 = vdwg.mxu0
    %v2346 = vadd.f32 %v1813, %v2268
    %v2347 = vadd.f32 %v1814, %v2273
    %v2348 = vadd.f32 %v1815, %v2278
    %v2349 = vadd.f32 %v1816, %v2283
    %v2350 = vadd.f32 %v1817, %v2288
    %v2351 = vadd.f32 %v1818, %v2293
    %v2352 = vadd.f32 %v1819, %v2298
    %v2353 = vadd.f32 %v1820, %v2303
    %v2354 = vadd.f32 %v1821, %v2308
    %v2355 = vadd.f32 %v1822, %v2313
    %v2356 = vadd.f32 %v1823, %v2318
    %v2357 = vadd.f32 %v1824, %v2323
    %v2358 = vadd.f32 %v1825, %v2328
    %v2359 = vadd.f32 %v1826, %v2333
    %v2360 = vadd.f32 %v1827, %v2338
    %v2361 = vadd.f32 %v1828, %v2343
    %s2362 = scalar_lea.vmem [#allocation5], 2048
    %v2363 = vld [vmem:[%s2362] sm:$0xff]
    %v2364 = vld [vmem:[%s2362 + $0x8] sm:$0xff]
    %v2365 = vld [vmem:[%s2362 + $0x10] sm:$0xff]
    %v2366 = vld [vmem:[%s2362 + $0x18] sm:$0xff]
    %v2367 = vld [vmem:[%s2362 + $0x20] sm:$0xff]
    %v2368 = vld [vmem:[%s2362 + $0x28] sm:$0xff]
    %v2369 = vld [vmem:[%s2362 + $0x30] sm:$0xff]
    %v2370 = vld [vmem:[%s2362 + $0x38] sm:$0xff]
    %v2371 = vld [vmem:[%s2362 + $0x40] sm:$0xff]
    %v2372 = vld [vmem:[%s2362 + $0x48] sm:$0xff]
    %v2373 = vld [vmem:[%s2362 + $0x50] sm:$0xff]
    %v2374 = vld [vmem:[%s2362 + $0x58] sm:$0xff]
    %v2375 = vld [vmem:[%s2362 + $0x60] sm:$0xff]
    %v2376 = vld [vmem:[%s2362 + $0x68] sm:$0xff]
    %v2377 = vld [vmem:[%s2362 + $0x70] sm:$0xff]
    %v2378 = vld [vmem:[%s2362 + $0x78] sm:$0xff]
    %v2379 = vld [vmem:[%s2362 + $0x80] sm:$0xff]
    %v2380 = vld [vmem:[%s2362 + $0x88] sm:$0xff]
    %v2381 = vld [vmem:[%s2362 + $0x90] sm:$0xff]
    %v2382 = vld [vmem:[%s2362 + $0x98] sm:$0xff]
    %v2383 = vld [vmem:[%s2362 + $0xa0] sm:$0xff]
    %v2384 = vld [vmem:[%s2362 + $0xa8] sm:$0xff]
    %v2385 = vld [vmem:[%s2362 + $0xb0] sm:$0xff]
    %v2386 = vld [vmem:[%s2362 + $0xb8] sm:$0xff]
    %v2387 = vld [vmem:[%s2362 + $0xc0] sm:$0xff]
    %v2388 = vld [vmem:[%s2362 + $0xc8] sm:$0xff]
    %v2389 = vld [vmem:[%s2362 + $0xd0] sm:$0xff]
    %v2390 = vld [vmem:[%s2362 + $0xd8] sm:$0xff]
    %v2391 = vld [vmem:[%s2362 + $0xe0] sm:$0xff]
    %v2392 = vld [vmem:[%s2362 + $0xe8] sm:$0xff]
    %v2393 = vld [vmem:[%s2362 + $0xf0] sm:$0xff]
    %v2394 = vld [vmem:[%s2362 + $0xf8] sm:$0xff]
    %v2395 = vld [vmem:[%s2362 + $0x100] sm:$0xff]
    %v2396 = vld [vmem:[%s2362 + $0x108] sm:$0xff]
    %v2397 = vld [vmem:[%s2362 + $0x110] sm:$0xff]
    %v2398 = vld [vmem:[%s2362 + $0x118] sm:$0xff]
    %v2399 = vld [vmem:[%s2362 + $0x120] sm:$0xff]
    %v2400 = vld [vmem:[%s2362 + $0x128] sm:$0xff]
    %v2401 = vld [vmem:[%s2362 + $0x130] sm:$0xff]
    %v2402 = vld [vmem:[%s2362 + $0x138] sm:$0xff]
    %v2403 = vld [vmem:[%s2362 + $0x140] sm:$0xff]
    %v2404 = vld [vmem:[%s2362 + $0x148] sm:$0xff]
    %v2405 = vld [vmem:[%s2362 + $0x150] sm:$0xff]
    %v2406 = vld [vmem:[%s2362 + $0x158] sm:$0xff]
    %v2407 = vld [vmem:[%s2362 + $0x160] sm:$0xff]
    %v2408 = vld [vmem:[%s2362 + $0x168] sm:$0xff]
    %v2409 = vld [vmem:[%s2362 + $0x170] sm:$0xff]
    %v2410 = vld [vmem:[%s2362 + $0x178] sm:$0xff]
    %v2411 = vld [vmem:[%s2362 + $0x180] sm:$0xff]
    %v2412 = vld [vmem:[%s2362 + $0x188] sm:$0xff]
    %v2413 = vld [vmem:[%s2362 + $0x190] sm:$0xff]
    %v2414 = vld [vmem:[%s2362 + $0x198] sm:$0xff]
    %v2415 = vld [vmem:[%s2362 + $0x1a0] sm:$0xff]
    %v2416 = vld [vmem:[%s2362 + $0x1a8] sm:$0xff]
    %v2417 = vld [vmem:[%s2362 + $0x1b0] sm:$0xff]
    %v2418 = vld [vmem:[%s2362 + $0x1b8] sm:$0xff]
    %v2419 = vld [vmem:[%s2362 + $0x1c0] sm:$0xff]
    %v2420 = vld [vmem:[%s2362 + $0x1c8] sm:$0xff]
    %v2421 = vld [vmem:[%s2362 + $0x1d0] sm:$0xff]
    %v2422 = vld [vmem:[%s2362 + $0x1d8] sm:$0xff]
    %v2423 = vld [vmem:[%s2362 + $0x1e0] sm:$0xff]
    %v2424 = vld [vmem:[%s2362 + $0x1e8] sm:$0xff]
    %v2425 = vld [vmem:[%s2362 + $0x1f0] sm:$0xff]
    %v2426 = vld [vmem:[%s2362 + $0x1f8] sm:$0xff]
    %2427 = vmatprep.subr.mxu0 0.0
    %2428 = vmatpush1.msra.mxu0 %v200
    %2429 = vmatprep.subr.mxu0 0.0
    %2430 = vmatpush1.msra.mxu0 %v201
    %2431 = vmatprep.subr.mxu0 0.0
    %2432 = vmatpush1.msra.mxu0 %v202
    %2433 = vmatprep.subr.mxu0 0.0
    %2434 = vmatpush1.msra.mxu0 %v203
    %2435 = vmatprep.subr.mxu0 0.0
    %2436 = vmatpush1.msra.mxu0 %v204
    %2437 = vmatprep.subr.mxu0 0.0
    %2438 = vmatpush1.msra.mxu0 %v205
    %2439 = vmatprep.subr.mxu0 0.0
    %2440 = vmatpush1.msra.mxu0 %v206
    %2441 = vmatprep.subr.mxu0 0.0
    %2442 = vmatpush1.msra.mxu0 %v207
    %2443 = vmatprep.subr.mxu0 0.0
    %2444 = vmatpush1.msra.mxu0 %v208
    %2445 = vmatprep.subr.mxu0 0.0
    %2446 = vmatpush1.msra.mxu0 %v209
    %2447 = vmatprep.subr.mxu0 0.0
    %2448 = vmatpush1.msra.mxu0 %v210
    %2449 = vmatprep.subr.mxu0 0.0
    %2450 = vmatpush1.msra.mxu0 %v211
    %2451 = vmatprep.subr.mxu0 0.0
    %2452 = vmatpush1.msra.mxu0 %v212
    %2453 = vmatprep.subr.mxu0 0.0
    %2454 = vmatpush1.msra.mxu0 %v213
    %2455 = vmatprep.subr.mxu0 0.0
    %2456 = vmatpush1.msra.mxu0 %v214
    %2457 = vmatprep.subr.mxu0 0.0
    %2458 = vmatpush1.msra.mxu0 %v215
    %2459 = vmatprep.subr.mxu0 0.0
    %2460 = vmatpush1.msra.mxu0 %v216
    %2461 = vmatprep.subr.mxu0 0.0
    %2462 = vmatpush1.msra.mxu0 %v217
    %2463 = vmatprep.subr.mxu0 0.0
    %2464 = vmatpush1.msra.mxu0 %v218
    %2465 = vmatprep.subr.mxu0 0.0
    %2466 = vmatpush1.msra.mxu0 %v219
    %2467 = vmatprep.subr.mxu0 0.0
    %2468 = vmatpush1.msra.mxu0 %v220
    %2469 = vmatprep.subr.mxu0 0.0
    %2470 = vmatpush1.msra.mxu0 %v221
    %2471 = vmatprep.subr.mxu0 0.0
    %2472 = vmatpush1.msra.mxu0 %v222
    %2473 = vmatprep.subr.mxu0 0.0
    %2474 = vmatpush1.msra.mxu0 %v223
    %2475 = vmatprep.subr.mxu0 0.0
    %2476 = vmatpush1.msra.mxu0 %v224
    %2477 = vmatprep.subr.mxu0 0.0
    %2478 = vmatpush1.msra.mxu0 %v225
    %2479 = vmatprep.subr.mxu0 0.0
    %2480 = vmatpush1.msra.mxu0 %v226
    %2481 = vmatprep.subr.mxu0 0.0
    %2482 = vmatpush1.msra.mxu0 %v227
    %2483 = vmatprep.subr.mxu0 0.0
    %2484 = vmatpush1.msra.mxu0 %v228
    %2485 = vmatprep.subr.mxu0 0.0
    %2486 = vmatpush1.msra.mxu0 %v229
    %2487 = vmatprep.subr.mxu0 0.0
    %2488 = vmatpush1.msra.mxu0 %v230
    %2489 = vmatprep.subr.mxu0 0.0
    %2490 = vmatpush1.msra.mxu0 %v231
    %2491 = vmatprep.mubr.f32.mxu0 %v2364
    %2492 = vmatmul.mubr.f32.gmra.mrb[0].mxu0 %v2363
    %v2493 = vpop.f32.mrb[0].mxu0
    %v2494 = vadd.f32 0.0, %v2493
    %v2495 = vpop.f32.mrb[0].mxu0
    %2496 = vmatprep.mubr.f32.mxu0 %v2368
    %2497 = vmatmul.mubr.f32.gmra.mrb[0].mxu0 %v2367
    %v2498 = vpop.f32.mrb[0].mxu0
    %v2499 = vadd.f32 0.0, %v2498
    %v2500 = vpop.f32.mrb[0].mxu0
    %2501 = vmatprep.mubr.f32.mxu0 %v2372
    %2502 = vmatmul.mubr.f32.gmra.mrb[0].mxu0 %v2371
    %v2503 = vpop.f32.mrb[0].mxu0
    %v2504 = vadd.f32 0.0, %v2503
    %v2505 = vpop.f32.mrb[0].mxu0
    %2506 = vmatprep.mubr.f32.mxu0 %v2376
    %2507 = vmatmul.mubr.f32.gmra.mrb[0].mxu0 %v2375
    %v2508 = vpop.f32.mrb[0].mxu0
    %v2509 = vadd.f32 0.0, %v2508
    %v2510 = vpop.f32.mrb[0].mxu0
    %2511 = vmatprep.mubr.f32.mxu0 %v2380
    %2512 = vmatmul.mubr.f32.gmra.mrb[0].mxu0 %v2379
    %v2513 = vpop.f32.mrb[0].mxu0
    %v2514 = vadd.f32 0.0, %v2513
    %v2515 = vpop.f32.mrb[0].mxu0
    %2516 = vmatprep.mubr.f32.mxu0 %v2384
    %2517 = vmatmul.mubr.f32.gmra.mrb[0].mxu0 %v2383
    %v2518 = vpop.f32.mrb[0].mxu0
    %v2519 = vadd.f32 0.0, %v2518
    %v2520 = vpop.f32.mrb[0].mxu0
    %2521 = vmatprep.mubr.f32.mxu0 %v2388
    %2522 = vmatmul.mubr.f32.gmra.mrb[0].mxu0 %v2387
    %v2523 = vpop.f32.mrb[0].mxu0
    %v2524 = vadd.f32 0.0, %v2523
    %v2525 = vpop.f32.mrb[0].mxu0
    %2526 = vmatprep.mubr.f32.mxu0 %v2392
    %2527 = vmatmul.mubr.f32.gmra.mrb[0].mxu0 %v2391
    %v2528 = vpop.f32.mrb[0].mxu0
    %v2529 = vadd.f32 0.0, %v2528
    %v2530 = vpop.f32.mrb[0].mxu0
    %2531 = vmatprep.mubr.f32.mxu0 %v2396
    %2532 = vmatmul.mubr.f32.gmra.mrb[0].mxu0 %v2395
    %v2533 = vpop.f32.mrb[0].mxu0
    %v2534 = vadd.f32 0.0, %v2533
    %v2535 = vpop.f32.mrb[0].mxu0
    %2536 = vmatprep.mubr.f32.mxu0 %v2400
    %2537 = vmatmul.mubr.f32.gmra.mrb[0].mxu0 %v2399
    %v2538 = vpop.f32.mrb[0].mxu0
    %v2539 = vadd.f32 0.0, %v2538
    %v2540 = vpop.f32.mrb[0].mxu0
    %2541 = vmatprep.mubr.f32.mxu0 %v2404
    %2542 = vmatmul.mubr.f32.gmra.mrb[0].mxu0 %v2403
    %v2543 = vpop.f32.mrb[0].mxu0
    %v2544 = vadd.f32 0.0, %v2543
    %v2545 = vpop.f32.mrb[0].mxu0
    %2546 = vmatprep.mubr.f32.mxu0 %v2408
    %2547 = vmatmul.mubr.f32.gmra.mrb[0].mxu0 %v2407
    %v2548 = vpop.f32.mrb[0].mxu0
    %v2549 = vadd.f32 0.0, %v2548
    %v2550 = vpop.f32.mrb[0].mxu0
    %2551 = vmatprep.mubr.f32.mxu0 %v2412
    %2552 = vmatmul.mubr.f32.gmra.mrb[0].mxu0 %v2411
    %v2553 = vpop.f32.mrb[0].mxu0
    %v2554 = vadd.f32 0.0, %v2553
    %v2555 = vpop.f32.mrb[0].mxu0
    %2556 = vmatprep.mubr.f32.mxu0 %v2416
    %2557 = vmatmul.mubr.f32.gmra.mrb[0].mxu0 %v2415
    %v2558 = vpop.f32.mrb[0].mxu0
    %v2559 = vadd.f32 0.0, %v2558
    %v2560 = vpop.f32.mrb[0].mxu0
    %2561 = vmatprep.mubr.f32.mxu0 %v2420
    %2562 = vmatmul.mubr.f32.gmra.mrb[0].mxu0 %v2419
    %v2563 = vpop.f32.mrb[0].mxu0
    %v2564 = vadd.f32 0.0, %v2563
    %v2565 = vpop.f32.mrb[0].mxu0
    %2566 = vmatprep.mubr.f32.mxu0 %v2424
    %2567 = vmatmul.mubr.f32.gmra.mrb[0].mxu0 %v2423
    %v2568 = vpop.f32.mrb[0].mxu0
    %v2569 = vadd.f32 0.0, %v2568
    %v2570 = vpop.f32.mrb[0].mxu0
    %2571 = vdwg.mxu0
    %2572 = vmatprep.subr.mxu0 0.0
    %2573 = vmatpush1.msra.mxu0 %v232
    %2574 = vmatprep.subr.mxu0 0.0
    %2575 = vmatpush1.msra.mxu0 %v233
    %2576 = vmatprep.subr.mxu0 0.0
    %2577 = vmatpush1.msra.mxu0 %v234
    %2578 = vmatprep.subr.mxu0 0.0
    %2579 = vmatpush1.msra.mxu0 %v235
    %2580 = vmatprep.subr.mxu0 0.0
    %2581 = vmatpush1.msra.mxu0 %v236
    %2582 = vmatprep.subr.mxu0 0.0
    %2583 = vmatpush1.msra.mxu0 %v237
    %2584 = vmatprep.subr.mxu0 0.0
    %2585 = vmatpush1.msra.mxu0 %v238
    %2586 = vmatprep.subr.mxu0 0.0
    %2587 = vmatpush1.msra.mxu0 %v239
    %2588 = vmatprep.subr.mxu0 0.0
    %2589 = vmatpush1.msra.mxu0 %v240
    %2590 = vmatprep.subr.mxu0 0.0
    %2591 = vmatpush1.msra.mxu0 %v241
    %2592 = vmatprep.subr.mxu0 0.0
    %2593 = vmatpush1.msra.mxu0 %v242
    %2594 = vmatprep.subr.mxu0 0.0
    %2595 = vmatpush1.msra.mxu0 %v243
    %2596 = vmatprep.subr.mxu0 0.0
    %2597 = vmatpush1.msra.mxu0 %v244
    %2598 = vmatprep.subr.mxu0 0.0
    %2599 = vmatpush1.msra.mxu0 %v245
    %2600 = vmatprep.subr.mxu0 0.0
    %2601 = vmatpush1.msra.mxu0 %v246
    %2602 = vmatprep.subr.mxu0 0.0
    %2603 = vmatpush1.msra.mxu0 %v247
    %2604 = vmatprep.subr.mxu0 0.0
    %2605 = vmatpush1.msra.mxu0 %v248
    %2606 = vmatprep.subr.mxu0 0.0
    %2607 = vmatpush1.msra.mxu0 %v249
    %2608 = vmatprep.subr.mxu0 0.0
    %2609 = vmatpush1.msra.mxu0 %v250
    %2610 = vmatprep.subr.mxu0 0.0
    %2611 = vmatpush1.msra.mxu0 %v251
    %2612 = vmatprep.subr.mxu0 0.0
    %2613 = vmatpush1.msra.mxu0 %v252
    %2614 = vmatprep.subr.mxu0 0.0
    %2615 = vmatpush1.msra.mxu0 %v253
    %2616 = vmatprep.subr.mxu0 0.0
    %2617 = vmatpush1.msra.mxu0 %v254
    %2618 = vmatprep.subr.mxu0 0.0
    %2619 = vmatpush1.msra.mxu0 %v255
    %2620 = vmatprep.subr.mxu0 0.0
    %2621 = vmatpush1.msra.mxu0 %v256
    %2622 = vmatprep.subr.mxu0 0.0
    %2623 = vmatpush1.msra.mxu0 %v257
    %2624 = vmatprep.subr.mxu0 0.0
    %2625 = vmatpush1.msra.mxu0 %v258
    %2626 = vmatprep.subr.mxu0 0.0
    %2627 = vmatpush1.msra.mxu0 %v259
    %2628 = vmatprep.subr.mxu0 0.0
    %2629 = vmatpush1.msra.mxu0 %v260
    %2630 = vmatprep.subr.mxu0 0.0
    %2631 = vmatpush1.msra.mxu0 %v261
    %2632 = vmatprep.subr.mxu0 0.0
    %2633 = vmatpush1.msra.mxu0 %v262
    %2634 = vmatprep.subr.mxu0 0.0
    %2635 = vmatpush1.msra.mxu0 %v263
    %2636 = vmatprep.mubr.f32.mxu0 %v2366
    %2637 = vmatmul.mubr.f32.gmra.mrb[0].mxu0 %v2365
    %v2638 = vpop.f32.mrb[0].mxu0
    %v2639 = vadd.f32 %v2494, %v2638
    %v2640 = vpop.f32.mrb[0].mxu0
    %2641 = vmatprep.mubr.f32.mxu0 %v2370
    %2642 = vmatmul.mubr.f32.gmra.mrb[0].mxu0 %v2369
    %v2643 = vpop.f32.mrb[0].mxu0
    %v2644 = vadd.f32 %v2499, %v2643
    %v2645 = vpop.f32.mrb[0].mxu0
    %2646 = vmatprep.mubr.f32.mxu0 %v2374
    %2647 = vmatmul.mubr.f32.gmra.mrb[0].mxu0 %v2373
    %v2648 = vpop.f32.mrb[0].mxu0
    %v2649 = vadd.f32 %v2504, %v2648
    %v2650 = vpop.f32.mrb[0].mxu0
    %2651 = vmatprep.mubr.f32.mxu0 %v2378
    %2652 = vmatmul.mubr.f32.gmra.mrb[0].mxu0 %v2377
    %v2653 = vpop.f32.mrb[0].mxu0
    %v2654 = vadd.f32 %v2509, %v2653
    %v2655 = vpop.f32.mrb[0].mxu0
    %2656 = vmatprep.mubr.f32.mxu0 %v2382
    %2657 = vmatmul.mubr.f32.gmra.mrb[0].mxu0 %v2381
    %v2658 = vpop.f32.mrb[0].mxu0
    %v2659 = vadd.f32 %v2514, %v2658
    %v2660 = vpop.f32.mrb[0].mxu0
    %2661 = vmatprep.mubr.f32.mxu0 %v2386
    %2662 = vmatmul.mubr.f32.gmra.mrb[0].mxu0 %v2385
    %v2663 = vpop.f32.mrb[0].mxu0
    %v2664 = vadd.f32 %v2519, %v2663
    %v2665 = vpop.f32.mrb[0].mxu0
    %2666 = vmatprep.mubr.f32.mxu0 %v2390
    %2667 = vmatmul.mubr.f32.gmra.mrb[0].mxu0 %v2389
    %v2668 = vpop.f32.mrb[0].mxu0
    %v2669 = vadd.f32 %v2524, %v2668
    %v2670 = vpop.f32.mrb[0].mxu0
    %2671 = vmatprep.mubr.f32.mxu0 %v2394
    %2672 = vmatmul.mubr.f32.gmra.mrb[0].mxu0 %v2393
    %v2673 = vpop.f32.mrb[0].mxu0
    %v2674 = vadd.f32 %v2529, %v2673
    %v2675 = vpop.f32.mrb[0].mxu0
    %2676 = vmatprep.mubr.f32.mxu0 %v2398
    %2677 = vmatmul.mubr.f32.gmra.mrb[0].mxu0 %v2397
    %v2678 = vpop.f32.mrb[0].mxu0
    %v2679 = vadd.f32 %v2534, %v2678
    %v2680 = vpop.f32.mrb[0].mxu0
    %2681 = vmatprep.mubr.f32.mxu0 %v2402
    %2682 = vmatmul.mubr.f32.gmra.mrb[0].mxu0 %v2401
    %v2683 = vpop.f32.mrb[0].mxu0
    %v2684 = vadd.f32 %v2539, %v2683
    %v2685 = vpop.f32.mrb[0].mxu0
    %2686 = vmatprep.mubr.f32.mxu0 %v2406
    %2687 = vmatmul.mubr.f32.gmra.mrb[0].mxu0 %v2405
    %v2688 = vpop.f32.mrb[0].mxu0
    %v2689 = vadd.f32 %v2544, %v2688
    %v2690 = vpop.f32.mrb[0].mxu0
    %2691 = vmatprep.mubr.f32.mxu0 %v2410
    %2692 = vmatmul.mubr.f32.gmra.mrb[0].mxu0 %v2409
    %v2693 = vpop.f32.mrb[0].mxu0
    %v2694 = vadd.f32 %v2549, %v2693
    %v2695 = vpop.f32.mrb[0].mxu0
    %2696 = vmatprep.mubr.f32.mxu0 %v2414
    %2697 = vmatmul.mubr.f32.gmra.mrb[0].mxu0 %v2413
    %v2698 = vpop.f32.mrb[0].mxu0
    %v2699 = vadd.f32 %v2554, %v2698
    %v2700 = vpop.f32.mrb[0].mxu0
    %2701 = vmatprep.mubr.f32.mxu0 %v2418
    %2702 = vmatmul.mubr.f32.gmra.mrb[0].mxu0 %v2417
    %v2703 = vpop.f32.mrb[0].mxu0
    %v2704 = vadd.f32 %v2559, %v2703
    %v2705 = vpop.f32.mrb[0].mxu0
    %2706 = vmatprep.mubr.f32.mxu0 %v2422
    %2707 = vmatmul.mubr.f32.gmra.mrb[0].mxu0 %v2421
    %v2708 = vpop.f32.mrb[0].mxu0
    %v2709 = vadd.f32 %v2564, %v2708
    %v2710 = vpop.f32.mrb[0].mxu0
    %2711 = vmatprep.mubr.f32.mxu0 %v2426
    %2712 = vmatmul.mubr.f32.gmra.mrb[0].mxu0 %v2425
    %v2713 = vpop.f32.mrb[0].mxu0
    %v2714 = vadd.f32 %v2569, %v2713
    %v2715 = vpop.f32.mrb[0].mxu0
    %2716 = vdwg.mxu0
    %s2717 = scalar_lea.vmem [#allocation10], 512
    %v2718 = vld [vmem:[%s2717] sm:$0xff]
    %v2719 = vld [vmem:[%s2717 + $0x8] sm:$0xff]
    %v2720 = vld [vmem:[%s2717 + $0x10] sm:$0xff]
    %v2721 = vld [vmem:[%s2717 + $0x18] sm:$0xff]
    %v2722 = vld [vmem:[%s2717 + $0x20] sm:$0xff]
    %v2723 = vld [vmem:[%s2717 + $0x28] sm:$0xff]
    %v2724 = vld [vmem:[%s2717 + $0x30] sm:$0xff]
    %v2725 = vld [vmem:[%s2717 + $0x38] sm:$0xff]
    %v2726 = vld [vmem:[%s2717 + $0x40] sm:$0xff]
    %v2727 = vld [vmem:[%s2717 + $0x48] sm:$0xff]
    %v2728 = vld [vmem:[%s2717 + $0x50] sm:$0xff]
    %v2729 = vld [vmem:[%s2717 + $0x58] sm:$0xff]
    %v2730 = vld [vmem:[%s2717 + $0x60] sm:$0xff]
    %v2731 = vld [vmem:[%s2717 + $0x68] sm:$0xff]
    %v2732 = vld [vmem:[%s2717 + $0x70] sm:$0xff]
    %v2733 = vld [vmem:[%s2717 + $0x78] sm:$0xff]
    %2734 = vmatprep.subr.mxu0 0.0
    %2735 = vmatpush1.msra.mxu0 %v2718
    %2736 = vmatprep.subr.mxu0 0.0
    %2737 = vmatpush1.msra.mxu0 %v2719
    %2738 = vmatprep.subr.mxu0 0.0
    %2739 = vmatpush1.msra.mxu0 %v2720
    %2740 = vmatprep.subr.mxu0 0.0
    %2741 = vmatpush1.msra.mxu0 %v2721
    %2742 = vmatprep.subr.mxu0 0.0
    %2743 = vmatpush1.msra.mxu0 %v2722
    %2744 = vmatprep.subr.mxu0 0.0
    %2745 = vmatpush1.msra.mxu0 %v2723
    %2746 = vmatprep.subr.mxu0 0.0
    %2747 = vmatpush1.msra.mxu0 %v2724
    %2748 = vmatprep.subr.mxu0 0.0
    %2749 = vmatpush1.msra.mxu0 %v2725
    %2750 = vmatprep.subr.mxu0 0.0
    %2751 = vmatpush1.msra.mxu0 %v2726
    %2752 = vmatprep.subr.mxu0 0.0
    %2753 = vmatpush1.msra.mxu0 %v2727
    %2754 = vmatprep.subr.mxu0 0.0
    %2755 = vmatpush1.msra.mxu0 %v2728
    %2756 = vmatprep.subr.mxu0 0.0
    %2757 = vmatpush1.msra.mxu0 %v2729
    %2758 = vmatprep.subr.mxu0 0.0
    %2759 = vmatpush1.msra.mxu0 %v2730
    %2760 = vmatprep.subr.mxu0 0.0
    %2761 = vmatpush1.msra.mxu0 %v2731
    %2762 = vmatprep.subr.mxu0 0.0
    %2763 = vmatpush1.msra.mxu0 %v2732
    %2764 = vmatprep.subr.mxu0 0.0
    %2765 = vmatpush1.msra.mxu0 %v2733
    %2766 = vmatprep.subr.mxu0 0.0
    %2767 = vmatpush1.msra.mxu0 0.0
    %2768 = vmatprep.subr.mxu0 0.0
    %2769 = vmatpush1.msra.mxu0 0.0
    %2770 = vmatprep.subr.mxu0 0.0
    %2771 = vmatpush1.msra.mxu0 0.0
    %2772 = vmatprep.subr.mxu0 0.0
    %2773 = vmatpush1.msra.mxu0 0.0
    %2774 = vmatprep.subr.mxu0 0.0
    %2775 = vmatpush1.msra.mxu0 0.0
    %2776 = vmatprep.subr.mxu0 0.0
    %2777 = vmatpush1.msra.mxu0 0.0
    %2778 = vmatprep.subr.mxu0 0.0
    %2779 = vmatpush1.msra.mxu0 0.0
    %2780 = vmatprep.subr.mxu0 0.0
    %2781 = vmatpush1.msra.mxu0 0.0
    %2782 = vmatprep.subr.mxu0 0.0
    %2783 = vmatpush1.msra.mxu0 0.0
    %2784 = vmatprep.subr.mxu0 0.0
    %2785 = vmatpush1.msra.mxu0 0.0
    %2786 = vmatprep.subr.mxu0 0.0
    %2787 = vmatpush1.msra.mxu0 0.0
    %2788 = vmatprep.subr.mxu0 0.0
    %2789 = vmatpush1.msra.mxu0 0.0
    %2790 = vmatprep.subr.mxu0 0.0
    %2791 = vmatpush1.msra.mxu0 0.0
    %2792 = vmatprep.subr.mxu0 0.0
    %2793 = vmatpush1.msra.mxu0 0.0
    %2794 = vmatprep.subr.mxu0 0.0
    %2795 = vmatpush1.msra.mxu0 0.0
    %2796 = vmatprep.subr.mxu0 0.0
    %2797 = vmatpush1.msra.mxu0 0.0
    %2798 = vmatprep.mubr.f32.mxu0 0.0
    %2799 = vmatmul.mubr.f32.gmra.mrb[0].mxu0 %v2639
    %v2800 = vpop.f32.mrb[0].mxu0
    %v2801 = vadd.f32 0.0, %v2800
    %v2802 = vpop.f32.mrb[0].mxu0
    %2803 = vmatprep.mubr.f32.mxu0 0.0
    %2804 = vmatmul.mubr.f32.gmra.mrb[0].mxu0 %v2644
    %v2805 = vpop.f32.mrb[0].mxu0
    %v2806 = vadd.f32 0.0, %v2805
    %v2807 = vpop.f32.mrb[0].mxu0
    %2808 = vmatprep.mubr.f32.mxu0 0.0
    %2809 = vmatmul.mubr.f32.gmra.mrb[0].mxu0 %v2649
    %v2810 = vpop.f32.mrb[0].mxu0
    %v2811 = vadd.f32 0.0, %v2810
    %v2812 = vpop.f32.mrb[0].mxu0
    %2813 = vmatprep.mubr.f32.mxu0 0.0
    %2814 = vmatmul.mubr.f32.gmra.mrb[0].mxu0 %v2654
    %v2815 = vpop.f32.mrb[0].mxu0
    %v2816 = vadd.f32 0.0, %v2815
    %v2817 = vpop.f32.mrb[0].mxu0
    %2818 = vmatprep.mubr.f32.mxu0 0.0
    %2819 = vmatmul.mubr.f32.gmra.mrb[0].mxu0 %v2659
    %v2820 = vpop.f32.mrb[0].mxu0
    %v2821 = vadd.f32 0.0, %v2820
    %v2822 = vpop.f32.mrb[0].mxu0
    %2823 = vmatprep.mubr.f32.mxu0 0.0
    %2824 = vmatmul.mubr.f32.gmra.mrb[0].mxu0 %v2664
    %v2825 = vpop.f32.mrb[0].mxu0
    %v2826 = vadd.f32 0.0, %v2825
    %v2827 = vpop.f32.mrb[0].mxu0
    %2828 = vmatprep.mubr.f32.mxu0 0.0
    %2829 = vmatmul.mubr.f32.gmra.mrb[0].mxu0 %v2669
    %v2830 = vpop.f32.mrb[0].mxu0
    %v2831 = vadd.f32 0.0, %v2830
    %v2832 = vpop.f32.mrb[0].mxu0
    %2833 = vmatprep.mubr.f32.mxu0 0.0
    %2834 = vmatmul.mubr.f32.gmra.mrb[0].mxu0 %v2674
    %v2835 = vpop.f32.mrb[0].mxu0
    %v2836 = vadd.f32 0.0, %v2835
    %v2837 = vpop.f32.mrb[0].mxu0
    %2838 = vmatprep.mubr.f32.mxu0 0.0
    %2839 = vmatmul.mubr.f32.gmra.mrb[0].mxu0 %v2679
    %v2840 = vpop.f32.mrb[0].mxu0
    %v2841 = vadd.f32 0.0, %v2840
    %v2842 = vpop.f32.mrb[0].mxu0
    %2843 = vmatprep.mubr.f32.mxu0 0.0
    %2844 = vmatmul.mubr.f32.gmra.mrb[0].mxu0 %v2684
    %v2845 = vpop.f32.mrb[0].mxu0
    %v2846 = vadd.f32 0.0, %v2845
    %v2847 = vpop.f32.mrb[0].mxu0
    %2848 = vmatprep.mubr.f32.mxu0 0.0
    %2849 = vmatmul.mubr.f32.gmra.mrb[0].mxu0 %v2689
    %v2850 = vpop.f32.mrb[0].mxu0
    %v2851 = vadd.f32 0.0, %v2850
    %v2852 = vpop.f32.mrb[0].mxu0
    %2853 = vmatprep.mubr.f32.mxu0 0.0
    %2854 = vmatmul.mubr.f32.gmra.mrb[0].mxu0 %v2694
    %v2855 = vpop.f32.mrb[0].mxu0
    %v2856 = vadd.f32 0.0, %v2855
    %v2857 = vpop.f32.mrb[0].mxu0
    %2858 = vmatprep.mubr.f32.mxu0 0.0
    %2859 = vmatmul.mubr.f32.gmra.mrb[0].mxu0 %v2699
    %v2860 = vpop.f32.mrb[0].mxu0
    %v2861 = vadd.f32 0.0, %v2860
    %v2862 = vpop.f32.mrb[0].mxu0
    %2863 = vmatprep.mubr.f32.mxu0 0.0
    %2864 = vmatmul.mubr.f32.gmra.mrb[0].mxu0 %v2704
    %v2865 = vpop.f32.mrb[0].mxu0
    %v2866 = vadd.f32 0.0, %v2865
    %v2867 = vpop.f32.mrb[0].mxu0
    %2868 = vmatprep.mubr.f32.mxu0 0.0
    %2869 = vmatmul.mubr.f32.gmra.mrb[0].mxu0 %v2709
    %v2870 = vpop.f32.mrb[0].mxu0
    %v2871 = vadd.f32 0.0, %v2870
    %v2872 = vpop.f32.mrb[0].mxu0
    %2873 = vmatprep.mubr.f32.mxu0 0.0
    %2874 = vmatmul.mubr.f32.gmra.mrb[0].mxu0 %v2714
    %v2875 = vpop.f32.mrb[0].mxu0
    %v2876 = vadd.f32 0.0, %v2875
    %v2877 = vpop.f32.mrb[0].mxu0
    %2878 = vdwg.mxu0
    %v2879 = vadd.f32 %v2346, %v2801
    %v2880 = vadd.f32 %v2347, %v2806
    %v2881 = vadd.f32 %v2348, %v2811
    %v2882 = vadd.f32 %v2349, %v2816
    %v2883 = vadd.f32 %v2350, %v2821
    %v2884 = vadd.f32 %v2351, %v2826
    %v2885 = vadd.f32 %v2352, %v2831
    %v2886 = vadd.f32 %v2353, %v2836
    %v2887 = vadd.f32 %v2354, %v2841
    %v2888 = vadd.f32 %v2355, %v2846
    %v2889 = vadd.f32 %v2356, %v2851
    %v2890 = vadd.f32 %v2357, %v2856
    %v2891 = vadd.f32 %v2358, %v2861
    %v2892 = vadd.f32 %v2359, %v2866
    %v2893 = vadd.f32 %v2360, %v2871
    %v2894 = vadd.f32 %v2361, %v2876
    %s2895 = scalar_lea.vmem [#allocation5], 2560
    %v2896 = vld [vmem:[%s2895] sm:$0xff]
    %v2897 = vld [vmem:[%s2895 + $0x8] sm:$0xff]
    %v2898 = vld [vmem:[%s2895 + $0x10] sm:$0xff]
    %v2899 = vld [vmem:[%s2895 + $0x18] sm:$0xff]
    %v2900 = vld [vmem:[%s2895 + $0x20] sm:$0xff]
    %v2901 = vld [vmem:[%s2895 + $0x28] sm:$0xff]
    %v2902 = vld [vmem:[%s2895 + $0x30] sm:$0xff]
    %v2903 = vld [vmem:[%s2895 + $0x38] sm:$0xff]
    %v2904 = vld [vmem:[%s2895 + $0x40] sm:$0xff]
    %v2905 = vld [vmem:[%s2895 + $0x48] sm:$0xff]
    %v2906 = vld [vmem:[%s2895 + $0x50] sm:$0xff]
    %v2907 = vld [vmem:[%s2895 + $0x58] sm:$0xff]
    %v2908 = vld [vmem:[%s2895 + $0x60] sm:$0xff]
    %v2909 = vld [vmem:[%s2895 + $0x68] sm:$0xff]
    %v2910 = vld [vmem:[%s2895 + $0x70] sm:$0xff]
    %v2911 = vld [vmem:[%s2895 + $0x78] sm:$0xff]
    %v2912 = vld [vmem:[%s2895 + $0x80] sm:$0xff]
    %v2913 = vld [vmem:[%s2895 + $0x88] sm:$0xff]
    %v2914 = vld [vmem:[%s2895 + $0x90] sm:$0xff]
    %v2915 = vld [vmem:[%s2895 + $0x98] sm:$0xff]
    %v2916 = vld [vmem:[%s2895 + $0xa0] sm:$0xff]
    %v2917 = vld [vmem:[%s2895 + $0xa8] sm:$0xff]
    %v2918 = vld [vmem:[%s2895 + $0xb0] sm:$0xff]
    %v2919 = vld [vmem:[%s2895 + $0xb8] sm:$0xff]
    %v2920 = vld [vmem:[%s2895 + $0xc0] sm:$0xff]
    %v2921 = vld [vmem:[%s2895 + $0xc8] sm:$0xff]
    %v2922 = vld [vmem:[%s2895 + $0xd0] sm:$0xff]
    %v2923 = vld [vmem:[%s2895 + $0xd8] sm:$0xff]
    %v2924 = vld [vmem:[%s2895 + $0xe0] sm:$0xff]
    %v2925 = vld [vmem:[%s2895 + $0xe8] sm:$0xff]
    %v2926 = vld [vmem:[%s2895 + $0xf0] sm:$0xff]
    %v2927 = vld [vmem:[%s2895 + $0xf8] sm:$0xff]
    %v2928 = vld [vmem:[%s2895 + $0x100] sm:$0xff]
    %v2929 = vld [vmem:[%s2895 + $0x108] sm:$0xff]
    %v2930 = vld [vmem:[%s2895 + $0x110] sm:$0xff]
    %v2931 = vld [vmem:[%s2895 + $0x118] sm:$0xff]
    %v2932 = vld [vmem:[%s2895 + $0x120] sm:$0xff]
    %v2933 = vld [vmem:[%s2895 + $0x128] sm:$0xff]
    %v2934 = vld [vmem:[%s2895 + $0x130] sm:$0xff]
    %v2935 = vld [vmem:[%s2895 + $0x138] sm:$0xff]
    %v2936 = vld [vmem:[%s2895 + $0x140] sm:$0xff]
    %v2937 = vld [vmem:[%s2895 + $0x148] sm:$0xff]
    %v2938 = vld [vmem:[%s2895 + $0x150] sm:$0xff]
    %v2939 = vld [vmem:[%s2895 + $0x158] sm:$0xff]
    %v2940 = vld [vmem:[%s2895 + $0x160] sm:$0xff]
    %v2941 = vld [vmem:[%s2895 + $0x168] sm:$0xff]
    %v2942 = vld [vmem:[%s2895 + $0x170] sm:$0xff]
    %v2943 = vld [vmem:[%s2895 + $0x178] sm:$0xff]
    %v2944 = vld [vmem:[%s2895 + $0x180] sm:$0xff]
    %v2945 = vld [vmem:[%s2895 + $0x188] sm:$0xff]
    %v2946 = vld [vmem:[%s2895 + $0x190] sm:$0xff]
    %v2947 = vld [vmem:[%s2895 + $0x198] sm:$0xff]
    %v2948 = vld [vmem:[%s2895 + $0x1a0] sm:$0xff]
    %v2949 = vld [vmem:[%s2895 + $0x1a8] sm:$0xff]
    %v2950 = vld [vmem:[%s2895 + $0x1b0] sm:$0xff]
    %v2951 = vld [vmem:[%s2895 + $0x1b8] sm:$0xff]
    %v2952 = vld [vmem:[%s2895 + $0x1c0] sm:$0xff]
    %v2953 = vld [vmem:[%s2895 + $0x1c8] sm:$0xff]
    %v2954 = vld [vmem:[%s2895 + $0x1d0] sm:$0xff]
    %v2955 = vld [vmem:[%s2895 + $0x1d8] sm:$0xff]
    %v2956 = vld [vmem:[%s2895 + $0x1e0] sm:$0xff]
    %v2957 = vld [vmem:[%s2895 + $0x1e8] sm:$0xff]
    %v2958 = vld [vmem:[%s2895 + $0x1f0] sm:$0xff]
    %v2959 = vld [vmem:[%s2895 + $0x1f8] sm:$0xff]
    %2960 = vmatprep.subr.mxu0 0.0
    %2961 = vmatpush1.msra.mxu0 %v200
    %2962 = vmatprep.subr.mxu0 0.0
    %2963 = vmatpush1.msra.mxu0 %v201
    %2964 = vmatprep.subr.mxu0 0.0
    %2965 = vmatpush1.msra.mxu0 %v202
    %2966 = vmatprep.subr.mxu0 0.0
    %2967 = vmatpush1.msra.mxu0 %v203
    %2968 = vmatprep.subr.mxu0 0.0
    %2969 = vmatpush1.msra.mxu0 %v204
    %2970 = vmatprep.subr.mxu0 0.0
    %2971 = vmatpush1.msra.mxu0 %v205
    %2972 = vmatprep.subr.mxu0 0.0
    %2973 = vmatpush1.msra.mxu0 %v206
    %2974 = vmatprep.subr.mxu0 0.0
    %2975 = vmatpush1.msra.mxu0 %v207
    %2976 = vmatprep.subr.mxu0 0.0
    %2977 = vmatpush1.msra.mxu0 %v208
    %2978 = vmatprep.subr.mxu0 0.0
    %2979 = vmatpush1.msra.mxu0 %v209
    %2980 = vmatprep.subr.mxu0 0.0
    %2981 = vmatpush1.msra.mxu0 %v210
    %2982 = vmatprep.subr.mxu0 0.0
    %2983 = vmatpush1.msra.mxu0 %v211
    %2984 = vmatprep.subr.mxu0 0.0
    %2985 = vmatpush1.msra.mxu0 %v212
    %2986 = vmatprep.subr.mxu0 0.0
    %2987 = vmatpush1.msra.mxu0 %v213
    %2988 = vmatprep.subr.mxu0 0.0
    %2989 = vmatpush1.msra.mxu0 %v214
    %2990 = vmatprep.subr.mxu0 0.0
    %2991 = vmatpush1.msra.mxu0 %v215
    %2992 = vmatprep.subr.mxu0 0.0
    %2993 = vmatpush1.msra.mxu0 %v216
    %2994 = vmatprep.subr.mxu0 0.0
    %2995 = vmatpush1.msra.mxu0 %v217
    %2996 = vmatprep.subr.mxu0 0.0
    %2997 = vmatpush1.msra.mxu0 %v218
    %2998 = vmatprep.subr.mxu0 0.0
    %2999 = vmatpush1.msra.mxu0 %v219
    %3000 = vmatprep.subr.mxu0 0.0
    %3001 = vmatpush1.msra.mxu0 %v220
    %3002 = vmatprep.subr.mxu0 0.0
    %3003 = vmatpush1.msra.mxu0 %v221
    %3004 = vmatprep.subr.mxu0 0.0
    %3005 = vmatpush1.msra.mxu0 %v222
    %3006 = vmatprep.subr.mxu0 0.0
    %3007 = vmatpush1.msra.mxu0 %v223
    %3008 = vmatprep.subr.mxu0 0.0
    %3009 = vmatpush1.msra.mxu0 %v224
    %3010 = vmatprep.subr.mxu0 0.0
    %3011 = vmatpush1.msra.mxu0 %v225
    %3012 = vmatprep.subr.mxu0 0.0
    %3013 = vmatpush1.msra.mxu0 %v226
    %3014 = vmatprep.subr.mxu0 0.0
    %3015 = vmatpush1.msra.mxu0 %v227
    %3016 = vmatprep.subr.mxu0 0.0
    %3017 = vmatpush1.msra.mxu0 %v228
    %3018 = vmatprep.subr.mxu0 0.0
    %3019 = vmatpush1.msra.mxu0 %v229
    %3020 = vmatprep.subr.mxu0 0.0
    %3021 = vmatpush1.msra.mxu0 %v230
    %3022 = vmatprep.subr.mxu0 0.0
    %3023 = vmatpush1.msra.mxu0 %v231
    %3024 = vmatprep.mubr.f32.mxu0 %v2897
    %3025 = vmatmul.mubr.f32.gmra.mrb[0].mxu0 %v2896
    %v3026 = vpop.f32.mrb[0].mxu0
    %v3027 = vadd.f32 0.0, %v3026
    %v3028 = vpop.f32.mrb[0].mxu0
    %3029 = vmatprep.mubr.f32.mxu0 %v2901
    %3030 = vmatmul.mubr.f32.gmra.mrb[0].mxu0 %v2900
    %v3031 = vpop.f32.mrb[0].mxu0
    %v3032 = vadd.f32 0.0, %v3031
    %v3033 = vpop.f32.mrb[0].mxu0
    %3034 = vmatprep.mubr.f32.mxu0 %v2905
    %3035 = vmatmul.mubr.f32.gmra.mrb[0].mxu0 %v2904
    %v3036 = vpop.f32.mrb[0].mxu0
    %v3037 = vadd.f32 0.0, %v3036
    %v3038 = vpop.f32.mrb[0].mxu0
    %3039 = vmatprep.mubr.f32.mxu0 %v2909
    %3040 = vmatmul.mubr.f32.gmra.mrb[0].mxu0 %v2908
    %v3041 = vpop.f32.mrb[0].mxu0
    %v3042 = vadd.f32 0.0, %v3041
    %v3043 = vpop.f32.mrb[0].mxu0
    %3044 = vmatprep.mubr.f32.mxu0 %v2913
    %3045 = vmatmul.mubr.f32.gmra.mrb[0].mxu0 %v2912
    %v3046 = vpop.f32.mrb[0].mxu0
    %v3047 = vadd.f32 0.0, %v3046
    %v3048 = vpop.f32.mrb[0].mxu0
    %3049 = vmatprep.mubr.f32.mxu0 %v2917
    %3050 = vmatmul.mubr.f32.gmra.mrb[0].mxu0 %v2916
    %v3051 = vpop.f32.mrb[0].mxu0
    %v3052 = vadd.f32 0.0, %v3051
    %v3053 = vpop.f32.mrb[0].mxu0
    %3054 = vmatprep.mubr.f32.mxu0 %v2921
    %3055 = vmatmul.mubr.f32.gmra.mrb[0].mxu0 %v2920
    %v3056 = vpop.f32.mrb[0].mxu0
    %v3057 = vadd.f32 0.0, %v3056
    %v3058 = vpop.f32.mrb[0].mxu0
    %3059 = vmatprep.mubr.f32.mxu0 %v2925
    %3060 = vmatmul.mubr.f32.gmra.mrb[0].mxu0 %v2924
    %v3061 = vpop.f32.mrb[0].mxu0
    %v3062 = vadd.f32 0.0, %v3061
    %v3063 = vpop.f32.mrb[0].mxu0
    %3064 = vmatprep.mubr.f32.mxu0 %v2929
    %3065 = vmatmul.mubr.f32.gmra.mrb[0].mxu0 %v2928
    %v3066 = vpop.f32.mrb[0].mxu0
    %v3067 = vadd.f32 0.0, %v3066
    %v3068 = vpop.f32.mrb[0].mxu0
    %3069 = vmatprep.mubr.f32.mxu0 %v2933
    %3070 = vmatmul.mubr.f32.gmra.mrb[0].mxu0 %v2932
    %v3071 = vpop.f32.mrb[0].mxu0
    %v3072 = vadd.f32 0.0, %v3071
    %v3073 = vpop.f32.mrb[0].mxu0
    %3074 = vmatprep.mubr.f32.mxu0 %v2937
    %3075 = vmatmul.mubr.f32.gmra.mrb[0].mxu0 %v2936
    %v3076 = vpop.f32.mrb[0].mxu0
    %v3077 = vadd.f32 0.0, %v3076
    %v3078 = vpop.f32.mrb[0].mxu0
    %3079 = vmatprep.mubr.f32.mxu0 %v2941
    %3080 = vmatmul.mubr.f32.gmra.mrb[0].mxu0 %v2940
    %v3081 = vpop.f32.mrb[0].mxu0
    %v3082 = vadd.f32 0.0, %v3081
    %v3083 = vpop.f32.mrb[0].mxu0
    %3084 = vmatprep.mubr.f32.mxu0 %v2945
    %3085 = vmatmul.mubr.f32.gmra.mrb[0].mxu0 %v2944
    %v3086 = vpop.f32.mrb[0].mxu0
    %v3087 = vadd.f32 0.0, %v3086
    %v3088 = vpop.f32.mrb[0].mxu0
    %3089 = vmatprep.mubr.f32.mxu0 %v2949
    %3090 = vmatmul.mubr.f32.gmra.mrb[0].mxu0 %v2948
    %v3091 = vpop.f32.mrb[0].mxu0
    %v3092 = vadd.f32 0.0, %v3091
    %v3093 = vpop.f32.mrb[0].mxu0
    %3094 = vmatprep.mubr.f32.mxu0 %v2953
    %3095 = vmatmul.mubr.f32.gmra.mrb[0].mxu0 %v2952
    %v3096 = vpop.f32.mrb[0].mxu0
    %v3097 = vadd.f32 0.0, %v3096
    %v3098 = vpop.f32.mrb[0].mxu0
    %3099 = vmatprep.mubr.f32.mxu0 %v2957
    %3100 = vmatmul.mubr.f32.gmra.mrb[0].mxu0 %v2956
    %v3101 = vpop.f32.mrb[0].mxu0
    %v3102 = vadd.f32 0.0, %v3101
    %v3103 = vpop.f32.mrb[0].mxu0
    %3104 = vdwg.mxu0
    %3105 = vmatprep.subr.mxu0 0.0
    %3106 = vmatpush1.msra.mxu0 %v232
    %3107 = vmatprep.subr.mxu0 0.0
    %3108 = vmatpush1.msra.mxu0 %v233
    %3109 = vmatprep.subr.mxu0 0.0
    %3110 = vmatpush1.msra.mxu0 %v234
    %3111 = vmatprep.subr.mxu0 0.0
    %3112 = vmatpush1.msra.mxu0 %v235
    %3113 = vmatprep.subr.mxu0 0.0
    %3114 = vmatpush1.msra.mxu0 %v236
    %3115 = vmatprep.subr.mxu0 0.0
    %3116 = vmatpush1.msra.mxu0 %v237
    %3117 = vmatprep.subr.mxu0 0.0
    %3118 = vmatpush1.msra.mxu0 %v238
    %3119 = vmatprep.subr.mxu0 0.0
    %3120 = vmatpush1.msra.mxu0 %v239
    %3121 = vmatprep.subr.mxu0 0.0
    %3122 = vmatpush1.msra.mxu0 %v240
    %3123 = vmatprep.subr.mxu0 0.0
    %3124 = vmatpush1.msra.mxu0 %v241
    %3125 = vmatprep.subr.mxu0 0.0
    %3126 = vmatpush1.msra.mxu0 %v242
    %3127 = vmatprep.subr.mxu0 0.0
    %3128 = vmatpush1.msra.mxu0 %v243
    %3129 = vmatprep.subr.mxu0 0.0
    %3130 = vmatpush1.msra.mxu0 %v244
    %3131 = vmatprep.subr.mxu0 0.0
    %3132 = vmatpush1.msra.mxu0 %v245
    %3133 = vmatprep.subr.mxu0 0.0
    %3134 = vmatpush1.msra.mxu0 %v246
    %3135 = vmatprep.subr.mxu0 0.0
    %3136 = vmatpush1.msra.mxu0 %v247
    %3137 = vmatprep.subr.mxu0 0.0
    %3138 = vmatpush1.msra.mxu0 %v248
    %3139 = vmatprep.subr.mxu0 0.0
    %3140 = vmatpush1.msra.mxu0 %v249
    %3141 = vmatprep.subr.mxu0 0.0
    %3142 = vmatpush1.msra.mxu0 %v250
    %3143 = vmatprep.subr.mxu0 0.0
    %3144 = vmatpush1.msra.mxu0 %v251
    %3145 = vmatprep.subr.mxu0 0.0
    %3146 = vmatpush1.msra.mxu0 %v252
    %3147 = vmatprep.subr.mxu0 0.0
    %3148 = vmatpush1.msra.mxu0 %v253
    %3149 = vmatprep.subr.mxu0 0.0
    %3150 = vmatpush1.msra.mxu0 %v254
    %3151 = vmatprep.subr.mxu0 0.0
    %3152 = vmatpush1.msra.mxu0 %v255
    %3153 = vmatprep.subr.mxu0 0.0
    %3154 = vmatpush1.msra.mxu0 %v256
    %3155 = vmatprep.subr.mxu0 0.0
    %3156 = vmatpush1.msra.mxu0 %v257
    %3157 = vmatprep.subr.mxu0 0.0
    %3158 = vmatpush1.msra.mxu0 %v258
    %3159 = vmatprep.subr.mxu0 0.0
    %3160 = vmatpush1.msra.mxu0 %v259
    %3161 = vmatprep.subr.mxu0 0.0
    %3162 = vmatpush1.msra.mxu0 %v260
    %3163 = vmatprep.subr.mxu0 0.0
    %3164 = vmatpush1.msra.mxu0 %v261
    %3165 = vmatprep.subr.mxu0 0.0
    %3166 = vmatpush1.msra.mxu0 %v262
    %3167 = vmatprep.subr.mxu0 0.0
    %3168 = vmatpush1.msra.mxu0 %v263
    %3169 = vmatprep.mubr.f32.mxu0 %v2899
    %3170 = vmatmul.mubr.f32.gmra.mrb[0].mxu0 %v2898
    %v3171 = vpop.f32.mrb[0].mxu0
    %v3172 = vadd.f32 %v3027, %v3171
    %v3173 = vpop.f32.mrb[0].mxu0
    %3174 = vmatprep.mubr.f32.mxu0 %v2903
    %3175 = vmatmul.mubr.f32.gmra.mrb[0].mxu0 %v2902
    %v3176 = vpop.f32.mrb[0].mxu0
    %v3177 = vadd.f32 %v3032, %v3176
    %v3178 = vpop.f32.mrb[0].mxu0
    %3179 = vmatprep.mubr.f32.mxu0 %v2907
    %3180 = vmatmul.mubr.f32.gmra.mrb[0].mxu0 %v2906
    %v3181 = vpop.f32.mrb[0].mxu0
    %v3182 = vadd.f32 %v3037, %v3181
    %v3183 = vpop.f32.mrb[0].mxu0
    %3184 = vmatprep.mubr.f32.mxu0 %v2911
    %3185 = vmatmul.mubr.f32.gmra.mrb[0].mxu0 %v2910
    %v3186 = vpop.f32.mrb[0].mxu0
    %v3187 = vadd.f32 %v3042, %v3186
    %v3188 = vpop.f32.mrb[0].mxu0
    %3189 = vmatprep.mubr.f32.mxu0 %v2915
    %3190 = vmatmul.mubr.f32.gmra.mrb[0].mxu0 %v2914
    %v3191 = vpop.f32.mrb[0].mxu0
    %v3192 = vadd.f32 %v3047, %v3191
    %v3193 = vpop.f32.mrb[0].mxu0
    %3194 = vmatprep.mubr.f32.mxu0 %v2919
    %3195 = vmatmul.mubr.f32.gmra.mrb[0].mxu0 %v2918
    %v3196 = vpop.f32.mrb[0].mxu0
    %v3197 = vadd.f32 %v3052, %v3196
    %v3198 = vpop.f32.mrb[0].mxu0
    %3199 = vmatprep.mubr.f32.mxu0 %v2923
    %3200 = vmatmul.mubr.f32.gmra.mrb[0].mxu0 %v2922
    %v3201 = vpop.f32.mrb[0].mxu0
    %v3202 = vadd.f32 %v3057, %v3201
    %v3203 = vpop.f32.mrb[0].mxu0
    %3204 = vmatprep.mubr.f32.mxu0 %v2927
    %3205 = vmatmul.mubr.f32.gmra.mrb[0].mxu0 %v2926
    %v3206 = vpop.f32.mrb[0].mxu0
    %v3207 = vadd.f32 %v3062, %v3206
    %v3208 = vpop.f32.mrb[0].mxu0
    %3209 = vmatprep.mubr.f32.mxu0 %v2931
    %3210 = vmatmul.mubr.f32.gmra.mrb[0].mxu0 %v2930
    %v3211 = vpop.f32.mrb[0].mxu0
    %v3212 = vadd.f32 %v3067, %v3211
    %v3213 = vpop.f32.mrb[0].mxu0
    %3214 = vmatprep.mubr.f32.mxu0 %v2935
    %3215 = vmatmul.mubr.f32.gmra.mrb[0].mxu0 %v2934
    %v3216 = vpop.f32.mrb[0].mxu0
    %v3217 = vadd.f32 %v3072, %v3216
    %v3218 = vpop.f32.mrb[0].mxu0
    %3219 = vmatprep.mubr.f32.mxu0 %v2939
    %3220 = vmatmul.mubr.f32.gmra.mrb[0].mxu0 %v2938
    %v3221 = vpop.f32.mrb[0].mxu0
    %v3222 = vadd.f32 %v3077, %v3221
    %v3223 = vpop.f32.mrb[0].mxu0
    %3224 = vmatprep.mubr.f32.mxu0 %v2943
    %3225 = vmatmul.mubr.f32.gmra.mrb[0].mxu0 %v2942
    %v3226 = vpop.f32.mrb[0].mxu0
    %v3227 = vadd.f32 %v3082, %v3226
    %v3228 = vpop.f32.mrb[0].mxu0
    %3229 = vmatprep.mubr.f32.mxu0 %v2947
    %3230 = vmatmul.mubr.f32.gmra.mrb[0].mxu0 %v2946
    %v3231 = vpop.f32.mrb[0].mxu0
    %v3232 = vadd.f32 %v3087, %v3231
    %v3233 = vpop.f32.mrb[0].mxu0
    %3234 = vmatprep.mubr.f32.mxu0 %v2951
    %3235 = vmatmul.mubr.f32.gmra.mrb[0].mxu0 %v2950
    %v3236 = vpop.f32.mrb[0].mxu0
    %v3237 = vadd.f32 %v3092, %v3236
    %v3238 = vpop.f32.mrb[0].mxu0
    %3239 = vmatprep.mubr.f32.mxu0 %v2955
    %3240 = vmatmul.mubr.f32.gmra.mrb[0].mxu0 %v2954
    %v3241 = vpop.f32.mrb[0].mxu0
    %v3242 = vadd.f32 %v3097, %v3241
    %v3243 = vpop.f32.mrb[0].mxu0
    %3244 = vmatprep.mubr.f32.mxu0 %v2959
    %3245 = vmatmul.mubr.f32.gmra.mrb[0].mxu0 %v2958
    %v3246 = vpop.f32.mrb[0].mxu0
    %v3247 = vadd.f32 %v3102, %v3246
    %v3248 = vpop.f32.mrb[0].mxu0
    %3249 = vdwg.mxu0
    %s3250 = scalar_lea.vmem [#allocation10], 640
    %v3251 = vld [vmem:[%s3250] sm:$0xff]
    %v3252 = vld [vmem:[%s3250 + $0x8] sm:$0xff]
    %v3253 = vld [vmem:[%s3250 + $0x10] sm:$0xff]
    %v3254 = vld [vmem:[%s3250 + $0x18] sm:$0xff]
    %v3255 = vld [vmem:[%s3250 + $0x20] sm:$0xff]
    %v3256 = vld [vmem:[%s3250 + $0x28] sm:$0xff]
    %v3257 = vld [vmem:[%s3250 + $0x30] sm:$0xff]
    %v3258 = vld [vmem:[%s3250 + $0x38] sm:$0xff]
    %v3259 = vld [vmem:[%s3250 + $0x40] sm:$0xff]
    %v3260 = vld [vmem:[%s3250 + $0x48] sm:$0xff]
    %v3261 = vld [vmem:[%s3250 + $0x50] sm:$0xff]
    %v3262 = vld [vmem:[%s3250 + $0x58] sm:$0xff]
    %v3263 = vld [vmem:[%s3250 + $0x60] sm:$0xff]
    %v3264 = vld [vmem:[%s3250 + $0x68] sm:$0xff]
    %v3265 = vld [vmem:[%s3250 + $0x70] sm:$0xff]
    %v3266 = vld [vmem:[%s3250 + $0x78] sm:$0xff]
    %3267 = vmatprep.subr.mxu0 0.0
    %3268 = vmatpush1.msra.mxu0 %v3251
    %3269 = vmatprep.subr.mxu0 0.0
    %3270 = vmatpush1.msra.mxu0 %v3252
    %3271 = vmatprep.subr.mxu0 0.0
    %3272 = vmatpush1.msra.mxu0 %v3253
    %3273 = vmatprep.subr.mxu0 0.0
    %3274 = vmatpush1.msra.mxu0 %v3254
    %3275 = vmatprep.subr.mxu0 0.0
    %3276 = vmatpush1.msra.mxu0 %v3255
    %3277 = vmatprep.subr.mxu0 0.0
    %3278 = vmatpush1.msra.mxu0 %v3256
    %3279 = vmatprep.subr.mxu0 0.0
    %3280 = vmatpush1.msra.mxu0 %v3257
    %3281 = vmatprep.subr.mxu0 0.0
    %3282 = vmatpush1.msra.mxu0 %v3258
    %3283 = vmatprep.subr.mxu0 0.0
    %3284 = vmatpush1.msra.mxu0 %v3259
    %3285 = vmatprep.subr.mxu0 0.0
    %3286 = vmatpush1.msra.mxu0 %v3260
    %3287 = vmatprep.subr.mxu0 0.0
    %3288 = vmatpush1.msra.mxu0 %v3261
    %3289 = vmatprep.subr.mxu0 0.0
    %3290 = vmatpush1.msra.mxu0 %v3262
    %3291 = vmatprep.subr.mxu0 0.0
    %3292 = vmatpush1.msra.mxu0 %v3263
    %3293 = vmatprep.subr.mxu0 0.0
    %3294 = vmatpush1.msra.mxu0 %v3264
    %3295 = vmatprep.subr.mxu0 0.0
    %3296 = vmatpush1.msra.mxu0 %v3265
    %3297 = vmatprep.subr.mxu0 0.0
    %3298 = vmatpush1.msra.mxu0 %v3266
    %3299 = vmatprep.subr.mxu0 0.0
    %3300 = vmatpush1.msra.mxu0 0.0
    %3301 = vmatprep.subr.mxu0 0.0
    %3302 = vmatpush1.msra.mxu0 0.0
    %3303 = vmatprep.subr.mxu0 0.0
    %3304 = vmatpush1.msra.mxu0 0.0
    %3305 = vmatprep.subr.mxu0 0.0
    %3306 = vmatpush1.msra.mxu0 0.0
    %3307 = vmatprep.subr.mxu0 0.0
    %3308 = vmatpush1.msra.mxu0 0.0
    %3309 = vmatprep.subr.mxu0 0.0
    %3310 = vmatpush1.msra.mxu0 0.0
    %3311 = vmatprep.subr.mxu0 0.0
    %3312 = vmatpush1.msra.mxu0 0.0
    %3313 = vmatprep.subr.mxu0 0.0
    %3314 = vmatpush1.msra.mxu0 0.0
    %3315 = vmatprep.subr.mxu0 0.0
    %3316 = vmatpush1.msra.mxu0 0.0
    %3317 = vmatprep.subr.mxu0 0.0
    %3318 = vmatpush1.msra.mxu0 0.0
    %3319 = vmatprep.subr.mxu0 0.0
    %3320 = vmatpush1.msra.mxu0 0.0
    %3321 = vmatprep.subr.mxu0 0.0
    %3322 = vmatpush1.msra.mxu0 0.0
    %3323 = vmatprep.subr.mxu0 0.0
    %3324 = vmatpush1.msra.mxu0 0.0
    %3325 = vmatprep.subr.mxu0 0.0
    %3326 = vmatpush1.msra.mxu0 0.0
    %3327 = vmatprep.subr.mxu0 0.0
    %3328 = vmatpush1.msra.mxu0 0.0
    %3329 = vmatprep.subr.mxu0 0.0
    %3330 = vmatpush1.msra.mxu0 0.0
    %3331 = vmatprep.mubr.f32.mxu0 0.0
    %3332 = vmatmul.mubr.f32.gmra.mrb[0].mxu0 %v3172
    %v3333 = vpop.f32.mrb[0].mxu0
    %v3334 = vadd.f32 0.0, %v3333
    %v3335 = vpop.f32.mrb[0].mxu0
    %3336 = vmatprep.mubr.f32.mxu0 0.0
    %3337 = vmatmul.mubr.f32.gmra.mrb[0].mxu0 %v3177
    %v3338 = vpop.f32.mrb[0].mxu0
    %v3339 = vadd.f32 0.0, %v3338
    %v3340 = vpop.f32.mrb[0].mxu0
    %3341 = vmatprep.mubr.f32.mxu0 0.0
    %3342 = vmatmul.mubr.f32.gmra.mrb[0].mxu0 %v3182
    %v3343 = vpop.f32.mrb[0].mxu0
    %v3344 = vadd.f32 0.0, %v3343
    %v3345 = vpop.f32.mrb[0].mxu0
    %3346 = vmatprep.mubr.f32.mxu0 0.0
    %3347 = vmatmul.mubr.f32.gmra.mrb[0].mxu0 %v3187
    %v3348 = vpop.f32.mrb[0].mxu0
    %v3349 = vadd.f32 0.0, %v3348
    %v3350 = vpop.f32.mrb[0].mxu0
    %3351 = vmatprep.mubr.f32.mxu0 0.0
    %3352 = vmatmul.mubr.f32.gmra.mrb[0].mxu0 %v3192
    %v3353 = vpop.f32.mrb[0].mxu0
    %v3354 = vadd.f32 0.0, %v3353
    %v3355 = vpop.f32.mrb[0].mxu0
    %3356 = vmatprep.mubr.f32.mxu0 0.0
    %3357 = vmatmul.mubr.f32.gmra.mrb[0].mxu0 %v3197
    %v3358 = vpop.f32.mrb[0].mxu0
    %v3359 = vadd.f32 0.0, %v3358
    %v3360 = vpop.f32.mrb[0].mxu0
    %3361 = vmatprep.mubr.f32.mxu0 0.0
    %3362 = vmatmul.mubr.f32.gmra.mrb[0].mxu0 %v3202
    %v3363 = vpop.f32.mrb[0].mxu0
    %v3364 = vadd.f32 0.0, %v3363
    %v3365 = vpop.f32.mrb[0].mxu0
    %3366 = vmatprep.mubr.f32.mxu0 0.0
    %3367 = vmatmul.mubr.f32.gmra.mrb[0].mxu0 %v3207
    %v3368 = vpop.f32.mrb[0].mxu0
    %v3369 = vadd.f32 0.0, %v3368
    %v3370 = vpop.f32.mrb[0].mxu0
    %3371 = vmatprep.mubr.f32.mxu0 0.0
    %3372 = vmatmul.mubr.f32.gmra.mrb[0].mxu0 %v3212
    %v3373 = vpop.f32.mrb[0].mxu0
    %v3374 = vadd.f32 0.0, %v3373
    %v3375 = vpop.f32.mrb[0].mxu0
    %3376 = vmatprep.mubr.f32.mxu0 0.0
    %3377 = vmatmul.mubr.f32.gmra.mrb[0].mxu0 %v3217
    %v3378 = vpop.f32.mrb[0].mxu0
    %v3379 = vadd.f32 0.0, %v3378
    %v3380 = vpop.f32.mrb[0].mxu0
    %3381 = vmatprep.mubr.f32.mxu0 0.0
    %3382 = vmatmul.mubr.f32.gmra.mrb[0].mxu0 %v3222
    %v3383 = vpop.f32.mrb[0].mxu0
    %v3384 = vadd.f32 0.0, %v3383
    %v3385 = vpop.f32.mrb[0].mxu0
    %3386 = vmatprep.mubr.f32.mxu0 0.0
    %3387 = vmatmul.mubr.f32.gmra.mrb[0].mxu0 %v3227
    %v3388 = vpop.f32.mrb[0].mxu0
    %v3389 = vadd.f32 0.0, %v3388
    %v3390 = vpop.f32.mrb[0].mxu0
    %3391 = vmatprep.mubr.f32.mxu0 0.0
    %3392 = vmatmul.mubr.f32.gmra.mrb[0].mxu0 %v3232
    %v3393 = vpop.f32.mrb[0].mxu0
    %v3394 = vadd.f32 0.0, %v3393
    %v3395 = vpop.f32.mrb[0].mxu0
    %3396 = vmatprep.mubr.f32.mxu0 0.0
    %3397 = vmatmul.mubr.f32.gmra.mrb[0].mxu0 %v3237
    %v3398 = vpop.f32.mrb[0].mxu0
    %v3399 = vadd.f32 0.0, %v3398
    %v3400 = vpop.f32.mrb[0].mxu0
    %3401 = vmatprep.mubr.f32.mxu0 0.0
    %3402 = vmatmul.mubr.f32.gmra.mrb[0].mxu0 %v3242
    %v3403 = vpop.f32.mrb[0].mxu0
    %v3404 = vadd.f32 0.0, %v3403
    %v3405 = vpop.f32.mrb[0].mxu0
    %3406 = vmatprep.mubr.f32.mxu0 0.0
    %3407 = vmatmul.mubr.f32.gmra.mrb[0].mxu0 %v3247
    %v3408 = vpop.f32.mrb[0].mxu0
    %v3409 = vadd.f32 0.0, %v3408
    %v3410 = vpop.f32.mrb[0].mxu0
    %3411 = vdwg.mxu0
    %v3412 = vadd.f32 %v2879, %v3334
    %v3413 = vadd.f32 %v2880, %v3339
    %v3414 = vadd.f32 %v2881, %v3344
    %v3415 = vadd.f32 %v2882, %v3349
    %v3416 = vadd.f32 %v2883, %v3354
    %v3417 = vadd.f32 %v2884, %v3359
    %v3418 = vadd.f32 %v2885, %v3364
    %v3419 = vadd.f32 %v2886, %v3369
    %v3420 = vadd.f32 %v2887, %v3374
    %v3421 = vadd.f32 %v2888, %v3379
    %v3422 = vadd.f32 %v2889, %v3384
    %v3423 = vadd.f32 %v2890, %v3389
    %v3424 = vadd.f32 %v2891, %v3394
    %v3425 = vadd.f32 %v2892, %v3399
    %v3426 = vadd.f32 %v2893, %v3404
    %v3427 = vadd.f32 %v2894, %v3409
    %s3428 = scalar_lea.vmem [#allocation5], 3072
    %v3429 = vld [vmem:[%s3428] sm:$0xff]
    %v3430 = vld [vmem:[%s3428 + $0x8] sm:$0xff]
    %v3431 = vld [vmem:[%s3428 + $0x10] sm:$0xff]
    %v3432 = vld [vmem:[%s3428 + $0x18] sm:$0xff]
    %v3433 = vld [vmem:[%s3428 + $0x20] sm:$0xff]
    %v3434 = vld [vmem:[%s3428 + $0x28] sm:$0xff]
    %v3435 = vld [vmem:[%s3428 + $0x30] sm:$0xff]
    %v3436 = vld [vmem:[%s3428 + $0x38] sm:$0xff]
    %v3437 = vld [vmem:[%s3428 + $0x40] sm:$0xff]
    %v3438 = vld [vmem:[%s3428 + $0x48] sm:$0xff]
    %v3439 = vld [vmem:[%s3428 + $0x50] sm:$0xff]
    %v3440 = vld [vmem:[%s3428 + $0x58] sm:$0xff]
    %v3441 = vld [vmem:[%s3428 + $0x60] sm:$0xff]
    %v3442 = vld [vmem:[%s3428 + $0x68] sm:$0xff]
    %v3443 = vld [vmem:[%s3428 + $0x70] sm:$0xff]
    %v3444 = vld [vmem:[%s3428 + $0x78] sm:$0xff]
    %v3445 = vld [vmem:[%s3428 + $0x80] sm:$0xff]
    %v3446 = vld [vmem:[%s3428 + $0x88] sm:$0xff]
    %v3447 = vld [vmem:[%s3428 + $0x90] sm:$0xff]
    %v3448 = vld [vmem:[%s3428 + $0x98] sm:$0xff]
    %v3449 = vld [vmem:[%s3428 + $0xa0] sm:$0xff]
    %v3450 = vld [vmem:[%s3428 + $0xa8] sm:$0xff]
    %v3451 = vld [vmem:[%s3428 + $0xb0] sm:$0xff]
    %v3452 = vld [vmem:[%s3428 + $0xb8] sm:$0xff]
    %v3453 = vld [vmem:[%s3428 + $0xc0] sm:$0xff]
    %v3454 = vld [vmem:[%s3428 + $0xc8] sm:$0xff]
    %v3455 = vld [vmem:[%s3428 + $0xd0] sm:$0xff]
    %v3456 = vld [vmem:[%s3428 + $0xd8] sm:$0xff]
    %v3457 = vld [vmem:[%s3428 + $0xe0] sm:$0xff]
    %v3458 = vld [vmem:[%s3428 + $0xe8] sm:$0xff]
    %v3459 = vld [vmem:[%s3428 + $0xf0] sm:$0xff]
    %v3460 = vld [vmem:[%s3428 + $0xf8] sm:$0xff]
    %v3461 = vld [vmem:[%s3428 + $0x100] sm:$0xff]
    %v3462 = vld [vmem:[%s3428 + $0x108] sm:$0xff]
    %v3463 = vld [vmem:[%s3428 + $0x110] sm:$0xff]
    %v3464 = vld [vmem:[%s3428 + $0x118] sm:$0xff]
    %v3465 = vld [vmem:[%s3428 + $0x120] sm:$0xff]
    %v3466 = vld [vmem:[%s3428 + $0x128] sm:$0xff]
    %v3467 = vld [vmem:[%s3428 + $0x130] sm:$0xff]
    %v3468 = vld [vmem:[%s3428 + $0x138] sm:$0xff]
    %v3469 = vld [vmem:[%s3428 + $0x140] sm:$0xff]
    %v3470 = vld [vmem:[%s3428 + $0x148] sm:$0xff]
    %v3471 = vld [vmem:[%s3428 + $0x150] sm:$0xff]
    %v3472 = vld [vmem:[%s3428 + $0x158] sm:$0xff]
    %v3473 = vld [vmem:[%s3428 + $0x160] sm:$0xff]
    %v3474 = vld [vmem:[%s3428 + $0x168] sm:$0xff]
    %v3475 = vld [vmem:[%s3428 + $0x170] sm:$0xff]
    %v3476 = vld [vmem:[%s3428 + $0x178] sm:$0xff]
    %v3477 = vld [vmem:[%s3428 + $0x180] sm:$0xff]
    %v3478 = vld [vmem:[%s3428 + $0x188] sm:$0xff]
    %v3479 = vld [vmem:[%s3428 + $0x190] sm:$0xff]
    %v3480 = vld [vmem:[%s3428 + $0x198] sm:$0xff]
    %v3481 = vld [vmem:[%s3428 + $0x1a0] sm:$0xff]
    %v3482 = vld [vmem:[%s3428 + $0x1a8] sm:$0xff]
    %v3483 = vld [vmem:[%s3428 + $0x1b0] sm:$0xff]
    %v3484 = vld [vmem:[%s3428 + $0x1b8] sm:$0xff]
    %v3485 = vld [vmem:[%s3428 + $0x1c0] sm:$0xff]
    %v3486 = vld [vmem:[%s3428 + $0x1c8] sm:$0xff]
    %v3487 = vld [vmem:[%s3428 + $0x1d0] sm:$0xff]
    %v3488 = vld [vmem:[%s3428 + $0x1d8] sm:$0xff]
    %v3489 = vld [vmem:[%s3428 + $0x1e0] sm:$0xff]
    %v3490 = vld [vmem:[%s3428 + $0x1e8] sm:$0xff]
    %v3491 = vld [vmem:[%s3428 + $0x1f0] sm:$0xff]
    %v3492 = vld [vmem:[%s3428 + $0x1f8] sm:$0xff]
    %3493 = vmatprep.subr.mxu0 0.0
    %3494 = vmatpush1.msra.mxu0 %v200
    %3495 = vmatprep.subr.mxu0 0.0
    %3496 = vmatpush1.msra.mxu0 %v201
    %3497 = vmatprep.subr.mxu0 0.0
    %3498 = vmatpush1.msra.mxu0 %v202
    %3499 = vmatprep.subr.mxu0 0.0
    %3500 = vmatpush1.msra.mxu0 %v203
    %3501 = vmatprep.subr.mxu0 0.0
    %3502 = vmatpush1.msra.mxu0 %v204
    %3503 = vmatprep.subr.mxu0 0.0
    %3504 = vmatpush1.msra.mxu0 %v205
    %3505 = vmatprep.subr.mxu0 0.0
    %3506 = vmatpush1.msra.mxu0 %v206
    %3507 = vmatprep.subr.mxu0 0.0
    %3508 = vmatpush1.msra.mxu0 %v207
    %3509 = vmatprep.subr.mxu0 0.0
    %3510 = vmatpush1.msra.mxu0 %v208
    %3511 = vmatprep.subr.mxu0 0.0
    %3512 = vmatpush1.msra.mxu0 %v209
    %3513 = vmatprep.subr.mxu0 0.0
    %3514 = vmatpush1.msra.mxu0 %v210
    %3515 = vmatprep.subr.mxu0 0.0
    %3516 = vmatpush1.msra.mxu0 %v211
    %3517 = vmatprep.subr.mxu0 0.0
    %3518 = vmatpush1.msra.mxu0 %v212
    %3519 = vmatprep.subr.mxu0 0.0
    %3520 = vmatpush1.msra.mxu0 %v213
    %3521 = vmatprep.subr.mxu0 0.0
    %3522 = vmatpush1.msra.mxu0 %v214
    %3523 = vmatprep.subr.mxu0 0.0
    %3524 = vmatpush1.msra.mxu0 %v215
    %3525 = vmatprep.subr.mxu0 0.0
    %3526 = vmatpush1.msra.mxu0 %v216
    %3527 = vmatprep.subr.mxu0 0.0
    %3528 = vmatpush1.msra.mxu0 %v217
    %3529 = vmatprep.subr.mxu0 0.0
    %3530 = vmatpush1.msra.mxu0 %v218
    %3531 = vmatprep.subr.mxu0 0.0
    %3532 = vmatpush1.msra.mxu0 %v219
    %3533 = vmatprep.subr.mxu0 0.0
    %3534 = vmatpush1.msra.mxu0 %v220
    %3535 = vmatprep.subr.mxu0 0.0
    %3536 = vmatpush1.msra.mxu0 %v221
    %3537 = vmatprep.subr.mxu0 0.0
    %3538 = vmatpush1.msra.mxu0 %v222
    %3539 = vmatprep.subr.mxu0 0.0
    %3540 = vmatpush1.msra.mxu0 %v223
    %3541 = vmatprep.subr.mxu0 0.0
    %3542 = vmatpush1.msra.mxu0 %v224
    %3543 = vmatprep.subr.mxu0 0.0
    %3544 = vmatpush1.msra.mxu0 %v225
    %3545 = vmatprep.subr.mxu0 0.0
    %3546 = vmatpush1.msra.mxu0 %v226
    %3547 = vmatprep.subr.mxu0 0.0
    %3548 = vmatpush1.msra.mxu0 %v227
    %3549 = vmatprep.subr.mxu0 0.0
    %3550 = vmatpush1.msra.mxu0 %v228
    %3551 = vmatprep.subr.mxu0 0.0
    %3552 = vmatpush1.msra.mxu0 %v229
    %3553 = vmatprep.subr.mxu0 0.0
    %3554 = vmatpush1.msra.mxu0 %v230
    %3555 = vmatprep.subr.mxu0 0.0
    %3556 = vmatpush1.msra.mxu0 %v231
    %3557 = vmatprep.mubr.f32.mxu0 %v3430
    %3558 = vmatmul.mubr.f32.gmra.mrb[0].mxu0 %v3429
    %v3559 = vpop.f32.mrb[0].mxu0
    %v3560 = vadd.f32 0.0, %v3559
    %v3561 = vpop.f32.mrb[0].mxu0
    %3562 = vmatprep.mubr.f32.mxu0 %v3434
    %3563 = vmatmul.mubr.f32.gmra.mrb[0].mxu0 %v3433
    %v3564 = vpop.f32.mrb[0].mxu0
    %v3565 = vadd.f32 0.0, %v3564
    %v3566 = vpop.f32.mrb[0].mxu0
    %3567 = vmatprep.mubr.f32.mxu0 %v3438
    %3568 = vmatmul.mubr.f32.gmra.mrb[0].mxu0 %v3437
    %v3569 = vpop.f32.mrb[0].mxu0
    %v3570 = vadd.f32 0.0, %v3569
    %v3571 = vpop.f32.mrb[0].mxu0
    %3572 = vmatprep.mubr.f32.mxu0 %v3442
    %3573 = vmatmul.mubr.f32.gmra.mrb[0].mxu0 %v3441
    %v3574 = vpop.f32.mrb[0].mxu0
    %v3575 = vadd.f32 0.0, %v3574
    %v3576 = vpop.f32.mrb[0].mxu0
    %3577 = vmatprep.mubr.f32.mxu0 %v3446
    %3578 = vmatmul.mubr.f32.gmra.mrb[0].mxu0 %v3445
    %v3579 = vpop.f32.mrb[0].mxu0
    %v3580 = vadd.f32 0.0, %v3579
    %v3581 = vpop.f32.mrb[0].mxu0
    %3582 = vmatprep.mubr.f32.mxu0 %v3450
    %3583 = vmatmul.mubr.f32.gmra.mrb[0].mxu0 %v3449
    %v3584 = vpop.f32.mrb[0].mxu0
    %v3585 = vadd.f32 0.0, %v3584
    %v3586 = vpop.f32.mrb[0].mxu0
    %3587 = vmatprep.mubr.f32.mxu0 %v3454
    %3588 = vmatmul.mubr.f32.gmra.mrb[0].mxu0 %v3453
    %v3589 = vpop.f32.mrb[0].mxu0
    %v3590 = vadd.f32 0.0, %v3589
    %v3591 = vpop.f32.mrb[0].mxu0
    %3592 = vmatprep.mubr.f32.mxu0 %v3458
    %3593 = vmatmul.mubr.f32.gmra.mrb[0].mxu0 %v3457
    %v3594 = vpop.f32.mrb[0].mxu0
    %v3595 = vadd.f32 0.0, %v3594
    %v3596 = vpop.f32.mrb[0].mxu0
    %3597 = vmatprep.mubr.f32.mxu0 %v3462
    %3598 = vmatmul.mubr.f32.gmra.mrb[0].mxu0 %v3461
    %v3599 = vpop.f32.mrb[0].mxu0
    %v3600 = vadd.f32 0.0, %v3599
    %v3601 = vpop.f32.mrb[0].mxu0
    %3602 = vmatprep.mubr.f32.mxu0 %v3466
    %3603 = vmatmul.mubr.f32.gmra.mrb[0].mxu0 %v3465
    %v3604 = vpop.f32.mrb[0].mxu0
    %v3605 = vadd.f32 0.0, %v3604
    %v3606 = vpop.f32.mrb[0].mxu0
    %3607 = vmatprep.mubr.f32.mxu0 %v3470
    %3608 = vmatmul.mubr.f32.gmra.mrb[0].mxu0 %v3469
    %v3609 = vpop.f32.mrb[0].mxu0
    %v3610 = vadd.f32 0.0, %v3609
    %v3611 = vpop.f32.mrb[0].mxu0
    %3612 = vmatprep.mubr.f32.mxu0 %v3474
    %3613 = vmatmul.mubr.f32.gmra.mrb[0].mxu0 %v3473
    %v3614 = vpop.f32.mrb[0].mxu0
    %v3615 = vadd.f32 0.0, %v3614
    %v3616 = vpop.f32.mrb[0].mxu0
    %3617 = vmatprep.mubr.f32.mxu0 %v3478
    %3618 = vmatmul.mubr.f32.gmra.mrb[0].mxu0 %v3477
    %v3619 = vpop.f32.mrb[0].mxu0
    %v3620 = vadd.f32 0.0, %v3619
    %v3621 = vpop.f32.mrb[0].mxu0
    %3622 = vmatprep.mubr.f32.mxu0 %v3482
    %3623 = vmatmul.mubr.f32.gmra.mrb[0].mxu0 %v3481
    %v3624 = vpop.f32.mrb[0].mxu0
    %v3625 = vadd.f32 0.0, %v3624
    %v3626 = vpop.f32.mrb[0].mxu0
    %3627 = vmatprep.mubr.f32.mxu0 %v3486
    %3628 = vmatmul.mubr.f32.gmra.mrb[0].mxu0 %v3485
    %v3629 = vpop.f32.mrb[0].mxu0
    %v3630 = vadd.f32 0.0, %v3629
    %v3631 = vpop.f32.mrb[0].mxu0
    %3632 = vmatprep.mubr.f32.mxu0 %v3490
    %3633 = vmatmul.mubr.f32.gmra.mrb[0].mxu0 %v3489
    %v3634 = vpop.f32.mrb[0].mxu0
    %v3635 = vadd.f32 0.0, %v3634
    %v3636 = vpop.f32.mrb[0].mxu0
    %3637 = vdwg.mxu0
    %3638 = vmatprep.subr.mxu0 0.0
    %3639 = vmatpush1.msra.mxu0 %v232
    %3640 = vmatprep.subr.mxu0 0.0
    %3641 = vmatpush1.msra.mxu0 %v233
    %3642 = vmatprep.subr.mxu0 0.0
    %3643 = vmatpush1.msra.mxu0 %v234
    %3644 = vmatprep.subr.mxu0 0.0
    %3645 = vmatpush1.msra.mxu0 %v235
    %3646 = vmatprep.subr.mxu0 0.0
    %3647 = vmatpush1.msra.mxu0 %v236
    %3648 = vmatprep.subr.mxu0 0.0
    %3649 = vmatpush1.msra.mxu0 %v237
    %3650 = vmatprep.subr.mxu0 0.0
    %3651 = vmatpush1.msra.mxu0 %v238
    %3652 = vmatprep.subr.mxu0 0.0
    %3653 = vmatpush1.msra.mxu0 %v239
    %3654 = vmatprep.subr.mxu0 0.0
    %3655 = vmatpush1.msra.mxu0 %v240
    %3656 = vmatprep.subr.mxu0 0.0
    %3657 = vmatpush1.msra.mxu0 %v241
    %3658 = vmatprep.subr.mxu0 0.0
    %3659 = vmatpush1.msra.mxu0 %v242
    %3660 = vmatprep.subr.mxu0 0.0
    %3661 = vmatpush1.msra.mxu0 %v243
    %3662 = vmatprep.subr.mxu0 0.0
    %3663 = vmatpush1.msra.mxu0 %v244
    %3664 = vmatprep.subr.mxu0 0.0
    %3665 = vmatpush1.msra.mxu0 %v245
    %3666 = vmatprep.subr.mxu0 0.0
    %3667 = vmatpush1.msra.mxu0 %v246
    %3668 = vmatprep.subr.mxu0 0.0
    %3669 = vmatpush1.msra.mxu0 %v247
    %3670 = vmatprep.subr.mxu0 0.0
    %3671 = vmatpush1.msra.mxu0 %v248
    %3672 = vmatprep.subr.mxu0 0.0
    %3673 = vmatpush1.msra.mxu0 %v249
    %3674 = vmatprep.subr.mxu0 0.0
    %3675 = vmatpush1.msra.mxu0 %v250
    %3676 = vmatprep.subr.mxu0 0.0
    %3677 = vmatpush1.msra.mxu0 %v251
    %3678 = vmatprep.subr.mxu0 0.0
    %3679 = vmatpush1.msra.mxu0 %v252
    %3680 = vmatprep.subr.mxu0 0.0
    %3681 = vmatpush1.msra.mxu0 %v253
    %3682 = vmatprep.subr.mxu0 0.0
    %3683 = vmatpush1.msra.mxu0 %v254
    %3684 = vmatprep.subr.mxu0 0.0
    %3685 = vmatpush1.msra.mxu0 %v255
    %3686 = vmatprep.subr.mxu0 0.0
    %3687 = vmatpush1.msra.mxu0 %v256
    %3688 = vmatprep.subr.mxu0 0.0
    %3689 = vmatpush1.msra.mxu0 %v257
    %3690 = vmatprep.subr.mxu0 0.0
    %3691 = vmatpush1.msra.mxu0 %v258
    %3692 = vmatprep.subr.mxu0 0.0
    %3693 = vmatpush1.msra.mxu0 %v259
    %3694 = vmatprep.subr.mxu0 0.0
    %3695 = vmatpush1.msra.mxu0 %v260
    %3696 = vmatprep.subr.mxu0 0.0
    %3697 = vmatpush1.msra.mxu0 %v261
    %3698 = vmatprep.subr.mxu0 0.0
    %3699 = vmatpush1.msra.mxu0 %v262
    %3700 = vmatprep.subr.mxu0 0.0
    %3701 = vmatpush1.msra.mxu0 %v263
    %3702 = vmatprep.mubr.f32.mxu0 %v3432
    %3703 = vmatmul.mubr.f32.gmra.mrb[0].mxu0 %v3431
    %v3704 = vpop.f32.mrb[0].mxu0
    %v3705 = vadd.f32 %v3560, %v3704
    %v3706 = vpop.f32.mrb[0].mxu0
    %3707 = vmatprep.mubr.f32.mxu0 %v3436
    %3708 = vmatmul.mubr.f32.gmra.mrb[0].mxu0 %v3435
    %v3709 = vpop.f32.mrb[0].mxu0
    %v3710 = vadd.f32 %v3565, %v3709
    %v3711 = vpop.f32.mrb[0].mxu0
    %3712 = vmatprep.mubr.f32.mxu0 %v3440
    %3713 = vmatmul.mubr.f32.gmra.mrb[0].mxu0 %v3439
    %v3714 = vpop.f32.mrb[0].mxu0
    %v3715 = vadd.f32 %v3570, %v3714
    %v3716 = vpop.f32.mrb[0].mxu0
    %3717 = vmatprep.mubr.f32.mxu0 %v3444
    %3718 = vmatmul.mubr.f32.gmra.mrb[0].mxu0 %v3443
    %v3719 = vpop.f32.mrb[0].mxu0
    %v3720 = vadd.f32 %v3575, %v3719
    %v3721 = vpop.f32.mrb[0].mxu0
    %3722 = vmatprep.mubr.f32.mxu0 %v3448
    %3723 = vmatmul.mubr.f32.gmra.mrb[0].mxu0 %v3447
    %v3724 = vpop.f32.mrb[0].mxu0
    %v3725 = vadd.f32 %v3580, %v3724
    %v3726 = vpop.f32.mrb[0].mxu0
    %3727 = vmatprep.mubr.f32.mxu0 %v3452
    %3728 = vmatmul.mubr.f32.gmra.mrb[0].mxu0 %v3451
    %v3729 = vpop.f32.mrb[0].mxu0
    %v3730 = vadd.f32 %v3585, %v3729
    %v3731 = vpop.f32.mrb[0].mxu0
    %3732 = vmatprep.mubr.f32.mxu0 %v3456
    %3733 = vmatmul.mubr.f32.gmra.mrb[0].mxu0 %v3455
    %v3734 = vpop.f32.mrb[0].mxu0
    %v3735 = vadd.f32 %v3590, %v3734
    %v3736 = vpop.f32.mrb[0].mxu0
    %3737 = vmatprep.mubr.f32.mxu0 %v3460
    %3738 = vmatmul.mubr.f32.gmra.mrb[0].mxu0 %v3459
    %v3739 = vpop.f32.mrb[0].mxu0
    %v3740 = vadd.f32 %v3595, %v3739
    %v3741 = vpop.f32.mrb[0].mxu0
    %3742 = vmatprep.mubr.f32.mxu0 %v3464
    %3743 = vmatmul.mubr.f32.gmra.mrb[0].mxu0 %v3463
    %v3744 = vpop.f32.mrb[0].mxu0
    %v3745 = vadd.f32 %v3600, %v3744
    %v3746 = vpop.f32.mrb[0].mxu0
    %3747 = vmatprep.mubr.f32.mxu0 %v3468
    %3748 = vmatmul.mubr.f32.gmra.mrb[0].mxu0 %v3467
    %v3749 = vpop.f32.mrb[0].mxu0
    %v3750 = vadd.f32 %v3605, %v3749
    %v3751 = vpop.f32.mrb[0].mxu0
    %3752 = vmatprep.mubr.f32.mxu0 %v3472
    %3753 = vmatmul.mubr.f32.gmra.mrb[0].mxu0 %v3471
    %v3754 = vpop.f32.mrb[0].mxu0
    %v3755 = vadd.f32 %v3610, %v3754
    %v3756 = vpop.f32.mrb[0].mxu0
    %3757 = vmatprep.mubr.f32.mxu0 %v3476
    %3758 = vmatmul.mubr.f32.gmra.mrb[0].mxu0 %v3475
    %v3759 = vpop.f32.mrb[0].mxu0
    %v3760 = vadd.f32 %v3615, %v3759
    %v3761 = vpop.f32.mrb[0].mxu0
    %3762 = vmatprep.mubr.f32.mxu0 %v3480
    %3763 = vmatmul.mubr.f32.gmra.mrb[0].mxu0 %v3479
    %v3764 = vpop.f32.mrb[0].mxu0
    %v3765 = vadd.f32 %v3620, %v3764
    %v3766 = vpop.f32.mrb[0].mxu0
    %3767 = vmatprep.mubr.f32.mxu0 %v3484
    %3768 = vmatmul.mubr.f32.gmra.mrb[0].mxu0 %v3483
    %v3769 = vpop.f32.mrb[0].mxu0
    %v3770 = vadd.f32 %v3625, %v3769
    %v3771 = vpop.f32.mrb[0].mxu0
    %3772 = vmatprep.mubr.f32.mxu0 %v3488
    %3773 = vmatmul.mubr.f32.gmra.mrb[0].mxu0 %v3487
    %v3774 = vpop.f32.mrb[0].mxu0
    %v3775 = vadd.f32 %v3630, %v3774
    %v3776 = vpop.f32.mrb[0].mxu0
    %3777 = vmatprep.mubr.f32.mxu0 %v3492
    %3778 = vmatmul.mubr.f32.gmra.mrb[0].mxu0 %v3491
    %v3779 = vpop.f32.mrb[0].mxu0
    %v3780 = vadd.f32 %v3635, %v3779
    %v3781 = vpop.f32.mrb[0].mxu0
    %3782 = vdwg.mxu0
    %s3783 = scalar_lea.vmem [#allocation10], 768
    %v3784 = vld [vmem:[%s3783] sm:$0xff]
    %v3785 = vld [vmem:[%s3783 + $0x8] sm:$0xff]
    %v3786 = vld [vmem:[%s3783 + $0x10] sm:$0xff]
    %v3787 = vld [vmem:[%s3783 + $0x18] sm:$0xff]
    %v3788 = vld [vmem:[%s3783 + $0x20] sm:$0xff]
    %v3789 = vld [vmem:[%s3783 + $0x28] sm:$0xff]
    %v3790 = vld [vmem:[%s3783 + $0x30] sm:$0xff]
    %v3791 = vld [vmem:[%s3783 + $0x38] sm:$0xff]
    %v3792 = vld [vmem:[%s3783 + $0x40] sm:$0xff]
    %v3793 = vld [vmem:[%s3783 + $0x48] sm:$0xff]
    %v3794 = vld [vmem:[%s3783 + $0x50] sm:$0xff]
    %v3795 = vld [vmem:[%s3783 + $0x58] sm:$0xff]
    %v3796 = vld [vmem:[%s3783 + $0x60] sm:$0xff]
    %v3797 = vld [vmem:[%s3783 + $0x68] sm:$0xff]
    %v3798 = vld [vmem:[%s3783 + $0x70] sm:$0xff]
    %v3799 = vld [vmem:[%s3783 + $0x78] sm:$0xff]
    %3800 = vmatprep.subr.mxu0 0.0
    %3801 = vmatpush1.msra.mxu0 %v3784
    %3802 = vmatprep.subr.mxu0 0.0
    %3803 = vmatpush1.msra.mxu0 %v3785
    %3804 = vmatprep.subr.mxu0 0.0
    %3805 = vmatpush1.msra.mxu0 %v3786
    %3806 = vmatprep.subr.mxu0 0.0
    %3807 = vmatpush1.msra.mxu0 %v3787
    %3808 = vmatprep.subr.mxu0 0.0
    %3809 = vmatpush1.msra.mxu0 %v3788
    %3810 = vmatprep.subr.mxu0 0.0
    %3811 = vmatpush1.msra.mxu0 %v3789
    %3812 = vmatprep.subr.mxu0 0.0
    %3813 = vmatpush1.msra.mxu0 %v3790
    %3814 = vmatprep.subr.mxu0 0.0
    %3815 = vmatpush1.msra.mxu0 %v3791
    %3816 = vmatprep.subr.mxu0 0.0
    %3817 = vmatpush1.msra.mxu0 %v3792
    %3818 = vmatprep.subr.mxu0 0.0
    %3819 = vmatpush1.msra.mxu0 %v3793
    %3820 = vmatprep.subr.mxu0 0.0
    %3821 = vmatpush1.msra.mxu0 %v3794
    %3822 = vmatprep.subr.mxu0 0.0
    %3823 = vmatpush1.msra.mxu0 %v3795
    %3824 = vmatprep.subr.mxu0 0.0
    %3825 = vmatpush1.msra.mxu0 %v3796
    %3826 = vmatprep.subr.mxu0 0.0
    %3827 = vmatpush1.msra.mxu0 %v3797
    %3828 = vmatprep.subr.mxu0 0.0
    %3829 = vmatpush1.msra.mxu0 %v3798
    %3830 = vmatprep.subr.mxu0 0.0
    %3831 = vmatpush1.msra.mxu0 %v3799
    %3832 = vmatprep.subr.mxu0 0.0
    %3833 = vmatpush1.msra.mxu0 0.0
    %3834 = vmatprep.subr.mxu0 0.0
    %3835 = vmatpush1.msra.mxu0 0.0
    %3836 = vmatprep.subr.mxu0 0.0
    %3837 = vmatpush1.msra.mxu0 0.0
    %3838 = vmatprep.subr.mxu0 0.0
    %3839 = vmatpush1.msra.mxu0 0.0
    %3840 = vmatprep.subr.mxu0 0.0
    %3841 = vmatpush1.msra.mxu0 0.0
    %3842 = vmatprep.subr.mxu0 0.0
    %3843 = vmatpush1.msra.mxu0 0.0
    %3844 = vmatprep.subr.mxu0 0.0
    %3845 = vmatpush1.msra.mxu0 0.0
    %3846 = vmatprep.subr.mxu0 0.0
    %3847 = vmatpush1.msra.mxu0 0.0
    %3848 = vmatprep.subr.mxu0 0.0
    %3849 = vmatpush1.msra.mxu0 0.0
    %3850 = vmatprep.subr.mxu0 0.0
    %3851 = vmatpush1.msra.mxu0 0.0
    %3852 = vmatprep.subr.mxu0 0.0
    %3853 = vmatpush1.msra.mxu0 0.0
    %3854 = vmatprep.subr.mxu0 0.0
    %3855 = vmatpush1.msra.mxu0 0.0
    %3856 = vmatprep.subr.mxu0 0.0
    %3857 = vmatpush1.msra.mxu0 0.0
    %3858 = vmatprep.subr.mxu0 0.0
    %3859 = vmatpush1.msra.mxu0 0.0
    %3860 = vmatprep.subr.mxu0 0.0
    %3861 = vmatpush1.msra.mxu0 0.0
    %3862 = vmatprep.subr.mxu0 0.0
    %3863 = vmatpush1.msra.mxu0 0.0
    %3864 = vmatprep.mubr.f32.mxu0 0.0
    %3865 = vmatmul.mubr.f32.gmra.mrb[0].mxu0 %v3705
    %v3866 = vpop.f32.mrb[0].mxu0
    %v3867 = vadd.f32 0.0, %v3866
    %v3868 = vpop.f32.mrb[0].mxu0
    %3869 = vmatprep.mubr.f32.mxu0 0.0
    %3870 = vmatmul.mubr.f32.gmra.mrb[0].mxu0 %v3710
    %v3871 = vpop.f32.mrb[0].mxu0
    %v3872 = vadd.f32 0.0, %v3871
    %v3873 = vpop.f32.mrb[0].mxu0
    %3874 = vmatprep.mubr.f32.mxu0 0.0
    %3875 = vmatmul.mubr.f32.gmra.mrb[0].mxu0 %v3715
    %v3876 = vpop.f32.mrb[0].mxu0
    %v3877 = vadd.f32 0.0, %v3876
    %v3878 = vpop.f32.mrb[0].mxu0
    %3879 = vmatprep.mubr.f32.mxu0 0.0
    %3880 = vmatmul.mubr.f32.gmra.mrb[0].mxu0 %v3720
    %v3881 = vpop.f32.mrb[0].mxu0
    %v3882 = vadd.f32 0.0, %v3881
    %v3883 = vpop.f32.mrb[0].mxu0
    %3884 = vmatprep.mubr.f32.mxu0 0.0
    %3885 = vmatmul.mubr.f32.gmra.mrb[0].mxu0 %v3725
    %v3886 = vpop.f32.mrb[0].mxu0
    %v3887 = vadd.f32 0.0, %v3886
    %v3888 = vpop.f32.mrb[0].mxu0
    %3889 = vmatprep.mubr.f32.mxu0 0.0
    %3890 = vmatmul.mubr.f32.gmra.mrb[0].mxu0 %v3730
    %v3891 = vpop.f32.mrb[0].mxu0
    %v3892 = vadd.f32 0.0, %v3891
    %v3893 = vpop.f32.mrb[0].mxu0
    %3894 = vmatprep.mubr.f32.mxu0 0.0
    %3895 = vmatmul.mubr.f32.gmra.mrb[0].mxu0 %v3735
    %v3896 = vpop.f32.mrb[0].mxu0
    %v3897 = vadd.f32 0.0, %v3896
    %v3898 = vpop.f32.mrb[0].mxu0
    %3899 = vmatprep.mubr.f32.mxu0 0.0
    %3900 = vmatmul.mubr.f32.gmra.mrb[0].mxu0 %v3740
    %v3901 = vpop.f32.mrb[0].mxu0
    %v3902 = vadd.f32 0.0, %v3901
    %v3903 = vpop.f32.mrb[0].mxu0
    %3904 = vmatprep.mubr.f32.mxu0 0.0
    %3905 = vmatmul.mubr.f32.gmra.mrb[0].mxu0 %v3745
    %v3906 = vpop.f32.mrb[0].mxu0
    %v3907 = vadd.f32 0.0, %v3906
    %v3908 = vpop.f32.mrb[0].mxu0
    %3909 = vmatprep.mubr.f32.mxu0 0.0
    %3910 = vmatmul.mubr.f32.gmra.mrb[0].mxu0 %v3750
    %v3911 = vpop.f32.mrb[0].mxu0
    %v3912 = vadd.f32 0.0, %v3911
    %v3913 = vpop.f32.mrb[0].mxu0
    %3914 = vmatprep.mubr.f32.mxu0 0.0
    %3915 = vmatmul.mubr.f32.gmra.mrb[0].mxu0 %v3755
    %v3916 = vpop.f32.mrb[0].mxu0
    %v3917 = vadd.f32 0.0, %v3916
    %v3918 = vpop.f32.mrb[0].mxu0
    %3919 = vmatprep.mubr.f32.mxu0 0.0
    %3920 = vmatmul.mubr.f32.gmra.mrb[0].mxu0 %v3760
    %v3921 = vpop.f32.mrb[0].mxu0
    %v3922 = vadd.f32 0.0, %v3921
    %v3923 = vpop.f32.mrb[0].mxu0
    %3924 = vmatprep.mubr.f32.mxu0 0.0
    %3925 = vmatmul.mubr.f32.gmra.mrb[0].mxu0 %v3765
    %v3926 = vpop.f32.mrb[0].mxu0
    %v3927 = vadd.f32 0.0, %v3926
    %v3928 = vpop.f32.mrb[0].mxu0
    %3929 = vmatprep.mubr.f32.mxu0 0.0
    %3930 = vmatmul.mubr.f32.gmra.mrb[0].mxu0 %v3770
    %v3931 = vpop.f32.mrb[0].mxu0
    %v3932 = vadd.f32 0.0, %v3931
    %v3933 = vpop.f32.mrb[0].mxu0
    %3934 = vmatprep.mubr.f32.mxu0 0.0
    %3935 = vmatmul.mubr.f32.gmra.mrb[0].mxu0 %v3775
    %v3936 = vpop.f32.mrb[0].mxu0
    %v3937 = vadd.f32 0.0, %v3936
    %v3938 = vpop.f32.mrb[0].mxu0
    %3939 = vmatprep.mubr.f32.mxu0 0.0
    %3940 = vmatmul.mubr.f32.gmra.mrb[0].mxu0 %v3780
    %v3941 = vpop.f32.mrb[0].mxu0
    %v3942 = vadd.f32 0.0, %v3941
    %v3943 = vpop.f32.mrb[0].mxu0
    %3944 = vdwg.mxu0
    %v3945 = vadd.f32 %v3412, %v3867
    %v3946 = vadd.f32 %v3413, %v3872
    %v3947 = vadd.f32 %v3414, %v3877
    %v3948 = vadd.f32 %v3415, %v3882
    %v3949 = vadd.f32 %v3416, %v3887
    %v3950 = vadd.f32 %v3417, %v3892
    %v3951 = vadd.f32 %v3418, %v3897
    %v3952 = vadd.f32 %v3419, %v3902
    %v3953 = vadd.f32 %v3420, %v3907
    %v3954 = vadd.f32 %v3421, %v3912
    %v3955 = vadd.f32 %v3422, %v3917
    %v3956 = vadd.f32 %v3423, %v3922
    %v3957 = vadd.f32 %v3424, %v3927
    %v3958 = vadd.f32 %v3425, %v3932
    %v3959 = vadd.f32 %v3426, %v3937
    %v3960 = vadd.f32 %v3427, %v3942
    %s3961 = scalar_lea.vmem [#allocation5], 3584
    %v3962 = vld [vmem:[%s3961] sm:$0xff]
    %v3963 = vld [vmem:[%s3961 + $0x8] sm:$0xff]
    %v3964 = vld [vmem:[%s3961 + $0x10] sm:$0xff]
    %v3965 = vld [vmem:[%s3961 + $0x18] sm:$0xff]
    %v3966 = vld [vmem:[%s3961 + $0x20] sm:$0xff]
    %v3967 = vld [vmem:[%s3961 + $0x28] sm:$0xff]
    %v3968 = vld [vmem:[%s3961 + $0x30] sm:$0xff]
    %v3969 = vld [vmem:[%s3961 + $0x38] sm:$0xff]
    %v3970 = vld [vmem:[%s3961 + $0x40] sm:$0xff]
    %v3971 = vld [vmem:[%s3961 + $0x48] sm:$0xff]
    %v3972 = vld [vmem:[%s3961 + $0x50] sm:$0xff]
    %v3973 = vld [vmem:[%s3961 + $0x58] sm:$0xff]
    %v3974 = vld [vmem:[%s3961 + $0x60] sm:$0xff]
    %v3975 = vld [vmem:[%s3961 + $0x68] sm:$0xff]
    %v3976 = vld [vmem:[%s3961 + $0x70] sm:$0xff]
    %v3977 = vld [vmem:[%s3961 + $0x78] sm:$0xff]
    %v3978 = vld [vmem:[%s3961 + $0x80] sm:$0xff]
    %v3979 = vld [vmem:[%s3961 + $0x88] sm:$0xff]
    %v3980 = vld [vmem:[%s3961 + $0x90] sm:$0xff]
    %v3981 = vld [vmem:[%s3961 + $0x98] sm:$0xff]
    %v3982 = vld [vmem:[%s3961 + $0xa0] sm:$0xff]
    %v3983 = vld [vmem:[%s3961 + $0xa8] sm:$0xff]
    %v3984 = vld [vmem:[%s3961 + $0xb0] sm:$0xff]
    %v3985 = vld [vmem:[%s3961 + $0xb8] sm:$0xff]
    %v3986 = vld [vmem:[%s3961 + $0xc0] sm:$0xff]
    %v3987 = vld [vmem:[%s3961 + $0xc8] sm:$0xff]
    %v3988 = vld [vmem:[%s3961 + $0xd0] sm:$0xff]
    %v3989 = vld [vmem:[%s3961 + $0xd8] sm:$0xff]
    %v3990 = vld [vmem:[%s3961 + $0xe0] sm:$0xff]
    %v3991 = vld [vmem:[%s3961 + $0xe8] sm:$0xff]
    %v3992 = vld [vmem:[%s3961 + $0xf0] sm:$0xff]
    %v3993 = vld [vmem:[%s3961 + $0xf8] sm:$0xff]
    %v3994 = vld [vmem:[%s3961 + $0x100] sm:$0xff]
    %v3995 = vld [vmem:[%s3961 + $0x108] sm:$0xff]
    %v3996 = vld [vmem:[%s3961 + $0x110] sm:$0xff]
    %v3997 = vld [vmem:[%s3961 + $0x118] sm:$0xff]
    %v3998 = vld [vmem:[%s3961 + $0x120] sm:$0xff]
    %v3999 = vld [vmem:[%s3961 + $0x128] sm:$0xff]
    %v4000 = vld [vmem:[%s3961 + $0x130] sm:$0xff]
    %v4001 = vld [vmem:[%s3961 + $0x138] sm:$0xff]
    %v4002 = vld [vmem:[%s3961 + $0x140] sm:$0xff]
    %v4003 = vld [vmem:[%s3961 + $0x148] sm:$0xff]
    %v4004 = vld [vmem:[%s3961 + $0x150] sm:$0xff]
    %v4005 = vld [vmem:[%s3961 + $0x158] sm:$0xff]
    %v4006 = vld [vmem:[%s3961 + $0x160] sm:$0xff]
    %v4007 = vld [vmem:[%s3961 + $0x168] sm:$0xff]
    %v4008 = vld [vmem:[%s3961 + $0x170] sm:$0xff]
    %v4009 = vld [vmem:[%s3961 + $0x178] sm:$0xff]
    %v4010 = vld [vmem:[%s3961 + $0x180] sm:$0xff]
    %v4011 = vld [vmem:[%s3961 + $0x188] sm:$0xff]
    %v4012 = vld [vmem:[%s3961 + $0x190] sm:$0xff]
    %v4013 = vld [vmem:[%s3961 + $0x198] sm:$0xff]
    %v4014 = vld [vmem:[%s3961 + $0x1a0] sm:$0xff]
    %v4015 = vld [vmem:[%s3961 + $0x1a8] sm:$0xff]
    %v4016 = vld [vmem:[%s3961 + $0x1b0] sm:$0xff]
    %v4017 = vld [vmem:[%s3961 + $0x1b8] sm:$0xff]
    %v4018 = vld [vmem:[%s3961 + $0x1c0] sm:$0xff]
    %v4019 = vld [vmem:[%s3961 + $0x1c8] sm:$0xff]
    %v4020 = vld [vmem:[%s3961 + $0x1d0] sm:$0xff]
    %v4021 = vld [vmem:[%s3961 + $0x1d8] sm:$0xff]
    %v4022 = vld [vmem:[%s3961 + $0x1e0] sm:$0xff]
    %v4023 = vld [vmem:[%s3961 + $0x1e8] sm:$0xff]
    %v4024 = vld [vmem:[%s3961 + $0x1f0] sm:$0xff]
    %v4025 = vld [vmem:[%s3961 + $0x1f8] sm:$0xff]
    %4026 = vmatprep.subr.mxu0 0.0
    %4027 = vmatpush1.msra.mxu0 %v200
    %4028 = vmatprep.subr.mxu0 0.0
    %4029 = vmatpush1.msra.mxu0 %v201
    %4030 = vmatprep.subr.mxu0 0.0
    %4031 = vmatpush1.msra.mxu0 %v202
    %4032 = vmatprep.subr.mxu0 0.0
    %4033 = vmatpush1.msra.mxu0 %v203
    %4034 = vmatprep.subr.mxu0 0.0
    %4035 = vmatpush1.msra.mxu0 %v204
    %4036 = vmatprep.subr.mxu0 0.0
    %4037 = vmatpush1.msra.mxu0 %v205
    %4038 = vmatprep.subr.mxu0 0.0
    %4039 = vmatpush1.msra.mxu0 %v206
    %4040 = vmatprep.subr.mxu0 0.0
    %4041 = vmatpush1.msra.mxu0 %v207
    %4042 = vmatprep.subr.mxu0 0.0
    %4043 = vmatpush1.msra.mxu0 %v208
    %4044 = vmatprep.subr.mxu0 0.0
    %4045 = vmatpush1.msra.mxu0 %v209
    %4046 = vmatprep.subr.mxu0 0.0
    %4047 = vmatpush1.msra.mxu0 %v210
    %4048 = vmatprep.subr.mxu0 0.0
    %4049 = vmatpush1.msra.mxu0 %v211
    %4050 = vmatprep.subr.mxu0 0.0
    %4051 = vmatpush1.msra.mxu0 %v212
    %4052 = vmatprep.subr.mxu0 0.0
    %4053 = vmatpush1.msra.mxu0 %v213
    %4054 = vmatprep.subr.mxu0 0.0
    %4055 = vmatpush1.msra.mxu0 %v214
    %4056 = vmatprep.subr.mxu0 0.0
    %4057 = vmatpush1.msra.mxu0 %v215
    %4058 = vmatprep.subr.mxu0 0.0
    %4059 = vmatpush1.msra.mxu0 %v216
    %4060 = vmatprep.subr.mxu0 0.0
    %4061 = vmatpush1.msra.mxu0 %v217
    %4062 = vmatprep.subr.mxu0 0.0
    %4063 = vmatpush1.msra.mxu0 %v218
    %4064 = vmatprep.subr.mxu0 0.0
    %4065 = vmatpush1.msra.mxu0 %v219
    %4066 = vmatprep.subr.mxu0 0.0
    %4067 = vmatpush1.msra.mxu0 %v220
    %4068 = vmatprep.subr.mxu0 0.0
    %4069 = vmatpush1.msra.mxu0 %v221
    %4070 = vmatprep.subr.mxu0 0.0
    %4071 = vmatpush1.msra.mxu0 %v222
    %4072 = vmatprep.subr.mxu0 0.0
    %4073 = vmatpush1.msra.mxu0 %v223
    %4074 = vmatprep.subr.mxu0 0.0
    %4075 = vmatpush1.msra.mxu0 %v224
    %4076 = vmatprep.subr.mxu0 0.0
    %4077 = vmatpush1.msra.mxu0 %v225
    %4078 = vmatprep.subr.mxu0 0.0
    %4079 = vmatpush1.msra.mxu0 %v226
    %4080 = vmatprep.subr.mxu0 0.0
    %4081 = vmatpush1.msra.mxu0 %v227
    %4082 = vmatprep.subr.mxu0 0.0
    %4083 = vmatpush1.msra.mxu0 %v228
    %4084 = vmatprep.subr.mxu0 0.0
    %4085 = vmatpush1.msra.mxu0 %v229
    %4086 = vmatprep.subr.mxu0 0.0
    %4087 = vmatpush1.msra.mxu0 %v230
    %4088 = vmatprep.subr.mxu0 0.0
    %4089 = vmatpush1.msra.mxu0 %v231
    %4090 = vmatprep.mubr.f32.mxu0 %v3963
    %4091 = vmatmul.mubr.f32.gmra.mrb[0].mxu0 %v3962
    %v4092 = vpop.f32.mrb[0].mxu0
    %v4093 = vadd.f32 0.0, %v4092
    %v4094 = vpop.f32.mrb[0].mxu0
    %4095 = vmatprep.mubr.f32.mxu0 %v3967
    %4096 = vmatmul.mubr.f32.gmra.mrb[0].mxu0 %v3966
    %v4097 = vpop.f32.mrb[0].mxu0
    %v4098 = vadd.f32 0.0, %v4097
    %v4099 = vpop.f32.mrb[0].mxu0
    %4100 = vmatprep.mubr.f32.mxu0 %v3971
    %4101 = vmatmul.mubr.f32.gmra.mrb[0].mxu0 %v3970
    %v4102 = vpop.f32.mrb[0].mxu0
    %v4103 = vadd.f32 0.0, %v4102
    %v4104 = vpop.f32.mrb[0].mxu0
    %4105 = vmatprep.mubr.f32.mxu0 %v3975
    %4106 = vmatmul.mubr.f32.gmra.mrb[0].mxu0 %v3974
    %v4107 = vpop.f32.mrb[0].mxu0
    %v4108 = vadd.f32 0.0, %v4107
    %v4109 = vpop.f32.mrb[0].mxu0
    %4110 = vmatprep.mubr.f32.mxu0 %v3979
    %4111 = vmatmul.mubr.f32.gmra.mrb[0].mxu0 %v3978
    %v4112 = vpop.f32.mrb[0].mxu0
    %v4113 = vadd.f32 0.0, %v4112
    %v4114 = vpop.f32.mrb[0].mxu0
    %4115 = vmatprep.mubr.f32.mxu0 %v3983
    %4116 = vmatmul.mubr.f32.gmra.mrb[0].mxu0 %v3982
    %v4117 = vpop.f32.mrb[0].mxu0
    %v4118 = vadd.f32 0.0, %v4117
    %v4119 = vpop.f32.mrb[0].mxu0
    %4120 = vmatprep.mubr.f32.mxu0 %v3987
    %4121 = vmatmul.mubr.f32.gmra.mrb[0].mxu0 %v3986
    %v4122 = vpop.f32.mrb[0].mxu0
    %v4123 = vadd.f32 0.0, %v4122
    %v4124 = vpop.f32.mrb[0].mxu0
    %4125 = vmatprep.mubr.f32.mxu0 %v3991
    %4126 = vmatmul.mubr.f32.gmra.mrb[0].mxu0 %v3990
    %v4127 = vpop.f32.mrb[0].mxu0
    %v4128 = vadd.f32 0.0, %v4127
    %v4129 = vpop.f32.mrb[0].mxu0
    %4130 = vmatprep.mubr.f32.mxu0 %v3995
    %4131 = vmatmul.mubr.f32.gmra.mrb[0].mxu0 %v3994
    %v4132 = vpop.f32.mrb[0].mxu0
    %v4133 = vadd.f32 0.0, %v4132
    %v4134 = vpop.f32.mrb[0].mxu0
    %4135 = vmatprep.mubr.f32.mxu0 %v3999
    %4136 = vmatmul.mubr.f32.gmra.mrb[0].mxu0 %v3998
    %v4137 = vpop.f32.mrb[0].mxu0
    %v4138 = vadd.f32 0.0, %v4137
    %v4139 = vpop.f32.mrb[0].mxu0
    %4140 = vmatprep.mubr.f32.mxu0 %v4003
    %4141 = vmatmul.mubr.f32.gmra.mrb[0].mxu0 %v4002
    %v4142 = vpop.f32.mrb[0].mxu0
    %v4143 = vadd.f32 0.0, %v4142
    %v4144 = vpop.f32.mrb[0].mxu0
    %4145 = vmatprep.mubr.f32.mxu0 %v4007
    %4146 = vmatmul.mubr.f32.gmra.mrb[0].mxu0 %v4006
    %v4147 = vpop.f32.mrb[0].mxu0
    %v4148 = vadd.f32 0.0, %v4147
    %v4149 = vpop.f32.mrb[0].mxu0
    %4150 = vmatprep.mubr.f32.mxu0 %v4011
    %4151 = vmatmul.mubr.f32.gmra.mrb[0].mxu0 %v4010
    %v4152 = vpop.f32.mrb[0].mxu0
    %v4153 = vadd.f32 0.0, %v4152
    %v4154 = vpop.f32.mrb[0].mxu0
    %4155 = vmatprep.mubr.f32.mxu0 %v4015
    %4156 = vmatmul.mubr.f32.gmra.mrb[0].mxu0 %v4014
    %v4157 = vpop.f32.mrb[0].mxu0
    %v4158 = vadd.f32 0.0, %v4157
    %v4159 = vpop.f32.mrb[0].mxu0
    %4160 = vmatprep.mubr.f32.mxu0 %v4019
    %4161 = vmatmul.mubr.f32.gmra.mrb[0].mxu0 %v4018
    %v4162 = vpop.f32.mrb[0].mxu0
    %v4163 = vadd.f32 0.0, %v4162
    %v4164 = vpop.f32.mrb[0].mxu0
    %4165 = vmatprep.mubr.f32.mxu0 %v4023
    %4166 = vmatmul.mubr.f32.gmra.mrb[0].mxu0 %v4022
    %v4167 = vpop.f32.mrb[0].mxu0
    %v4168 = vadd.f32 0.0, %v4167
    %v4169 = vpop.f32.mrb[0].mxu0
    %4170 = vdwg.mxu0
    %4171 = vmatprep.subr.mxu0 0.0
    %4172 = vmatpush1.msra.mxu0 %v232
    %4173 = vmatprep.subr.mxu0 0.0
    %4174 = vmatpush1.msra.mxu0 %v233
    %4175 = vmatprep.subr.mxu0 0.0
    %4176 = vmatpush1.msra.mxu0 %v234
    %4177 = vmatprep.subr.mxu0 0.0
    %4178 = vmatpush1.msra.mxu0 %v235
    %4179 = vmatprep.subr.mxu0 0.0
    %4180 = vmatpush1.msra.mxu0 %v236
    %4181 = vmatprep.subr.mxu0 0.0
    %4182 = vmatpush1.msra.mxu0 %v237
    %4183 = vmatprep.subr.mxu0 0.0
    %4184 = vmatpush1.msra.mxu0 %v238
    %4185 = vmatprep.subr.mxu0 0.0
    %4186 = vmatpush1.msra.mxu0 %v239
    %4187 = vmatprep.subr.mxu0 0.0
    %4188 = vmatpush1.msra.mxu0 %v240
    %4189 = vmatprep.subr.mxu0 0.0
    %4190 = vmatpush1.msra.mxu0 %v241
    %4191 = vmatprep.subr.mxu0 0.0
    %4192 = vmatpush1.msra.mxu0 %v242
    %4193 = vmatprep.subr.mxu0 0.0
    %4194 = vmatpush1.msra.mxu0 %v243
    %4195 = vmatprep.subr.mxu0 0.0
    %4196 = vmatpush1.msra.mxu0 %v244
    %4197 = vmatprep.subr.mxu0 0.0
    %4198 = vmatpush1.msra.mxu0 %v245
    %4199 = vmatprep.subr.mxu0 0.0
    %4200 = vmatpush1.msra.mxu0 %v246
    %4201 = vmatprep.subr.mxu0 0.0
    %4202 = vmatpush1.msra.mxu0 %v247
    %4203 = vmatprep.subr.mxu0 0.0
    %4204 = vmatpush1.msra.mxu0 %v248
    %4205 = vmatprep.subr.mxu0 0.0
    %4206 = vmatpush1.msra.mxu0 %v249
    %4207 = vmatprep.subr.mxu0 0.0
    %4208 = vmatpush1.msra.mxu0 %v250
    %4209 = vmatprep.subr.mxu0 0.0
    %4210 = vmatpush1.msra.mxu0 %v251
    %4211 = vmatprep.subr.mxu0 0.0
    %4212 = vmatpush1.msra.mxu0 %v252
    %4213 = vmatprep.subr.mxu0 0.0
    %4214 = vmatpush1.msra.mxu0 %v253
    %4215 = vmatprep.subr.mxu0 0.0
    %4216 = vmatpush1.msra.mxu0 %v254
    %4217 = vmatprep.subr.mxu0 0.0
    %4218 = vmatpush1.msra.mxu0 %v255
    %4219 = vmatprep.subr.mxu0 0.0
    %4220 = vmatpush1.msra.mxu0 %v256
    %4221 = vmatprep.subr.mxu0 0.0
    %4222 = vmatpush1.msra.mxu0 %v257
    %4223 = vmatprep.subr.mxu0 0.0
    %4224 = vmatpush1.msra.mxu0 %v258
    %4225 = vmatprep.subr.mxu0 0.0
    %4226 = vmatpush1.msra.mxu0 %v259
    %4227 = vmatprep.subr.mxu0 0.0
    %4228 = vmatpush1.msra.mxu0 %v260
    %4229 = vmatprep.subr.mxu0 0.0
    %4230 = vmatpush1.msra.mxu0 %v261
    %4231 = vmatprep.subr.mxu0 0.0
    %4232 = vmatpush1.msra.mxu0 %v262
    %4233 = vmatprep.subr.mxu0 0.0
    %4234 = vmatpush1.msra.mxu0 %v263
    %4235 = vmatprep.mubr.f32.mxu0 %v3965
    %4236 = vmatmul.mubr.f32.gmra.mrb[0].mxu0 %v3964
    %v4237 = vpop.f32.mrb[0].mxu0
    %v4238 = vadd.f32 %v4093, %v4237
    %v4239 = vpop.f32.mrb[0].mxu0
    %4240 = vmatprep.mubr.f32.mxu0 %v3969
    %4241 = vmatmul.mubr.f32.gmra.mrb[0].mxu0 %v3968
    %v4242 = vpop.f32.mrb[0].mxu0
    %v4243 = vadd.f32 %v4098, %v4242
    %v4244 = vpop.f32.mrb[0].mxu0
    %4245 = vmatprep.mubr.f32.mxu0 %v3973
    %4246 = vmatmul.mubr.f32.gmra.mrb[0].mxu0 %v3972
    %v4247 = vpop.f32.mrb[0].mxu0
    %v4248 = vadd.f32 %v4103, %v4247
    %v4249 = vpop.f32.mrb[0].mxu0
    %4250 = vmatprep.mubr.f32.mxu0 %v3977
    %4251 = vmatmul.mubr.f32.gmra.mrb[0].mxu0 %v3976
    %v4252 = vpop.f32.mrb[0].mxu0
    %v4253 = vadd.f32 %v4108, %v4252
    %v4254 = vpop.f32.mrb[0].mxu0
    %4255 = vmatprep.mubr.f32.mxu0 %v3981
    %4256 = vmatmul.mubr.f32.gmra.mrb[0].mxu0 %v3980
    %v4257 = vpop.f32.mrb[0].mxu0
    %v4258 = vadd.f32 %v4113, %v4257
    %v4259 = vpop.f32.mrb[0].mxu0
    %4260 = vmatprep.mubr.f32.mxu0 %v3985
    %4261 = vmatmul.mubr.f32.gmra.mrb[0].mxu0 %v3984
    %v4262 = vpop.f32.mrb[0].mxu0
    %v4263 = vadd.f32 %v4118, %v4262
    %v4264 = vpop.f32.mrb[0].mxu0
    %4265 = vmatprep.mubr.f32.mxu0 %v3989
    %4266 = vmatmul.mubr.f32.gmra.mrb[0].mxu0 %v3988
    %v4267 = vpop.f32.mrb[0].mxu0
    %v4268 = vadd.f32 %v4123, %v4267
    %v4269 = vpop.f32.mrb[0].mxu0
    %4270 = vmatprep.mubr.f32.mxu0 %v3993
    %4271 = vmatmul.mubr.f32.gmra.mrb[0].mxu0 %v3992
    %v4272 = vpop.f32.mrb[0].mxu0
    %v4273 = vadd.f32 %v4128, %v4272
    %v4274 = vpop.f32.mrb[0].mxu0
    %4275 = vmatprep.mubr.f32.mxu0 %v3997
    %4276 = vmatmul.mubr.f32.gmra.mrb[0].mxu0 %v3996
    %v4277 = vpop.f32.mrb[0].mxu0
    %v4278 = vadd.f32 %v4133, %v4277
    %v4279 = vpop.f32.mrb[0].mxu0
    %4280 = vmatprep.mubr.f32.mxu0 %v4001
    %4281 = vmatmul.mubr.f32.gmra.mrb[0].mxu0 %v4000
    %v4282 = vpop.f32.mrb[0].mxu0
    %v4283 = vadd.f32 %v4138, %v4282
    %v4284 = vpop.f32.mrb[0].mxu0
    %4285 = vmatprep.mubr.f32.mxu0 %v4005
    %4286 = vmatmul.mubr.f32.gmra.mrb[0].mxu0 %v4004
    %v4287 = vpop.f32.mrb[0].mxu0
    %v4288 = vadd.f32 %v4143, %v4287
    %v4289 = vpop.f32.mrb[0].mxu0
    %4290 = vmatprep.mubr.f32.mxu0 %v4009
    %4291 = vmatmul.mubr.f32.gmra.mrb[0].mxu0 %v4008
    %v4292 = vpop.f32.mrb[0].mxu0
    %v4293 = vadd.f32 %v4148, %v4292
    %v4294 = vpop.f32.mrb[0].mxu0
    %4295 = vmatprep.mubr.f32.mxu0 %v4013
    %4296 = vmatmul.mubr.f32.gmra.mrb[0].mxu0 %v4012
    %v4297 = vpop.f32.mrb[0].mxu0
    %v4298 = vadd.f32 %v4153, %v4297
    %v4299 = vpop.f32.mrb[0].mxu0
    %4300 = vmatprep.mubr.f32.mxu0 %v4017
    %4301 = vmatmul.mubr.f32.gmra.mrb[0].mxu0 %v4016
    %v4302 = vpop.f32.mrb[0].mxu0
    %v4303 = vadd.f32 %v4158, %v4302
    %v4304 = vpop.f32.mrb[0].mxu0
    %4305 = vmatprep.mubr.f32.mxu0 %v4021
    %4306 = vmatmul.mubr.f32.gmra.mrb[0].mxu0 %v4020
    %v4307 = vpop.f32.mrb[0].mxu0
    %v4308 = vadd.f32 %v4163, %v4307
    %v4309 = vpop.f32.mrb[0].mxu0
    %4310 = vmatprep.mubr.f32.mxu0 %v4025
    %4311 = vmatmul.mubr.f32.gmra.mrb[0].mxu0 %v4024
    %v4312 = vpop.f32.mrb[0].mxu0
    %v4313 = vadd.f32 %v4168, %v4312
    %v4314 = vpop.f32.mrb[0].mxu0
    %4315 = vdwg.mxu0
    %s4316 = scalar_lea.vmem [#allocation10], 896
    %v4317 = vld [vmem:[%s4316] sm:$0xff]
    %v4318 = vld [vmem:[%s4316 + $0x8] sm:$0xff]
    %v4319 = vld [vmem:[%s4316 + $0x10] sm:$0xff]
    %v4320 = vld [vmem:[%s4316 + $0x18] sm:$0xff]
    %v4321 = vld [vmem:[%s4316 + $0x20] sm:$0xff]
    %v4322 = vld [vmem:[%s4316 + $0x28] sm:$0xff]
    %v4323 = vld [vmem:[%s4316 + $0x30] sm:$0xff]
    %v4324 = vld [vmem:[%s4316 + $0x38] sm:$0xff]
    %v4325 = vld [vmem:[%s4316 + $0x40] sm:$0xff]
    %v4326 = vld [vmem:[%s4316 + $0x48] sm:$0xff]
    %v4327 = vld [vmem:[%s4316 + $0x50] sm:$0xff]
    %v4328 = vld [vmem:[%s4316 + $0x58] sm:$0xff]
    %v4329 = vld [vmem:[%s4316 + $0x60] sm:$0xff]
    %v4330 = vld [vmem:[%s4316 + $0x68] sm:$0xff]
    %v4331 = vld [vmem:[%s4316 + $0x70] sm:$0xff]
    %v4332 = vld [vmem:[%s4316 + $0x78] sm:$0xff]
    %4333 = vmatprep.subr.mxu0 0.0
    %4334 = vmatpush1.msra.mxu0 %v4317
    %4335 = vmatprep.subr.mxu0 0.0
    %4336 = vmatpush1.msra.mxu0 %v4318
    %4337 = vmatprep.subr.mxu0 0.0
    %4338 = vmatpush1.msra.mxu0 %v4319
    %4339 = vmatprep.subr.mxu0 0.0
    %4340 = vmatpush1.msra.mxu0 %v4320
    %4341 = vmatprep.subr.mxu0 0.0
    %4342 = vmatpush1.msra.mxu0 %v4321
    %4343 = vmatprep.subr.mxu0 0.0
    %4344 = vmatpush1.msra.mxu0 %v4322
    %4345 = vmatprep.subr.mxu0 0.0
    %4346 = vmatpush1.msra.mxu0 %v4323
    %4347 = vmatprep.subr.mxu0 0.0
    %4348 = vmatpush1.msra.mxu0 %v4324
    %4349 = vmatprep.subr.mxu0 0.0
    %4350 = vmatpush1.msra.mxu0 %v4325
    %4351 = vmatprep.subr.mxu0 0.0
    %4352 = vmatpush1.msra.mxu0 %v4326
    %4353 = vmatprep.subr.mxu0 0.0
    %4354 = vmatpush1.msra.mxu0 %v4327
    %4355 = vmatprep.subr.mxu0 0.0
    %4356 = vmatpush1.msra.mxu0 %v4328
    %4357 = vmatprep.subr.mxu0 0.0
    %4358 = vmatpush1.msra.mxu0 %v4329
    %4359 = vmatprep.subr.mxu0 0.0
    %4360 = vmatpush1.msra.mxu0 %v4330
    %4361 = vmatprep.subr.mxu0 0.0
    %4362 = vmatpush1.msra.mxu0 %v4331
    %4363 = vmatprep.subr.mxu0 0.0
    %4364 = vmatpush1.msra.mxu0 %v4332
    %4365 = vmatprep.subr.mxu0 0.0
    %4366 = vmatpush1.msra.mxu0 0.0
    %4367 = vmatprep.subr.mxu0 0.0
    %4368 = vmatpush1.msra.mxu0 0.0
    %4369 = vmatprep.subr.mxu0 0.0
    %4370 = vmatpush1.msra.mxu0 0.0
    %4371 = vmatprep.subr.mxu0 0.0
    %4372 = vmatpush1.msra.mxu0 0.0
    %4373 = vmatprep.subr.mxu0 0.0
    %4374 = vmatpush1.msra.mxu0 0.0
    %4375 = vmatprep.subr.mxu0 0.0
    %4376 = vmatpush1.msra.mxu0 0.0
    %4377 = vmatprep.subr.mxu0 0.0
    %4378 = vmatpush1.msra.mxu0 0.0
    %4379 = vmatprep.subr.mxu0 0.0
    %4380 = vmatpush1.msra.mxu0 0.0
    %4381 = vmatprep.subr.mxu0 0.0
    %4382 = vmatpush1.msra.mxu0 0.0
    %4383 = vmatprep.subr.mxu0 0.0
    %4384 = vmatpush1.msra.mxu0 0.0
    %4385 = vmatprep.subr.mxu0 0.0
    %4386 = vmatpush1.msra.mxu0 0.0
    %4387 = vmatprep.subr.mxu0 0.0
    %4388 = vmatpush1.msra.mxu0 0.0
    %4389 = vmatprep.subr.mxu0 0.0
    %4390 = vmatpush1.msra.mxu0 0.0
    %4391 = vmatprep.subr.mxu0 0.0
    %4392 = vmatpush1.msra.mxu0 0.0
    %4393 = vmatprep.subr.mxu0 0.0
    %4394 = vmatpush1.msra.mxu0 0.0
    %4395 = vmatprep.subr.mxu0 0.0
    %4396 = vmatpush1.msra.mxu0 0.0
    %4397 = vmatprep.mubr.f32.mxu0 0.0
    %4398 = vmatmul.mubr.f32.gmra.mrb[0].mxu0 %v4238
    %v4399 = vpop.f32.mrb[0].mxu0
    %v4400 = vadd.f32 0.0, %v4399
    %v4401 = vpop.f32.mrb[0].mxu0
    %4402 = vmatprep.mubr.f32.mxu0 0.0
    %4403 = vmatmul.mubr.f32.gmra.mrb[0].mxu0 %v4243
    %v4404 = vpop.f32.mrb[0].mxu0
    %v4405 = vadd.f32 0.0, %v4404
    %v4406 = vpop.f32.mrb[0].mxu0
    %4407 = vmatprep.mubr.f32.mxu0 0.0
    %4408 = vmatmul.mubr.f32.gmra.mrb[0].mxu0 %v4248
    %v4409 = vpop.f32.mrb[0].mxu0
    %v4410 = vadd.f32 0.0, %v4409
    %v4411 = vpop.f32.mrb[0].mxu0
    %4412 = vmatprep.mubr.f32.mxu0 0.0
    %4413 = vmatmul.mubr.f32.gmra.mrb[0].mxu0 %v4253
    %v4414 = vpop.f32.mrb[0].mxu0
    %v4415 = vadd.f32 0.0, %v4414
    %v4416 = vpop.f32.mrb[0].mxu0
    %4417 = vmatprep.mubr.f32.mxu0 0.0
    %4418 = vmatmul.mubr.f32.gmra.mrb[0].mxu0 %v4258
    %v4419 = vpop.f32.mrb[0].mxu0
    %v4420 = vadd.f32 0.0, %v4419
    %v4421 = vpop.f32.mrb[0].mxu0
    %4422 = vmatprep.mubr.f32.mxu0 0.0
    %4423 = vmatmul.mubr.f32.gmra.mrb[0].mxu0 %v4263
    %v4424 = vpop.f32.mrb[0].mxu0
    %v4425 = vadd.f32 0.0, %v4424
    %v4426 = vpop.f32.mrb[0].mxu0
    %4427 = vmatprep.mubr.f32.mxu0 0.0
    %4428 = vmatmul.mubr.f32.gmra.mrb[0].mxu0 %v4268
    %v4429 = vpop.f32.mrb[0].mxu0
    %v4430 = vadd.f32 0.0, %v4429
    %v4431 = vpop.f32.mrb[0].mxu0
    %4432 = vmatprep.mubr.f32.mxu0 0.0
    %4433 = vmatmul.mubr.f32.gmra.mrb[0].mxu0 %v4273
    %v4434 = vpop.f32.mrb[0].mxu0
    %v4435 = vadd.f32 0.0, %v4434
    %v4436 = vpop.f32.mrb[0].mxu0
    %4437 = vmatprep.mubr.f32.mxu0 0.0
    %4438 = vmatmul.mubr.f32.gmra.mrb[0].mxu0 %v4278
    %v4439 = vpop.f32.mrb[0].mxu0
    %v4440 = vadd.f32 0.0, %v4439
    %v4441 = vpop.f32.mrb[0].mxu0
    %4442 = vmatprep.mubr.f32.mxu0 0.0
    %4443 = vmatmul.mubr.f32.gmra.mrb[0].mxu0 %v4283
    %v4444 = vpop.f32.mrb[0].mxu0
    %v4445 = vadd.f32 0.0, %v4444
    %v4446 = vpop.f32.mrb[0].mxu0
    %4447 = vmatprep.mubr.f32.mxu0 0.0
    %4448 = vmatmul.mubr.f32.gmra.mrb[0].mxu0 %v4288
    %v4449 = vpop.f32.mrb[0].mxu0
    %v4450 = vadd.f32 0.0, %v4449
    %v4451 = vpop.f32.mrb[0].mxu0
    %4452 = vmatprep.mubr.f32.mxu0 0.0
    %4453 = vmatmul.mubr.f32.gmra.mrb[0].mxu0 %v4293
    %v4454 = vpop.f32.mrb[0].mxu0
    %v4455 = vadd.f32 0.0, %v4454
    %v4456 = vpop.f32.mrb[0].mxu0
    %4457 = vmatprep.mubr.f32.mxu0 0.0
    %4458 = vmatmul.mubr.f32.gmra.mrb[0].mxu0 %v4298
    %v4459 = vpop.f32.mrb[0].mxu0
    %v4460 = vadd.f32 0.0, %v4459
    %v4461 = vpop.f32.mrb[0].mxu0
    %4462 = vmatprep.mubr.f32.mxu0 0.0
    %4463 = vmatmul.mubr.f32.gmra.mrb[0].mxu0 %v4303
    %v4464 = vpop.f32.mrb[0].mxu0
    %v4465 = vadd.f32 0.0, %v4464
    %v4466 = vpop.f32.mrb[0].mxu0
    %4467 = vmatprep.mubr.f32.mxu0 0.0
    %4468 = vmatmul.mubr.f32.gmra.mrb[0].mxu0 %v4308
    %v4469 = vpop.f32.mrb[0].mxu0
    %v4470 = vadd.f32 0.0, %v4469
    %v4471 = vpop.f32.mrb[0].mxu0
    %4472 = vmatprep.mubr.f32.mxu0 0.0
    %4473 = vmatmul.mubr.f32.gmra.mrb[0].mxu0 %v4313
    %v4474 = vpop.f32.mrb[0].mxu0
    %v4475 = vadd.f32 0.0, %v4474
    %v4476 = vpop.f32.mrb[0].mxu0
    %4477 = vdwg.mxu0
    %v4478 = vadd.f32 %v3945, %v4400
    %v4479 = vadd.f32 %v3946, %v4405
    %v4480 = vadd.f32 %v3947, %v4410
    %v4481 = vadd.f32 %v3948, %v4415
    %v4482 = vadd.f32 %v3949, %v4420
    %v4483 = vadd.f32 %v3950, %v4425
    %v4484 = vadd.f32 %v3951, %v4430
    %v4485 = vadd.f32 %v3952, %v4435
    %v4486 = vadd.f32 %v3953, %v4440
    %v4487 = vadd.f32 %v3954, %v4445
    %v4488 = vadd.f32 %v3955, %v4450
    %v4489 = vadd.f32 %v3956, %v4455
    %v4490 = vadd.f32 %v3957, %v4460
    %v4491 = vadd.f32 %v3958, %v4465
    %v4492 = vadd.f32 %v3959, %v4470
    %v4493 = vadd.f32 %v3960, %v4475
    %s4494 = scalar_lea.vmem [#allocation5], 4096
    %v4495 = vld [vmem:[%s4494] sm:$0xff]
    %v4496 = vld [vmem:[%s4494 + $0x8] sm:$0xff]
    %v4497 = vld [vmem:[%s4494 + $0x10] sm:$0xff]
    %v4498 = vld [vmem:[%s4494 + $0x18] sm:$0xff]
    %v4499 = vld [vmem:[%s4494 + $0x20] sm:$0xff]
    %v4500 = vld [vmem:[%s4494 + $0x28] sm:$0xff]
    %v4501 = vld [vmem:[%s4494 + $0x30] sm:$0xff]
    %v4502 = vld [vmem:[%s4494 + $0x38] sm:$0xff]
    %v4503 = vld [vmem:[%s4494 + $0x40] sm:$0xff]
    %v4504 = vld [vmem:[%s4494 + $0x48] sm:$0xff]
    %v4505 = vld [vmem:[%s4494 + $0x50] sm:$0xff]
    %v4506 = vld [vmem:[%s4494 + $0x58] sm:$0xff]
    %v4507 = vld [vmem:[%s4494 + $0x60] sm:$0xff]
    %v4508 = vld [vmem:[%s4494 + $0x68] sm:$0xff]
    %v4509 = vld [vmem:[%s4494 + $0x70] sm:$0xff]
    %v4510 = vld [vmem:[%s4494 + $0x78] sm:$0xff]
    %v4511 = vld [vmem:[%s4494 + $0x80] sm:$0xff]
    %v4512 = vld [vmem:[%s4494 + $0x88] sm:$0xff]
    %v4513 = vld [vmem:[%s4494 + $0x90] sm:$0xff]
    %v4514 = vld [vmem:[%s4494 + $0x98] sm:$0xff]
    %v4515 = vld [vmem:[%s4494 + $0xa0] sm:$0xff]
    %v4516 = vld [vmem:[%s4494 + $0xa8] sm:$0xff]
    %v4517 = vld [vmem:[%s4494 + $0xb0] sm:$0xff]
    %v4518 = vld [vmem:[%s4494 + $0xb8] sm:$0xff]
    %v4519 = vld [vmem:[%s4494 + $0xc0] sm:$0xff]
    %v4520 = vld [vmem:[%s4494 + $0xc8] sm:$0xff]
    %v4521 = vld [vmem:[%s4494 + $0xd0] sm:$0xff]
    %v4522 = vld [vmem:[%s4494 + $0xd8] sm:$0xff]
    %v4523 = vld [vmem:[%s4494 + $0xe0] sm:$0xff]
    %v4524 = vld [vmem:[%s4494 + $0xe8] sm:$0xff]
    %v4525 = vld [vmem:[%s4494 + $0xf0] sm:$0xff]
    %v4526 = vld [vmem:[%s4494 + $0xf8] sm:$0xff]
    %v4527 = vld [vmem:[%s4494 + $0x100] sm:$0xff]
    %v4528 = vld [vmem:[%s4494 + $0x108] sm:$0xff]
    %v4529 = vld [vmem:[%s4494 + $0x110] sm:$0xff]
    %v4530 = vld [vmem:[%s4494 + $0x118] sm:$0xff]
    %v4531 = vld [vmem:[%s4494 + $0x120] sm:$0xff]
    %v4532 = vld [vmem:[%s4494 + $0x128] sm:$0xff]
    %v4533 = vld [vmem:[%s4494 + $0x130] sm:$0xff]
    %v4534 = vld [vmem:[%s4494 + $0x138] sm:$0xff]
    %v4535 = vld [vmem:[%s4494 + $0x140] sm:$0xff]
    %v4536 = vld [vmem:[%s4494 + $0x148] sm:$0xff]
    %v4537 = vld [vmem:[%s4494 + $0x150] sm:$0xff]
    %v4538 = vld [vmem:[%s4494 + $0x158] sm:$0xff]
    %v4539 = vld [vmem:[%s4494 + $0x160] sm:$0xff]
    %v4540 = vld [vmem:[%s4494 + $0x168] sm:$0xff]
    %v4541 = vld [vmem:[%s4494 + $0x170] sm:$0xff]
    %v4542 = vld [vmem:[%s4494 + $0x178] sm:$0xff]
    %v4543 = vld [vmem:[%s4494 + $0x180] sm:$0xff]
    %v4544 = vld [vmem:[%s4494 + $0x188] sm:$0xff]
    %v4545 = vld [vmem:[%s4494 + $0x190] sm:$0xff]
    %v4546 = vld [vmem:[%s4494 + $0x198] sm:$0xff]
    %v4547 = vld [vmem:[%s4494 + $0x1a0] sm:$0xff]
    %v4548 = vld [vmem:[%s4494 + $0x1a8] sm:$0xff]
    %v4549 = vld [vmem:[%s4494 + $0x1b0] sm:$0xff]
    %v4550 = vld [vmem:[%s4494 + $0x1b8] sm:$0xff]
    %v4551 = vld [vmem:[%s4494 + $0x1c0] sm:$0xff]
    %v4552 = vld [vmem:[%s4494 + $0x1c8] sm:$0xff]
    %v4553 = vld [vmem:[%s4494 + $0x1d0] sm:$0xff]
    %v4554 = vld [vmem:[%s4494 + $0x1d8] sm:$0xff]
    %v4555 = vld [vmem:[%s4494 + $0x1e0] sm:$0xff]
    %v4556 = vld [vmem:[%s4494 + $0x1e8] sm:$0xff]
    %v4557 = vld [vmem:[%s4494 + $0x1f0] sm:$0xff]
    %v4558 = vld [vmem:[%s4494 + $0x1f8] sm:$0xff]
    %4559 = vmatprep.subr.mxu0 0.0
    %4560 = vmatpush1.msra.mxu0 %v200
    %4561 = vmatprep.subr.mxu0 0.0
    %4562 = vmatpush1.msra.mxu0 %v201
    %4563 = vmatprep.subr.mxu0 0.0
    %4564 = vmatpush1.msra.mxu0 %v202
    %4565 = vmatprep.subr.mxu0 0.0
    %4566 = vmatpush1.msra.mxu0 %v203
    %4567 = vmatprep.subr.mxu0 0.0
    %4568 = vmatpush1.msra.mxu0 %v204
    %4569 = vmatprep.subr.mxu0 0.0
    %4570 = vmatpush1.msra.mxu0 %v205
    %4571 = vmatprep.subr.mxu0 0.0
    %4572 = vmatpush1.msra.mxu0 %v206
    %4573 = vmatprep.subr.mxu0 0.0
    %4574 = vmatpush1.msra.mxu0 %v207
    %4575 = vmatprep.subr.mxu0 0.0
    %4576 = vmatpush1.msra.mxu0 %v208
    %4577 = vmatprep.subr.mxu0 0.0
    %4578 = vmatpush1.msra.mxu0 %v209
    %4579 = vmatprep.subr.mxu0 0.0
    %4580 = vmatpush1.msra.mxu0 %v210
    %4581 = vmatprep.subr.mxu0 0.0
    %4582 = vmatpush1.msra.mxu0 %v211
    %4583 = vmatprep.subr.mxu0 0.0
    %4584 = vmatpush1.msra.mxu0 %v212
    %4585 = vmatprep.subr.mxu0 0.0
    %4586 = vmatpush1.msra.mxu0 %v213
    %4587 = vmatprep.subr.mxu0 0.0
    %4588 = vmatpush1.msra.mxu0 %v214
    %4589 = vmatprep.subr.mxu0 0.0
    %4590 = vmatpush1.msra.mxu0 %v215
    %4591 = vmatprep.subr.mxu0 0.0
    %4592 = vmatpush1.msra.mxu0 %v216
    %4593 = vmatprep.subr.mxu0 0.0
    %4594 = vmatpush1.msra.mxu0 %v217
    %4595 = vmatprep.subr.mxu0 0.0
    %4596 = vmatpush1.msra.mxu0 %v218
    %4597 = vmatprep.subr.mxu0 0.0
    %4598 = vmatpush1.msra.mxu0 %v219
    %4599 = vmatprep.subr.mxu0 0.0
    %4600 = vmatpush1.msra.mxu0 %v220
    %4601 = vmatprep.subr.mxu0 0.0
    %4602 = vmatpush1.msra.mxu0 %v221
    %4603 = vmatprep.subr.mxu0 0.0
    %4604 = vmatpush1.msra.mxu0 %v222
    %4605 = vmatprep.subr.mxu0 0.0
    %4606 = vmatpush1.msra.mxu0 %v223
    %4607 = vmatprep.subr.mxu0 0.0
    %4608 = vmatpush1.msra.mxu0 %v224
    %4609 = vmatprep.subr.mxu0 0.0
    %4610 = vmatpush1.msra.mxu0 %v225
    %4611 = vmatprep.subr.mxu0 0.0
    %4612 = vmatpush1.msra.mxu0 %v226
    %4613 = vmatprep.subr.mxu0 0.0
    %4614 = vmatpush1.msra.mxu0 %v227
    %4615 = vmatprep.subr.mxu0 0.0
    %4616 = vmatpush1.msra.mxu0 %v228
    %4617 = vmatprep.subr.mxu0 0.0
    %4618 = vmatpush1.msra.mxu0 %v229
    %4619 = vmatprep.subr.mxu0 0.0
    %4620 = vmatpush1.msra.mxu0 %v230
    %4621 = vmatprep.subr.mxu0 0.0
    %4622 = vmatpush1.msra.mxu0 %v231
    %4623 = vmatprep.mubr.f32.mxu0 %v4496
    %4624 = vmatmul.mubr.f32.gmra.mrb[0].mxu0 %v4495
    %v4625 = vpop.f32.mrb[0].mxu0
    %v4626 = vadd.f32 0.0, %v4625
    %v4627 = vpop.f32.mrb[0].mxu0
    %4628 = vmatprep.mubr.f32.mxu0 %v4500
    %4629 = vmatmul.mubr.f32.gmra.mrb[0].mxu0 %v4499
    %v4630 = vpop.f32.mrb[0].mxu0
    %v4631 = vadd.f32 0.0, %v4630
    %v4632 = vpop.f32.mrb[0].mxu0
    %4633 = vmatprep.mubr.f32.mxu0 %v4504
    %4634 = vmatmul.mubr.f32.gmra.mrb[0].mxu0 %v4503
    %v4635 = vpop.f32.mrb[0].mxu0
    %v4636 = vadd.f32 0.0, %v4635
    %v4637 = vpop.f32.mrb[0].mxu0
    %4638 = vmatprep.mubr.f32.mxu0 %v4508
    %4639 = vmatmul.mubr.f32.gmra.mrb[0].mxu0 %v4507
    %v4640 = vpop.f32.mrb[0].mxu0
    %v4641 = vadd.f32 0.0, %v4640
    %v4642 = vpop.f32.mrb[0].mxu0
    %4643 = vmatprep.mubr.f32.mxu0 %v4512
    %4644 = vmatmul.mubr.f32.gmra.mrb[0].mxu0 %v4511
    %v4645 = vpop.f32.mrb[0].mxu0
    %v4646 = vadd.f32 0.0, %v4645
    %v4647 = vpop.f32.mrb[0].mxu0
    %4648 = vmatprep.mubr.f32.mxu0 %v4516
    %4649 = vmatmul.mubr.f32.gmra.mrb[0].mxu0 %v4515
    %v4650 = vpop.f32.mrb[0].mxu0
    %v4651 = vadd.f32 0.0, %v4650
    %v4652 = vpop.f32.mrb[0].mxu0
    %4653 = vmatprep.mubr.f32.mxu0 %v4520
    %4654 = vmatmul.mubr.f32.gmra.mrb[0].mxu0 %v4519
    %v4655 = vpop.f32.mrb[0].mxu0
    %v4656 = vadd.f32 0.0, %v4655
    %v4657 = vpop.f32.mrb[0].mxu0
    %4658 = vmatprep.mubr.f32.mxu0 %v4524
    %4659 = vmatmul.mubr.f32.gmra.mrb[0].mxu0 %v4523
    %v4660 = vpop.f32.mrb[0].mxu0
    %v4661 = vadd.f32 0.0, %v4660
    %v4662 = vpop.f32.mrb[0].mxu0
    %4663 = vmatprep.mubr.f32.mxu0 %v4528
    %4664 = vmatmul.mubr.f32.gmra.mrb[0].mxu0 %v4527
    %v4665 = vpop.f32.mrb[0].mxu0
    %v4666 = vadd.f32 0.0, %v4665
    %v4667 = vpop.f32.mrb[0].mxu0
    %4668 = vmatprep.mubr.f32.mxu0 %v4532
    %4669 = vmatmul.mubr.f32.gmra.mrb[0].mxu0 %v4531
    %v4670 = vpop.f32.mrb[0].mxu0
    %v4671 = vadd.f32 0.0, %v4670
    %v4672 = vpop.f32.mrb[0].mxu0
    %4673 = vmatprep.mubr.f32.mxu0 %v4536
    %4674 = vmatmul.mubr.f32.gmra.mrb[0].mxu0 %v4535
    %v4675 = vpop.f32.mrb[0].mxu0
    %v4676 = vadd.f32 0.0, %v4675
    %v4677 = vpop.f32.mrb[0].mxu0
    %4678 = vmatprep.mubr.f32.mxu0 %v4540
    %4679 = vmatmul.mubr.f32.gmra.mrb[0].mxu0 %v4539
    %v4680 = vpop.f32.mrb[0].mxu0
    %v4681 = vadd.f32 0.0, %v4680
    %v4682 = vpop.f32.mrb[0].mxu0
    %4683 = vmatprep.mubr.f32.mxu0 %v4544
    %4684 = vmatmul.mubr.f32.gmra.mrb[0].mxu0 %v4543
    %v4685 = vpop.f32.mrb[0].mxu0
    %v4686 = vadd.f32 0.0, %v4685
    %v4687 = vpop.f32.mrb[0].mxu0
    %4688 = vmatprep.mubr.f32.mxu0 %v4548
    %4689 = vmatmul.mubr.f32.gmra.mrb[0].mxu0 %v4547
    %v4690 = vpop.f32.mrb[0].mxu0
    %v4691 = vadd.f32 0.0, %v4690
    %v4692 = vpop.f32.mrb[0].mxu0
    %4693 = vmatprep.mubr.f32.mxu0 %v4552
    %4694 = vmatmul.mubr.f32.gmra.mrb[0].mxu0 %v4551
    %v4695 = vpop.f32.mrb[0].mxu0
    %v4696 = vadd.f32 0.0, %v4695
    %v4697 = vpop.f32.mrb[0].mxu0
    %4698 = vmatprep.mubr.f32.mxu0 %v4556
    %4699 = vmatmul.mubr.f32.gmra.mrb[0].mxu0 %v4555
    %v4700 = vpop.f32.mrb[0].mxu0
    %v4701 = vadd.f32 0.0, %v4700
    %v4702 = vpop.f32.mrb[0].mxu0
    %4703 = vdwg.mxu0
    %4704 = vmatprep.subr.mxu0 0.0
    %4705 = vmatpush1.msra.mxu0 %v232
    %4706 = vmatprep.subr.mxu0 0.0
    %4707 = vmatpush1.msra.mxu0 %v233
    %4708 = vmatprep.subr.mxu0 0.0
    %4709 = vmatpush1.msra.mxu0 %v234
    %4710 = vmatprep.subr.mxu0 0.0
    %4711 = vmatpush1.msra.mxu0 %v235
    %4712 = vmatprep.subr.mxu0 0.0
    %4713 = vmatpush1.msra.mxu0 %v236
    %4714 = vmatprep.subr.mxu0 0.0
    %4715 = vmatpush1.msra.mxu0 %v237
    %4716 = vmatprep.subr.mxu0 0.0
    %4717 = vmatpush1.msra.mxu0 %v238
    %4718 = vmatprep.subr.mxu0 0.0
    %4719 = vmatpush1.msra.mxu0 %v239
    %4720 = vmatprep.subr.mxu0 0.0
    %4721 = vmatpush1.msra.mxu0 %v240
    %4722 = vmatprep.subr.mxu0 0.0
    %4723 = vmatpush1.msra.mxu0 %v241
    %4724 = vmatprep.subr.mxu0 0.0
    %4725 = vmatpush1.msra.mxu0 %v242
    %4726 = vmatprep.subr.mxu0 0.0
    %4727 = vmatpush1.msra.mxu0 %v243
    %4728 = vmatprep.subr.mxu0 0.0
    %4729 = vmatpush1.msra.mxu0 %v244
    %4730 = vmatprep.subr.mxu0 0.0
    %4731 = vmatpush1.msra.mxu0 %v245
    %4732 = vmatprep.subr.mxu0 0.0
    %4733 = vmatpush1.msra.mxu0 %v246
    %4734 = vmatprep.subr.mxu0 0.0
    %4735 = vmatpush1.msra.mxu0 %v247
    %4736 = vmatprep.subr.mxu0 0.0
    %4737 = vmatpush1.msra.mxu0 %v248
    %4738 = vmatprep.subr.mxu0 0.0
    %4739 = vmatpush1.msra.mxu0 %v249
    %4740 = vmatprep.subr.mxu0 0.0
    %4741 = vmatpush1.msra.mxu0 %v250
    %4742 = vmatprep.subr.mxu0 0.0
    %4743 = vmatpush1.msra.mxu0 %v251
    %4744 = vmatprep.subr.mxu0 0.0
    %4745 = vmatpush1.msra.mxu0 %v252
    %4746 = vmatprep.subr.mxu0 0.0
    %4747 = vmatpush1.msra.mxu0 %v253
    %4748 = vmatprep.subr.mxu0 0.0
    %4749 = vmatpush1.msra.mxu0 %v254
    %4750 = vmatprep.subr.mxu0 0.0
    %4751 = vmatpush1.msra.mxu0 %v255
    %4752 = vmatprep.subr.mxu0 0.0
    %4753 = vmatpush1.msra.mxu0 %v256
    %4754 = vmatprep.subr.mxu0 0.0
    %4755 = vmatpush1.msra.mxu0 %v257
    %4756 = vmatprep.subr.mxu0 0.0
    %4757 = vmatpush1.msra.mxu0 %v258
    %4758 = vmatprep.subr.mxu0 0.0
    %4759 = vmatpush1.msra.mxu0 %v259
    %4760 = vmatprep.subr.mxu0 0.0
    %4761 = vmatpush1.msra.mxu0 %v260
    %4762 = vmatprep.subr.mxu0 0.0
    %4763 = vmatpush1.msra.mxu0 %v261
    %4764 = vmatprep.subr.mxu0 0.0
    %4765 = vmatpush1.msra.mxu0 %v262
    %4766 = vmatprep.subr.mxu0 0.0
    %4767 = vmatpush1.msra.mxu0 %v263
    %4768 = vmatprep.mubr.f32.mxu0 %v4498
    %4769 = vmatmul.mubr.f32.gmra.mrb[0].mxu0 %v4497
    %v4770 = vpop.f32.mrb[0].mxu0
    %v4771 = vadd.f32 %v4626, %v4770
    %v4772 = vpop.f32.mrb[0].mxu0
    %4773 = vmatprep.mubr.f32.mxu0 %v4502
    %4774 = vmatmul.mubr.f32.gmra.mrb[0].mxu0 %v4501
    %v4775 = vpop.f32.mrb[0].mxu0
    %v4776 = vadd.f32 %v4631, %v4775
    %v4777 = vpop.f32.mrb[0].mxu0
    %4778 = vmatprep.mubr.f32.mxu0 %v4506
    %4779 = vmatmul.mubr.f32.gmra.mrb[0].mxu0 %v4505
    %v4780 = vpop.f32.mrb[0].mxu0
    %v4781 = vadd.f32 %v4636, %v4780
    %v4782 = vpop.f32.mrb[0].mxu0
    %4783 = vmatprep.mubr.f32.mxu0 %v4510
    %4784 = vmatmul.mubr.f32.gmra.mrb[0].mxu0 %v4509
    %v4785 = vpop.f32.mrb[0].mxu0
    %v4786 = vadd.f32 %v4641, %v4785
    %v4787 = vpop.f32.mrb[0].mxu0
    %4788 = vmatprep.mubr.f32.mxu0 %v4514
    %4789 = vmatmul.mubr.f32.gmra.mrb[0].mxu0 %v4513
    %v4790 = vpop.f32.mrb[0].mxu0
    %v4791 = vadd.f32 %v4646, %v4790
    %v4792 = vpop.f32.mrb[0].mxu0
    %4793 = vmatprep.mubr.f32.mxu0 %v4518
    %4794 = vmatmul.mubr.f32.gmra.mrb[0].mxu0 %v4517
    %v4795 = vpop.f32.mrb[0].mxu0
    %v4796 = vadd.f32 %v4651, %v4795
    %v4797 = vpop.f32.mrb[0].mxu0
    %4798 = vmatprep.mubr.f32.mxu0 %v4522
    %4799 = vmatmul.mubr.f32.gmra.mrb[0].mxu0 %v4521
    %v4800 = vpop.f32.mrb[0].mxu0
    %v4801 = vadd.f32 %v4656, %v4800
    %v4802 = vpop.f32.mrb[0].mxu0
    %4803 = vmatprep.mubr.f32.mxu0 %v4526
    %4804 = vmatmul.mubr.f32.gmra.mrb[0].mxu0 %v4525
    %v4805 = vpop.f32.mrb[0].mxu0
    %v4806 = vadd.f32 %v4661, %v4805
    %v4807 = vpop.f32.mrb[0].mxu0
    %4808 = vmatprep.mubr.f32.mxu0 %v4530
    %4809 = vmatmul.mubr.f32.gmra.mrb[0].mxu0 %v4529
    %v4810 = vpop.f32.mrb[0].mxu0
    %v4811 = vadd.f32 %v4666, %v4810
    %v4812 = vpop.f32.mrb[0].mxu0
    %4813 = vmatprep.mubr.f32.mxu0 %v4534
    %4814 = vmatmul.mubr.f32.gmra.mrb[0].mxu0 %v4533
    %v4815 = vpop.f32.mrb[0].mxu0
    %v4816 = vadd.f32 %v4671, %v4815
    %v4817 = vpop.f32.mrb[0].mxu0
    %4818 = vmatprep.mubr.f32.mxu0 %v4538
    %4819 = vmatmul.mubr.f32.gmra.mrb[0].mxu0 %v4537
    %v4820 = vpop.f32.mrb[0].mxu0
    %v4821 = vadd.f32 %v4676, %v4820
    %v4822 = vpop.f32.mrb[0].mxu0
    %4823 = vmatprep.mubr.f32.mxu0 %v4542
    %4824 = vmatmul.mubr.f32.gmra.mrb[0].mxu0 %v4541
    %v4825 = vpop.f32.mrb[0].mxu0
    %v4826 = vadd.f32 %v4681, %v4825
    %v4827 = vpop.f32.mrb[0].mxu0
    %4828 = vmatprep.mubr.f32.mxu0 %v4546
    %4829 = vmatmul.mubr.f32.gmra.mrb[0].mxu0 %v4545
    %v4830 = vpop.f32.mrb[0].mxu0
    %v4831 = vadd.f32 %v4686, %v4830
    %v4832 = vpop.f32.mrb[0].mxu0
    %4833 = vmatprep.mubr.f32.mxu0 %v4550
    %4834 = vmatmul.mubr.f32.gmra.mrb[0].mxu0 %v4549
    %v4835 = vpop.f32.mrb[0].mxu0
    %v4836 = vadd.f32 %v4691, %v4835
    %v4837 = vpop.f32.mrb[0].mxu0
    %4838 = vmatprep.mubr.f32.mxu0 %v4554
    %4839 = vmatmul.mubr.f32.gmra.mrb[0].mxu0 %v4553
    %v4840 = vpop.f32.mrb[0].mxu0
    %v4841 = vadd.f32 %v4696, %v4840
    %v4842 = vpop.f32.mrb[0].mxu0
    %4843 = vmatprep.mubr.f32.mxu0 %v4558
    %4844 = vmatmul.mubr.f32.gmra.mrb[0].mxu0 %v4557
    %v4845 = vpop.f32.mrb[0].mxu0
    %v4846 = vadd.f32 %v4701, %v4845
    %v4847 = vpop.f32.mrb[0].mxu0
    %4848 = vdwg.mxu0
    %s4849 = scalar_lea.vmem [#allocation10], 1024
    %v4850 = vld [vmem:[%s4849] sm:$0xff]
    %v4851 = vld [vmem:[%s4849 + $0x8] sm:$0xff]
    %v4852 = vld [vmem:[%s4849 + $0x10] sm:$0xff]
    %v4853 = vld [vmem:[%s4849 + $0x18] sm:$0xff]
    %v4854 = vld [vmem:[%s4849 + $0x20] sm:$0xff]
    %v4855 = vld [vmem:[%s4849 + $0x28] sm:$0xff]
    %v4856 = vld [vmem:[%s4849 + $0x30] sm:$0xff]
    %v4857 = vld [vmem:[%s4849 + $0x38] sm:$0xff]
    %v4858 = vld [vmem:[%s4849 + $0x40] sm:$0xff]
    %v4859 = vld [vmem:[%s4849 + $0x48] sm:$0xff]
    %v4860 = vld [vmem:[%s4849 + $0x50] sm:$0xff]
    %v4861 = vld [vmem:[%s4849 + $0x58] sm:$0xff]
    %v4862 = vld [vmem:[%s4849 + $0x60] sm:$0xff]
    %v4863 = vld [vmem:[%s4849 + $0x68] sm:$0xff]
    %v4864 = vld [vmem:[%s4849 + $0x70] sm:$0xff]
    %v4865 = vld [vmem:[%s4849 + $0x78] sm:$0xff]
    %4866 = vmatprep.subr.mxu0 0.0
    %4867 = vmatpush1.msra.mxu0 %v4850
    %4868 = vmatprep.subr.mxu0 0.0
    %4869 = vmatpush1.msra.mxu0 %v4851
    %4870 = vmatprep.subr.mxu0 0.0
    %4871 = vmatpush1.msra.mxu0 %v4852
    %4872 = vmatprep.subr.mxu0 0.0
    %4873 = vmatpush1.msra.mxu0 %v4853
    %4874 = vmatprep.subr.mxu0 0.0
    %4875 = vmatpush1.msra.mxu0 %v4854
    %4876 = vmatprep.subr.mxu0 0.0
    %4877 = vmatpush1.msra.mxu0 %v4855
    %4878 = vmatprep.subr.mxu0 0.0
    %4879 = vmatpush1.msra.mxu0 %v4856
    %4880 = vmatprep.subr.mxu0 0.0
    %4881 = vmatpush1.msra.mxu0 %v4857
    %4882 = vmatprep.subr.mxu0 0.0
    %4883 = vmatpush1.msra.mxu0 %v4858
    %4884 = vmatprep.subr.mxu0 0.0
    %4885 = vmatpush1.msra.mxu0 %v4859
    %4886 = vmatprep.subr.mxu0 0.0
    %4887 = vmatpush1.msra.mxu0 %v4860
    %4888 = vmatprep.subr.mxu0 0.0
    %4889 = vmatpush1.msra.mxu0 %v4861
    %4890 = vmatprep.subr.mxu0 0.0
    %4891 = vmatpush1.msra.mxu0 %v4862
    %4892 = vmatprep.subr.mxu0 0.0
    %4893 = vmatpush1.msra.mxu0 %v4863
    %4894 = vmatprep.subr.mxu0 0.0
    %4895 = vmatpush1.msra.mxu0 %v4864
    %4896 = vmatprep.subr.mxu0 0.0
    %4897 = vmatpush1.msra.mxu0 %v4865
    %4898 = vmatprep.subr.mxu0 0.0
    %4899 = vmatpush1.msra.mxu0 0.0
    %4900 = vmatprep.subr.mxu0 0.0
    %4901 = vmatpush1.msra.mxu0 0.0
    %4902 = vmatprep.subr.mxu0 0.0
    %4903 = vmatpush1.msra.mxu0 0.0
    %4904 = vmatprep.subr.mxu0 0.0
    %4905 = vmatpush1.msra.mxu0 0.0
    %4906 = vmatprep.subr.mxu0 0.0
    %4907 = vmatpush1.msra.mxu0 0.0
    %4908 = vmatprep.subr.mxu0 0.0
    %4909 = vmatpush1.msra.mxu0 0.0
    %4910 = vmatprep.subr.mxu0 0.0
    %4911 = vmatpush1.msra.mxu0 0.0
    %4912 = vmatprep.subr.mxu0 0.0
    %4913 = vmatpush1.msra.mxu0 0.0
    %4914 = vmatprep.subr.mxu0 0.0
    %4915 = vmatpush1.msra.mxu0 0.0
    %4916 = vmatprep.subr.mxu0 0.0
    %4917 = vmatpush1.msra.mxu0 0.0
    %4918 = vmatprep.subr.mxu0 0.0
    %4919 = vmatpush1.msra.mxu0 0.0
    %4920 = vmatprep.subr.mxu0 0.0
    %4921 = vmatpush1.msra.mxu0 0.0
    %4922 = vmatprep.subr.mxu0 0.0
    %4923 = vmatpush1.msra.mxu0 0.0
    %4924 = vmatprep.subr.mxu0 0.0
    %4925 = vmatpush1.msra.mxu0 0.0
    %4926 = vmatprep.subr.mxu0 0.0
    %4927 = vmatpush1.msra.mxu0 0.0
    %4928 = vmatprep.subr.mxu0 0.0
    %4929 = vmatpush1.msra.mxu0 0.0
    %4930 = vmatprep.mubr.f32.mxu0 0.0
    %4931 = vmatmul.mubr.f32.gmra.mrb[0].mxu0 %v4771
    %v4932 = vpop.f32.mrb[0].mxu0
    %v4933 = vadd.f32 0.0, %v4932
    %v4934 = vpop.f32.mrb[0].mxu0
    %4935 = vmatprep.mubr.f32.mxu0 0.0
    %4936 = vmatmul.mubr.f32.gmra.mrb[0].mxu0 %v4776
    %v4937 = vpop.f32.mrb[0].mxu0
    %v4938 = vadd.f32 0.0, %v4937
    %v4939 = vpop.f32.mrb[0].mxu0
    %4940 = vmatprep.mubr.f32.mxu0 0.0
    %4941 = vmatmul.mubr.f32.gmra.mrb[0].mxu0 %v4781
    %v4942 = vpop.f32.mrb[0].mxu0
    %v4943 = vadd.f32 0.0, %v4942
    %v4944 = vpop.f32.mrb[0].mxu0
    %4945 = vmatprep.mubr.f32.mxu0 0.0
    %4946 = vmatmul.mubr.f32.gmra.mrb[0].mxu0 %v4786
    %v4947 = vpop.f32.mrb[0].mxu0
    %v4948 = vadd.f32 0.0, %v4947
    %v4949 = vpop.f32.mrb[0].mxu0
    %4950 = vmatprep.mubr.f32.mxu0 0.0
    %4951 = vmatmul.mubr.f32.gmra.mrb[0].mxu0 %v4791
    %v4952 = vpop.f32.mrb[0].mxu0
    %v4953 = vadd.f32 0.0, %v4952
    %v4954 = vpop.f32.mrb[0].mxu0
    %4955 = vmatprep.mubr.f32.mxu0 0.0
    %4956 = vmatmul.mubr.f32.gmra.mrb[0].mxu0 %v4796
    %v4957 = vpop.f32.mrb[0].mxu0
    %v4958 = vadd.f32 0.0, %v4957
    %v4959 = vpop.f32.mrb[0].mxu0
    %4960 = vmatprep.mubr.f32.mxu0 0.0
    %4961 = vmatmul.mubr.f32.gmra.mrb[0].mxu0 %v4801
    %v4962 = vpop.f32.mrb[0].mxu0
    %v4963 = vadd.f32 0.0, %v4962
    %v4964 = vpop.f32.mrb[0].mxu0
    %4965 = vmatprep.mubr.f32.mxu0 0.0
    %4966 = vmatmul.mubr.f32.gmra.mrb[0].mxu0 %v4806
    %v4967 = vpop.f32.mrb[0].mxu0
    %v4968 = vadd.f32 0.0, %v4967
    %v4969 = vpop.f32.mrb[0].mxu0
    %4970 = vmatprep.mubr.f32.mxu0 0.0
    %4971 = vmatmul.mubr.f32.gmra.mrb[0].mxu0 %v4811
    %v4972 = vpop.f32.mrb[0].mxu0
    %v4973 = vadd.f32 0.0, %v4972
    %v4974 = vpop.f32.mrb[0].mxu0
    %4975 = vmatprep.mubr.f32.mxu0 0.0
    %4976 = vmatmul.mubr.f32.gmra.mrb[0].mxu0 %v4816
    %v4977 = vpop.f32.mrb[0].mxu0
    %v4978 = vadd.f32 0.0, %v4977
    %v4979 = vpop.f32.mrb[0].mxu0
    %4980 = vmatprep.mubr.f32.mxu0 0.0
    %4981 = vmatmul.mubr.f32.gmra.mrb[0].mxu0 %v4821
    %v4982 = vpop.f32.mrb[0].mxu0
    %v4983 = vadd.f32 0.0, %v4982
    %v4984 = vpop.f32.mrb[0].mxu0
    %4985 = vmatprep.mubr.f32.mxu0 0.0
    %4986 = vmatmul.mubr.f32.gmra.mrb[0].mxu0 %v4826
    %v4987 = vpop.f32.mrb[0].mxu0
    %v4988 = vadd.f32 0.0, %v4987
    %v4989 = vpop.f32.mrb[0].mxu0
    %4990 = vmatprep.mubr.f32.mxu0 0.0
    %4991 = vmatmul.mubr.f32.gmra.mrb[0].mxu0 %v4831
    %v4992 = vpop.f32.mrb[0].mxu0
    %v4993 = vadd.f32 0.0, %v4992
    %v4994 = vpop.f32.mrb[0].mxu0
    %4995 = vmatprep.mubr.f32.mxu0 0.0
    %4996 = vmatmul.mubr.f32.gmra.mrb[0].mxu0 %v4836
    %v4997 = vpop.f32.mrb[0].mxu0
    %v4998 = vadd.f32 0.0, %v4997
    %v4999 = vpop.f32.mrb[0].mxu0
    %5000 = vmatprep.mubr.f32.mxu0 0.0
    %5001 = vmatmul.mubr.f32.gmra.mrb[0].mxu0 %v4841
    %v5002 = vpop.f32.mrb[0].mxu0
    %v5003 = vadd.f32 0.0, %v5002
    %v5004 = vpop.f32.mrb[0].mxu0
    %5005 = vmatprep.mubr.f32.mxu0 0.0
    %5006 = vmatmul.mubr.f32.gmra.mrb[0].mxu0 %v4846
    %v5007 = vpop.f32.mrb[0].mxu0
    %v5008 = vadd.f32 0.0, %v5007
    %v5009 = vpop.f32.mrb[0].mxu0
    %5010 = vdwg.mxu0
    %v5011 = vadd.f32 %v4478, %v4933
    %v5012 = vadd.f32 %v4479, %v4938
    %v5013 = vadd.f32 %v4480, %v4943
    %v5014 = vadd.f32 %v4481, %v4948
    %v5015 = vadd.f32 %v4482, %v4953
    %v5016 = vadd.f32 %v4483, %v4958
    %v5017 = vadd.f32 %v4484, %v4963
    %v5018 = vadd.f32 %v4485, %v4968
    %v5019 = vadd.f32 %v4486, %v4973
    %v5020 = vadd.f32 %v4487, %v4978
    %v5021 = vadd.f32 %v4488, %v4983
    %v5022 = vadd.f32 %v4489, %v4988
    %v5023 = vadd.f32 %v4490, %v4993
    %v5024 = vadd.f32 %v4491, %v4998
    %v5025 = vadd.f32 %v4492, %v5003
    %v5026 = vadd.f32 %v4493, %v5008
    %v5027 = vld [vmem:[#allocation16] sm:$0x1]
    %v5029 = vlaneseq
    %v5030 = vshrl.u32 %v5029, 7
    %v5031 = vsub.s32 0, %v5030
    %v5032 = vrot.slane %v5027, %v5031
    %v5034 = vadd.f32 %v5011, %v5032
    %v5035 = vadd.f32 %v5012, %v5032
    %v5036 = vadd.f32 %v5013, %v5032
    %v5037 = vadd.f32 %v5014, %v5032
    %v5038 = vadd.f32 %v5015, %v5032
    %v5039 = vadd.f32 %v5016, %v5032
    %v5040 = vadd.f32 %v5017, %v5032
    %v5041 = vadd.f32 %v5018, %v5032
    %v5042 = vadd.f32 %v5019, %v5032
    %v5043 = vadd.f32 %v5020, %v5032
    %v5044 = vadd.f32 %v5021, %v5032
    %v5045 = vadd.f32 %v5022, %v5032
    %v5046 = vadd.f32 %v5023, %v5032
    %v5047 = vadd.f32 %v5024, %v5032
    %v5048 = vadd.f32 %v5025, %v5032
    %v5049 = vadd.f32 %v5026, %v5032
    %v5050 = vmul.f32 %v5034, 0.5
    %v5051 = vmul.f32 %v5035, 0.5
    %v5052 = vmul.f32 %v5036, 0.5
    %v5053 = vmul.f32 %v5037, 0.5
    %v5054 = vmul.f32 %v5038, 0.5
    %v5055 = vmul.f32 %v5039, 0.5
    %v5056 = vmul.f32 %v5040, 0.5
    %v5057 = vmul.f32 %v5041, 0.5
    %v5058 = vmul.f32 %v5042, 0.5
    %v5059 = vmul.f32 %v5043, 0.5
    %v5060 = vmul.f32 %v5044, 0.5
    %v5061 = vmul.f32 %v5045, 0.5
    %v5062 = vmul.f32 %v5046, 0.5
    %v5063 = vmul.f32 %v5047, 0.5
    %v5064 = vmul.f32 %v5048, 0.5
    %v5065 = vmul.f32 %v5049, 0.5
    %v5066 = vmul.f32 %v5034, 0.70710677
    %v5067 = vmul.f32 %v5035, 0.70710677
    %v5068 = vmul.f32 %v5036, 0.70710677
    %v5069 = vmul.f32 %v5037, 0.70710677
    %v5070 = vmul.f32 %v5038, 0.70710677
    %v5071 = vmul.f32 %v5039, 0.70710677
    %v5072 = vmul.f32 %v5040, 0.70710677
    %v5073 = vmul.f32 %v5041, 0.70710677
    %v5074 = vmul.f32 %v5042, 0.70710677
    %v5075 = vmul.f32 %v5043, 0.70710677
    %v5076 = vmul.f32 %v5044, 0.70710677
    %v5077 = vmul.f32 %v5045, 0.70710677
    %v5078 = vmul.f32 %v5046, 0.70710677
    %v5079 = vmul.f32 %v5047, 0.70710677
    %v5080 = vmul.f32 %v5048, 0.70710677
    %v5081 = vmul.f32 %v5049, 0.70710677
    %v5082 = verf.f32.pop %v5066
    %v5083 = verf.f32.pop %v5067
    %v5084 = verf.f32.pop %v5068
    %v5085 = verf.f32.pop %v5069
    %v5086 = verf.f32.pop %v5070
    %v5087 = verf.f32.pop %v5071
    %v5088 = verf.f32.pop %v5072
    %v5089 = verf.f32.pop %v5073
    %v5090 = verf.f32.pop %v5074
    %v5091 = verf.f32.pop %v5075
    %v5092 = verf.f32.pop %v5076
    %v5093 = verf.f32.pop %v5077
    %v5094 = verf.f32.pop %v5078
    %v5095 = verf.f32.pop %v5079
    %v5096 = verf.f32.pop %v5080
    %v5097 = verf.f32.pop %v5081
    %v5098 = vadd.f32 %v5082, 1.0
    %v5099 = vadd.f32 %v5083, 1.0
    %v5100 = vadd.f32 %v5084, 1.0
    %v5101 = vadd.f32 %v5085, 1.0
    %v5102 = vadd.f32 %v5086, 1.0
    %v5103 = vadd.f32 %v5087, 1.0
    %v5104 = vadd.f32 %v5088, 1.0
    %v5105 = vadd.f32 %v5089, 1.0
    %v5106 = vadd.f32 %v5090, 1.0
    %v5107 = vadd.f32 %v5091, 1.0
    %v5108 = vadd.f32 %v5092, 1.0
    %v5109 = vadd.f32 %v5093, 1.0
    %v5110 = vadd.f32 %v5094, 1.0
    %v5111 = vadd.f32 %v5095, 1.0
    %v5112 = vadd.f32 %v5096, 1.0
    %v5113 = vadd.f32 %v5097, 1.0
    %v5114 = vmul.f32 %v5050, %v5098
    %v5115 = vmul.f32 %v5051, %v5099
    %v5116 = vmul.f32 %v5052, %v5100
    %v5117 = vmul.f32 %v5053, %v5101
    %v5118 = vmul.f32 %v5054, %v5102
    %v5119 = vmul.f32 %v5055, %v5103
    %v5120 = vmul.f32 %v5056, %v5104
    %v5121 = vmul.f32 %v5057, %v5105
    %v5122 = vmul.f32 %v5058, %v5106
    %v5123 = vmul.f32 %v5059, %v5107
    %v5124 = vmul.f32 %v5060, %v5108
    %v5125 = vmul.f32 %v5061, %v5109
    %v5126 = vmul.f32 %v5062, %v5110
    %v5127 = vmul.f32 %v5063, %v5111
    %v5128 = vmul.f32 %v5064, %v5112
    %v5129 = vmul.f32 %v5065, %v5113
    %v5130 = vld [vmem:[#allocation7] sm:$0xff]
    %v5131 = vld [vmem:[#allocation7 + $0x8] sm:$0xff]
    %v5132 = vld [vmem:[#allocation7 + $0x10] sm:$0xff]
    %v5133 = vld [vmem:[#allocation7 + $0x18] sm:$0xff]
    %5134 = vmatprep.subr.mxu0 0.0
    %5135 = vmatpush1.msra.mxu0 %v5114
    %5136 = vmatprep.subr.mxu0 0.0
    %5137 = vmatpush1.msra.mxu0 %v5115
    %5138 = vmatprep.subr.mxu0 0.0
    %5139 = vmatpush1.msra.mxu0 %v5116
    %5140 = vmatprep.subr.mxu0 0.0
    %5141 = vmatpush1.msra.mxu0 %v5117
    %5142 = vmatprep.subr.mxu0 0.0
    %5143 = vmatpush1.msra.mxu0 %v5118
    %5144 = vmatprep.subr.mxu0 0.0
    %5145 = vmatpush1.msra.mxu0 %v5119
    %5146 = vmatprep.subr.mxu0 0.0
    %5147 = vmatpush1.msra.mxu0 %v5120
    %5148 = vmatprep.subr.mxu0 0.0
    %5149 = vmatpush1.msra.mxu0 %v5121
    %5150 = vmatprep.subr.mxu0 0.0
    %5151 = vmatpush1.msra.mxu0 %v5122
    %5152 = vmatprep.subr.mxu0 0.0
    %5153 = vmatpush1.msra.mxu0 %v5123
    %5154 = vmatprep.subr.mxu0 0.0
    %5155 = vmatpush1.msra.mxu0 %v5124
    %5156 = vmatprep.subr.mxu0 0.0
    %5157 = vmatpush1.msra.mxu0 %v5125
    %5158 = vmatprep.subr.mxu0 0.0
    %5159 = vmatpush1.msra.mxu0 %v5126
    %5160 = vmatprep.subr.mxu0 0.0
    %5161 = vmatpush1.msra.mxu0 %v5127
    %5162 = vmatprep.subr.mxu0 0.0
    %5163 = vmatpush1.msra.mxu0 %v5128
    %5164 = vmatprep.subr.mxu0 0.0
    %5165 = vmatpush1.msra.mxu0 %v5129
    %5166 = vmatprep.subr.mxu0 0.0
    %5167 = vmatpush1.msra.mxu0 0.0
    %5168 = vmatprep.subr.mxu0 0.0
    %5169 = vmatpush1.msra.mxu0 0.0
    %5170 = vmatprep.subr.mxu0 0.0
    %5171 = vmatpush1.msra.mxu0 0.0
    %5172 = vmatprep.subr.mxu0 0.0
    %5173 = vmatpush1.msra.mxu0 0.0
    %5174 = vmatprep.subr.mxu0 0.0
    %5175 = vmatpush1.msra.mxu0 0.0
    %5176 = vmatprep.subr.mxu0 0.0
    %5177 = vmatpush1.msra.mxu0 0.0
    %5178 = vmatprep.subr.mxu0 0.0
    %5179 = vmatpush1.msra.mxu0 0.0
    %5180 = vmatprep.subr.mxu0 0.0
    %5181 = vmatpush1.msra.mxu0 0.0
    %5182 = vmatprep.subr.mxu0 0.0
    %5183 = vmatpush1.msra.mxu0 0.0
    %5184 = vmatprep.subr.mxu0 0.0
    %5185 = vmatpush1.msra.mxu0 0.0
    %5186 = vmatprep.subr.mxu0 0.0
    %5187 = vmatpush1.msra.mxu0 0.0
    %5188 = vmatprep.subr.mxu0 0.0
    %5189 = vmatpush1.msra.mxu0 0.0
    %5190 = vmatprep.subr.mxu0 0.0
    %5191 = vmatpush1.msra.mxu0 0.0
    %5192 = vmatprep.subr.mxu0 0.0
    %5193 = vmatpush1.msra.mxu0 0.0
    %5194 = vmatprep.subr.mxu0 0.0
    %5195 = vmatpush1.msra.mxu0 0.0
    %5196 = vmatprep.subr.mxu0 0.0
    %5197 = vmatpush1.msra.mxu0 0.0
    %5198 = vmatprep.mubr.f32.mxu0 0.0
    %5199 = vmatmul.mubr.f32.gmra.mrb[0].mxu0 %v5130
    %v5200 = vpop.f32.mrb[0].mxu0
    %v5201 = vadd.f32 0.0, %v5200
    %v5202 = vpop.f32.mrb[0].mxu0
    %5203 = vmatprep.mubr.f32.mxu0 0.0
    %5204 = vmatmul.mubr.f32.gmra.mrb[0].mxu0 %v5131
    %v5205 = vpop.f32.mrb[0].mxu0
    %v5206 = vadd.f32 0.0, %v5205
    %v5207 = vpop.f32.mrb[0].mxu0
    %5208 = vmatprep.mubr.f32.mxu0 0.0
    %5209 = vmatmul.mubr.f32.gmra.mrb[0].mxu0 %v5132
    %v5210 = vpop.f32.mrb[0].mxu0
    %v5211 = vadd.f32 0.0, %v5210
    %v5212 = vpop.f32.mrb[0].mxu0
    %5213 = vmatprep.mubr.f32.mxu0 0.0
    %5214 = vmatmul.mubr.f32.gmra.mrb[0].mxu0 %v5133
    %v5215 = vpop.f32.mrb[0].mxu0
    %v5216 = vadd.f32 0.0, %v5215
    %v5217 = vpop.f32.mrb[0].mxu0
    %5218 = vdwg.mxu0
    %v5219 = vld [vmem:[#allocation11] sm:$0xff]
    %v5220 = vld [vmem:[#allocation11 + $0x8] sm:$0xff]
    %v5221 = vld [vmem:[#allocation11 + $0x10] sm:$0xff]
    %v5222 = vld [vmem:[#allocation11 + $0x18] sm:$0xff]
    %v5223 = vld [vmem:[#allocation11 + $0x20] sm:$0xff]
    %v5224 = vld [vmem:[#allocation11 + $0x28] sm:$0xff]
    %v5225 = vld [vmem:[#allocation11 + $0x30] sm:$0xff]
    %v5226 = vld [vmem:[#allocation11 + $0x38] sm:$0xff]
    %v5227 = vld [vmem:[#allocation11 + $0x40] sm:$0xff]
    %v5228 = vld [vmem:[#allocation11 + $0x48] sm:$0xff]
    %v5229 = vld [vmem:[#allocation11 + $0x50] sm:$0xff]
    %v5230 = vld [vmem:[#allocation11 + $0x58] sm:$0xff]
    %v5231 = vld [vmem:[#allocation11 + $0x60] sm:$0xff]
    %v5232 = vld [vmem:[#allocation11 + $0x68] sm:$0xff]
    %v5233 = vld [vmem:[#allocation11 + $0x70] sm:$0xff]
    %v5234 = vld [vmem:[#allocation11 + $0x78] sm:$0xff]
    %s5235 = scalar_lea.vmem [#allocation7], 32
    %v5236 = vld [vmem:[%s5235] sm:$0xff]
    %v5237 = vld [vmem:[%s5235 + $0x8] sm:$0xff]
    %v5238 = vld [vmem:[%s5235 + $0x10] sm:$0xff]
    %v5239 = vld [vmem:[%s5235 + $0x18] sm:$0xff]
    %5240 = vmatprep.subr.mxu0 0.0
    %5241 = vmatpush1.msra.mxu0 %v5114
    %5242 = vmatprep.subr.mxu0 0.0
    %5243 = vmatpush1.msra.mxu0 %v5115
    %5244 = vmatprep.subr.mxu0 0.0
    %5245 = vmatpush1.msra.mxu0 %v5116
    %5246 = vmatprep.subr.mxu0 0.0
    %5247 = vmatpush1.msra.mxu0 %v5117
    %5248 = vmatprep.subr.mxu0 0.0
    %5249 = vmatpush1.msra.mxu0 %v5118
    %5250 = vmatprep.subr.mxu0 0.0
    %5251 = vmatpush1.msra.mxu0 %v5119
    %5252 = vmatprep.subr.mxu0 0.0
    %5253 = vmatpush1.msra.mxu0 %v5120
    %5254 = vmatprep.subr.mxu0 0.0
    %5255 = vmatpush1.msra.mxu0 %v5121
    %5256 = vmatprep.subr.mxu0 0.0
    %5257 = vmatpush1.msra.mxu0 %v5122
    %5258 = vmatprep.subr.mxu0 0.0
    %5259 = vmatpush1.msra.mxu0 %v5123
    %5260 = vmatprep.subr.mxu0 0.0
    %5261 = vmatpush1.msra.mxu0 %v5124
    %5262 = vmatprep.subr.mxu0 0.0
    %5263 = vmatpush1.msra.mxu0 %v5125
    %5264 = vmatprep.subr.mxu0 0.0
    %5265 = vmatpush1.msra.mxu0 %v5126
    %5266 = vmatprep.subr.mxu0 0.0
    %5267 = vmatpush1.msra.mxu0 %v5127
    %5268 = vmatprep.subr.mxu0 0.0
    %5269 = vmatpush1.msra.mxu0 %v5128
    %5270 = vmatprep.subr.mxu0 0.0
    %5271 = vmatpush1.msra.mxu0 %v5129
    %5272 = vmatprep.subr.mxu0 0.0
    %5273 = vmatpush1.msra.mxu0 0.0
    %5274 = vmatprep.subr.mxu0 0.0
    %5275 = vmatpush1.msra.mxu0 0.0
    %5276 = vmatprep.subr.mxu0 0.0
    %5277 = vmatpush1.msra.mxu0 0.0
    %5278 = vmatprep.subr.mxu0 0.0
    %5279 = vmatpush1.msra.mxu0 0.0
    %5280 = vmatprep.subr.mxu0 0.0
    %5281 = vmatpush1.msra.mxu0 0.0
    %5282 = vmatprep.subr.mxu0 0.0
    %5283 = vmatpush1.msra.mxu0 0.0
    %5284 = vmatprep.subr.mxu0 0.0
    %5285 = vmatpush1.msra.mxu0 0.0
    %5286 = vmatprep.subr.mxu0 0.0
    %5287 = vmatpush1.msra.mxu0 0.0
    %5288 = vmatprep.subr.mxu0 0.0
    %5289 = vmatpush1.msra.mxu0 0.0
    %5290 = vmatprep.subr.mxu0 0.0
    %5291 = vmatpush1.msra.mxu0 0.0
    %5292 = vmatprep.subr.mxu0 0.0
    %5293 = vmatpush1.msra.mxu0 0.0
    %5294 = vmatprep.subr.mxu0 0.0
    %5295 = vmatpush1.msra.mxu0 0.0
    %5296 = vmatprep.subr.mxu0 0.0
    %5297 = vmatpush1.msra.mxu0 0.0
    %5298 = vmatprep.subr.mxu0 0.0
    %5299 = vmatpush1.msra.mxu0 0.0
    %5300 = vmatprep.subr.mxu0 0.0
    %5301 = vmatpush1.msra.mxu0 0.0
    %5302 = vmatprep.subr.mxu0 0.0
    %5303 = vmatpush1.msra.mxu0 0.0
    %5304 = vmatprep.mubr.f32.mxu0 0.0
    %5305 = vmatmul.mubr.f32.gmra.mrb[0].mxu0 %v5236
    %v5306 = vpop.f32.mrb[0].mxu0
    %v5307 = vadd.f32 0.0, %v5306
    %v5308 = vpop.f32.mrb[0].mxu0
    %5309 = vmatprep.mubr.f32.mxu0 0.0
    %5310 = vmatmul.mubr.f32.gmra.mrb[0].mxu0 %v5237
    %v5311 = vpop.f32.mrb[0].mxu0
    %v5312 = vadd.f32 0.0, %v5311
    %v5313 = vpop.f32.mrb[0].mxu0
    %5314 = vmatprep.mubr.f32.mxu0 0.0
    %5315 = vmatmul.mubr.f32.gmra.mrb[0].mxu0 %v5238
    %v5316 = vpop.f32.mrb[0].mxu0
    %v5317 = vadd.f32 0.0, %v5316
    %v5318 = vpop.f32.mrb[0].mxu0
    %5319 = vmatprep.mubr.f32.mxu0 0.0
    %5320 = vmatmul.mubr.f32.gmra.mrb[0].mxu0 %v5239
    %v5321 = vpop.f32.mrb[0].mxu0
    %v5322 = vadd.f32 0.0, %v5321
    %v5323 = vpop.f32.mrb[0].mxu0
    %5324 = vdwg.mxu0
    %s5325 = scalar_lea.vmem [#allocation11], 128
    %v5326 = vld [vmem:[%s5325] sm:$0xff]
    %v5327 = vld [vmem:[%s5325 + $0x8] sm:$0xff]
    %v5328 = vld [vmem:[%s5325 + $0x10] sm:$0xff]
    %v5329 = vld [vmem:[%s5325 + $0x18] sm:$0xff]
    %v5330 = vld [vmem:[%s5325 + $0x20] sm:$0xff]
    %v5331 = vld [vmem:[%s5325 + $0x28] sm:$0xff]
    %v5332 = vld [vmem:[%s5325 + $0x30] sm:$0xff]
    %v5333 = vld [vmem:[%s5325 + $0x38] sm:$0xff]
    %v5334 = vld [vmem:[%s5325 + $0x40] sm:$0xff]
    %v5335 = vld [vmem:[%s5325 + $0x48] sm:$0xff]
    %v5336 = vld [vmem:[%s5325 + $0x50] sm:$0xff]
    %v5337 = vld [vmem:[%s5325 + $0x58] sm:$0xff]
    %v5338 = vld [vmem:[%s5325 + $0x60] sm:$0xff]
    %v5339 = vld [vmem:[%s5325 + $0x68] sm:$0xff]
    %v5340 = vld [vmem:[%s5325 + $0x70] sm:$0xff]
    %v5341 = vld [vmem:[%s5325 + $0x78] sm:$0xff]
    %5342 = vmatprep.subr.mxu0 0.0
    %5343 = vmatpush1.msra.mxu0 %v5326
    %5344 = vmatprep.subr.mxu0 0.0
    %5345 = vmatpush1.msra.mxu0 %v5327
    %5346 = vmatprep.subr.mxu0 0.0
    %5347 = vmatpush1.msra.mxu0 %v5328
    %5348 = vmatprep.subr.mxu0 0.0
    %5349 = vmatpush1.msra.mxu0 %v5329
    %5350 = vmatprep.subr.mxu0 0.0
    %5351 = vmatpush1.msra.mxu0 %v5330
    %5352 = vmatprep.subr.mxu0 0.0
    %5353 = vmatpush1.msra.mxu0 %v5331
    %5354 = vmatprep.subr.mxu0 0.0
    %5355 = vmatpush1.msra.mxu0 %v5332
    %5356 = vmatprep.subr.mxu0 0.0
    %5357 = vmatpush1.msra.mxu0 %v5333
    %5358 = vmatprep.subr.mxu0 0.0
    %5359 = vmatpush1.msra.mxu0 %v5334
    %5360 = vmatprep.subr.mxu0 0.0
    %5361 = vmatpush1.msra.mxu0 %v5335
    %5362 = vmatprep.subr.mxu0 0.0
    %5363 = vmatpush1.msra.mxu0 %v5336
    %5364 = vmatprep.subr.mxu0 0.0
    %5365 = vmatpush1.msra.mxu0 %v5337
    %5366 = vmatprep.subr.mxu0 0.0
    %5367 = vmatpush1.msra.mxu0 %v5338
    %5368 = vmatprep.subr.mxu0 0.0
    %5369 = vmatpush1.msra.mxu0 %v5339
    %5370 = vmatprep.subr.mxu0 0.0
    %5371 = vmatpush1.msra.mxu0 %v5340
    %5372 = vmatprep.subr.mxu0 0.0
    %5373 = vmatpush1.msra.mxu0 %v5341
    %5374 = vmatprep.subr.mxu0 0.0
    %5375 = vmatpush1.msra.mxu0 0.0
    %5376 = vmatprep.subr.mxu0 0.0
    %5377 = vmatpush1.msra.mxu0 0.0
    %5378 = vmatprep.subr.mxu0 0.0
    %5379 = vmatpush1.msra.mxu0 0.0
    %5380 = vmatprep.subr.mxu0 0.0
    %5381 = vmatpush1.msra.mxu0 0.0
    %5382 = vmatprep.subr.mxu0 0.0
    %5383 = vmatpush1.msra.mxu0 0.0
    %5384 = vmatprep.subr.mxu0 0.0
    %5385 = vmatpush1.msra.mxu0 0.0
    %5386 = vmatprep.subr.mxu0 0.0
    %5387 = vmatpush1.msra.mxu0 0.0
    %5388 = vmatprep.subr.mxu0 0.0
    %5389 = vmatpush1.msra.mxu0 0.0
    %5390 = vmatprep.subr.mxu0 0.0
    %5391 = vmatpush1.msra.mxu0 0.0
    %5392 = vmatprep.subr.mxu0 0.0
    %5393 = vmatpush1.msra.mxu0 0.0
    %5394 = vmatprep.subr.mxu0 0.0
    %5395 = vmatpush1.msra.mxu0 0.0
    %5396 = vmatprep.subr.mxu0 0.0
    %5397 = vmatpush1.msra.mxu0 0.0
    %5398 = vmatprep.subr.mxu0 0.0
    %5399 = vmatpush1.msra.mxu0 0.0
    %5400 = vmatprep.subr.mxu0 0.0
    %5401 = vmatpush1.msra.mxu0 0.0
    %5402 = vmatprep.subr.mxu0 0.0
    %5403 = vmatpush1.msra.mxu0 0.0
    %5404 = vmatprep.subr.mxu0 0.0
    %5405 = vmatpush1.msra.mxu0 0.0
    %5406 = vmatprep.mubr.f32.mxu0 0.0
    %5407 = vmatmul.mubr.f32.gmra.mrb[0].mxu0 %v5307
    %v5408 = vpop.f32.mrb[0].mxu0
    %v5409 = vadd.f32 0.0, %v5408
    %v5410 = vpop.f32.mrb[0].mxu0
    %5411 = vmatprep.mubr.f32.mxu0 0.0
    %5412 = vmatmul.mubr.f32.gmra.mrb[0].mxu0 %v5312
    %v5413 = vpop.f32.mrb[0].mxu0
    %v5414 = vadd.f32 0.0, %v5413
    %v5415 = vpop.f32.mrb[0].mxu0
    %5416 = vmatprep.mubr.f32.mxu0 0.0
    %5417 = vmatmul.mubr.f32.gmra.mrb[0].mxu0 %v5317
    %v5418 = vpop.f32.mrb[0].mxu0
    %v5419 = vadd.f32 0.0, %v5418
    %v5420 = vpop.f32.mrb[0].mxu0
    %5421 = vmatprep.mubr.f32.mxu0 0.0
    %5422 = vmatmul.mubr.f32.gmra.mrb[0].mxu0 %v5322
    %v5423 = vpop.f32.mrb[0].mxu0
    %v5424 = vadd.f32 0.0, %v5423
    %v5425 = vpop.f32.mrb[0].mxu0
    %5426 = vdwg.mxu0
    %5427 = vmatprep.subr.mxu0 0.0
    %5428 = vmatpush1.msra.mxu0 %v5219
    %5429 = vmatprep.subr.mxu0 0.0
    %5430 = vmatpush1.msra.mxu0 %v5220
    %5431 = vmatprep.subr.mxu0 0.0
    %5432 = vmatpush1.msra.mxu0 %v5221
    %5433 = vmatprep.subr.mxu0 0.0
    %5434 = vmatpush1.msra.mxu0 %v5222
    %5435 = vmatprep.subr.mxu0 0.0
    %5436 = vmatpush1.msra.mxu0 %v5223
    %5437 = vmatprep.subr.mxu0 0.0
    %5438 = vmatpush1.msra.mxu0 %v5224
    %5439 = vmatprep.subr.mxu0 0.0
    %5440 = vmatpush1.msra.mxu0 %v5225
    %5441 = vmatprep.subr.mxu0 0.0
    %5442 = vmatpush1.msra.mxu0 %v5226
    %5443 = vmatprep.subr.mxu0 0.0
    %5444 = vmatpush1.msra.mxu0 %v5227
    %5445 = vmatprep.subr.mxu0 0.0
    %5446 = vmatpush1.msra.mxu0 %v5228
    %5447 = vmatprep.subr.mxu0 0.0
    %5448 = vmatpush1.msra.mxu0 %v5229
    %5449 = vmatprep.subr.mxu0 0.0
    %5450 = vmatpush1.msra.mxu0 %v5230
    %5451 = vmatprep.subr.mxu0 0.0
    %5452 = vmatpush1.msra.mxu0 %v5231
    %5453 = vmatprep.subr.mxu0 0.0
    %5454 = vmatpush1.msra.mxu0 %v5232
    %5455 = vmatprep.subr.mxu0 0.0
    %5456 = vmatpush1.msra.mxu0 %v5233
    %5457 = vmatprep.subr.mxu0 0.0
    %5458 = vmatpush1.msra.mxu0 %v5234
    %5459 = vmatprep.subr.mxu0 0.0
    %5460 = vmatpush1.msra.mxu0 0.0
    %5461 = vmatprep.subr.mxu0 0.0
    %5462 = vmatpush1.msra.mxu0 0.0
    %5463 = vmatprep.subr.mxu0 0.0
    %5464 = vmatpush1.msra.mxu0 0.0
    %5465 = vmatprep.subr.mxu0 0.0
    %5466 = vmatpush1.msra.mxu0 0.0
    %5467 = vmatprep.subr.mxu0 0.0
    %5468 = vmatpush1.msra.mxu0 0.0
    %5469 = vmatprep.subr.mxu0 0.0
    %5470 = vmatpush1.msra.mxu0 0.0
    %5471 = vmatprep.subr.mxu0 0.0
    %5472 = vmatpush1.msra.mxu0 0.0
    %5473 = vmatprep.subr.mxu0 0.0
    %5474 = vmatpush1.msra.mxu0 0.0
    %5475 = vmatprep.subr.mxu0 0.0
    %5476 = vmatpush1.msra.mxu0 0.0
    %5477 = vmatprep.subr.mxu0 0.0
    %5478 = vmatpush1.msra.mxu0 0.0
    %5479 = vmatprep.subr.mxu0 0.0
    %5480 = vmatpush1.msra.mxu0 0.0
    %5481 = vmatprep.subr.mxu0 0.0
    %5482 = vmatpush1.msra.mxu0 0.0
    %5483 = vmatprep.subr.mxu0 0.0
    %5484 = vmatpush1.msra.mxu0 0.0
    %5485 = vmatprep.subr.mxu0 0.0
    %5486 = vmatpush1.msra.mxu0 0.0
    %5487 = vmatprep.subr.mxu0 0.0
    %5488 = vmatpush1.msra.mxu0 0.0
    %5489 = vmatprep.subr.mxu0 0.0
    %5490 = vmatpush1.msra.mxu0 0.0
    %5491 = vmatprep.mubr.f32.mxu0 0.0
    %5492 = vmatmul.mubr.f32.gmra.mrb[0].mxu0 %v5201
    %v5493 = vpop.f32.mrb[0].mxu0
    %v5494 = vadd.f32 %v5409, %v5493
    %v5495 = vpop.f32.mrb[0].mxu0
    %5496 = vmatprep.mubr.f32.mxu0 0.0
    %5497 = vmatmul.mubr.f32.gmra.mrb[0].mxu0 %v5206
    %v5498 = vpop.f32.mrb[0].mxu0
    %v5499 = vadd.f32 %v5414, %v5498
    %v5500 = vpop.f32.mrb[0].mxu0
    %5501 = vmatprep.mubr.f32.mxu0 0.0
    %5502 = vmatmul.mubr.f32.gmra.mrb[0].mxu0 %v5211
    %v5503 = vpop.f32.mrb[0].mxu0
    %v5504 = vadd.f32 %v5419, %v5503
    %v5505 = vpop.f32.mrb[0].mxu0
    %5506 = vmatprep.mubr.f32.mxu0 0.0
    %5507 = vmatmul.mubr.f32.gmra.mrb[0].mxu0 %v5216
    %v5508 = vpop.f32.mrb[0].mxu0
    %v5509 = vadd.f32 %v5424, %v5508
    %v5510 = vpop.f32.mrb[0].mxu0
    %5511 = vdwg.mxu0
    %s5512 = scalar_lea.vmem [#allocation7], 64
    %v5513 = vld [vmem:[%s5512] sm:$0xff]
    %v5514 = vld [vmem:[%s5512 + $0x8] sm:$0xff]
    %v5515 = vld [vmem:[%s5512 + $0x10] sm:$0xff]
    %v5516 = vld [vmem:[%s5512 + $0x18] sm:$0xff]
    %5517 = vmatprep.subr.mxu0 0.0
    %5518 = vmatpush1.msra.mxu0 %v5114
    %5519 = vmatprep.subr.mxu0 0.0
    %5520 = vmatpush1.msra.mxu0 %v5115
    %5521 = vmatprep.subr.mxu0 0.0
    %5522 = vmatpush1.msra.mxu0 %v5116
    %5523 = vmatprep.subr.mxu0 0.0
    %5524 = vmatpush1.msra.mxu0 %v5117
    %5525 = vmatprep.subr.mxu0 0.0
    %5526 = vmatpush1.msra.mxu0 %v5118
    %5527 = vmatprep.subr.mxu0 0.0
    %5528 = vmatpush1.msra.mxu0 %v5119
    %5529 = vmatprep.subr.mxu0 0.0
    %5530 = vmatpush1.msra.mxu0 %v5120
    %5531 = vmatprep.subr.mxu0 0.0
    %5532 = vmatpush1.msra.mxu0 %v5121
    %5533 = vmatprep.subr.mxu0 0.0
    %5534 = vmatpush1.msra.mxu0 %v5122
    %5535 = vmatprep.subr.mxu0 0.0
    %5536 = vmatpush1.msra.mxu0 %v5123
    %5537 = vmatprep.subr.mxu0 0.0
    %5538 = vmatpush1.msra.mxu0 %v5124
    %5539 = vmatprep.subr.mxu0 0.0
    %5540 = vmatpush1.msra.mxu0 %v5125
    %5541 = vmatprep.subr.mxu0 0.0
    %5542 = vmatpush1.msra.mxu0 %v5126
    %5543 = vmatprep.subr.mxu0 0.0
    %5544 = vmatpush1.msra.mxu0 %v5127
    %5545 = vmatprep.subr.mxu0 0.0
    %5546 = vmatpush1.msra.mxu0 %v5128
    %5547 = vmatprep.subr.mxu0 0.0
    %5548 = vmatpush1.msra.mxu0 %v5129
    %5549 = vmatprep.subr.mxu0 0.0
    %5550 = vmatpush1.msra.mxu0 0.0
    %5551 = vmatprep.subr.mxu0 0.0
    %5552 = vmatpush1.msra.mxu0 0.0
    %5553 = vmatprep.subr.mxu0 0.0
    %5554 = vmatpush1.msra.mxu0 0.0
    %5555 = vmatprep.subr.mxu0 0.0
    %5556 = vmatpush1.msra.mxu0 0.0
    %5557 = vmatprep.subr.mxu0 0.0
    %5558 = vmatpush1.msra.mxu0 0.0
    %5559 = vmatprep.subr.mxu0 0.0
    %5560 = vmatpush1.msra.mxu0 0.0
    %5561 = vmatprep.subr.mxu0 0.0
    %5562 = vmatpush1.msra.mxu0 0.0
    %5563 = vmatprep.subr.mxu0 0.0
    %5564 = vmatpush1.msra.mxu0 0.0
    %5565 = vmatprep.subr.mxu0 0.0
    %5566 = vmatpush1.msra.mxu0 0.0
    %5567 = vmatprep.subr.mxu0 0.0
    %5568 = vmatpush1.msra.mxu0 0.0
    %5569 = vmatprep.subr.mxu0 0.0
    %5570 = vmatpush1.msra.mxu0 0.0
    %5571 = vmatprep.subr.mxu0 0.0
    %5572 = vmatpush1.msra.mxu0 0.0
    %5573 = vmatprep.subr.mxu0 0.0
    %5574 = vmatpush1.msra.mxu0 0.0
    %5575 = vmatprep.subr.mxu0 0.0
    %5576 = vmatpush1.msra.mxu0 0.0
    %5577 = vmatprep.subr.mxu0 0.0
    %5578 = vmatpush1.msra.mxu0 0.0
    %5579 = vmatprep.subr.mxu0 0.0
    %5580 = vmatpush1.msra.mxu0 0.0
    %5581 = vmatprep.mubr.f32.mxu0 0.0
    %5582 = vmatmul.mubr.f32.gmra.mrb[0].mxu0 %v5513
    %v5583 = vpop.f32.mrb[0].mxu0
    %v5584 = vadd.f32 0.0, %v5583
    %v5585 = vpop.f32.mrb[0].mxu0
    %5586 = vmatprep.mubr.f32.mxu0 0.0
    %5587 = vmatmul.mubr.f32.gmra.mrb[0].mxu0 %v5514
    %v5588 = vpop.f32.mrb[0].mxu0
    %v5589 = vadd.f32 0.0, %v5588
    %v5590 = vpop.f32.mrb[0].mxu0
    %5591 = vmatprep.mubr.f32.mxu0 0.0
    %5592 = vmatmul.mubr.f32.gmra.mrb[0].mxu0 %v5515
    %v5593 = vpop.f32.mrb[0].mxu0
    %v5594 = vadd.f32 0.0, %v5593
    %v5595 = vpop.f32.mrb[0].mxu0
    %5596 = vmatprep.mubr.f32.mxu0 0.0
    %5597 = vmatmul.mubr.f32.gmra.mrb[0].mxu0 %v5516
    %v5598 = vpop.f32.mrb[0].mxu0
    %v5599 = vadd.f32 0.0, %v5598
    %v5600 = vpop.f32.mrb[0].mxu0
    %5601 = vdwg.mxu0
    %s5602 = scalar_lea.vmem [#allocation11], 256
    %v5603 = vld [vmem:[%s5602] sm:$0xff]
    %v5604 = vld [vmem:[%s5602 + $0x8] sm:$0xff]
    %v5605 = vld [vmem:[%s5602 + $0x10] sm:$0xff]
    %v5606 = vld [vmem:[%s5602 + $0x18] sm:$0xff]
    %v5607 = vld [vmem:[%s5602 + $0x20] sm:$0xff]
    %v5608 = vld [vmem:[%s5602 + $0x28] sm:$0xff]
    %v5609 = vld [vmem:[%s5602 + $0x30] sm:$0xff]
    %v5610 = vld [vmem:[%s5602 + $0x38] sm:$0xff]
    %v5611 = vld [vmem:[%s5602 + $0x40] sm:$0xff]
    %v5612 = vld [vmem:[%s5602 + $0x48] sm:$0xff]
    %v5613 = vld [vmem:[%s5602 + $0x50] sm:$0xff]
    %v5614 = vld [vmem:[%s5602 + $0x58] sm:$0xff]
    %v5615 = vld [vmem:[%s5602 + $0x60] sm:$0xff]
    %v5616 = vld [vmem:[%s5602 + $0x68] sm:$0xff]
    %v5617 = vld [vmem:[%s5602 + $0x70] sm:$0xff]
    %v5618 = vld [vmem:[%s5602 + $0x78] sm:$0xff]
    %5619 = vmatprep.subr.mxu0 0.0
    %5620 = vmatpush1.msra.mxu0 %v5603
    %5621 = vmatprep.subr.mxu0 0.0
    %5622 = vmatpush1.msra.mxu0 %v5604
    %5623 = vmatprep.subr.mxu0 0.0
    %5624 = vmatpush1.msra.mxu0 %v5605
    %5625 = vmatprep.subr.mxu0 0.0
    %5626 = vmatpush1.msra.mxu0 %v5606
    %5627 = vmatprep.subr.mxu0 0.0
    %5628 = vmatpush1.msra.mxu0 %v5607
    %5629 = vmatprep.subr.mxu0 0.0
    %5630 = vmatpush1.msra.mxu0 %v5608
    %5631 = vmatprep.subr.mxu0 0.0
    %5632 = vmatpush1.msra.mxu0 %v5609
    %5633 = vmatprep.subr.mxu0 0.0
    %5634 = vmatpush1.msra.mxu0 %v5610
    %5635 = vmatprep.subr.mxu0 0.0
    %5636 = vmatpush1.msra.mxu0 %v5611
    %5637 = vmatprep.subr.mxu0 0.0
    %5638 = vmatpush1.msra.mxu0 %v5612
    %5639 = vmatprep.subr.mxu0 0.0
    %5640 = vmatpush1.msra.mxu0 %v5613
    %5641 = vmatprep.subr.mxu0 0.0
    %5642 = vmatpush1.msra.mxu0 %v5614
    %5643 = vmatprep.subr.mxu0 0.0
    %5644 = vmatpush1.msra.mxu0 %v5615
    %5645 = vmatprep.subr.mxu0 0.0
    %5646 = vmatpush1.msra.mxu0 %v5616
    %5647 = vmatprep.subr.mxu0 0.0
    %5648 = vmatpush1.msra.mxu0 %v5617
    %5649 = vmatprep.subr.mxu0 0.0
    %5650 = vmatpush1.msra.mxu0 %v5618
    %5651 = vmatprep.subr.mxu0 0.0
    %5652 = vmatpush1.msra.mxu0 0.0
    %5653 = vmatprep.subr.mxu0 0.0
    %5654 = vmatpush1.msra.mxu0 0.0
    %5655 = vmatprep.subr.mxu0 0.0
    %5656 = vmatpush1.msra.mxu0 0.0
    %5657 = vmatprep.subr.mxu0 0.0
    %5658 = vmatpush1.msra.mxu0 0.0
    %5659 = vmatprep.subr.mxu0 0.0
    %5660 = vmatpush1.msra.mxu0 0.0
    %5661 = vmatprep.subr.mxu0 0.0
    %5662 = vmatpush1.msra.mxu0 0.0
    %5663 = vmatprep.subr.mxu0 0.0
    %5664 = vmatpush1.msra.mxu0 0.0
    %5665 = vmatprep.subr.mxu0 0.0
    %5666 = vmatpush1.msra.mxu0 0.0
    %5667 = vmatprep.subr.mxu0 0.0
    %5668 = vmatpush1.msra.mxu0 0.0
    %5669 = vmatprep.subr.mxu0 0.0
    %5670 = vmatpush1.msra.mxu0 0.0
    %5671 = vmatprep.subr.mxu0 0.0
    %5672 = vmatpush1.msra.mxu0 0.0
    %5673 = vmatprep.subr.mxu0 0.0
    %5674 = vmatpush1.msra.mxu0 0.0
    %5675 = vmatprep.subr.mxu0 0.0
    %5676 = vmatpush1.msra.mxu0 0.0
    %5677 = vmatprep.subr.mxu0 0.0
    %5678 = vmatpush1.msra.mxu0 0.0
    %5679 = vmatprep.subr.mxu0 0.0
    %5680 = vmatpush1.msra.mxu0 0.0
    %5681 = vmatprep.subr.mxu0 0.0
    %5682 = vmatpush1.msra.mxu0 0.0
    %5683 = vmatprep.mubr.f32.mxu0 0.0
    %5684 = vmatmul.mubr.f32.gmra.mrb[0].mxu0 %v5584
    %v5685 = vpop.f32.mrb[0].mxu0
    %v5686 = vadd.f32 0.0, %v5685
    %v5687 = vpop.f32.mrb[0].mxu0
    %5688 = vmatprep.mubr.f32.mxu0 0.0
    %5689 = vmatmul.mubr.f32.gmra.mrb[0].mxu0 %v5589
    %v5690 = vpop.f32.mrb[0].mxu0
    %v5691 = vadd.f32 0.0, %v5690
    %v5692 = vpop.f32.mrb[0].mxu0
    %5693 = vmatprep.mubr.f32.mxu0 0.0
    %5694 = vmatmul.mubr.f32.gmra.mrb[0].mxu0 %v5594
    %v5695 = vpop.f32.mrb[0].mxu0
    %v5696 = vadd.f32 0.0, %v5695
    %v5697 = vpop.f32.mrb[0].mxu0
    %5698 = vmatprep.mubr.f32.mxu0 0.0
    %5699 = vmatmul.mubr.f32.gmra.mrb[0].mxu0 %v5599
    %v5700 = vpop.f32.mrb[0].mxu0
    %v5701 = vadd.f32 0.0, %v5700
    %v5702 = vpop.f32.mrb[0].mxu0
    %5703 = vdwg.mxu0
    %v5704 = vadd.f32 %v5494, %v5686
    %v5705 = vadd.f32 %v5499, %v5691
    %v5706 = vadd.f32 %v5504, %v5696
    %v5707 = vadd.f32 %v5509, %v5701
    %s5708 = scalar_lea.vmem [#allocation7], 96
    %v5709 = vld [vmem:[%s5708] sm:$0xff]
    %v5710 = vld [vmem:[%s5708 + $0x8] sm:$0xff]
    %v5711 = vld [vmem:[%s5708 + $0x10] sm:$0xff]
    %v5712 = vld [vmem:[%s5708 + $0x18] sm:$0xff]
    %5713 = vmatprep.subr.mxu0 0.0
    %5714 = vmatpush1.msra.mxu0 %v5114
    %5715 = vmatprep.subr.mxu0 0.0
    %5716 = vmatpush1.msra.mxu0 %v5115
    %5717 = vmatprep.subr.mxu0 0.0
    %5718 = vmatpush1.msra.mxu0 %v5116
    %5719 = vmatprep.subr.mxu0 0.0
    %5720 = vmatpush1.msra.mxu0 %v5117
    %5721 = vmatprep.subr.mxu0 0.0
    %5722 = vmatpush1.msra.mxu0 %v5118
    %5723 = vmatprep.subr.mxu0 0.0
    %5724 = vmatpush1.msra.mxu0 %v5119
    %5725 = vmatprep.subr.mxu0 0.0
    %5726 = vmatpush1.msra.mxu0 %v5120
    %5727 = vmatprep.subr.mxu0 0.0
    %5728 = vmatpush1.msra.mxu0 %v5121
    %5729 = vmatprep.subr.mxu0 0.0
    %5730 = vmatpush1.msra.mxu0 %v5122
    %5731 = vmatprep.subr.mxu0 0.0
    %5732 = vmatpush1.msra.mxu0 %v5123
    %5733 = vmatprep.subr.mxu0 0.0
    %5734 = vmatpush1.msra.mxu0 %v5124
    %5735 = vmatprep.subr.mxu0 0.0
    %5736 = vmatpush1.msra.mxu0 %v5125
    %5737 = vmatprep.subr.mxu0 0.0
    %5738 = vmatpush1.msra.mxu0 %v5126
    %5739 = vmatprep.subr.mxu0 0.0
    %5740 = vmatpush1.msra.mxu0 %v5127
    %5741 = vmatprep.subr.mxu0 0.0
    %5742 = vmatpush1.msra.mxu0 %v5128
    %5743 = vmatprep.subr.mxu0 0.0
    %5744 = vmatpush1.msra.mxu0 %v5129
    %5745 = vmatprep.subr.mxu0 0.0
    %5746 = vmatpush1.msra.mxu0 0.0
    %5747 = vmatprep.subr.mxu0 0.0
    %5748 = vmatpush1.msra.mxu0 0.0
    %5749 = vmatprep.subr.mxu0 0.0
    %5750 = vmatpush1.msra.mxu0 0.0
    %5751 = vmatprep.subr.mxu0 0.0
    %5752 = vmatpush1.msra.mxu0 0.0
    %5753 = vmatprep.subr.mxu0 0.0
    %5754 = vmatpush1.msra.mxu0 0.0
    %5755 = vmatprep.subr.mxu0 0.0
    %5756 = vmatpush1.msra.mxu0 0.0
    %5757 = vmatprep.subr.mxu0 0.0
    %5758 = vmatpush1.msra.mxu0 0.0
    %5759 = vmatprep.subr.mxu0 0.0
    %5760 = vmatpush1.msra.mxu0 0.0
    %5761 = vmatprep.subr.mxu0 0.0
    %5762 = vmatpush1.msra.mxu0 0.0
    %5763 = vmatprep.subr.mxu0 0.0
    %5764 = vmatpush1.msra.mxu0 0.0
    %5765 = vmatprep.subr.mxu0 0.0
    %5766 = vmatpush1.msra.mxu0 0.0
    %5767 = vmatprep.subr.mxu0 0.0
    %5768 = vmatpush1.msra.mxu0 0.0
    %5769 = vmatprep.subr.mxu0 0.0
    %5770 = vmatpush1.msra.mxu0 0.0
    %5771 = vmatprep.subr.mxu0 0.0
    %5772 = vmatpush1.msra.mxu0 0.0
    %5773 = vmatprep.subr.mxu0 0.0
    %5774 = vmatpush1.msra.mxu0 0.0
    %5775 = vmatprep.subr.mxu0 0.0
    %5776 = vmatpush1.msra.mxu0 0.0
    %5777 = vmatprep.mubr.f32.mxu0 0.0
    %5778 = vmatmul.mubr.f32.gmra.mrb[0].mxu0 %v5709
    %v5779 = vpop.f32.mrb[0].mxu0
    %v5780 = vadd.f32 0.0, %v5779
    %v5781 = vpop.f32.mrb[0].mxu0
    %5782 = vmatprep.mubr.f32.mxu0 0.0
    %5783 = vmatmul.mubr.f32.gmra.mrb[0].mxu0 %v5710
    %v5784 = vpop.f32.mrb[0].mxu0
    %v5785 = vadd.f32 0.0, %v5784
    %v5786 = vpop.f32.mrb[0].mxu0
    %5787 = vmatprep.mubr.f32.mxu0 0.0
    %5788 = vmatmul.mubr.f32.gmra.mrb[0].mxu0 %v5711
    %v5789 = vpop.f32.mrb[0].mxu0
    %v5790 = vadd.f32 0.0, %v5789
    %v5791 = vpop.f32.mrb[0].mxu0
    %5792 = vmatprep.mubr.f32.mxu0 0.0
    %5793 = vmatmul.mubr.f32.gmra.mrb[0].mxu0 %v5712
    %v5794 = vpop.f32.mrb[0].mxu0
    %v5795 = vadd.f32 0.0, %v5794
    %v5796 = vpop.f32.mrb[0].mxu0
    %5797 = vdwg.mxu0
    %s5798 = scalar_lea.vmem [#allocation11], 384
    %v5799 = vld [vmem:[%s5798] sm:$0xff]
    %v5800 = vld [vmem:[%s5798 + $0x8] sm:$0xff]
    %v5801 = vld [vmem:[%s5798 + $0x10] sm:$0xff]
    %v5802 = vld [vmem:[%s5798 + $0x18] sm:$0xff]
    %v5803 = vld [vmem:[%s5798 + $0x20] sm:$0xff]
    %v5804 = vld [vmem:[%s5798 + $0x28] sm:$0xff]
    %v5805 = vld [vmem:[%s5798 + $0x30] sm:$0xff]
    %v5806 = vld [vmem:[%s5798 + $0x38] sm:$0xff]
    %v5807 = vld [vmem:[%s5798 + $0x40] sm:$0xff]
    %v5808 = vld [vmem:[%s5798 + $0x48] sm:$0xff]
    %v5809 = vld [vmem:[%s5798 + $0x50] sm:$0xff]
    %v5810 = vld [vmem:[%s5798 + $0x58] sm:$0xff]
    %v5811 = vld [vmem:[%s5798 + $0x60] sm:$0xff]
    %v5812 = vld [vmem:[%s5798 + $0x68] sm:$0xff]
    %v5813 = vld [vmem:[%s5798 + $0x70] sm:$0xff]
    %v5814 = vld [vmem:[%s5798 + $0x78] sm:$0xff]
    %5815 = vmatprep.subr.mxu0 0.0
    %5816 = vmatpush1.msra.mxu0 %v5799
    %5817 = vmatprep.subr.mxu0 0.0
    %5818 = vmatpush1.msra.mxu0 %v5800
    %5819 = vmatprep.subr.mxu0 0.0
    %5820 = vmatpush1.msra.mxu0 %v5801
    %5821 = vmatprep.subr.mxu0 0.0
    %5822 = vmatpush1.msra.mxu0 %v5802
    %5823 = vmatprep.subr.mxu0 0.0
    %5824 = vmatpush1.msra.mxu0 %v5803
    %5825 = vmatprep.subr.mxu0 0.0
    %5826 = vmatpush1.msra.mxu0 %v5804
    %5827 = vmatprep.subr.mxu0 0.0
    %5828 = vmatpush1.msra.mxu0 %v5805
    %5829 = vmatprep.subr.mxu0 0.0
    %5830 = vmatpush1.msra.mxu0 %v5806
    %5831 = vmatprep.subr.mxu0 0.0
    %5832 = vmatpush1.msra.mxu0 %v5807
    %5833 = vmatprep.subr.mxu0 0.0
    %5834 = vmatpush1.msra.mxu0 %v5808
    %5835 = vmatprep.subr.mxu0 0.0
    %5836 = vmatpush1.msra.mxu0 %v5809
    %5837 = vmatprep.subr.mxu0 0.0
    %5838 = vmatpush1.msra.mxu0 %v5810
    %5839 = vmatprep.subr.mxu0 0.0
    %5840 = vmatpush1.msra.mxu0 %v5811
    %5841 = vmatprep.subr.mxu0 0.0
    %5842 = vmatpush1.msra.mxu0 %v5812
    %5843 = vmatprep.subr.mxu0 0.0
    %5844 = vmatpush1.msra.mxu0 %v5813
    %5845 = vmatprep.subr.mxu0 0.0
    %5846 = vmatpush1.msra.mxu0 %v5814
    %5847 = vmatprep.subr.mxu0 0.0
    %5848 = vmatpush1.msra.mxu0 0.0
    %5849 = vmatprep.subr.mxu0 0.0
    %5850 = vmatpush1.msra.mxu0 0.0
    %5851 = vmatprep.subr.mxu0 0.0
    %5852 = vmatpush1.msra.mxu0 0.0
    %5853 = vmatprep.subr.mxu0 0.0
    %5854 = vmatpush1.msra.mxu0 0.0
    %5855 = vmatprep.subr.mxu0 0.0
    %5856 = vmatpush1.msra.mxu0 0.0
    %5857 = vmatprep.subr.mxu0 0.0
    %5858 = vmatpush1.msra.mxu0 0.0
    %5859 = vmatprep.subr.mxu0 0.0
    %5860 = vmatpush1.msra.mxu0 0.0
    %5861 = vmatprep.subr.mxu0 0.0
    %5862 = vmatpush1.msra.mxu0 0.0
    %5863 = vmatprep.subr.mxu0 0.0
    %5864 = vmatpush1.msra.mxu0 0.0
    %5865 = vmatprep.subr.mxu0 0.0
    %5866 = vmatpush1.msra.mxu0 0.0
    %5867 = vmatprep.subr.mxu0 0.0
    %5868 = vmatpush1.msra.mxu0 0.0
    %5869 = vmatprep.subr.mxu0 0.0
    %5870 = vmatpush1.msra.mxu0 0.0
    %5871 = vmatprep.subr.mxu0 0.0
    %5872 = vmatpush1.msra.mxu0 0.0
    %5873 = vmatprep.subr.mxu0 0.0
    %5874 = vmatpush1.msra.mxu0 0.0
    %5875 = vmatprep.subr.mxu0 0.0
    %5876 = vmatpush1.msra.mxu0 0.0
    %5877 = vmatprep.subr.mxu0 0.0
    %5878 = vmatpush1.msra.mxu0 0.0
    %5879 = vmatprep.mubr.f32.mxu0 0.0
    %5880 = vmatmul.mubr.f32.gmra.mrb[0].mxu0 %v5780
    %v5881 = vpop.f32.mrb[0].mxu0
    %v5882 = vadd.f32 0.0, %v5881
    %v5883 = vpop.f32.mrb[0].mxu0
    %5884 = vmatprep.mubr.f32.mxu0 0.0
    %5885 = vmatmul.mubr.f32.gmra.mrb[0].mxu0 %v5785
    %v5886 = vpop.f32.mrb[0].mxu0
    %v5887 = vadd.f32 0.0, %v5886
    %v5888 = vpop.f32.mrb[0].mxu0
    %5889 = vmatprep.mubr.f32.mxu0 0.0
    %5890 = vmatmul.mubr.f32.gmra.mrb[0].mxu0 %v5790
    %v5891 = vpop.f32.mrb[0].mxu0
    %v5892 = vadd.f32 0.0, %v5891
    %v5893 = vpop.f32.mrb[0].mxu0
    %5894 = vmatprep.mubr.f32.mxu0 0.0
    %5895 = vmatmul.mubr.f32.gmra.mrb[0].mxu0 %v5795
    %v5896 = vpop.f32.mrb[0].mxu0
    %v5897 = vadd.f32 0.0, %v5896
    %v5898 = vpop.f32.mrb[0].mxu0
    %5899 = vdwg.mxu0
    %v5900 = vadd.f32 %v5704, %v5882
    %v5901 = vadd.f32 %v5705, %v5887
    %v5902 = vadd.f32 %v5706, %v5892
    %v5903 = vadd.f32 %v5707, %v5897
    %s5904 = scalar_lea.vmem [#allocation7], 128
    %v5905 = vld [vmem:[%s5904] sm:$0xff]
    %v5906 = vld [vmem:[%s5904 + $0x8] sm:$0xff]
    %v5907 = vld [vmem:[%s5904 + $0x10] sm:$0xff]
    %v5908 = vld [vmem:[%s5904 + $0x18] sm:$0xff]
    %5909 = vmatprep.subr.mxu0 0.0
    %5910 = vmatpush1.msra.mxu0 %v5114
    %5911 = vmatprep.subr.mxu0 0.0
    %5912 = vmatpush1.msra.mxu0 %v5115
    %5913 = vmatprep.subr.mxu0 0.0
    %5914 = vmatpush1.msra.mxu0 %v5116
    %5915 = vmatprep.subr.mxu0 0.0
    %5916 = vmatpush1.msra.mxu0 %v5117
    %5917 = vmatprep.subr.mxu0 0.0
    %5918 = vmatpush1.msra.mxu0 %v5118
    %5919 = vmatprep.subr.mxu0 0.0
    %5920 = vmatpush1.msra.mxu0 %v5119
    %5921 = vmatprep.subr.mxu0 0.0
    %5922 = vmatpush1.msra.mxu0 %v5120
    %5923 = vmatprep.subr.mxu0 0.0
    %5924 = vmatpush1.msra.mxu0 %v5121
    %5925 = vmatprep.subr.mxu0 0.0
    %5926 = vmatpush1.msra.mxu0 %v5122
    %5927 = vmatprep.subr.mxu0 0.0
    %5928 = vmatpush1.msra.mxu0 %v5123
    %5929 = vmatprep.subr.mxu0 0.0
    %5930 = vmatpush1.msra.mxu0 %v5124
    %5931 = vmatprep.subr.mxu0 0.0
    %5932 = vmatpush1.msra.mxu0 %v5125
    %5933 = vmatprep.subr.mxu0 0.0
    %5934 = vmatpush1.msra.mxu0 %v5126
    %5935 = vmatprep.subr.mxu0 0.0
    %5936 = vmatpush1.msra.mxu0 %v5127
    %5937 = vmatprep.subr.mxu0 0.0
    %5938 = vmatpush1.msra.mxu0 %v5128
    %5939 = vmatprep.subr.mxu0 0.0
    %5940 = vmatpush1.msra.mxu0 %v5129
    %5941 = vmatprep.subr.mxu0 0.0
    %5942 = vmatpush1.msra.mxu0 0.0
    %5943 = vmatprep.subr.mxu0 0.0
    %5944 = vmatpush1.msra.mxu0 0.0
    %5945 = vmatprep.subr.mxu0 0.0
    %5946 = vmatpush1.msra.mxu0 0.0
    %5947 = vmatprep.subr.mxu0 0.0
    %5948 = vmatpush1.msra.mxu0 0.0
    %5949 = vmatprep.subr.mxu0 0.0
    %5950 = vmatpush1.msra.mxu0 0.0
    %5951 = vmatprep.subr.mxu0 0.0
    %5952 = vmatpush1.msra.mxu0 0.0
    %5953 = vmatprep.subr.mxu0 0.0
    %5954 = vmatpush1.msra.mxu0 0.0
    %5955 = vmatprep.subr.mxu0 0.0
    %5956 = vmatpush1.msra.mxu0 0.0
    %5957 = vmatprep.subr.mxu0 0.0
    %5958 = vmatpush1.msra.mxu0 0.0
    %5959 = vmatprep.subr.mxu0 0.0
    %5960 = vmatpush1.msra.mxu0 0.0
    %5961 = vmatprep.subr.mxu0 0.0
    %5962 = vmatpush1.msra.mxu0 0.0
    %5963 = vmatprep.subr.mxu0 0.0
    %5964 = vmatpush1.msra.mxu0 0.0
    %5965 = vmatprep.subr.mxu0 0.0
    %5966 = vmatpush1.msra.mxu0 0.0
    %5967 = vmatprep.subr.mxu0 0.0
    %5968 = vmatpush1.msra.mxu0 0.0
    %5969 = vmatprep.subr.mxu0 0.0
    %5970 = vmatpush1.msra.mxu0 0.0
    %5971 = vmatprep.subr.mxu0 0.0
    %5972 = vmatpush1.msra.mxu0 0.0
    %5973 = vmatprep.mubr.f32.mxu0 0.0
    %5974 = vmatmul.mubr.f32.gmra.mrb[0].mxu0 %v5905
    %v5975 = vpop.f32.mrb[0].mxu0
    %v5976 = vadd.f32 0.0, %v5975
    %v5977 = vpop.f32.mrb[0].mxu0
    %5978 = vmatprep.mubr.f32.mxu0 0.0
    %5979 = vmatmul.mubr.f32.gmra.mrb[0].mxu0 %v5906
    %v5980 = vpop.f32.mrb[0].mxu0
    %v5981 = vadd.f32 0.0, %v5980
    %v5982 = vpop.f32.mrb[0].mxu0
    %5983 = vmatprep.mubr.f32.mxu0 0.0
    %5984 = vmatmul.mubr.f32.gmra.mrb[0].mxu0 %v5907
    %v5985 = vpop.f32.mrb[0].mxu0
    %v5986 = vadd.f32 0.0, %v5985
    %v5987 = vpop.f32.mrb[0].mxu0
    %5988 = vmatprep.mubr.f32.mxu0 0.0
    %5989 = vmatmul.mubr.f32.gmra.mrb[0].mxu0 %v5908
    %v5990 = vpop.f32.mrb[0].mxu0
    %v5991 = vadd.f32 0.0, %v5990
    %v5992 = vpop.f32.mrb[0].mxu0
    %5993 = vdwg.mxu0
    %s5994 = scalar_lea.vmem [#allocation11], 512
    %v5995 = vld [vmem:[%s5994] sm:$0xff]
    %v5996 = vld [vmem:[%s5994 + $0x8] sm:$0xff]
    %v5997 = vld [vmem:[%s5994 + $0x10] sm:$0xff]
    %v5998 = vld [vmem:[%s5994 + $0x18] sm:$0xff]
    %v5999 = vld [vmem:[%s5994 + $0x20] sm:$0xff]
    %v6000 = vld [vmem:[%s5994 + $0x28] sm:$0xff]
    %v6001 = vld [vmem:[%s5994 + $0x30] sm:$0xff]
    %v6002 = vld [vmem:[%s5994 + $0x38] sm:$0xff]
    %v6003 = vld [vmem:[%s5994 + $0x40] sm:$0xff]
    %v6004 = vld [vmem:[%s5994 + $0x48] sm:$0xff]
    %v6005 = vld [vmem:[%s5994 + $0x50] sm:$0xff]
    %v6006 = vld [vmem:[%s5994 + $0x58] sm:$0xff]
    %v6007 = vld [vmem:[%s5994 + $0x60] sm:$0xff]
    %v6008 = vld [vmem:[%s5994 + $0x68] sm:$0xff]
    %v6009 = vld [vmem:[%s5994 + $0x70] sm:$0xff]
    %v6010 = vld [vmem:[%s5994 + $0x78] sm:$0xff]
    %6011 = vmatprep.subr.mxu0 0.0
    %6012 = vmatpush1.msra.mxu0 %v5995
    %6013 = vmatprep.subr.mxu0 0.0
    %6014 = vmatpush1.msra.mxu0 %v5996
    %6015 = vmatprep.subr.mxu0 0.0
    %6016 = vmatpush1.msra.mxu0 %v5997
    %6017 = vmatprep.subr.mxu0 0.0
    %6018 = vmatpush1.msra.mxu0 %v5998
    %6019 = vmatprep.subr.mxu0 0.0
    %6020 = vmatpush1.msra.mxu0 %v5999
    %6021 = vmatprep.subr.mxu0 0.0
    %6022 = vmatpush1.msra.mxu0 %v6000
    %6023 = vmatprep.subr.mxu0 0.0
    %6024 = vmatpush1.msra.mxu0 %v6001
    %6025 = vmatprep.subr.mxu0 0.0
    %6026 = vmatpush1.msra.mxu0 %v6002
    %6027 = vmatprep.subr.mxu0 0.0
    %6028 = vmatpush1.msra.mxu0 %v6003
    %6029 = vmatprep.subr.mxu0 0.0
    %6030 = vmatpush1.msra.mxu0 %v6004
    %6031 = vmatprep.subr.mxu0 0.0
    %6032 = vmatpush1.msra.mxu0 %v6005
    %6033 = vmatprep.subr.mxu0 0.0
    %6034 = vmatpush1.msra.mxu0 %v6006
    %6035 = vmatprep.subr.mxu0 0.0
    %6036 = vmatpush1.msra.mxu0 %v6007
    %6037 = vmatprep.subr.mxu0 0.0
    %6038 = vmatpush1.msra.mxu0 %v6008
    %6039 = vmatprep.subr.mxu0 0.0
    %6040 = vmatpush1.msra.mxu0 %v6009
    %6041 = vmatprep.subr.mxu0 0.0
    %6042 = vmatpush1.msra.mxu0 %v6010
    %6043 = vmatprep.subr.mxu0 0.0
    %6044 = vmatpush1.msra.mxu0 0.0
    %6045 = vmatprep.subr.mxu0 0.0
    %6046 = vmatpush1.msra.mxu0 0.0
    %6047 = vmatprep.subr.mxu0 0.0
    %6048 = vmatpush1.msra.mxu0 0.0
    %6049 = vmatprep.subr.mxu0 0.0
    %6050 = vmatpush1.msra.mxu0 0.0
    %6051 = vmatprep.subr.mxu0 0.0
    %6052 = vmatpush1.msra.mxu0 0.0
    %6053 = vmatprep.subr.mxu0 0.0
    %6054 = vmatpush1.msra.mxu0 0.0
    %6055 = vmatprep.subr.mxu0 0.0
    %6056 = vmatpush1.msra.mxu0 0.0
    %6057 = vmatprep.subr.mxu0 0.0
    %6058 = vmatpush1.msra.mxu0 0.0
    %6059 = vmatprep.subr.mxu0 0.0
    %6060 = vmatpush1.msra.mxu0 0.0
    %6061 = vmatprep.subr.mxu0 0.0
    %6062 = vmatpush1.msra.mxu0 0.0
    %6063 = vmatprep.subr.mxu0 0.0
    %6064 = vmatpush1.msra.mxu0 0.0
    %6065 = vmatprep.subr.mxu0 0.0
    %6066 = vmatpush1.msra.mxu0 0.0
    %6067 = vmatprep.subr.mxu0 0.0
    %6068 = vmatpush1.msra.mxu0 0.0
    %6069 = vmatprep.subr.mxu0 0.0
    %6070 = vmatpush1.msra.mxu0 0.0
    %6071 = vmatprep.subr.mxu0 0.0
    %6072 = vmatpush1.msra.mxu0 0.0
    %6073 = vmatprep.subr.mxu0 0.0
    %6074 = vmatpush1.msra.mxu0 0.0
    %6075 = vmatprep.mubr.f32.mxu0 0.0
    %6076 = vmatmul.mubr.f32.gmra.mrb[0].mxu0 %v5976
    %v6077 = vpop.f32.mrb[0].mxu0
    %v6078 = vadd.f32 0.0, %v6077
    %v6079 = vpop.f32.mrb[0].mxu0
    %6080 = vmatprep.mubr.f32.mxu0 0.0
    %6081 = vmatmul.mubr.f32.gmra.mrb[0].mxu0 %v5981
    %v6082 = vpop.f32.mrb[0].mxu0
    %v6083 = vadd.f32 0.0, %v6082
    %v6084 = vpop.f32.mrb[0].mxu0
    %6085 = vmatprep.mubr.f32.mxu0 0.0
    %6086 = vmatmul.mubr.f32.gmra.mrb[0].mxu0 %v5986
    %v6087 = vpop.f32.mrb[0].mxu0
    %v6088 = vadd.f32 0.0, %v6087
    %v6089 = vpop.f32.mrb[0].mxu0
    %6090 = vmatprep.mubr.f32.mxu0 0.0
    %6091 = vmatmul.mubr.f32.gmra.mrb[0].mxu0 %v5991
    %v6092 = vpop.f32.mrb[0].mxu0
    %v6093 = vadd.f32 0.0, %v6092
    %v6094 = vpop.f32.mrb[0].mxu0
    %6095 = vdwg.mxu0
    %v6096 = vadd.f32 %v5900, %v6078
    %v6097 = vadd.f32 %v5901, %v6083
    %v6098 = vadd.f32 %v5902, %v6088
    %v6099 = vadd.f32 %v5903, %v6093
    %s6100 = scalar_lea.vmem [#allocation7], 160
    %v6101 = vld [vmem:[%s6100] sm:$0xff]
    %v6102 = vld [vmem:[%s6100 + $0x8] sm:$0xff]
    %v6103 = vld [vmem:[%s6100 + $0x10] sm:$0xff]
    %v6104 = vld [vmem:[%s6100 + $0x18] sm:$0xff]
    %6105 = vmatprep.subr.mxu0 0.0
    %6106 = vmatpush1.msra.mxu0 %v5114
    %6107 = vmatprep.subr.mxu0 0.0
    %6108 = vmatpush1.msra.mxu0 %v5115
    %6109 = vmatprep.subr.mxu0 0.0
    %6110 = vmatpush1.msra.mxu0 %v5116
    %6111 = vmatprep.subr.mxu0 0.0
    %6112 = vmatpush1.msra.mxu0 %v5117
    %6113 = vmatprep.subr.mxu0 0.0
    %6114 = vmatpush1.msra.mxu0 %v5118
    %6115 = vmatprep.subr.mxu0 0.0
    %6116 = vmatpush1.msra.mxu0 %v5119
    %6117 = vmatprep.subr.mxu0 0.0
    %6118 = vmatpush1.msra.mxu0 %v5120
    %6119 = vmatprep.subr.mxu0 0.0
    %6120 = vmatpush1.msra.mxu0 %v5121
    %6121 = vmatprep.subr.mxu0 0.0
    %6122 = vmatpush1.msra.mxu0 %v5122
    %6123 = vmatprep.subr.mxu0 0.0
    %6124 = vmatpush1.msra.mxu0 %v5123
    %6125 = vmatprep.subr.mxu0 0.0
    %6126 = vmatpush1.msra.mxu0 %v5124
    %6127 = vmatprep.subr.mxu0 0.0
    %6128 = vmatpush1.msra.mxu0 %v5125
    %6129 = vmatprep.subr.mxu0 0.0
    %6130 = vmatpush1.msra.mxu0 %v5126
    %6131 = vmatprep.subr.mxu0 0.0
    %6132 = vmatpush1.msra.mxu0 %v5127
    %6133 = vmatprep.subr.mxu0 0.0
    %6134 = vmatpush1.msra.mxu0 %v5128
    %6135 = vmatprep.subr.mxu0 0.0
    %6136 = vmatpush1.msra.mxu0 %v5129
    %6137 = vmatprep.subr.mxu0 0.0
    %6138 = vmatpush1.msra.mxu0 0.0
    %6139 = vmatprep.subr.mxu0 0.0
    %6140 = vmatpush1.msra.mxu0 0.0
    %6141 = vmatprep.subr.mxu0 0.0
    %6142 = vmatpush1.msra.mxu0 0.0
    %6143 = vmatprep.subr.mxu0 0.0
    %6144 = vmatpush1.msra.mxu0 0.0
    %6145 = vmatprep.subr.mxu0 0.0
    %6146 = vmatpush1.msra.mxu0 0.0
    %6147 = vmatprep.subr.mxu0 0.0
    %6148 = vmatpush1.msra.mxu0 0.0
    %6149 = vmatprep.subr.mxu0 0.0
    %6150 = vmatpush1.msra.mxu0 0.0
    %6151 = vmatprep.subr.mxu0 0.0
    %6152 = vmatpush1.msra.mxu0 0.0
    %6153 = vmatprep.subr.mxu0 0.0
    %6154 = vmatpush1.msra.mxu0 0.0
    %6155 = vmatprep.subr.mxu0 0.0
    %6156 = vmatpush1.msra.mxu0 0.0
    %6157 = vmatprep.subr.mxu0 0.0
    %6158 = vmatpush1.msra.mxu0 0.0
    %6159 = vmatprep.subr.mxu0 0.0
    %6160 = vmatpush1.msra.mxu0 0.0
    %6161 = vmatprep.subr.mxu0 0.0
    %6162 = vmatpush1.msra.mxu0 0.0
    %6163 = vmatprep.subr.mxu0 0.0
    %6164 = vmatpush1.msra.mxu0 0.0
    %6165 = vmatprep.subr.mxu0 0.0
    %6166 = vmatpush1.msra.mxu0 0.0
    %6167 = vmatprep.subr.mxu0 0.0
    %6168 = vmatpush1.msra.mxu0 0.0
    %6169 = vmatprep.mubr.f32.mxu0 0.0
    %6170 = vmatmul.mubr.f32.gmra.mrb[0].mxu0 %v6101
    %v6171 = vpop.f32.mrb[0].mxu0
    %v6172 = vadd.f32 0.0, %v6171
    %v6173 = vpop.f32.mrb[0].mxu0
    %6174 = vmatprep.mubr.f32.mxu0 0.0
    %6175 = vmatmul.mubr.f32.gmra.mrb[0].mxu0 %v6102
    %v6176 = vpop.f32.mrb[0].mxu0
    %v6177 = vadd.f32 0.0, %v6176
    %v6178 = vpop.f32.mrb[0].mxu0
    %6179 = vmatprep.mubr.f32.mxu0 0.0
    %6180 = vmatmul.mubr.f32.gmra.mrb[0].mxu0 %v6103
    %v6181 = vpop.f32.mrb[0].mxu0
    %v6182 = vadd.f32 0.0, %v6181
    %v6183 = vpop.f32.mrb[0].mxu0
    %6184 = vmatprep.mubr.f32.mxu0 0.0
    %6185 = vmatmul.mubr.f32.gmra.mrb[0].mxu0 %v6104
    %v6186 = vpop.f32.mrb[0].mxu0
    %v6187 = vadd.f32 0.0, %v6186
    %v6188 = vpop.f32.mrb[0].mxu0
    %6189 = vdwg.mxu0
    %s6190 = scalar_lea.vmem [#allocation11], 640
    %v6191 = vld [vmem:[%s6190] sm:$0xff]
    %v6192 = vld [vmem:[%s6190 + $0x8] sm:$0xff]
    %v6193 = vld [vmem:[%s6190 + $0x10] sm:$0xff]
    %v6194 = vld [vmem:[%s6190 + $0x18] sm:$0xff]
    %v6195 = vld [vmem:[%s6190 + $0x20] sm:$0xff]
    %v6196 = vld [vmem:[%s6190 + $0x28] sm:$0xff]
    %v6197 = vld [vmem:[%s6190 + $0x30] sm:$0xff]
    %v6198 = vld [vmem:[%s6190 + $0x38] sm:$0xff]
    %v6199 = vld [vmem:[%s6190 + $0x40] sm:$0xff]
    %v6200 = vld [vmem:[%s6190 + $0x48] sm:$0xff]
    %v6201 = vld [vmem:[%s6190 + $0x50] sm:$0xff]
    %v6202 = vld [vmem:[%s6190 + $0x58] sm:$0xff]
    %v6203 = vld [vmem:[%s6190 + $0x60] sm:$0xff]
    %v6204 = vld [vmem:[%s6190 + $0x68] sm:$0xff]
    %v6205 = vld [vmem:[%s6190 + $0x70] sm:$0xff]
    %v6206 = vld [vmem:[%s6190 + $0x78] sm:$0xff]
    %6207 = vmatprep.subr.mxu0 0.0
    %6208 = vmatpush1.msra.mxu0 %v6191
    %6209 = vmatprep.subr.mxu0 0.0
    %6210 = vmatpush1.msra.mxu0 %v6192
    %6211 = vmatprep.subr.mxu0 0.0
    %6212 = vmatpush1.msra.mxu0 %v6193
    %6213 = vmatprep.subr.mxu0 0.0
    %6214 = vmatpush1.msra.mxu0 %v6194
    %6215 = vmatprep.subr.mxu0 0.0
    %6216 = vmatpush1.msra.mxu0 %v6195
    %6217 = vmatprep.subr.mxu0 0.0
    %6218 = vmatpush1.msra.mxu0 %v6196
    %6219 = vmatprep.subr.mxu0 0.0
    %6220 = vmatpush1.msra.mxu0 %v6197
    %6221 = vmatprep.subr.mxu0 0.0
    %6222 = vmatpush1.msra.mxu0 %v6198
    %6223 = vmatprep.subr.mxu0 0.0
    %6224 = vmatpush1.msra.mxu0 %v6199
    %6225 = vmatprep.subr.mxu0 0.0
    %6226 = vmatpush1.msra.mxu0 %v6200
    %6227 = vmatprep.subr.mxu0 0.0
    %6228 = vmatpush1.msra.mxu0 %v6201
    %6229 = vmatprep.subr.mxu0 0.0
    %6230 = vmatpush1.msra.mxu0 %v6202
    %6231 = vmatprep.subr.mxu0 0.0
    %6232 = vmatpush1.msra.mxu0 %v6203
    %6233 = vmatprep.subr.mxu0 0.0
    %6234 = vmatpush1.msra.mxu0 %v6204
    %6235 = vmatprep.subr.mxu0 0.0
    %6236 = vmatpush1.msra.mxu0 %v6205
    %6237 = vmatprep.subr.mxu0 0.0
    %6238 = vmatpush1.msra.mxu0 %v6206
    %6239 = vmatprep.subr.mxu0 0.0
    %6240 = vmatpush1.msra.mxu0 0.0
    %6241 = vmatprep.subr.mxu0 0.0
    %6242 = vmatpush1.msra.mxu0 0.0
    %6243 = vmatprep.subr.mxu0 0.0
    %6244 = vmatpush1.msra.mxu0 0.0
    %6245 = vmatprep.subr.mxu0 0.0
    %6246 = vmatpush1.msra.mxu0 0.0
    %6247 = vmatprep.subr.mxu0 0.0
    %6248 = vmatpush1.msra.mxu0 0.0
    %6249 = vmatprep.subr.mxu0 0.0
    %6250 = vmatpush1.msra.mxu0 0.0
    %6251 = vmatprep.subr.mxu0 0.0
    %6252 = vmatpush1.msra.mxu0 0.0
    %6253 = vmatprep.subr.mxu0 0.0
    %6254 = vmatpush1.msra.mxu0 0.0
    %6255 = vmatprep.subr.mxu0 0.0
    %6256 = vmatpush1.msra.mxu0 0.0
    %6257 = vmatprep.subr.mxu0 0.0
    %6258 = vmatpush1.msra.mxu0 0.0
    %6259 = vmatprep.subr.mxu0 0.0
    %6260 = vmatpush1.msra.mxu0 0.0
    %6261 = vmatprep.subr.mxu0 0.0
    %6262 = vmatpush1.msra.mxu0 0.0
    %6263 = vmatprep.subr.mxu0 0.0
    %6264 = vmatpush1.msra.mxu0 0.0
    %6265 = vmatprep.subr.mxu0 0.0
    %6266 = vmatpush1.msra.mxu0 0.0
    %6267 = vmatprep.subr.mxu0 0.0
    %6268 = vmatpush1.msra.mxu0 0.0
    %6269 = vmatprep.subr.mxu0 0.0
    %6270 = vmatpush1.msra.mxu0 0.0
    %6271 = vmatprep.mubr.f32.mxu0 0.0
    %6272 = vmatmul.mubr.f32.gmra.mrb[0].mxu0 %v6172
    %v6273 = vpop.f32.mrb[0].mxu0
    %v6274 = vadd.f32 0.0, %v6273
    %v6275 = vpop.f32.mrb[0].mxu0
    %6276 = vmatprep.mubr.f32.mxu0 0.0
    %6277 = vmatmul.mubr.f32.gmra.mrb[0].mxu0 %v6177
    %v6278 = vpop.f32.mrb[0].mxu0
    %v6279 = vadd.f32 0.0, %v6278
    %v6280 = vpop.f32.mrb[0].mxu0
    %6281 = vmatprep.mubr.f32.mxu0 0.0
    %6282 = vmatmul.mubr.f32.gmra.mrb[0].mxu0 %v6182
    %v6283 = vpop.f32.mrb[0].mxu0
    %v6284 = vadd.f32 0.0, %v6283
    %v6285 = vpop.f32.mrb[0].mxu0
    %6286 = vmatprep.mubr.f32.mxu0 0.0
    %6287 = vmatmul.mubr.f32.gmra.mrb[0].mxu0 %v6187
    %v6288 = vpop.f32.mrb[0].mxu0
    %v6289 = vadd.f32 0.0, %v6288
    %v6290 = vpop.f32.mrb[0].mxu0
    %6291 = vdwg.mxu0
    %v6292 = vadd.f32 %v6096, %v6274
    %v6293 = vadd.f32 %v6097, %v6279
    %v6294 = vadd.f32 %v6098, %v6284
    %v6295 = vadd.f32 %v6099, %v6289
    %s6296 = scalar_lea.vmem [#allocation7], 192
    %v6297 = vld [vmem:[%s6296] sm:$0xff]
    %v6298 = vld [vmem:[%s6296 + $0x8] sm:$0xff]
    %v6299 = vld [vmem:[%s6296 + $0x10] sm:$0xff]
    %v6300 = vld [vmem:[%s6296 + $0x18] sm:$0xff]
    %6301 = vmatprep.subr.mxu0 0.0
    %6302 = vmatpush1.msra.mxu0 %v5114
    %6303 = vmatprep.subr.mxu0 0.0
    %6304 = vmatpush1.msra.mxu0 %v5115
    %6305 = vmatprep.subr.mxu0 0.0
    %6306 = vmatpush1.msra.mxu0 %v5116
    %6307 = vmatprep.subr.mxu0 0.0
    %6308 = vmatpush1.msra.mxu0 %v5117
    %6309 = vmatprep.subr.mxu0 0.0
    %6310 = vmatpush1.msra.mxu0 %v5118
    %6311 = vmatprep.subr.mxu0 0.0
    %6312 = vmatpush1.msra.mxu0 %v5119
    %6313 = vmatprep.subr.mxu0 0.0
    %6314 = vmatpush1.msra.mxu0 %v5120
    %6315 = vmatprep.subr.mxu0 0.0
    %6316 = vmatpush1.msra.mxu0 %v5121
    %6317 = vmatprep.subr.mxu0 0.0
    %6318 = vmatpush1.msra.mxu0 %v5122
    %6319 = vmatprep.subr.mxu0 0.0
    %6320 = vmatpush1.msra.mxu0 %v5123
    %6321 = vmatprep.subr.mxu0 0.0
    %6322 = vmatpush1.msra.mxu0 %v5124
    %6323 = vmatprep.subr.mxu0 0.0
    %6324 = vmatpush1.msra.mxu0 %v5125
    %6325 = vmatprep.subr.mxu0 0.0
    %6326 = vmatpush1.msra.mxu0 %v5126
    %6327 = vmatprep.subr.mxu0 0.0
    %6328 = vmatpush1.msra.mxu0 %v5127
    %6329 = vmatprep.subr.mxu0 0.0
    %6330 = vmatpush1.msra.mxu0 %v5128
    %6331 = vmatprep.subr.mxu0 0.0
    %6332 = vmatpush1.msra.mxu0 %v5129
    %6333 = vmatprep.subr.mxu0 0.0
    %6334 = vmatpush1.msra.mxu0 0.0
    %6335 = vmatprep.subr.mxu0 0.0
    %6336 = vmatpush1.msra.mxu0 0.0
    %6337 = vmatprep.subr.mxu0 0.0
    %6338 = vmatpush1.msra.mxu0 0.0
    %6339 = vmatprep.subr.mxu0 0.0
    %6340 = vmatpush1.msra.mxu0 0.0
    %6341 = vmatprep.subr.mxu0 0.0
    %6342 = vmatpush1.msra.mxu0 0.0
    %6343 = vmatprep.subr.mxu0 0.0
    %6344 = vmatpush1.msra.mxu0 0.0
    %6345 = vmatprep.subr.mxu0 0.0
    %6346 = vmatpush1.msra.mxu0 0.0
    %6347 = vmatprep.subr.mxu0 0.0
    %6348 = vmatpush1.msra.mxu0 0.0
    %6349 = vmatprep.subr.mxu0 0.0
    %6350 = vmatpush1.msra.mxu0 0.0
    %6351 = vmatprep.subr.mxu0 0.0
    %6352 = vmatpush1.msra.mxu0 0.0
    %6353 = vmatprep.subr.mxu0 0.0
    %6354 = vmatpush1.msra.mxu0 0.0
    %6355 = vmatprep.subr.mxu0 0.0
    %6356 = vmatpush1.msra.mxu0 0.0
    %6357 = vmatprep.subr.mxu0 0.0
    %6358 = vmatpush1.msra.mxu0 0.0
    %6359 = vmatprep.subr.mxu0 0.0
    %6360 = vmatpush1.msra.mxu0 0.0
    %6361 = vmatprep.subr.mxu0 0.0
    %6362 = vmatpush1.msra.mxu0 0.0
    %6363 = vmatprep.subr.mxu0 0.0
    %6364 = vmatpush1.msra.mxu0 0.0
    %6365 = vmatprep.mubr.f32.mxu0 0.0
    %6366 = vmatmul.mubr.f32.gmra.mrb[0].mxu0 %v6297
    %v6367 = vpop.f32.mrb[0].mxu0
    %v6368 = vadd.f32 0.0, %v6367
    %v6369 = vpop.f32.mrb[0].mxu0
    %6370 = vmatprep.mubr.f32.mxu0 0.0
    %6371 = vmatmul.mubr.f32.gmra.mrb[0].mxu0 %v6298
    %v6372 = vpop.f32.mrb[0].mxu0
    %v6373 = vadd.f32 0.0, %v6372
    %v6374 = vpop.f32.mrb[0].mxu0
    %6375 = vmatprep.mubr.f32.mxu0 0.0
    %6376 = vmatmul.mubr.f32.gmra.mrb[0].mxu0 %v6299
    %v6377 = vpop.f32.mrb[0].mxu0
    %v6378 = vadd.f32 0.0, %v6377
    %v6379 = vpop.f32.mrb[0].mxu0
    %6380 = vmatprep.mubr.f32.mxu0 0.0
    %6381 = vmatmul.mubr.f32.gmra.mrb[0].mxu0 %v6300
    %v6382 = vpop.f32.mrb[0].mxu0
    %v6383 = vadd.f32 0.0, %v6382
    %v6384 = vpop.f32.mrb[0].mxu0
    %6385 = vdwg.mxu0
    %s6386 = scalar_lea.vmem [#allocation11], 768
    %v6387 = vld [vmem:[%s6386] sm:$0xff]
    %v6388 = vld [vmem:[%s6386 + $0x8] sm:$0xff]
    %v6389 = vld [vmem:[%s6386 + $0x10] sm:$0xff]
    %v6390 = vld [vmem:[%s6386 + $0x18] sm:$0xff]
    %v6391 = vld [vmem:[%s6386 + $0x20] sm:$0xff]
    %v6392 = vld [vmem:[%s6386 + $0x28] sm:$0xff]
    %v6393 = vld [vmem:[%s6386 + $0x30] sm:$0xff]
    %v6394 = vld [vmem:[%s6386 + $0x38] sm:$0xff]
    %v6395 = vld [vmem:[%s6386 + $0x40] sm:$0xff]
    %v6396 = vld [vmem:[%s6386 + $0x48] sm:$0xff]
    %v6397 = vld [vmem:[%s6386 + $0x50] sm:$0xff]
    %v6398 = vld [vmem:[%s6386 + $0x58] sm:$0xff]
    %v6399 = vld [vmem:[%s6386 + $0x60] sm:$0xff]
    %v6400 = vld [vmem:[%s6386 + $0x68] sm:$0xff]
    %v6401 = vld [vmem:[%s6386 + $0x70] sm:$0xff]
    %v6402 = vld [vmem:[%s6386 + $0x78] sm:$0xff]
    %6403 = vmatprep.subr.mxu0 0.0
    %6404 = vmatpush1.msra.mxu0 %v6387
    %6405 = vmatprep.subr.mxu0 0.0
    %6406 = vmatpush1.msra.mxu0 %v6388
    %6407 = vmatprep.subr.mxu0 0.0
    %6408 = vmatpush1.msra.mxu0 %v6389
    %6409 = vmatprep.subr.mxu0 0.0
    %6410 = vmatpush1.msra.mxu0 %v6390
    %6411 = vmatprep.subr.mxu0 0.0
    %6412 = vmatpush1.msra.mxu0 %v6391
    %6413 = vmatprep.subr.mxu0 0.0
    %6414 = vmatpush1.msra.mxu0 %v6392
    %6415 = vmatprep.subr.mxu0 0.0
    %6416 = vmatpush1.msra.mxu0 %v6393
    %6417 = vmatprep.subr.mxu0 0.0
    %6418 = vmatpush1.msra.mxu0 %v6394
    %6419 = vmatprep.subr.mxu0 0.0
    %6420 = vmatpush1.msra.mxu0 %v6395
    %6421 = vmatprep.subr.mxu0 0.0
    %6422 = vmatpush1.msra.mxu0 %v6396
    %6423 = vmatprep.subr.mxu0 0.0
    %6424 = vmatpush1.msra.mxu0 %v6397
    %6425 = vmatprep.subr.mxu0 0.0
    %6426 = vmatpush1.msra.mxu0 %v6398
    %6427 = vmatprep.subr.mxu0 0.0
    %6428 = vmatpush1.msra.mxu0 %v6399
    %6429 = vmatprep.subr.mxu0 0.0
    %6430 = vmatpush1.msra.mxu0 %v6400
    %6431 = vmatprep.subr.mxu0 0.0
    %6432 = vmatpush1.msra.mxu0 %v6401
    %6433 = vmatprep.subr.mxu0 0.0
    %6434 = vmatpush1.msra.mxu0 %v6402
    %6435 = vmatprep.subr.mxu0 0.0
    %6436 = vmatpush1.msra.mxu0 0.0
    %6437 = vmatprep.subr.mxu0 0.0
    %6438 = vmatpush1.msra.mxu0 0.0
    %6439 = vmatprep.subr.mxu0 0.0
    %6440 = vmatpush1.msra.mxu0 0.0
    %6441 = vmatprep.subr.mxu0 0.0
    %6442 = vmatpush1.msra.mxu0 0.0
    %6443 = vmatprep.subr.mxu0 0.0
    %6444 = vmatpush1.msra.mxu0 0.0
    %6445 = vmatprep.subr.mxu0 0.0
    %6446 = vmatpush1.msra.mxu0 0.0
    %6447 = vmatprep.subr.mxu0 0.0
    %6448 = vmatpush1.msra.mxu0 0.0
    %6449 = vmatprep.subr.mxu0 0.0
    %6450 = vmatpush1.msra.mxu0 0.0
    %6451 = vmatprep.subr.mxu0 0.0
    %6452 = vmatpush1.msra.mxu0 0.0
    %6453 = vmatprep.subr.mxu0 0.0
    %6454 = vmatpush1.msra.mxu0 0.0
    %6455 = vmatprep.subr.mxu0 0.0
    %6456 = vmatpush1.msra.mxu0 0.0
    %6457 = vmatprep.subr.mxu0 0.0
    %6458 = vmatpush1.msra.mxu0 0.0
    %6459 = vmatprep.subr.mxu0 0.0
    %6460 = vmatpush1.msra.mxu0 0.0
    %6461 = vmatprep.subr.mxu0 0.0
    %6462 = vmatpush1.msra.mxu0 0.0
    %6463 = vmatprep.subr.mxu0 0.0
    %6464 = vmatpush1.msra.mxu0 0.0
    %6465 = vmatprep.subr.mxu0 0.0
    %6466 = vmatpush1.msra.mxu0 0.0
    %6467 = vmatprep.mubr.f32.mxu0 0.0
    %6468 = vmatmul.mubr.f32.gmra.mrb[0].mxu0 %v6368
    %v6469 = vpop.f32.mrb[0].mxu0
    %v6470 = vadd.f32 0.0, %v6469
    %v6471 = vpop.f32.mrb[0].mxu0
    %6472 = vmatprep.mubr.f32.mxu0 0.0
    %6473 = vmatmul.mubr.f32.gmra.mrb[0].mxu0 %v6373
    %v6474 = vpop.f32.mrb[0].mxu0
    %v6475 = vadd.f32 0.0, %v6474
    %v6476 = vpop.f32.mrb[0].mxu0
    %6477 = vmatprep.mubr.f32.mxu0 0.0
    %6478 = vmatmul.mubr.f32.gmra.mrb[0].mxu0 %v6378
    %v6479 = vpop.f32.mrb[0].mxu0
    %v6480 = vadd.f32 0.0, %v6479
    %v6481 = vpop.f32.mrb[0].mxu0
    %6482 = vmatprep.mubr.f32.mxu0 0.0
    %6483 = vmatmul.mubr.f32.gmra.mrb[0].mxu0 %v6383
    %v6484 = vpop.f32.mrb[0].mxu0
    %v6485 = vadd.f32 0.0, %v6484
    %v6486 = vpop.f32.mrb[0].mxu0
    %6487 = vdwg.mxu0
    %v6488 = vadd.f32 %v6292, %v6470
    %v6489 = vadd.f32 %v6293, %v6475
    %v6490 = vadd.f32 %v6294, %v6480
    %v6491 = vadd.f32 %v6295, %v6485
    %s6492 = scalar_lea.vmem [#allocation7], 224
    %v6493 = vld [vmem:[%s6492] sm:$0xff]
    %v6494 = vld [vmem:[%s6492 + $0x8] sm:$0xff]
    %v6495 = vld [vmem:[%s6492 + $0x10] sm:$0xff]
    %v6496 = vld [vmem:[%s6492 + $0x18] sm:$0xff]
    %6497 = vmatprep.subr.mxu0 0.0
    %6498 = vmatpush1.msra.mxu0 %v5114
    %6499 = vmatprep.subr.mxu0 0.0
    %6500 = vmatpush1.msra.mxu0 %v5115
    %6501 = vmatprep.subr.mxu0 0.0
    %6502 = vmatpush1.msra.mxu0 %v5116
    %6503 = vmatprep.subr.mxu0 0.0
    %6504 = vmatpush1.msra.mxu0 %v5117
    %6505 = vmatprep.subr.mxu0 0.0
    %6506 = vmatpush1.msra.mxu0 %v5118
    %6507 = vmatprep.subr.mxu0 0.0
    %6508 = vmatpush1.msra.mxu0 %v5119
    %6509 = vmatprep.subr.mxu0 0.0
    %6510 = vmatpush1.msra.mxu0 %v5120
    %6511 = vmatprep.subr.mxu0 0.0
    %6512 = vmatpush1.msra.mxu0 %v5121
    %6513 = vmatprep.subr.mxu0 0.0
    %6514 = vmatpush1.msra.mxu0 %v5122
    %6515 = vmatprep.subr.mxu0 0.0
    %6516 = vmatpush1.msra.mxu0 %v5123
    %6517 = vmatprep.subr.mxu0 0.0
    %6518 = vmatpush1.msra.mxu0 %v5124
    %6519 = vmatprep.subr.mxu0 0.0
    %6520 = vmatpush1.msra.mxu0 %v5125
    %6521 = vmatprep.subr.mxu0 0.0
    %6522 = vmatpush1.msra.mxu0 %v5126
    %6523 = vmatprep.subr.mxu0 0.0
    %6524 = vmatpush1.msra.mxu0 %v5127
    %6525 = vmatprep.subr.mxu0 0.0
    %6526 = vmatpush1.msra.mxu0 %v5128
    %6527 = vmatprep.subr.mxu0 0.0
    %6528 = vmatpush1.msra.mxu0 %v5129
    %6529 = vmatprep.subr.mxu0 0.0
    %6530 = vmatpush1.msra.mxu0 0.0
    %6531 = vmatprep.subr.mxu0 0.0
    %6532 = vmatpush1.msra.mxu0 0.0
    %6533 = vmatprep.subr.mxu0 0.0
    %6534 = vmatpush1.msra.mxu0 0.0
    %6535 = vmatprep.subr.mxu0 0.0
    %6536 = vmatpush1.msra.mxu0 0.0
    %6537 = vmatprep.subr.mxu0 0.0
    %6538 = vmatpush1.msra.mxu0 0.0
    %6539 = vmatprep.subr.mxu0 0.0
    %6540 = vmatpush1.msra.mxu0 0.0
    %6541 = vmatprep.subr.mxu0 0.0
    %6542 = vmatpush1.msra.mxu0 0.0
    %6543 = vmatprep.subr.mxu0 0.0
    %6544 = vmatpush1.msra.mxu0 0.0
    %6545 = vmatprep.subr.mxu0 0.0
    %6546 = vmatpush1.msra.mxu0 0.0
    %6547 = vmatprep.subr.mxu0 0.0
    %6548 = vmatpush1.msra.mxu0 0.0
    %6549 = vmatprep.subr.mxu0 0.0
    %6550 = vmatpush1.msra.mxu0 0.0
    %6551 = vmatprep.subr.mxu0 0.0
    %6552 = vmatpush1.msra.mxu0 0.0
    %6553 = vmatprep.subr.mxu0 0.0
    %6554 = vmatpush1.msra.mxu0 0.0
    %6555 = vmatprep.subr.mxu0 0.0
    %6556 = vmatpush1.msra.mxu0 0.0
    %6557 = vmatprep.subr.mxu0 0.0
    %6558 = vmatpush1.msra.mxu0 0.0
    %6559 = vmatprep.subr.mxu0 0.0
    %6560 = vmatpush1.msra.mxu0 0.0
    %6561 = vmatprep.mubr.f32.mxu0 0.0
    %6562 = vmatmul.mubr.f32.gmra.mrb[0].mxu0 %v6493
    %v6563 = vpop.f32.mrb[0].mxu0
    %v6564 = vadd.f32 0.0, %v6563
    %v6565 = vpop.f32.mrb[0].mxu0
    %6566 = vmatprep.mubr.f32.mxu0 0.0
    %6567 = vmatmul.mubr.f32.gmra.mrb[0].mxu0 %v6494
    %v6568 = vpop.f32.mrb[0].mxu0
    %v6569 = vadd.f32 0.0, %v6568
    %v6570 = vpop.f32.mrb[0].mxu0
    %6571 = vmatprep.mubr.f32.mxu0 0.0
    %6572 = vmatmul.mubr.f32.gmra.mrb[0].mxu0 %v6495
    %v6573 = vpop.f32.mrb[0].mxu0
    %v6574 = vadd.f32 0.0, %v6573
    %v6575 = vpop.f32.mrb[0].mxu0
    %6576 = vmatprep.mubr.f32.mxu0 0.0
    %6577 = vmatmul.mubr.f32.gmra.mrb[0].mxu0 %v6496
    %v6578 = vpop.f32.mrb[0].mxu0
    %v6579 = vadd.f32 0.0, %v6578
    %v6580 = vpop.f32.mrb[0].mxu0
    %6581 = vdwg.mxu0
    %s6582 = scalar_lea.vmem [#allocation11], 896
    %v6583 = vld [vmem:[%s6582] sm:$0xff]
    %v6584 = vld [vmem:[%s6582 + $0x8] sm:$0xff]
    %v6585 = vld [vmem:[%s6582 + $0x10] sm:$0xff]
    %v6586 = vld [vmem:[%s6582 + $0x18] sm:$0xff]
    %v6587 = vld [vmem:[%s6582 + $0x20] sm:$0xff]
    %v6588 = vld [vmem:[%s6582 + $0x28] sm:$0xff]
    %v6589 = vld [vmem:[%s6582 + $0x30] sm:$0xff]
    %v6590 = vld [vmem:[%s6582 + $0x38] sm:$0xff]
    %v6591 = vld [vmem:[%s6582 + $0x40] sm:$0xff]
    %v6592 = vld [vmem:[%s6582 + $0x48] sm:$0xff]
    %v6593 = vld [vmem:[%s6582 + $0x50] sm:$0xff]
    %v6594 = vld [vmem:[%s6582 + $0x58] sm:$0xff]
    %v6595 = vld [vmem:[%s6582 + $0x60] sm:$0xff]
    %v6596 = vld [vmem:[%s6582 + $0x68] sm:$0xff]
    %v6597 = vld [vmem:[%s6582 + $0x70] sm:$0xff]
    %v6598 = vld [vmem:[%s6582 + $0x78] sm:$0xff]
    %6599 = vmatprep.subr.mxu0 0.0
    %6600 = vmatpush1.msra.mxu0 %v6583
    %6601 = vmatprep.subr.mxu0 0.0
    %6602 = vmatpush1.msra.mxu0 %v6584
    %6603 = vmatprep.subr.mxu0 0.0
    %6604 = vmatpush1.msra.mxu0 %v6585
    %6605 = vmatprep.subr.mxu0 0.0
    %6606 = vmatpush1.msra.mxu0 %v6586
    %6607 = vmatprep.subr.mxu0 0.0
    %6608 = vmatpush1.msra.mxu0 %v6587
    %6609 = vmatprep.subr.mxu0 0.0
    %6610 = vmatpush1.msra.mxu0 %v6588
    %6611 = vmatprep.subr.mxu0 0.0
    %6612 = vmatpush1.msra.mxu0 %v6589
    %6613 = vmatprep.subr.mxu0 0.0
    %6614 = vmatpush1.msra.mxu0 %v6590
    %6615 = vmatprep.subr.mxu0 0.0
    %6616 = vmatpush1.msra.mxu0 %v6591
    %6617 = vmatprep.subr.mxu0 0.0
    %6618 = vmatpush1.msra.mxu0 %v6592
    %6619 = vmatprep.subr.mxu0 0.0
    %6620 = vmatpush1.msra.mxu0 %v6593
    %6621 = vmatprep.subr.mxu0 0.0
    %6622 = vmatpush1.msra.mxu0 %v6594
    %6623 = vmatprep.subr.mxu0 0.0
    %6624 = vmatpush1.msra.mxu0 %v6595
    %6625 = vmatprep.subr.mxu0 0.0
    %6626 = vmatpush1.msra.mxu0 %v6596
    %6627 = vmatprep.subr.mxu0 0.0
    %6628 = vmatpush1.msra.mxu0 %v6597
    %6629 = vmatprep.subr.mxu0 0.0
    %6630 = vmatpush1.msra.mxu0 %v6598
    %6631 = vmatprep.subr.mxu0 0.0
    %6632 = vmatpush1.msra.mxu0 0.0
    %6633 = vmatprep.subr.mxu0 0.0
    %6634 = vmatpush1.msra.mxu0 0.0
    %6635 = vmatprep.subr.mxu0 0.0
    %6636 = vmatpush1.msra.mxu0 0.0
    %6637 = vmatprep.subr.mxu0 0.0
    %6638 = vmatpush1.msra.mxu0 0.0
    %6639 = vmatprep.subr.mxu0 0.0
    %6640 = vmatpush1.msra.mxu0 0.0
    %6641 = vmatprep.subr.mxu0 0.0
    %6642 = vmatpush1.msra.mxu0 0.0
    %6643 = vmatprep.subr.mxu0 0.0
    %6644 = vmatpush1.msra.mxu0 0.0
    %6645 = vmatprep.subr.mxu0 0.0
    %6646 = vmatpush1.msra.mxu0 0.0
    %6647 = vmatprep.subr.mxu0 0.0
    %6648 = vmatpush1.msra.mxu0 0.0
    %6649 = vmatprep.subr.mxu0 0.0
    %6650 = vmatpush1.msra.mxu0 0.0
    %6651 = vmatprep.subr.mxu0 0.0
    %6652 = vmatpush1.msra.mxu0 0.0
    %6653 = vmatprep.subr.mxu0 0.0
    %6654 = vmatpush1.msra.mxu0 0.0
    %6655 = vmatprep.subr.mxu0 0.0
    %6656 = vmatpush1.msra.mxu0 0.0
    %6657 = vmatprep.subr.mxu0 0.0
    %6658 = vmatpush1.msra.mxu0 0.0
    %6659 = vmatprep.subr.mxu0 0.0
    %6660 = vmatpush1.msra.mxu0 0.0
    %6661 = vmatprep.subr.mxu0 0.0
    %6662 = vmatpush1.msra.mxu0 0.0
    %6663 = vmatprep.mubr.f32.mxu0 0.0
    %6664 = vmatmul.mubr.f32.gmra.mrb[0].mxu0 %v6564
    %v6665 = vpop.f32.mrb[0].mxu0
    %v6666 = vadd.f32 0.0, %v6665
    %v6667 = vpop.f32.mrb[0].mxu0
    %6668 = vmatprep.mubr.f32.mxu0 0.0
    %6669 = vmatmul.mubr.f32.gmra.mrb[0].mxu0 %v6569
    %v6670 = vpop.f32.mrb[0].mxu0
    %v6671 = vadd.f32 0.0, %v6670
    %v6672 = vpop.f32.mrb[0].mxu0
    %6673 = vmatprep.mubr.f32.mxu0 0.0
    %6674 = vmatmul.mubr.f32.gmra.mrb[0].mxu0 %v6574
    %v6675 = vpop.f32.mrb[0].mxu0
    %v6676 = vadd.f32 0.0, %v6675
    %v6677 = vpop.f32.mrb[0].mxu0
    %6678 = vmatprep.mubr.f32.mxu0 0.0
    %6679 = vmatmul.mubr.f32.gmra.mrb[0].mxu0 %v6579
    %v6680 = vpop.f32.mrb[0].mxu0
    %v6681 = vadd.f32 0.0, %v6680
    %v6682 = vpop.f32.mrb[0].mxu0
    %6683 = vdwg.mxu0
    %v6684 = vadd.f32 %v6488, %v6666
    %v6685 = vadd.f32 %v6489, %v6671
    %v6686 = vadd.f32 %v6490, %v6676
    %v6687 = vadd.f32 %v6491, %v6681
    %s6688 = scalar_lea.vmem [#allocation7], 256
    %v6689 = vld [vmem:[%s6688] sm:$0xff]
    %v6690 = vld [vmem:[%s6688 + $0x8] sm:$0xff]
    %v6691 = vld [vmem:[%s6688 + $0x10] sm:$0xff]
    %v6692 = vld [vmem:[%s6688 + $0x18] sm:$0xff]
    %6693 = vmatprep.subr.mxu0 0.0
    %6694 = vmatpush1.msra.mxu0 %v5114
    %6695 = vmatprep.subr.mxu0 0.0
    %6696 = vmatpush1.msra.mxu0 %v5115
    %6697 = vmatprep.subr.mxu0 0.0
    %6698 = vmatpush1.msra.mxu0 %v5116
    %6699 = vmatprep.subr.mxu0 0.0
    %6700 = vmatpush1.msra.mxu0 %v5117
    %6701 = vmatprep.subr.mxu0 0.0
    %6702 = vmatpush1.msra.mxu0 %v5118
    %6703 = vmatprep.subr.mxu0 0.0
    %6704 = vmatpush1.msra.mxu0 %v5119
    %6705 = vmatprep.subr.mxu0 0.0
    %6706 = vmatpush1.msra.mxu0 %v5120
    %6707 = vmatprep.subr.mxu0 0.0
    %6708 = vmatpush1.msra.mxu0 %v5121
    %6709 = vmatprep.subr.mxu0 0.0
    %6710 = vmatpush1.msra.mxu0 %v5122
    %6711 = vmatprep.subr.mxu0 0.0
    %6712 = vmatpush1.msra.mxu0 %v5123
    %6713 = vmatprep.subr.mxu0 0.0
    %6714 = vmatpush1.msra.mxu0 %v5124
    %6715 = vmatprep.subr.mxu0 0.0
    %6716 = vmatpush1.msra.mxu0 %v5125
    %6717 = vmatprep.subr.mxu0 0.0
    %6718 = vmatpush1.msra.mxu0 %v5126
    %6719 = vmatprep.subr.mxu0 0.0
    %6720 = vmatpush1.msra.mxu0 %v5127
    %6721 = vmatprep.subr.mxu0 0.0
    %6722 = vmatpush1.msra.mxu0 %v5128
    %6723 = vmatprep.subr.mxu0 0.0
    %6724 = vmatpush1.msra.mxu0 %v5129
    %6725 = vmatprep.subr.mxu0 0.0
    %6726 = vmatpush1.msra.mxu0 0.0
    %6727 = vmatprep.subr.mxu0 0.0
    %6728 = vmatpush1.msra.mxu0 0.0
    %6729 = vmatprep.subr.mxu0 0.0
    %6730 = vmatpush1.msra.mxu0 0.0
    %6731 = vmatprep.subr.mxu0 0.0
    %6732 = vmatpush1.msra.mxu0 0.0
    %6733 = vmatprep.subr.mxu0 0.0
    %6734 = vmatpush1.msra.mxu0 0.0
    %6735 = vmatprep.subr.mxu0 0.0
    %6736 = vmatpush1.msra.mxu0 0.0
    %6737 = vmatprep.subr.mxu0 0.0
    %6738 = vmatpush1.msra.mxu0 0.0
    %6739 = vmatprep.subr.mxu0 0.0
    %6740 = vmatpush1.msra.mxu0 0.0
    %6741 = vmatprep.subr.mxu0 0.0
    %6742 = vmatpush1.msra.mxu0 0.0
    %6743 = vmatprep.subr.mxu0 0.0
    %6744 = vmatpush1.msra.mxu0 0.0
    %6745 = vmatprep.subr.mxu0 0.0
    %6746 = vmatpush1.msra.mxu0 0.0
    %6747 = vmatprep.subr.mxu0 0.0
    %6748 = vmatpush1.msra.mxu0 0.0
    %6749 = vmatprep.subr.mxu0 0.0
    %6750 = vmatpush1.msra.mxu0 0.0
    %6751 = vmatprep.subr.mxu0 0.0
    %6752 = vmatpush1.msra.mxu0 0.0
    %6753 = vmatprep.subr.mxu0 0.0
    %6754 = vmatpush1.msra.mxu0 0.0
    %6755 = vmatprep.subr.mxu0 0.0
    %6756 = vmatpush1.msra.mxu0 0.0
    %6757 = vmatprep.mubr.f32.mxu0 0.0
    %6758 = vmatmul.mubr.f32.gmra.mrb[0].mxu0 %v6689
    %v6759 = vpop.f32.mrb[0].mxu0
    %v6760 = vadd.f32 0.0, %v6759
    %v6761 = vpop.f32.mrb[0].mxu0
    %6762 = vmatprep.mubr.f32.mxu0 0.0
    %6763 = vmatmul.mubr.f32.gmra.mrb[0].mxu0 %v6690
    %v6764 = vpop.f32.mrb[0].mxu0
    %v6765 = vadd.f32 0.0, %v6764
    %v6766 = vpop.f32.mrb[0].mxu0
    %6767 = vmatprep.mubr.f32.mxu0 0.0
    %6768 = vmatmul.mubr.f32.gmra.mrb[0].mxu0 %v6691
    %v6769 = vpop.f32.mrb[0].mxu0
    %v6770 = vadd.f32 0.0, %v6769
    %v6771 = vpop.f32.mrb[0].mxu0
    %6772 = vmatprep.mubr.f32.mxu0 0.0
    %6773 = vmatmul.mubr.f32.gmra.mrb[0].mxu0 %v6692
    %v6774 = vpop.f32.mrb[0].mxu0
    %v6775 = vadd.f32 0.0, %v6774
    %v6776 = vpop.f32.mrb[0].mxu0
    %6777 = vdwg.mxu0
    %s6778 = scalar_lea.vmem [#allocation11], 1024
    %v6779 = vld [vmem:[%s6778] sm:$0xff]
    %v6780 = vld [vmem:[%s6778 + $0x8] sm:$0xff]
    %v6781 = vld [vmem:[%s6778 + $0x10] sm:$0xff]
    %v6782 = vld [vmem:[%s6778 + $0x18] sm:$0xff]
    %v6783 = vld [vmem:[%s6778 + $0x20] sm:$0xff]
    %v6784 = vld [vmem:[%s6778 + $0x28] sm:$0xff]
    %v6785 = vld [vmem:[%s6778 + $0x30] sm:$0xff]
    %v6786 = vld [vmem:[%s6778 + $0x38] sm:$0xff]
    %v6787 = vld [vmem:[%s6778 + $0x40] sm:$0xff]
    %v6788 = vld [vmem:[%s6778 + $0x48] sm:$0xff]
    %v6789 = vld [vmem:[%s6778 + $0x50] sm:$0xff]
    %v6790 = vld [vmem:[%s6778 + $0x58] sm:$0xff]
    %v6791 = vld [vmem:[%s6778 + $0x60] sm:$0xff]
    %v6792 = vld [vmem:[%s6778 + $0x68] sm:$0xff]
    %v6793 = vld [vmem:[%s6778 + $0x70] sm:$0xff]
    %v6794 = vld [vmem:[%s6778 + $0x78] sm:$0xff]
    %6795 = vmatprep.subr.mxu0 0.0
    %6796 = vmatpush1.msra.mxu0 %v6779
    %6797 = vmatprep.subr.mxu0 0.0
    %6798 = vmatpush1.msra.mxu0 %v6780
    %6799 = vmatprep.subr.mxu0 0.0
    %6800 = vmatpush1.msra.mxu0 %v6781
    %6801 = vmatprep.subr.mxu0 0.0
    %6802 = vmatpush1.msra.mxu0 %v6782
    %6803 = vmatprep.subr.mxu0 0.0
    %6804 = vmatpush1.msra.mxu0 %v6783
    %6805 = vmatprep.subr.mxu0 0.0
    %6806 = vmatpush1.msra.mxu0 %v6784
    %6807 = vmatprep.subr.mxu0 0.0
    %6808 = vmatpush1.msra.mxu0 %v6785
    %6809 = vmatprep.subr.mxu0 0.0
    %6810 = vmatpush1.msra.mxu0 %v6786
    %6811 = vmatprep.subr.mxu0 0.0
    %6812 = vmatpush1.msra.mxu0 %v6787
    %6813 = vmatprep.subr.mxu0 0.0
    %6814 = vmatpush1.msra.mxu0 %v6788
    %6815 = vmatprep.subr.mxu0 0.0
    %6816 = vmatpush1.msra.mxu0 %v6789
    %6817 = vmatprep.subr.mxu0 0.0
    %6818 = vmatpush1.msra.mxu0 %v6790
    %6819 = vmatprep.subr.mxu0 0.0
    %6820 = vmatpush1.msra.mxu0 %v6791
    %6821 = vmatprep.subr.mxu0 0.0
    %6822 = vmatpush1.msra.mxu0 %v6792
    %6823 = vmatprep.subr.mxu0 0.0
    %6824 = vmatpush1.msra.mxu0 %v6793
    %6825 = vmatprep.subr.mxu0 0.0
    %6826 = vmatpush1.msra.mxu0 %v6794
    %6827 = vmatprep.subr.mxu0 0.0
    %6828 = vmatpush1.msra.mxu0 0.0
    %6829 = vmatprep.subr.mxu0 0.0
    %6830 = vmatpush1.msra.mxu0 0.0
    %6831 = vmatprep.subr.mxu0 0.0
    %6832 = vmatpush1.msra.mxu0 0.0
    %6833 = vmatprep.subr.mxu0 0.0
    %6834 = vmatpush1.msra.mxu0 0.0
    %6835 = vmatprep.subr.mxu0 0.0
    %6836 = vmatpush1.msra.mxu0 0.0
    %6837 = vmatprep.subr.mxu0 0.0
    %6838 = vmatpush1.msra.mxu0 0.0
    %6839 = vmatprep.subr.mxu0 0.0
    %6840 = vmatpush1.msra.mxu0 0.0
    %6841 = vmatprep.subr.mxu0 0.0
    %6842 = vmatpush1.msra.mxu0 0.0
    %6843 = vmatprep.subr.mxu0 0.0
    %6844 = vmatpush1.msra.mxu0 0.0
    %6845 = vmatprep.subr.mxu0 0.0
    %6846 = vmatpush1.msra.mxu0 0.0
    %6847 = vmatprep.subr.mxu0 0.0
    %6848 = vmatpush1.msra.mxu0 0.0
    %6849 = vmatprep.subr.mxu0 0.0
    %6850 = vmatpush1.msra.mxu0 0.0
    %6851 = vmatprep.subr.mxu0 0.0
    %6852 = vmatpush1.msra.mxu0 0.0
    %6853 = vmatprep.subr.mxu0 0.0
    %6854 = vmatpush1.msra.mxu0 0.0
    %6855 = vmatprep.subr.mxu0 0.0
    %6856 = vmatpush1.msra.mxu0 0.0
    %6857 = vmatprep.subr.mxu0 0.0
    %6858 = vmatpush1.msra.mxu0 0.0
    %6859 = vmatprep.mubr.f32.mxu0 0.0
    %6860 = vmatmul.mubr.f32.gmra.mrb[0].mxu0 %v6760
    %v6861 = vpop.f32.mrb[0].mxu0
    %v6862 = vadd.f32 0.0, %v6861
    %v6863 = vpop.f32.mrb[0].mxu0
    %6864 = vmatprep.mubr.f32.mxu0 0.0
    %6865 = vmatmul.mubr.f32.gmra.mrb[0].mxu0 %v6765
    %v6866 = vpop.f32.mrb[0].mxu0
    %v6867 = vadd.f32 0.0, %v6866
    %v6868 = vpop.f32.mrb[0].mxu0
    %6869 = vmatprep.mubr.f32.mxu0 0.0
    %6870 = vmatmul.mubr.f32.gmra.mrb[0].mxu0 %v6770
    %v6871 = vpop.f32.mrb[0].mxu0
    %v6872 = vadd.f32 0.0, %v6871
    %v6873 = vpop.f32.mrb[0].mxu0
    %6874 = vmatprep.mubr.f32.mxu0 0.0
    %6875 = vmatmul.mubr.f32.gmra.mrb[0].mxu0 %v6775
    %v6876 = vpop.f32.mrb[0].mxu0
    %v6877 = vadd.f32 0.0, %v6876
    %v6878 = vpop.f32.mrb[0].mxu0
    %6879 = vdwg.mxu0
    %v6880 = vadd.f32 %v6684, %v6862
    %v6881 = vadd.f32 %v6685, %v6867
    %v6882 = vadd.f32 %v6686, %v6872
    %v6883 = vadd.f32 %v6687, %v6877
    %v6884 = vld [vmem:[#allocation17] sm:$0x1]
    %v6886 = vlaneseq
    %v6887 = vshrl.u32 %v6886, 7
    %v6888 = vsub.s32 0, %v6887
    %v6889 = vrot.slane %v6884, %v6888
    %v6891 = vadd.f32 %v6880, %v6889
    %v6892 = vadd.f32 %v6881, %v6889
    %v6893 = vadd.f32 %v6882, %v6889
    %v6894 = vadd.f32 %v6883, %v6889
    %v6895 = vmul.f32 %v6891, 0.5
    %v6896 = vmul.f32 %v6892, 0.5
    %v6897 = vmul.f32 %v6893, 0.5
    %v6898 = vmul.f32 %v6894, 0.5
    %v6899 = vmul.f32 %v6891, 0.70710677
    %v6900 = vmul.f32 %v6892, 0.70710677
    %v6901 = vmul.f32 %v6893, 0.70710677
    %v6902 = vmul.f32 %v6894, 0.70710677
    %v6903 = verf.f32.pop %v6899
    %v6904 = verf.f32.pop %v6900
    %v6905 = verf.f32.pop %v6901
    %v6906 = verf.f32.pop %v6902
    %v6907 = vadd.f32 %v6903, 1.0
    %v6908 = vadd.f32 %v6904, 1.0
    %v6909 = vadd.f32 %v6905, 1.0
    %v6910 = vadd.f32 %v6906, 1.0
    %v6911 = vmul.f32 %v6895, %v6907
    %v6912 = vmul.f32 %v6896, %v6908
    %v6913 = vmul.f32 %v6897, %v6909
    %v6914 = vmul.f32 %v6898, %v6910
    %v6915 = vld [vmem:[#allocation8] sm:$0xff]
    %vm6916 = vcmask 261120
    %v6918 = vsel %vm6916, %v6915, 0
    %6920 = vmatprep.subr.mxu0 0.0
    %6921 = vmatpush1.msra.mxu0 %v6911
    %6922 = vmatprep.subr.mxu0 0.0
    %6923 = vmatpush1.msra.mxu0 %v6912
    %6924 = vmatprep.subr.mxu0 0.0
    %6925 = vmatpush1.msra.mxu0 %v6913
    %6926 = vmatprep.subr.mxu0 0.0
    %6927 = vmatpush1.msra.mxu0 %v6914
    %6928 = vmatprep.subr.mxu0 0.0
    %6929 = vmatpush1.msra.mxu0 0.0
    %6930 = vmatprep.subr.mxu0 0.0
    %6931 = vmatpush1.msra.mxu0 0.0
    %6932 = vmatprep.subr.mxu0 0.0
    %6933 = vmatpush1.msra.mxu0 0.0
    %6934 = vmatprep.subr.mxu0 0.0
    %6935 = vmatpush1.msra.mxu0 0.0
    %6936 = vmatprep.subr.mxu0 0.0
    %6937 = vmatpush1.msra.mxu0 0.0
    %6938 = vmatprep.subr.mxu0 0.0
    %6939 = vmatpush1.msra.mxu0 0.0
    %6940 = vmatprep.subr.mxu0 0.0
    %6941 = vmatpush1.msra.mxu0 0.0
    %6942 = vmatprep.subr.mxu0 0.0
    %6943 = vmatpush1.msra.mxu0 0.0
    %6944 = vmatprep.subr.mxu0 0.0
    %6945 = vmatpush1.msra.mxu0 0.0
    %6946 = vmatprep.subr.mxu0 0.0
    %6947 = vmatpush1.msra.mxu0 0.0
    %6948 = vmatprep.subr.mxu0 0.0
    %6949 = vmatpush1.msra.mxu0 0.0
    %6950 = vmatprep.subr.mxu0 0.0
    %6951 = vmatpush1.msra.mxu0 0.0
    %6952 = vmatprep.subr.mxu0 0.0
    %6953 = vmatpush1.msra.mxu0 0.0
    %6954 = vmatprep.subr.mxu0 0.0
    %6955 = vmatpush1.msra.mxu0 0.0
    %6956 = vmatprep.subr.mxu0 0.0
    %6957 = vmatpush1.msra.mxu0 0.0
    %6958 = vmatprep.subr.mxu0 0.0
    %6959 = vmatpush1.msra.mxu0 0.0
    %6960 = vmatprep.subr.mxu0 0.0
    %6961 = vmatpush1.msra.mxu0 0.0
    %6962 = vmatprep.subr.mxu0 0.0
    %6963 = vmatpush1.msra.mxu0 0.0
    %6964 = vmatprep.subr.mxu0 0.0
    %6965 = vmatpush1.msra.mxu0 0.0
    %6966 = vmatprep.subr.mxu0 0.0
    %6967 = vmatpush1.msra.mxu0 0.0
    %6968 = vmatprep.subr.mxu0 0.0
    %6969 = vmatpush1.msra.mxu0 0.0
    %6970 = vmatprep.subr.mxu0 0.0
    %6971 = vmatpush1.msra.mxu0 0.0
    %6972 = vmatprep.subr.mxu0 0.0
    %6973 = vmatpush1.msra.mxu0 0.0
    %6974 = vmatprep.subr.mxu0 0.0
    %6975 = vmatpush1.msra.mxu0 0.0
    %6976 = vmatprep.subr.mxu0 0.0
    %6977 = vmatpush1.msra.mxu0 0.0
    %6978 = vmatprep.subr.mxu0 0.0
    %6979 = vmatpush1.msra.mxu0 0.0
    %6980 = vmatprep.subr.mxu0 0.0
    %6981 = vmatpush1.msra.mxu0 0.0
    %6982 = vmatprep.subr.mxu0 0.0
    %6983 = vmatpush1.msra.mxu0 0.0
    %6984 = vmatprep.mubr.f32.mxu0 0.0
    %6985 = vmatmul.mubr.f32.gmra.mrb[0].mxu0 %v6918
    %v6986 = vpop.f32.mrb[0].mxu0
    %v6987 = vadd.f32 0.0, %v6986
    %v6988 = vpop.f32.mrb[0].mxu0
    %6989 = vdwg.mxu0
    %v6990 = vld [vmem:[#allocation13] sm:$0xff]
    %v6991 = vld [vmem:[#allocation13 + $0x8] sm:$0xff]
    %v6992 = vld [vmem:[#allocation13 + $0x10] sm:$0xff]
    %v6993 = vld [vmem:[#allocation13 + $0x18] sm:$0xff]
    %v6994 = vld [vmem:[#allocation13 + $0x20] sm:$0xff]
    %v6995 = vld [vmem:[#allocation13 + $0x28] sm:$0xff]
    %v6996 = vld [vmem:[#allocation13 + $0x30] sm:$0xff]
    %v6997 = vld [vmem:[#allocation13 + $0x38] sm:$0xff]
    %v6998 = vld [vmem:[#allocation13 + $0x40] sm:$0xff]
    %v6999 = vld [vmem:[#allocation13 + $0x48] sm:$0xff]
    %v7000 = vld [vmem:[#allocation13 + $0x50] sm:$0xff]
    %v7001 = vld [vmem:[#allocation13 + $0x58] sm:$0xff]
    %v7002 = vld [vmem:[#allocation13 + $0x60] sm:$0xff]
    %v7003 = vld [vmem:[#allocation13 + $0x68] sm:$0xff]
    %v7004 = vld [vmem:[#allocation13 + $0x70] sm:$0xff]
    %v7005 = vld [vmem:[#allocation13 + $0x78] sm:$0xff]
    %s7006 = scalar_lea.vmem [#allocation8], 8
    %v7007 = vld [vmem:[%s7006] sm:$0xff]
    %v7009 = vsel %vm6916, %v7007, 0
    %7011 = vmatprep.subr.mxu0 0.0
    %7012 = vmatpush1.msra.mxu0 %v6911
    %7013 = vmatprep.subr.mxu0 0.0
    %7014 = vmatpush1.msra.mxu0 %v6912
    %7015 = vmatprep.subr.mxu0 0.0
    %7016 = vmatpush1.msra.mxu0 %v6913
    %7017 = vmatprep.subr.mxu0 0.0
    %7018 = vmatpush1.msra.mxu0 %v6914
    %7019 = vmatprep.subr.mxu0 0.0
    %7020 = vmatpush1.msra.mxu0 0.0
    %7021 = vmatprep.subr.mxu0 0.0
    %7022 = vmatpush1.msra.mxu0 0.0
    %7023 = vmatprep.subr.mxu0 0.0
    %7024 = vmatpush1.msra.mxu0 0.0
    %7025 = vmatprep.subr.mxu0 0.0
    %7026 = vmatpush1.msra.mxu0 0.0
    %7027 = vmatprep.subr.mxu0 0.0
    %7028 = vmatpush1.msra.mxu0 0.0
    %7029 = vmatprep.subr.mxu0 0.0
    %7030 = vmatpush1.msra.mxu0 0.0
    %7031 = vmatprep.subr.mxu0 0.0
    %7032 = vmatpush1.msra.mxu0 0.0
    %7033 = vmatprep.subr.mxu0 0.0
    %7034 = vmatpush1.msra.mxu0 0.0
    %7035 = vmatprep.subr.mxu0 0.0
    %7036 = vmatpush1.msra.mxu0 0.0
    %7037 = vmatprep.subr.mxu0 0.0
    %7038 = vmatpush1.msra.mxu0 0.0
    %7039 = vmatprep.subr.mxu0 0.0
    %7040 = vmatpush1.msra.mxu0 0.0
    %7041 = vmatprep.subr.mxu0 0.0
    %7042 = vmatpush1.msra.mxu0 0.0
    %7043 = vmatprep.subr.mxu0 0.0
    %7044 = vmatpush1.msra.mxu0 0.0
    %7045 = vmatprep.subr.mxu0 0.0
    %7046 = vmatpush1.msra.mxu0 0.0
    %7047 = vmatprep.subr.mxu0 0.0
    %7048 = vmatpush1.msra.mxu0 0.0
    %7049 = vmatprep.subr.mxu0 0.0
    %7050 = vmatpush1.msra.mxu0 0.0
    %7051 = vmatprep.subr.mxu0 0.0
    %7052 = vmatpush1.msra.mxu0 0.0
    %7053 = vmatprep.subr.mxu0 0.0
    %7054 = vmatpush1.msra.mxu0 0.0
    %7055 = vmatprep.subr.mxu0 0.0
    %7056 = vmatpush1.msra.mxu0 0.0
    %7057 = vmatprep.subr.mxu0 0.0
    %7058 = vmatpush1.msra.mxu0 0.0
    %7059 = vmatprep.subr.mxu0 0.0
    %7060 = vmatpush1.msra.mxu0 0.0
    %7061 = vmatprep.subr.mxu0 0.0
    %7062 = vmatpush1.msra.mxu0 0.0
    %7063 = vmatprep.subr.mxu0 0.0
    %7064 = vmatpush1.msra.mxu0 0.0
    %7065 = vmatprep.subr.mxu0 0.0
    %7066 = vmatpush1.msra.mxu0 0.0
    %7067 = vmatprep.subr.mxu0 0.0
    %7068 = vmatpush1.msra.mxu0 0.0
    %7069 = vmatprep.subr.mxu0 0.0
    %7070 = vmatpush1.msra.mxu0 0.0
    %7071 = vmatprep.subr.mxu0 0.0
    %7072 = vmatpush1.msra.mxu0 0.0
    %7073 = vmatprep.subr.mxu0 0.0
    %7074 = vmatpush1.msra.mxu0 0.0
    %7075 = vmatprep.mubr.f32.mxu0 0.0
    %7076 = vmatmul.mubr.f32.gmra.mrb[0].mxu0 %v7009
    %v7077 = vpop.f32.mrb[0].mxu0
    %v7078 = vadd.f32 0.0, %v7077
    %v7079 = vpop.f32.mrb[0].mxu0
    %7080 = vdwg.mxu0
    %s7081 = scalar_lea.vmem [#allocation13], 128
    %v7082 = vld [vmem:[%s7081] sm:$0xff]
    %v7083 = vld [vmem:[%s7081 + $0x8] sm:$0xff]
    %v7084 = vld [vmem:[%s7081 + $0x10] sm:$0xff]
    %v7085 = vld [vmem:[%s7081 + $0x18] sm:$0xff]
    %v7086 = vld [vmem:[%s7081 + $0x20] sm:$0xff]
    %v7087 = vld [vmem:[%s7081 + $0x28] sm:$0xff]
    %v7088 = vld [vmem:[%s7081 + $0x30] sm:$0xff]
    %v7089 = vld [vmem:[%s7081 + $0x38] sm:$0xff]
    %v7090 = vld [vmem:[%s7081 + $0x40] sm:$0xff]
    %v7091 = vld [vmem:[%s7081 + $0x48] sm:$0xff]
    %v7092 = vld [vmem:[%s7081 + $0x50] sm:$0xff]
    %v7093 = vld [vmem:[%s7081 + $0x58] sm:$0xff]
    %v7094 = vld [vmem:[%s7081 + $0x60] sm:$0xff]
    %v7095 = vld [vmem:[%s7081 + $0x68] sm:$0xff]
    %v7096 = vld [vmem:[%s7081 + $0x70] sm:$0xff]
    %v7097 = vld [vmem:[%s7081 + $0x78] sm:$0xff]
    %7098 = vmatprep.subr.mxu0 0.0
    %7099 = vmatpush1.msra.mxu0 %v7082
    %7100 = vmatprep.subr.mxu0 0.0
    %7101 = vmatpush1.msra.mxu0 %v7083
    %7102 = vmatprep.subr.mxu0 0.0
    %7103 = vmatpush1.msra.mxu0 %v7084
    %7104 = vmatprep.subr.mxu0 0.0
    %7105 = vmatpush1.msra.mxu0 %v7085
    %7106 = vmatprep.subr.mxu0 0.0
    %7107 = vmatpush1.msra.mxu0 %v7086
    %7108 = vmatprep.subr.mxu0 0.0
    %7109 = vmatpush1.msra.mxu0 %v7087
    %7110 = vmatprep.subr.mxu0 0.0
    %7111 = vmatpush1.msra.mxu0 %v7088
    %7112 = vmatprep.subr.mxu0 0.0
    %7113 = vmatpush1.msra.mxu0 %v7089
    %7114 = vmatprep.subr.mxu0 0.0
    %7115 = vmatpush1.msra.mxu0 %v7090
    %7116 = vmatprep.subr.mxu0 0.0
    %7117 = vmatpush1.msra.mxu0 %v7091
    %7118 = vmatprep.subr.mxu0 0.0
    %7119 = vmatpush1.msra.mxu0 %v7092
    %7120 = vmatprep.subr.mxu0 0.0
    %7121 = vmatpush1.msra.mxu0 %v7093
    %7122 = vmatprep.subr.mxu0 0.0
    %7123 = vmatpush1.msra.mxu0 %v7094
    %7124 = vmatprep.subr.mxu0 0.0
    %7125 = vmatpush1.msra.mxu0 %v7095
    %7126 = vmatprep.subr.mxu0 0.0
    %7127 = vmatpush1.msra.mxu0 %v7096
    %7128 = vmatprep.subr.mxu0 0.0
    %7129 = vmatpush1.msra.mxu0 %v7097
    %7130 = vmatprep.subr.mxu0 0.0
    %7131 = vmatpush1.msra.mxu0 0.0
    %7132 = vmatprep.subr.mxu0 0.0
    %7133 = vmatpush1.msra.mxu0 0.0
    %7134 = vmatprep.subr.mxu0 0.0
    %7135 = vmatpush1.msra.mxu0 0.0
    %7136 = vmatprep.subr.mxu0 0.0
    %7137 = vmatpush1.msra.mxu0 0.0
    %7138 = vmatprep.subr.mxu0 0.0
    %7139 = vmatpush1.msra.mxu0 0.0
    %7140 = vmatprep.subr.mxu0 0.0
    %7141 = vmatpush1.msra.mxu0 0.0
    %7142 = vmatprep.subr.mxu0 0.0
    %7143 = vmatpush1.msra.mxu0 0.0
    %7144 = vmatprep.subr.mxu0 0.0
    %7145 = vmatpush1.msra.mxu0 0.0
    %7146 = vmatprep.subr.mxu0 0.0
    %7147 = vmatpush1.msra.mxu0 0.0
    %7148 = vmatprep.subr.mxu0 0.0
    %7149 = vmatpush1.msra.mxu0 0.0
    %7150 = vmatprep.subr.mxu0 0.0
    %7151 = vmatpush1.msra.mxu0 0.0
    %7152 = vmatprep.subr.mxu0 0.0
    %7153 = vmatpush1.msra.mxu0 0.0
    %7154 = vmatprep.subr.mxu0 0.0
    %7155 = vmatpush1.msra.mxu0 0.0
    %7156 = vmatprep.subr.mxu0 0.0
    %7157 = vmatpush1.msra.mxu0 0.0
    %7158 = vmatprep.subr.mxu0 0.0
    %7159 = vmatpush1.msra.mxu0 0.0
    %7160 = vmatprep.subr.mxu0 0.0
    %7161 = vmatpush1.msra.mxu0 0.0
    %7162 = vmatprep.mubr.f32.mxu0 0.0
    %7163 = vmatmul.mubr.f32.gmra.mrb[0].mxu0 %v7078
    %v7164 = vpop.f32.mrb[0].mxu0
    %v7165 = vadd.f32 0.0, %v7164
    %v7166 = vpop.f32.mrb[0].mxu0
    %7167 = vdwg.mxu0
    %7168 = vmatprep.subr.mxu0 0.0
    %7169 = vmatpush1.msra.mxu0 %v6990
    %7170 = vmatprep.subr.mxu0 0.0
    %7171 = vmatpush1.msra.mxu0 %v6991
    %7172 = vmatprep.subr.mxu0 0.0
    %7173 = vmatpush1.msra.mxu0 %v6992
    %7174 = vmatprep.subr.mxu0 0.0
    %7175 = vmatpush1.msra.mxu0 %v6993
    %7176 = vmatprep.subr.mxu0 0.0
    %7177 = vmatpush1.msra.mxu0 %v6994
    %7178 = vmatprep.subr.mxu0 0.0
    %7179 = vmatpush1.msra.mxu0 %v6995
    %7180 = vmatprep.subr.mxu0 0.0
    %7181 = vmatpush1.msra.mxu0 %v6996
    %7182 = vmatprep.subr.mxu0 0.0
    %7183 = vmatpush1.msra.mxu0 %v6997
    %7184 = vmatprep.subr.mxu0 0.0
    %7185 = vmatpush1.msra.mxu0 %v6998
    %7186 = vmatprep.subr.mxu0 0.0
    %7187 = vmatpush1.msra.mxu0 %v6999
    %7188 = vmatprep.subr.mxu0 0.0
    %7189 = vmatpush1.msra.mxu0 %v7000
    %7190 = vmatprep.subr.mxu0 0.0
    %7191 = vmatpush1.msra.mxu0 %v7001
    %7192 = vmatprep.subr.mxu0 0.0
    %7193 = vmatpush1.msra.mxu0 %v7002
    %7194 = vmatprep.subr.mxu0 0.0
    %7195 = vmatpush1.msra.mxu0 %v7003
    %7196 = vmatprep.subr.mxu0 0.0
    %7197 = vmatpush1.msra.mxu0 %v7004
    %7198 = vmatprep.subr.mxu0 0.0
    %7199 = vmatpush1.msra.mxu0 %v7005
    %7200 = vmatprep.subr.mxu0 0.0
    %7201 = vmatpush1.msra.mxu0 0.0
    %7202 = vmatprep.subr.mxu0 0.0
    %7203 = vmatpush1.msra.mxu0 0.0
    %7204 = vmatprep.subr.mxu0 0.0
    %7205 = vmatpush1.msra.mxu0 0.0
    %7206 = vmatprep.subr.mxu0 0.0
    %7207 = vmatpush1.msra.mxu0 0.0
    %7208 = vmatprep.subr.mxu0 0.0
    %7209 = vmatpush1.msra.mxu0 0.0
    %7210 = vmatprep.subr.mxu0 0.0
    %7211 = vmatpush1.msra.mxu0 0.0
    %7212 = vmatprep.subr.mxu0 0.0
    %7213 = vmatpush1.msra.mxu0 0.0
    %7214 = vmatprep.subr.mxu0 0.0
    %7215 = vmatpush1.msra.mxu0 0.0
    %7216 = vmatprep.subr.mxu0 0.0
    %7217 = vmatpush1.msra.mxu0 0.0
    %7218 = vmatprep.subr.mxu0 0.0
    %7219 = vmatpush1.msra.mxu0 0.0
    %7220 = vmatprep.subr.mxu0 0.0
    %7221 = vmatpush1.msra.mxu0 0.0
    %7222 = vmatprep.subr.mxu0 0.0
    %7223 = vmatpush1.msra.mxu0 0.0
    %7224 = vmatprep.subr.mxu0 0.0
    %7225 = vmatpush1.msra.mxu0 0.0
    %7226 = vmatprep.subr.mxu0 0.0
    %7227 = vmatpush1.msra.mxu0 0.0
    %7228 = vmatprep.subr.mxu0 0.0
    %7229 = vmatpush1.msra.mxu0 0.0
    %7230 = vmatprep.subr.mxu0 0.0
    %7231 = vmatpush1.msra.mxu0 0.0
    %7232 = vmatprep.mubr.f32.mxu0 0.0
    %7233 = vmatmul.mubr.f32.gmra.mrb[0].mxu0 %v6987
    %v7234 = vpop.f32.mrb[0].mxu0
    %v7235 = vadd.f32 %v7165, %v7234
    %v7236 = vpop.f32.mrb[0].mxu0
    %7237 = vdwg.mxu0
    %s7238 = scalar_lea.vmem [#allocation8], 16
    %v7239 = vld [vmem:[%s7238] sm:$0xff]
    %v7241 = vsel %vm6916, %v7239, 0
    %7243 = vmatprep.subr.mxu0 0.0
    %7244 = vmatpush1.msra.mxu0 %v6911
    %7245 = vmatprep.subr.mxu0 0.0
    %7246 = vmatpush1.msra.mxu0 %v6912
    %7247 = vmatprep.subr.mxu0 0.0
    %7248 = vmatpush1.msra.mxu0 %v6913
    %7249 = vmatprep.subr.mxu0 0.0
    %7250 = vmatpush1.msra.mxu0 %v6914
    %7251 = vmatprep.subr.mxu0 0.0
    %7252 = vmatpush1.msra.mxu0 0.0
    %7253 = vmatprep.subr.mxu0 0.0
    %7254 = vmatpush1.msra.mxu0 0.0
    %7255 = vmatprep.subr.mxu0 0.0
    %7256 = vmatpush1.msra.mxu0 0.0
    %7257 = vmatprep.subr.mxu0 0.0
    %7258 = vmatpush1.msra.mxu0 0.0
    %7259 = vmatprep.subr.mxu0 0.0
    %7260 = vmatpush1.msra.mxu0 0.0
    %7261 = vmatprep.subr.mxu0 0.0
    %7262 = vmatpush1.msra.mxu0 0.0
    %7263 = vmatprep.subr.mxu0 0.0
    %7264 = vmatpush1.msra.mxu0 0.0
    %7265 = vmatprep.subr.mxu0 0.0
    %7266 = vmatpush1.msra.mxu0 0.0
    %7267 = vmatprep.subr.mxu0 0.0
    %7268 = vmatpush1.msra.mxu0 0.0
    %7269 = vmatprep.subr.mxu0 0.0
    %7270 = vmatpush1.msra.mxu0 0.0
    %7271 = vmatprep.subr.mxu0 0.0
    %7272 = vmatpush1.msra.mxu0 0.0
    %7273 = vmatprep.subr.mxu0 0.0
    %7274 = vmatpush1.msra.mxu0 0.0
    %7275 = vmatprep.subr.mxu0 0.0
    %7276 = vmatpush1.msra.mxu0 0.0
    %7277 = vmatprep.subr.mxu0 0.0
    %7278 = vmatpush1.msra.mxu0 0.0
    %7279 = vmatprep.subr.mxu0 0.0
    %7280 = vmatpush1.msra.mxu0 0.0
    %7281 = vmatprep.subr.mxu0 0.0
    %7282 = vmatpush1.msra.mxu0 0.0
    %7283 = vmatprep.subr.mxu0 0.0
    %7284 = vmatpush1.msra.mxu0 0.0
    %7285 = vmatprep.subr.mxu0 0.0
    %7286 = vmatpush1.msra.mxu0 0.0
    %7287 = vmatprep.subr.mxu0 0.0
    %7288 = vmatpush1.msra.mxu0 0.0
    %7289 = vmatprep.subr.mxu0 0.0
    %7290 = vmatpush1.msra.mxu0 0.0
    %7291 = vmatprep.subr.mxu0 0.0
    %7292 = vmatpush1.msra.mxu0 0.0
    %7293 = vmatprep.subr.mxu0 0.0
    %7294 = vmatpush1.msra.mxu0 0.0
    %7295 = vmatprep.subr.mxu0 0.0
    %7296 = vmatpush1.msra.mxu0 0.0
    %7297 = vmatprep.subr.mxu0 0.0
    %7298 = vmatpush1.msra.mxu0 0.0
    %7299 = vmatprep.subr.mxu0 0.0
    %7300 = vmatpush1.msra.mxu0 0.0
    %7301 = vmatprep.subr.mxu0 0.0
    %7302 = vmatpush1.msra.mxu0 0.0
    %7303 = vmatprep.subr.mxu0 0.0
    %7304 = vmatpush1.msra.mxu0 0.0
    %7305 = vmatprep.subr.mxu0 0.0
    %7306 = vmatpush1.msra.mxu0 0.0
    %7307 = vmatprep.mubr.f32.mxu0 0.0
    %7308 = vmatmul.mubr.f32.gmra.mrb[0].mxu0 %v7241
    %v7309 = vpop.f32.mrb[0].mxu0
    %v7310 = vadd.f32 0.0, %v7309
    %v7311 = vpop.f32.mrb[0].mxu0
    %7312 = vdwg.mxu0
    %s7313 = scalar_lea.vmem [#allocation13], 256
    %v7314 = vld [vmem:[%s7313] sm:$0xff]
    %v7315 = vld [vmem:[%s7313 + $0x8] sm:$0xff]
    %v7316 = vld [vmem:[%s7313 + $0x10] sm:$0xff]
    %v7317 = vld [vmem:[%s7313 + $0x18] sm:$0xff]
    %v7318 = vld [vmem:[%s7313 + $0x20] sm:$0xff]
    %v7319 = vld [vmem:[%s7313 + $0x28] sm:$0xff]
    %v7320 = vld [vmem:[%s7313 + $0x30] sm:$0xff]
    %v7321 = vld [vmem:[%s7313 + $0x38] sm:$0xff]
    %v7322 = vld [vmem:[%s7313 + $0x40] sm:$0xff]
    %v7323 = vld [vmem:[%s7313 + $0x48] sm:$0xff]
    %v7324 = vld [vmem:[%s7313 + $0x50] sm:$0xff]
    %v7325 = vld [vmem:[%s7313 + $0x58] sm:$0xff]
    %v7326 = vld [vmem:[%s7313 + $0x60] sm:$0xff]
    %v7327 = vld [vmem:[%s7313 + $0x68] sm:$0xff]
    %v7328 = vld [vmem:[%s7313 + $0x70] sm:$0xff]
    %v7329 = vld [vmem:[%s7313 + $0x78] sm:$0xff]
    %7330 = vmatprep.subr.mxu0 0.0
    %7331 = vmatpush1.msra.mxu0 %v7314
    %7332 = vmatprep.subr.mxu0 0.0
    %7333 = vmatpush1.msra.mxu0 %v7315
    %7334 = vmatprep.subr.mxu0 0.0
    %7335 = vmatpush1.msra.mxu0 %v7316
    %7336 = vmatprep.subr.mxu0 0.0
    %7337 = vmatpush1.msra.mxu0 %v7317
    %7338 = vmatprep.subr.mxu0 0.0
    %7339 = vmatpush1.msra.mxu0 %v7318
    %7340 = vmatprep.subr.mxu0 0.0
    %7341 = vmatpush1.msra.mxu0 %v7319
    %7342 = vmatprep.subr.mxu0 0.0
    %7343 = vmatpush1.msra.mxu0 %v7320
    %7344 = vmatprep.subr.mxu0 0.0
    %7345 = vmatpush1.msra.mxu0 %v7321
    %7346 = vmatprep.subr.mxu0 0.0
    %7347 = vmatpush1.msra.mxu0 %v7322
    %7348 = vmatprep.subr.mxu0 0.0
    %7349 = vmatpush1.msra.mxu0 %v7323
    %7350 = vmatprep.subr.mxu0 0.0
    %7351 = vmatpush1.msra.mxu0 %v7324
    %7352 = vmatprep.subr.mxu0 0.0
    %7353 = vmatpush1.msra.mxu0 %v7325
    %7354 = vmatprep.subr.mxu0 0.0
    %7355 = vmatpush1.msra.mxu0 %v7326
    %7356 = vmatprep.subr.mxu0 0.0
    %7357 = vmatpush1.msra.mxu0 %v7327
    %7358 = vmatprep.subr.mxu0 0.0
    %7359 = vmatpush1.msra.mxu0 %v7328
    %7360 = vmatprep.subr.mxu0 0.0
    %7361 = vmatpush1.msra.mxu0 %v7329
    %7362 = vmatprep.subr.mxu0 0.0
    %7363 = vmatpush1.msra.mxu0 0.0
    %7364 = vmatprep.subr.mxu0 0.0
    %7365 = vmatpush1.msra.mxu0 0.0
    %7366 = vmatprep.subr.mxu0 0.0
    %7367 = vmatpush1.msra.mxu0 0.0
    %7368 = vmatprep.subr.mxu0 0.0
    %7369 = vmatpush1.msra.mxu0 0.0
    %7370 = vmatprep.subr.mxu0 0.0
    %7371 = vmatpush1.msra.mxu0 0.0
    %7372 = vmatprep.subr.mxu0 0.0
    %7373 = vmatpush1.msra.mxu0 0.0
    %7374 = vmatprep.subr.mxu0 0.0
    %7375 = vmatpush1.msra.mxu0 0.0
    %7376 = vmatprep.subr.mxu0 0.0
    %7377 = vmatpush1.msra.mxu0 0.0
    %7378 = vmatprep.subr.mxu0 0.0
    %7379 = vmatpush1.msra.mxu0 0.0
    %7380 = vmatprep.subr.mxu0 0.0
    %7381 = vmatpush1.msra.mxu0 0.0
    %7382 = vmatprep.subr.mxu0 0.0
    %7383 = vmatpush1.msra.mxu0 0.0
    %7384 = vmatprep.subr.mxu0 0.0
    %7385 = vmatpush1.msra.mxu0 0.0
    %7386 = vmatprep.subr.mxu0 0.0
    %7387 = vmatpush1.msra.mxu0 0.0
    %7388 = vmatprep.subr.mxu0 0.0
    %7389 = vmatpush1.msra.mxu0 0.0
    %7390 = vmatprep.subr.mxu0 0.0
    %7391 = vmatpush1.msra.mxu0 0.0
    %7392 = vmatprep.subr.mxu0 0.0
    %7393 = vmatpush1.msra.mxu0 0.0
    %7394 = vmatprep.mubr.f32.mxu0 0.0
    %7395 = vmatmul.mubr.f32.gmra.mrb[0].mxu0 %v7310
    %v7396 = vpop.f32.mrb[0].mxu0
    %v7397 = vadd.f32 0.0, %v7396
    %v7398 = vpop.f32.mrb[0].mxu0
    %7399 = vdwg.mxu0
    %v7400 = vadd.f32 %v7235, %v7397
    %s7401 = scalar_lea.vmem [#allocation8], 24
    %v7402 = vld [vmem:[%s7401] sm:$0xff]
    %v7404 = vsel %vm6916, %v7402, 0
    %7406 = vmatprep.subr.mxu0 0.0
    %7407 = vmatpush1.msra.mxu0 %v6911
    %7408 = vmatprep.subr.mxu0 0.0
    %7409 = vmatpush1.msra.mxu0 %v6912
    %7410 = vmatprep.subr.mxu0 0.0
    %7411 = vmatpush1.msra.mxu0 %v6913
    %7412 = vmatprep.subr.mxu0 0.0
    %7413 = vmatpush1.msra.mxu0 %v6914
    %7414 = vmatprep.subr.mxu0 0.0
    %7415 = vmatpush1.msra.mxu0 0.0
    %7416 = vmatprep.subr.mxu0 0.0
    %7417 = vmatpush1.msra.mxu0 0.0
    %7418 = vmatprep.subr.mxu0 0.0
    %7419 = vmatpush1.msra.mxu0 0.0
    %7420 = vmatprep.subr.mxu0 0.0
    %7421 = vmatpush1.msra.mxu0 0.0
    %7422 = vmatprep.subr.mxu0 0.0
    %7423 = vmatpush1.msra.mxu0 0.0
    %7424 = vmatprep.subr.mxu0 0.0
    %7425 = vmatpush1.msra.mxu0 0.0
    %7426 = vmatprep.subr.mxu0 0.0
    %7427 = vmatpush1.msra.mxu0 0.0
    %7428 = vmatprep.subr.mxu0 0.0
    %7429 = vmatpush1.msra.mxu0 0.0
    %7430 = vmatprep.subr.mxu0 0.0
    %7431 = vmatpush1.msra.mxu0 0.0
    %7432 = vmatprep.subr.mxu0 0.0
    %7433 = vmatpush1.msra.mxu0 0.0
    %7434 = vmatprep.subr.mxu0 0.0
    %7435 = vmatpush1.msra.mxu0 0.0
    %7436 = vmatprep.subr.mxu0 0.0
    %7437 = vmatpush1.msra.mxu0 0.0
    %7438 = vmatprep.subr.mxu0 0.0
    %7439 = vmatpush1.msra.mxu0 0.0
    %7440 = vmatprep.subr.mxu0 0.0
    %7441 = vmatpush1.msra.mxu0 0.0
    %7442 = vmatprep.subr.mxu0 0.0
    %7443 = vmatpush1.msra.mxu0 0.0
    %7444 = vmatprep.subr.mxu0 0.0
    %7445 = vmatpush1.msra.mxu0 0.0
    %7446 = vmatprep.subr.mxu0 0.0
    %7447 = vmatpush1.msra.mxu0 0.0
    %7448 = vmatprep.subr.mxu0 0.0
    %7449 = vmatpush1.msra.mxu0 0.0
    %7450 = vmatprep.subr.mxu0 0.0
    %7451 = vmatpush1.msra.mxu0 0.0
    %7452 = vmatprep.subr.mxu0 0.0
    %7453 = vmatpush1.msra.mxu0 0.0
    %7454 = vmatprep.subr.mxu0 0.0
    %7455 = vmatpush1.msra.mxu0 0.0
    %7456 = vmatprep.subr.mxu0 0.0
    %7457 = vmatpush1.msra.mxu0 0.0
    %7458 = vmatprep.subr.mxu0 0.0
    %7459 = vmatpush1.msra.mxu0 0.0
    %7460 = vmatprep.subr.mxu0 0.0
    %7461 = vmatpush1.msra.mxu0 0.0
    %7462 = vmatprep.subr.mxu0 0.0
    %7463 = vmatpush1.msra.mxu0 0.0
    %7464 = vmatprep.subr.mxu0 0.0
    %7465 = vmatpush1.msra.mxu0 0.0
    %7466 = vmatprep.subr.mxu0 0.0
    %7467 = vmatpush1.msra.mxu0 0.0
    %7468 = vmatprep.subr.mxu0 0.0
    %7469 = vmatpush1.msra.mxu0 0.0
    %7470 = vmatprep.mubr.f32.mxu0 0.0
    %7471 = vmatmul.mubr.f32.gmra.mrb[0].mxu0 %v7404
    %v7472 = vpop.f32.mrb[0].mxu0
    %v7473 = vadd.f32 0.0, %v7472
    %v7474 = vpop.f32.mrb[0].mxu0
    %7475 = vdwg.mxu0
    %s7476 = scalar_lea.vmem [#allocation13], 384
    %v7477 = vld [vmem:[%s7476] sm:$0xff]
    %v7478 = vld [vmem:[%s7476 + $0x8] sm:$0xff]
    %v7479 = vld [vmem:[%s7476 + $0x10] sm:$0xff]
    %v7480 = vld [vmem:[%s7476 + $0x18] sm:$0xff]
    %v7481 = vld [vmem:[%s7476 + $0x20] sm:$0xff]
    %v7482 = vld [vmem:[%s7476 + $0x28] sm:$0xff]
    %v7483 = vld [vmem:[%s7476 + $0x30] sm:$0xff]
    %v7484 = vld [vmem:[%s7476 + $0x38] sm:$0xff]
    %v7485 = vld [vmem:[%s7476 + $0x40] sm:$0xff]
    %v7486 = vld [vmem:[%s7476 + $0x48] sm:$0xff]
    %v7487 = vld [vmem:[%s7476 + $0x50] sm:$0xff]
    %v7488 = vld [vmem:[%s7476 + $0x58] sm:$0xff]
    %v7489 = vld [vmem:[%s7476 + $0x60] sm:$0xff]
    %v7490 = vld [vmem:[%s7476 + $0x68] sm:$0xff]
    %v7491 = vld [vmem:[%s7476 + $0x70] sm:$0xff]
    %v7492 = vld [vmem:[%s7476 + $0x78] sm:$0xff]
    %7493 = vmatprep.subr.mxu0 0.0
    %7494 = vmatpush1.msra.mxu0 %v7477
    %7495 = vmatprep.subr.mxu0 0.0
    %7496 = vmatpush1.msra.mxu0 %v7478
    %7497 = vmatprep.subr.mxu0 0.0
    %7498 = vmatpush1.msra.mxu0 %v7479
    %7499 = vmatprep.subr.mxu0 0.0
    %7500 = vmatpush1.msra.mxu0 %v7480
    %7501 = vmatprep.subr.mxu0 0.0
    %7502 = vmatpush1.msra.mxu0 %v7481
    %7503 = vmatprep.subr.mxu0 0.0
    %7504 = vmatpush1.msra.mxu0 %v7482
    %7505 = vmatprep.subr.mxu0 0.0
    %7506 = vmatpush1.msra.mxu0 %v7483
    %7507 = vmatprep.subr.mxu0 0.0
    %7508 = vmatpush1.msra.mxu0 %v7484
    %7509 = vmatprep.subr.mxu0 0.0
    %7510 = vmatpush1.msra.mxu0 %v7485
    %7511 = vmatprep.subr.mxu0 0.0
    %7512 = vmatpush1.msra.mxu0 %v7486
    %7513 = vmatprep.subr.mxu0 0.0
    %7514 = vmatpush1.msra.mxu0 %v7487
    %7515 = vmatprep.subr.mxu0 0.0
    %7516 = vmatpush1.msra.mxu0 %v7488
    %7517 = vmatprep.subr.mxu0 0.0
    %7518 = vmatpush1.msra.mxu0 %v7489
    %7519 = vmatprep.subr.mxu0 0.0
    %7520 = vmatpush1.msra.mxu0 %v7490
    %7521 = vmatprep.subr.mxu0 0.0
    %7522 = vmatpush1.msra.mxu0 %v7491
    %7523 = vmatprep.subr.mxu0 0.0
    %7524 = vmatpush1.msra.mxu0 %v7492
    %7525 = vmatprep.subr.mxu0 0.0
    %7526 = vmatpush1.msra.mxu0 0.0
    %7527 = vmatprep.subr.mxu0 0.0
    %7528 = vmatpush1.msra.mxu0 0.0
    %7529 = vmatprep.subr.mxu0 0.0
    %7530 = vmatpush1.msra.mxu0 0.0
    %7531 = vmatprep.subr.mxu0 0.0
    %7532 = vmatpush1.msra.mxu0 0.0
    %7533 = vmatprep.subr.mxu0 0.0
    %7534 = vmatpush1.msra.mxu0 0.0
    %7535 = vmatprep.subr.mxu0 0.0
    %7536 = vmatpush1.msra.mxu0 0.0
    %7537 = vmatprep.subr.mxu0 0.0
    %7538 = vmatpush1.msra.mxu0 0.0
    %7539 = vmatprep.subr.mxu0 0.0
    %7540 = vmatpush1.msra.mxu0 0.0
    %7541 = vmatprep.subr.mxu0 0.0
    %7542 = vmatpush1.msra.mxu0 0.0
    %7543 = vmatprep.subr.mxu0 0.0
    %7544 = vmatpush1.msra.mxu0 0.0
    %7545 = vmatprep.subr.mxu0 0.0
    %7546 = vmatpush1.msra.mxu0 0.0
    %7547 = vmatprep.subr.mxu0 0.0
    %7548 = vmatpush1.msra.mxu0 0.0
    %7549 = vmatprep.subr.mxu0 0.0
    %7550 = vmatpush1.msra.mxu0 0.0
    %7551 = vmatprep.subr.mxu0 0.0
    %7552 = vmatpush1.msra.mxu0 0.0
    %7553 = vmatprep.subr.mxu0 0.0
    %7554 = vmatpush1.msra.mxu0 0.0
    %7555 = vmatprep.subr.mxu0 0.0
    %7556 = vmatpush1.msra.mxu0 0.0
    %7557 = vmatprep.mubr.f32.mxu0 0.0
    %7558 = vmatmul.mubr.f32.gmra.mrb[0].mxu0 %v7473
    %v7559 = vpop.f32.mrb[0].mxu0
    %v7560 = vadd.f32 0.0, %v7559
    %v7561 = vpop.f32.mrb[0].mxu0
    %7562 = vdwg.mxu0
    %v7563 = vadd.f32 %v7400, %v7560
    %s7564 = scalar_lea.vmem [#allocation8], 32
    %v7565 = vld [vmem:[%s7564] sm:$0xff]
    %v7567 = vsel %vm6916, %v7565, 0
    %7569 = vmatprep.subr.mxu0 0.0
    %7570 = vmatpush1.msra.mxu0 %v6911
    %7571 = vmatprep.subr.mxu0 0.0
    %7572 = vmatpush1.msra.mxu0 %v6912
    %7573 = vmatprep.subr.mxu0 0.0
    %7574 = vmatpush1.msra.mxu0 %v6913
    %7575 = vmatprep.subr.mxu0 0.0
    %7576 = vmatpush1.msra.mxu0 %v6914
    %7577 = vmatprep.subr.mxu0 0.0
    %7578 = vmatpush1.msra.mxu0 0.0
    %7579 = vmatprep.subr.mxu0 0.0
    %7580 = vmatpush1.msra.mxu0 0.0
    %7581 = vmatprep.subr.mxu0 0.0
    %7582 = vmatpush1.msra.mxu0 0.0
    %7583 = vmatprep.subr.mxu0 0.0
    %7584 = vmatpush1.msra.mxu0 0.0
    %7585 = vmatprep.subr.mxu0 0.0
    %7586 = vmatpush1.msra.mxu0 0.0
    %7587 = vmatprep.subr.mxu0 0.0
    %7588 = vmatpush1.msra.mxu0 0.0
    %7589 = vmatprep.subr.mxu0 0.0
    %7590 = vmatpush1.msra.mxu0 0.0
    %7591 = vmatprep.subr.mxu0 0.0
    %7592 = vmatpush1.msra.mxu0 0.0
    %7593 = vmatprep.subr.mxu0 0.0
    %7594 = vmatpush1.msra.mxu0 0.0
    %7595 = vmatprep.subr.mxu0 0.0
    %7596 = vmatpush1.msra.mxu0 0.0
    %7597 = vmatprep.subr.mxu0 0.0
    %7598 = vmatpush1.msra.mxu0 0.0
    %7599 = vmatprep.subr.mxu0 0.0
    %7600 = vmatpush1.msra.mxu0 0.0
    %7601 = vmatprep.subr.mxu0 0.0
    %7602 = vmatpush1.msra.mxu0 0.0
    %7603 = vmatprep.subr.mxu0 0.0
    %7604 = vmatpush1.msra.mxu0 0.0
    %7605 = vmatprep.subr.mxu0 0.0
    %7606 = vmatpush1.msra.mxu0 0.0
    %7607 = vmatprep.subr.mxu0 0.0
    %7608 = vmatpush1.msra.mxu0 0.0
    %7609 = vmatprep.subr.mxu0 0.0
    %7610 = vmatpush1.msra.mxu0 0.0
    %7611 = vmatprep.subr.mxu0 0.0
    %7612 = vmatpush1.msra.mxu0 0.0
    %7613 = vmatprep.subr.mxu0 0.0
    %7614 = vmatpush1.msra.mxu0 0.0
    %7615 = vmatprep.subr.mxu0 0.0
    %7616 = vmatpush1.msra.mxu0 0.0
    %7617 = vmatprep.subr.mxu0 0.0
    %7618 = vmatpush1.msra.mxu0 0.0
    %7619 = vmatprep.subr.mxu0 0.0
    %7620 = vmatpush1.msra.mxu0 0.0
    %7621 = vmatprep.subr.mxu0 0.0
    %7622 = vmatpush1.msra.mxu0 0.0
    %7623 = vmatprep.subr.mxu0 0.0
    %7624 = vmatpush1.msra.mxu0 0.0
    %7625 = vmatprep.subr.mxu0 0.0
    %7626 = vmatpush1.msra.mxu0 0.0
    %7627 = vmatprep.subr.mxu0 0.0
    %7628 = vmatpush1.msra.mxu0 0.0
    %7629 = vmatprep.subr.mxu0 0.0
    %7630 = vmatpush1.msra.mxu0 0.0
    %7631 = vmatprep.subr.mxu0 0.0
    %7632 = vmatpush1.msra.mxu0 0.0
    %7633 = vmatprep.mubr.f32.mxu0 0.0
    %7634 = vmatmul.mubr.f32.gmra.mrb[0].mxu0 %v7567
    %v7635 = vpop.f32.mrb[0].mxu0
    %v7636 = vadd.f32 0.0, %v7635
    %v7637 = vpop.f32.mrb[0].mxu0
    %7638 = vdwg.mxu0
    %s7639 = scalar_lea.vmem [#allocation13], 512
    %v7640 = vld [vmem:[%s7639] sm:$0xff]
    %v7641 = vld [vmem:[%s7639 + $0x8] sm:$0xff]
    %v7642 = vld [vmem:[%s7639 + $0x10] sm:$0xff]
    %v7643 = vld [vmem:[%s7639 + $0x18] sm:$0xff]
    %v7644 = vld [vmem:[%s7639 + $0x20] sm:$0xff]
    %v7645 = vld [vmem:[%s7639 + $0x28] sm:$0xff]
    %v7646 = vld [vmem:[%s7639 + $0x30] sm:$0xff]
    %v7647 = vld [vmem:[%s7639 + $0x38] sm:$0xff]
    %v7648 = vld [vmem:[%s7639 + $0x40] sm:$0xff]
    %v7649 = vld [vmem:[%s7639 + $0x48] sm:$0xff]
    %v7650 = vld [vmem:[%s7639 + $0x50] sm:$0xff]
    %v7651 = vld [vmem:[%s7639 + $0x58] sm:$0xff]
    %v7652 = vld [vmem:[%s7639 + $0x60] sm:$0xff]
    %v7653 = vld [vmem:[%s7639 + $0x68] sm:$0xff]
    %v7654 = vld [vmem:[%s7639 + $0x70] sm:$0xff]
    %v7655 = vld [vmem:[%s7639 + $0x78] sm:$0xff]
    %7656 = vmatprep.subr.mxu0 0.0
    %7657 = vmatpush1.msra.mxu0 %v7640
    %7658 = vmatprep.subr.mxu0 0.0
    %7659 = vmatpush1.msra.mxu0 %v7641
    %7660 = vmatprep.subr.mxu0 0.0
    %7661 = vmatpush1.msra.mxu0 %v7642
    %7662 = vmatprep.subr.mxu0 0.0
    %7663 = vmatpush1.msra.mxu0 %v7643
    %7664 = vmatprep.subr.mxu0 0.0
    %7665 = vmatpush1.msra.mxu0 %v7644
    %7666 = vmatprep.subr.mxu0 0.0
    %7667 = vmatpush1.msra.mxu0 %v7645
    %7668 = vmatprep.subr.mxu0 0.0
    %7669 = vmatpush1.msra.mxu0 %v7646
    %7670 = vmatprep.subr.mxu0 0.0
    %7671 = vmatpush1.msra.mxu0 %v7647
    %7672 = vmatprep.subr.mxu0 0.0
    %7673 = vmatpush1.msra.mxu0 %v7648
    %7674 = vmatprep.subr.mxu0 0.0
    %7675 = vmatpush1.msra.mxu0 %v7649
    %7676 = vmatprep.subr.mxu0 0.0
    %7677 = vmatpush1.msra.mxu0 %v7650
    %7678 = vmatprep.subr.mxu0 0.0
    %7679 = vmatpush1.msra.mxu0 %v7651
    %7680 = vmatprep.subr.mxu0 0.0
    %7681 = vmatpush1.msra.mxu0 %v7652
    %7682 = vmatprep.subr.mxu0 0.0
    %7683 = vmatpush1.msra.mxu0 %v7653
    %7684 = vmatprep.subr.mxu0 0.0
    %7685 = vmatpush1.msra.mxu0 %v7654
    %7686 = vmatprep.subr.mxu0 0.0
    %7687 = vmatpush1.msra.mxu0 %v7655
    %7688 = vmatprep.subr.mxu0 0.0
    %7689 = vmatpush1.msra.mxu0 0.0
    %7690 = vmatprep.subr.mxu0 0.0
    %7691 = vmatpush1.msra.mxu0 0.0
    %7692 = vmatprep.subr.mxu0 0.0
    %7693 = vmatpush1.msra.mxu0 0.0
    %7694 = vmatprep.subr.mxu0 0.0
    %7695 = vmatpush1.msra.mxu0 0.0
    %7696 = vmatprep.subr.mxu0 0.0
    %7697 = vmatpush1.msra.mxu0 0.0
    %7698 = vmatprep.subr.mxu0 0.0
    %7699 = vmatpush1.msra.mxu0 0.0
    %7700 = vmatprep.subr.mxu0 0.0
    %7701 = vmatpush1.msra.mxu0 0.0
    %7702 = vmatprep.subr.mxu0 0.0
    %7703 = vmatpush1.msra.mxu0 0.0
    %7704 = vmatprep.subr.mxu0 0.0
    %7705 = vmatpush1.msra.mxu0 0.0
    %7706 = vmatprep.subr.mxu0 0.0
    %7707 = vmatpush1.msra.mxu0 0.0
    %7708 = vmatprep.subr.mxu0 0.0
    %7709 = vmatpush1.msra.mxu0 0.0
    %7710 = vmatprep.subr.mxu0 0.0
    %7711 = vmatpush1.msra.mxu0 0.0
    %7712 = vmatprep.subr.mxu0 0.0
    %7713 = vmatpush1.msra.mxu0 0.0
    %7714 = vmatprep.subr.mxu0 0.0
    %7715 = vmatpush1.msra.mxu0 0.0
    %7716 = vmatprep.subr.mxu0 0.0
    %7717 = vmatpush1.msra.mxu0 0.0
    %7718 = vmatprep.subr.mxu0 0.0
    %7719 = vmatpush1.msra.mxu0 0.0
    %7720 = vmatprep.mubr.f32.mxu0 0.0
    %7721 = vmatmul.mubr.f32.gmra.mrb[0].mxu0 %v7636
    %v7722 = vpop.f32.mrb[0].mxu0
    %v7723 = vadd.f32 0.0, %v7722
    %v7724 = vpop.f32.mrb[0].mxu0
    %7725 = vdwg.mxu0
    %v7726 = vadd.f32 %v7563, %v7723
    %s7727 = scalar_lea.vmem [#allocation8], 40
    %v7728 = vld [vmem:[%s7727] sm:$0xff]
    %v7730 = vsel %vm6916, %v7728, 0
    %7732 = vmatprep.subr.mxu0 0.0
    %7733 = vmatpush1.msra.mxu0 %v6911
    %7734 = vmatprep.subr.mxu0 0.0
    %7735 = vmatpush1.msra.mxu0 %v6912
    %7736 = vmatprep.subr.mxu0 0.0
    %7737 = vmatpush1.msra.mxu0 %v6913
    %7738 = vmatprep.subr.mxu0 0.0
    %7739 = vmatpush1.msra.mxu0 %v6914
    %7740 = vmatprep.subr.mxu0 0.0
    %7741 = vmatpush1.msra.mxu0 0.0
    %7742 = vmatprep.subr.mxu0 0.0
    %7743 = vmatpush1.msra.mxu0 0.0
    %7744 = vmatprep.subr.mxu0 0.0
    %7745 = vmatpush1.msra.mxu0 0.0
    %7746 = vmatprep.subr.mxu0 0.0
    %7747 = vmatpush1.msra.mxu0 0.0
    %7748 = vmatprep.subr.mxu0 0.0
    %7749 = vmatpush1.msra.mxu0 0.0
    %7750 = vmatprep.subr.mxu0 0.0
    %7751 = vmatpush1.msra.mxu0 0.0
    %7752 = vmatprep.subr.mxu0 0.0
    %7753 = vmatpush1.msra.mxu0 0.0
    %7754 = vmatprep.subr.mxu0 0.0
    %7755 = vmatpush1.msra.mxu0 0.0
    %7756 = vmatprep.subr.mxu0 0.0
    %7757 = vmatpush1.msra.mxu0 0.0
    %7758 = vmatprep.subr.mxu0 0.0
    %7759 = vmatpush1.msra.mxu0 0.0
    %7760 = vmatprep.subr.mxu0 0.0
    %7761 = vmatpush1.msra.mxu0 0.0
    %7762 = vmatprep.subr.mxu0 0.0
    %7763 = vmatpush1.msra.mxu0 0.0
    %7764 = vmatprep.subr.mxu0 0.0
    %7765 = vmatpush1.msra.mxu0 0.0
    %7766 = vmatprep.subr.mxu0 0.0
    %7767 = vmatpush1.msra.mxu0 0.0
    %7768 = vmatprep.subr.mxu0 0.0
    %7769 = vmatpush1.msra.mxu0 0.0
    %7770 = vmatprep.subr.mxu0 0.0
    %7771 = vmatpush1.msra.mxu0 0.0
    %7772 = vmatprep.subr.mxu0 0.0
    %7773 = vmatpush1.msra.mxu0 0.0
    %7774 = vmatprep.subr.mxu0 0.0
    %7775 = vmatpush1.msra.mxu0 0.0
    %7776 = vmatprep.subr.mxu0 0.0
    %7777 = vmatpush1.msra.mxu0 0.0
    %7778 = vmatprep.subr.mxu0 0.0
    %7779 = vmatpush1.msra.mxu0 0.0
    %7780 = vmatprep.subr.mxu0 0.0
    %7781 = vmatpush1.msra.mxu0 0.0
    %7782 = vmatprep.subr.mxu0 0.0
    %7783 = vmatpush1.msra.mxu0 0.0
    %7784 = vmatprep.subr.mxu0 0.0
    %7785 = vmatpush1.msra.mxu0 0.0
    %7786 = vmatprep.subr.mxu0 0.0
    %7787 = vmatpush1.msra.mxu0 0.0
    %7788 = vmatprep.subr.mxu0 0.0
    %7789 = vmatpush1.msra.mxu0 0.0
    %7790 = vmatprep.subr.mxu0 0.0
    %7791 = vmatpush1.msra.mxu0 0.0
    %7792 = vmatprep.subr.mxu0 0.0
    %7793 = vmatpush1.msra.mxu0 0.0
    %7794 = vmatprep.subr.mxu0 0.0
    %7795 = vmatpush1.msra.mxu0 0.0
    %7796 = vmatprep.mubr.f32.mxu0 0.0
    %7797 = vmatmul.mubr.f32.gmra.mrb[0].mxu0 %v7730
    %v7798 = vpop.f32.mrb[0].mxu0
    %v7799 = vadd.f32 0.0, %v7798
    %v7800 = vpop.f32.mrb[0].mxu0
    %7801 = vdwg.mxu0
    %s7802 = scalar_lea.vmem [#allocation13], 640
    %v7803 = vld [vmem:[%s7802] sm:$0xff]
    %v7804 = vld [vmem:[%s7802 + $0x8] sm:$0xff]
    %v7805 = vld [vmem:[%s7802 + $0x10] sm:$0xff]
    %v7806 = vld [vmem:[%s7802 + $0x18] sm:$0xff]
    %v7807 = vld [vmem:[%s7802 + $0x20] sm:$0xff]
    %v7808 = vld [vmem:[%s7802 + $0x28] sm:$0xff]
    %v7809 = vld [vmem:[%s7802 + $0x30] sm:$0xff]
    %v7810 = vld [vmem:[%s7802 + $0x38] sm:$0xff]
    %v7811 = vld [vmem:[%s7802 + $0x40] sm:$0xff]
    %v7812 = vld [vmem:[%s7802 + $0x48] sm:$0xff]
    %v7813 = vld [vmem:[%s7802 + $0x50] sm:$0xff]
    %v7814 = vld [vmem:[%s7802 + $0x58] sm:$0xff]
    %v7815 = vld [vmem:[%s7802 + $0x60] sm:$0xff]
    %v7816 = vld [vmem:[%s7802 + $0x68] sm:$0xff]
    %v7817 = vld [vmem:[%s7802 + $0x70] sm:$0xff]
    %v7818 = vld [vmem:[%s7802 + $0x78] sm:$0xff]
    %7819 = vmatprep.subr.mxu0 0.0
    %7820 = vmatpush1.msra.mxu0 %v7803
    %7821 = vmatprep.subr.mxu0 0.0
    %7822 = vmatpush1.msra.mxu0 %v7804
    %7823 = vmatprep.subr.mxu0 0.0
    %7824 = vmatpush1.msra.mxu0 %v7805
    %7825 = vmatprep.subr.mxu0 0.0
    %7826 = vmatpush1.msra.mxu0 %v7806
    %7827 = vmatprep.subr.mxu0 0.0
    %7828 = vmatpush1.msra.mxu0 %v7807
    %7829 = vmatprep.subr.mxu0 0.0
    %7830 = vmatpush1.msra.mxu0 %v7808
    %7831 = vmatprep.subr.mxu0 0.0
    %7832 = vmatpush1.msra.mxu0 %v7809
    %7833 = vmatprep.subr.mxu0 0.0
    %7834 = vmatpush1.msra.mxu0 %v7810
    %7835 = vmatprep.subr.mxu0 0.0
    %7836 = vmatpush1.msra.mxu0 %v7811
    %7837 = vmatprep.subr.mxu0 0.0
    %7838 = vmatpush1.msra.mxu0 %v7812
    %7839 = vmatprep.subr.mxu0 0.0
    %7840 = vmatpush1.msra.mxu0 %v7813
    %7841 = vmatprep.subr.mxu0 0.0
    %7842 = vmatpush1.msra.mxu0 %v7814
    %7843 = vmatprep.subr.mxu0 0.0
    %7844 = vmatpush1.msra.mxu0 %v7815
    %7845 = vmatprep.subr.mxu0 0.0
    %7846 = vmatpush1.msra.mxu0 %v7816
    %7847 = vmatprep.subr.mxu0 0.0
    %7848 = vmatpush1.msra.mxu0 %v7817
    %7849 = vmatprep.subr.mxu0 0.0
    %7850 = vmatpush1.msra.mxu0 %v7818
    %7851 = vmatprep.subr.mxu0 0.0
    %7852 = vmatpush1.msra.mxu0 0.0
    %7853 = vmatprep.subr.mxu0 0.0
    %7854 = vmatpush1.msra.mxu0 0.0
    %7855 = vmatprep.subr.mxu0 0.0
    %7856 = vmatpush1.msra.mxu0 0.0
    %7857 = vmatprep.subr.mxu0 0.0
    %7858 = vmatpush1.msra.mxu0 0.0
    %7859 = vmatprep.subr.mxu0 0.0
    %7860 = vmatpush1.msra.mxu0 0.0
    %7861 = vmatprep.subr.mxu0 0.0
    %7862 = vmatpush1.msra.mxu0 0.0
    %7863 = vmatprep.subr.mxu0 0.0
    %7864 = vmatpush1.msra.mxu0 0.0
    %7865 = vmatprep.subr.mxu0 0.0
    %7866 = vmatpush1.msra.mxu0 0.0
    %7867 = vmatprep.subr.mxu0 0.0
    %7868 = vmatpush1.msra.mxu0 0.0
    %7869 = vmatprep.subr.mxu0 0.0
    %7870 = vmatpush1.msra.mxu0 0.0
    %7871 = vmatprep.subr.mxu0 0.0
    %7872 = vmatpush1.msra.mxu0 0.0
    %7873 = vmatprep.subr.mxu0 0.0
    %7874 = vmatpush1.msra.mxu0 0.0
    %7875 = vmatprep.subr.mxu0 0.0
    %7876 = vmatpush1.msra.mxu0 0.0
    %7877 = vmatprep.subr.mxu0 0.0
    %7878 = vmatpush1.msra.mxu0 0.0
    %7879 = vmatprep.subr.mxu0 0.0
    %7880 = vmatpush1.msra.mxu0 0.0
    %7881 = vmatprep.subr.mxu0 0.0
    %7882 = vmatpush1.msra.mxu0 0.0
    %7883 = vmatprep.mubr.f32.mxu0 0.0
    %7884 = vmatmul.mubr.f32.gmra.mrb[0].mxu0 %v7799
    %v7885 = vpop.f32.mrb[0].mxu0
    %v7886 = vadd.f32 0.0, %v7885
    %v7887 = vpop.f32.mrb[0].mxu0
    %7888 = vdwg.mxu0
    %v7889 = vadd.f32 %v7726, %v7886
    %s7890 = scalar_lea.vmem [#allocation8], 48
    %v7891 = vld [vmem:[%s7890] sm:$0xff]
    %v7893 = vsel %vm6916, %v7891, 0
    %7895 = vmatprep.subr.mxu0 0.0
    %7896 = vmatpush1.msra.mxu0 %v6911
    %7897 = vmatprep.subr.mxu0 0.0
    %7898 = vmatpush1.msra.mxu0 %v6912
    %7899 = vmatprep.subr.mxu0 0.0
    %7900 = vmatpush1.msra.mxu0 %v6913
    %7901 = vmatprep.subr.mxu0 0.0
    %7902 = vmatpush1.msra.mxu0 %v6914
    %7903 = vmatprep.subr.mxu0 0.0
    %7904 = vmatpush1.msra.mxu0 0.0
    %7905 = vmatprep.subr.mxu0 0.0
    %7906 = vmatpush1.msra.mxu0 0.0
    %7907 = vmatprep.subr.mxu0 0.0
    %7908 = vmatpush1.msra.mxu0 0.0
    %7909 = vmatprep.subr.mxu0 0.0
    %7910 = vmatpush1.msra.mxu0 0.0
    %7911 = vmatprep.subr.mxu0 0.0
    %7912 = vmatpush1.msra.mxu0 0.0
    %7913 = vmatprep.subr.mxu0 0.0
    %7914 = vmatpush1.msra.mxu0 0.0
    %7915 = vmatprep.subr.mxu0 0.0
    %7916 = vmatpush1.msra.mxu0 0.0
    %7917 = vmatprep.subr.mxu0 0.0
    %7918 = vmatpush1.msra.mxu0 0.0
    %7919 = vmatprep.subr.mxu0 0.0
    %7920 = vmatpush1.msra.mxu0 0.0
    %7921 = vmatprep.subr.mxu0 0.0
    %7922 = vmatpush1.msra.mxu0 0.0
    %7923 = vmatprep.subr.mxu0 0.0
    %7924 = vmatpush1.msra.mxu0 0.0
    %7925 = vmatprep.subr.mxu0 0.0
    %7926 = vmatpush1.msra.mxu0 0.0
    %7927 = vmatprep.subr.mxu0 0.0
    %7928 = vmatpush1.msra.mxu0 0.0
    %7929 = vmatprep.subr.mxu0 0.0
    %7930 = vmatpush1.msra.mxu0 0.0
    %7931 = vmatprep.subr.mxu0 0.0
    %7932 = vmatpush1.msra.mxu0 0.0
    %7933 = vmatprep.subr.mxu0 0.0
    %7934 = vmatpush1.msra.mxu0 0.0
    %7935 = vmatprep.subr.mxu0 0.0
    %7936 = vmatpush1.msra.mxu0 0.0
    %7937 = vmatprep.subr.mxu0 0.0
    %7938 = vmatpush1.msra.mxu0 0.0
    %7939 = vmatprep.subr.mxu0 0.0
    %7940 = vmatpush1.msra.mxu0 0.0
    %7941 = vmatprep.subr.mxu0 0.0
    %7942 = vmatpush1.msra.mxu0 0.0
    %7943 = vmatprep.subr.mxu0 0.0
    %7944 = vmatpush1.msra.mxu0 0.0
    %7945 = vmatprep.subr.mxu0 0.0
    %7946 = vmatpush1.msra.mxu0 0.0
    %7947 = vmatprep.subr.mxu0 0.0
    %7948 = vmatpush1.msra.mxu0 0.0
    %7949 = vmatprep.subr.mxu0 0.0
    %7950 = vmatpush1.msra.mxu0 0.0
    %7951 = vmatprep.subr.mxu0 0.0
    %7952 = vmatpush1.msra.mxu0 0.0
    %7953 = vmatprep.subr.mxu0 0.0
    %7954 = vmatpush1.msra.mxu0 0.0
    %7955 = vmatprep.subr.mxu0 0.0
    %7956 = vmatpush1.msra.mxu0 0.0
    %7957 = vmatprep.subr.mxu0 0.0
    %7958 = vmatpush1.msra.mxu0 0.0
    %7959 = vmatprep.mubr.f32.mxu0 0.0
    %7960 = vmatmul.mubr.f32.gmra.mrb[0].mxu0 %v7893
    %v7961 = vpop.f32.mrb[0].mxu0
    %v7962 = vadd.f32 0.0, %v7961
    %v7963 = vpop.f32.mrb[0].mxu0
    %7964 = vdwg.mxu0
    %s7965 = scalar_lea.vmem [#allocation13], 768
    %v7966 = vld [vmem:[%s7965] sm:$0xff]
    %v7967 = vld [vmem:[%s7965 + $0x8] sm:$0xff]
    %v7968 = vld [vmem:[%s7965 + $0x10] sm:$0xff]
    %v7969 = vld [vmem:[%s7965 + $0x18] sm:$0xff]
    %v7970 = vld [vmem:[%s7965 + $0x20] sm:$0xff]
    %v7971 = vld [vmem:[%s7965 + $0x28] sm:$0xff]
    %v7972 = vld [vmem:[%s7965 + $0x30] sm:$0xff]
    %v7973 = vld [vmem:[%s7965 + $0x38] sm:$0xff]
    %v7974 = vld [vmem:[%s7965 + $0x40] sm:$0xff]
    %v7975 = vld [vmem:[%s7965 + $0x48] sm:$0xff]
    %v7976 = vld [vmem:[%s7965 + $0x50] sm:$0xff]
    %v7977 = vld [vmem:[%s7965 + $0x58] sm:$0xff]
    %v7978 = vld [vmem:[%s7965 + $0x60] sm:$0xff]
    %v7979 = vld [vmem:[%s7965 + $0x68] sm:$0xff]
    %v7980 = vld [vmem:[%s7965 + $0x70] sm:$0xff]
    %v7981 = vld [vmem:[%s7965 + $0x78] sm:$0xff]
    %7982 = vmatprep.subr.mxu0 0.0
    %7983 = vmatpush1.msra.mxu0 %v7966
    %7984 = vmatprep.subr.mxu0 0.0
    %7985 = vmatpush1.msra.mxu0 %v7967
    %7986 = vmatprep.subr.mxu0 0.0
    %7987 = vmatpush1.msra.mxu0 %v7968
    %7988 = vmatprep.subr.mxu0 0.0
    %7989 = vmatpush1.msra.mxu0 %v7969
    %7990 = vmatprep.subr.mxu0 0.0
    %7991 = vmatpush1.msra.mxu0 %v7970
    %7992 = vmatprep.subr.mxu0 0.0
    %7993 = vmatpush1.msra.mxu0 %v7971
    %7994 = vmatprep.subr.mxu0 0.0
    %7995 = vmatpush1.msra.mxu0 %v7972
    %7996 = vmatprep.subr.mxu0 0.0
    %7997 = vmatpush1.msra.mxu0 %v7973
    %7998 = vmatprep.subr.mxu0 0.0
    %7999 = vmatpush1.msra.mxu0 %v7974
    %8000 = vmatprep.subr.mxu0 0.0
    %8001 = vmatpush1.msra.mxu0 %v7975
    %8002 = vmatprep.subr.mxu0 0.0
    %8003 = vmatpush1.msra.mxu0 %v7976
    %8004 = vmatprep.subr.mxu0 0.0
    %8005 = vmatpush1.msra.mxu0 %v7977
    %8006 = vmatprep.subr.mxu0 0.0
    %8007 = vmatpush1.msra.mxu0 %v7978
    %8008 = vmatprep.subr.mxu0 0.0
    %8009 = vmatpush1.msra.mxu0 %v7979
    %8010 = vmatprep.subr.mxu0 0.0
    %8011 = vmatpush1.msra.mxu0 %v7980
    %8012 = vmatprep.subr.mxu0 0.0
    %8013 = vmatpush1.msra.mxu0 %v7981
    %8014 = vmatprep.subr.mxu0 0.0
    %8015 = vmatpush1.msra.mxu0 0.0
    %8016 = vmatprep.subr.mxu0 0.0
    %8017 = vmatpush1.msra.mxu0 0.0
    %8018 = vmatprep.subr.mxu0 0.0
    %8019 = vmatpush1.msra.mxu0 0.0
    %8020 = vmatprep.subr.mxu0 0.0
    %8021 = vmatpush1.msra.mxu0 0.0
    %8022 = vmatprep.subr.mxu0 0.0
    %8023 = vmatpush1.msra.mxu0 0.0
    %8024 = vmatprep.subr.mxu0 0.0
    %8025 = vmatpush1.msra.mxu0 0.0
    %8026 = vmatprep.subr.mxu0 0.0
    %8027 = vmatpush1.msra.mxu0 0.0
    %8028 = vmatprep.subr.mxu0 0.0
    %8029 = vmatpush1.msra.mxu0 0.0
    %8030 = vmatprep.subr.mxu0 0.0
    %8031 = vmatpush1.msra.mxu0 0.0
    %8032 = vmatprep.subr.mxu0 0.0
    %8033 = vmatpush1.msra.mxu0 0.0
    %8034 = vmatprep.subr.mxu0 0.0
    %8035 = vmatpush1.msra.mxu0 0.0
    %8036 = vmatprep.subr.mxu0 0.0
    %8037 = vmatpush1.msra.mxu0 0.0
    %8038 = vmatprep.subr.mxu0 0.0
    %8039 = vmatpush1.msra.mxu0 0.0
    %8040 = vmatprep.subr.mxu0 0.0
    %8041 = vmatpush1.msra.mxu0 0.0
    %8042 = vmatprep.subr.mxu0 0.0
    %8043 = vmatpush1.msra.mxu0 0.0
    %8044 = vmatprep.subr.mxu0 0.0
    %8045 = vmatpush1.msra.mxu0 0.0
    %8046 = vmatprep.mubr.f32.mxu0 0.0
    %8047 = vmatmul.mubr.f32.gmra.mrb[0].mxu0 %v7962
    %v8048 = vpop.f32.mrb[0].mxu0
    %v8049 = vadd.f32 0.0, %v8048
    %v8050 = vpop.f32.mrb[0].mxu0
    %8051 = vdwg.mxu0
    %v8052 = vadd.f32 %v7889, %v8049
    %s8053 = scalar_lea.vmem [#allocation8], 56
    %v8054 = vld [vmem:[%s8053] sm:$0xff]
    %v8056 = vsel %vm6916, %v8054, 0
    %8058 = vmatprep.subr.mxu0 0.0
    %8059 = vmatpush1.msra.mxu0 %v6911
    %8060 = vmatprep.subr.mxu0 0.0
    %8061 = vmatpush1.msra.mxu0 %v6912
    %8062 = vmatprep.subr.mxu0 0.0
    %8063 = vmatpush1.msra.mxu0 %v6913
    %8064 = vmatprep.subr.mxu0 0.0
    %8065 = vmatpush1.msra.mxu0 %v6914
    %8066 = vmatprep.subr.mxu0 0.0
    %8067 = vmatpush1.msra.mxu0 0.0
    %8068 = vmatprep.subr.mxu0 0.0
    %8069 = vmatpush1.msra.mxu0 0.0
    %8070 = vmatprep.subr.mxu0 0.0
    %8071 = vmatpush1.msra.mxu0 0.0
    %8072 = vmatprep.subr.mxu0 0.0
    %8073 = vmatpush1.msra.mxu0 0.0
    %8074 = vmatprep.subr.mxu0 0.0
    %8075 = vmatpush1.msra.mxu0 0.0
    %8076 = vmatprep.subr.mxu0 0.0
    %8077 = vmatpush1.msra.mxu0 0.0
    %8078 = vmatprep.subr.mxu0 0.0
    %8079 = vmatpush1.msra.mxu0 0.0
    %8080 = vmatprep.subr.mxu0 0.0
    %8081 = vmatpush1.msra.mxu0 0.0
    %8082 = vmatprep.subr.mxu0 0.0
    %8083 = vmatpush1.msra.mxu0 0.0
    %8084 = vmatprep.subr.mxu0 0.0
    %8085 = vmatpush1.msra.mxu0 0.0
    %8086 = vmatprep.subr.mxu0 0.0
    %8087 = vmatpush1.msra.mxu0 0.0
    %8088 = vmatprep.subr.mxu0 0.0
    %8089 = vmatpush1.msra.mxu0 0.0
    %8090 = vmatprep.subr.mxu0 0.0
    %8091 = vmatpush1.msra.mxu0 0.0
    %8092 = vmatprep.subr.mxu0 0.0
    %8093 = vmatpush1.msra.mxu0 0.0
    %8094 = vmatprep.subr.mxu0 0.0
    %8095 = vmatpush1.msra.mxu0 0.0
    %8096 = vmatprep.subr.mxu0 0.0
    %8097 = vmatpush1.msra.mxu0 0.0
    %8098 = vmatprep.subr.mxu0 0.0
    %8099 = vmatpush1.msra.mxu0 0.0
    %8100 = vmatprep.subr.mxu0 0.0
    %8101 = vmatpush1.msra.mxu0 0.0
    %8102 = vmatprep.subr.mxu0 0.0
    %8103 = vmatpush1.msra.mxu0 0.0
    %8104 = vmatprep.subr.mxu0 0.0
    %8105 = vmatpush1.msra.mxu0 0.0
    %8106 = vmatprep.subr.mxu0 0.0
    %8107 = vmatpush1.msra.mxu0 0.0
    %8108 = vmatprep.subr.mxu0 0.0
    %8109 = vmatpush1.msra.mxu0 0.0
    %8110 = vmatprep.subr.mxu0 0.0
    %8111 = vmatpush1.msra.mxu0 0.0
    %8112 = vmatprep.subr.mxu0 0.0
    %8113 = vmatpush1.msra.mxu0 0.0
    %8114 = vmatprep.subr.mxu0 0.0
    %8115 = vmatpush1.msra.mxu0 0.0
    %8116 = vmatprep.subr.mxu0 0.0
    %8117 = vmatpush1.msra.mxu0 0.0
    %8118 = vmatprep.subr.mxu0 0.0
    %8119 = vmatpush1.msra.mxu0 0.0
    %8120 = vmatprep.subr.mxu0 0.0
    %8121 = vmatpush1.msra.mxu0 0.0
    %8122 = vmatprep.mubr.f32.mxu0 0.0
    %8123 = vmatmul.mubr.f32.gmra.mrb[0].mxu0 %v8056
    %v8124 = vpop.f32.mrb[0].mxu0
    %v8125 = vadd.f32 0.0, %v8124
    %v8126 = vpop.f32.mrb[0].mxu0
    %8127 = vdwg.mxu0
    %s8128 = scalar_lea.vmem [#allocation13], 896
    %v8129 = vld [vmem:[%s8128] sm:$0xff]
    %v8130 = vld [vmem:[%s8128 + $0x8] sm:$0xff]
    %v8131 = vld [vmem:[%s8128 + $0x10] sm:$0xff]
    %v8132 = vld [vmem:[%s8128 + $0x18] sm:$0xff]
    %v8133 = vld [vmem:[%s8128 + $0x20] sm:$0xff]
    %v8134 = vld [vmem:[%s8128 + $0x28] sm:$0xff]
    %v8135 = vld [vmem:[%s8128 + $0x30] sm:$0xff]
    %v8136 = vld [vmem:[%s8128 + $0x38] sm:$0xff]
    %v8137 = vld [vmem:[%s8128 + $0x40] sm:$0xff]
    %v8138 = vld [vmem:[%s8128 + $0x48] sm:$0xff]
    %v8139 = vld [vmem:[%s8128 + $0x50] sm:$0xff]
    %v8140 = vld [vmem:[%s8128 + $0x58] sm:$0xff]
    %v8141 = vld [vmem:[%s8128 + $0x60] sm:$0xff]
    %v8142 = vld [vmem:[%s8128 + $0x68] sm:$0xff]
    %v8143 = vld [vmem:[%s8128 + $0x70] sm:$0xff]
    %v8144 = vld [vmem:[%s8128 + $0x78] sm:$0xff]
    %8145 = vmatprep.subr.mxu0 0.0
    %8146 = vmatpush1.msra.mxu0 %v8129
    %8147 = vmatprep.subr.mxu0 0.0
    %8148 = vmatpush1.msra.mxu0 %v8130
    %8149 = vmatprep.subr.mxu0 0.0
    %8150 = vmatpush1.msra.mxu0 %v8131
    %8151 = vmatprep.subr.mxu0 0.0
    %8152 = vmatpush1.msra.mxu0 %v8132
    %8153 = vmatprep.subr.mxu0 0.0
    %8154 = vmatpush1.msra.mxu0 %v8133
    %8155 = vmatprep.subr.mxu0 0.0
    %8156 = vmatpush1.msra.mxu0 %v8134
    %8157 = vmatprep.subr.mxu0 0.0
    %8158 = vmatpush1.msra.mxu0 %v8135
    %8159 = vmatprep.subr.mxu0 0.0
    %8160 = vmatpush1.msra.mxu0 %v8136
    %8161 = vmatprep.subr.mxu0 0.0
    %8162 = vmatpush1.msra.mxu0 %v8137
    %8163 = vmatprep.subr.mxu0 0.0
    %8164 = vmatpush1.msra.mxu0 %v8138
    %8165 = vmatprep.subr.mxu0 0.0
    %8166 = vmatpush1.msra.mxu0 %v8139
    %8167 = vmatprep.subr.mxu0 0.0
    %8168 = vmatpush1.msra.mxu0 %v8140
    %8169 = vmatprep.subr.mxu0 0.0
    %8170 = vmatpush1.msra.mxu0 %v8141
    %8171 = vmatprep.subr.mxu0 0.0
    %8172 = vmatpush1.msra.mxu0 %v8142
    %8173 = vmatprep.subr.mxu0 0.0
    %8174 = vmatpush1.msra.mxu0 %v8143
    %8175 = vmatprep.subr.mxu0 0.0
    %8176 = vmatpush1.msra.mxu0 %v8144
    %8177 = vmatprep.subr.mxu0 0.0
    %8178 = vmatpush1.msra.mxu0 0.0
    %8179 = vmatprep.subr.mxu0 0.0
    %8180 = vmatpush1.msra.mxu0 0.0
    %8181 = vmatprep.subr.mxu0 0.0
    %8182 = vmatpush1.msra.mxu0 0.0
    %8183 = vmatprep.subr.mxu0 0.0
    %8184 = vmatpush1.msra.mxu0 0.0
    %8185 = vmatprep.subr.mxu0 0.0
    %8186 = vmatpush1.msra.mxu0 0.0
    %8187 = vmatprep.subr.mxu0 0.0
    %8188 = vmatpush1.msra.mxu0 0.0
    %8189 = vmatprep.subr.mxu0 0.0
    %8190 = vmatpush1.msra.mxu0 0.0
    %8191 = vmatprep.subr.mxu0 0.0
    %8192 = vmatpush1.msra.mxu0 0.0
    %8193 = vmatprep.subr.mxu0 0.0
    %8194 = vmatpush1.msra.mxu0 0.0
    %8195 = vmatprep.subr.mxu0 0.0
    %8196 = vmatpush1.msra.mxu0 0.0
    %8197 = vmatprep.subr.mxu0 0.0
    %8198 = vmatpush1.msra.mxu0 0.0
    %8199 = vmatprep.subr.mxu0 0.0
    %8200 = vmatpush1.msra.mxu0 0.0
    %8201 = vmatprep.subr.mxu0 0.0
    %8202 = vmatpush1.msra.mxu0 0.0
    %8203 = vmatprep.subr.mxu0 0.0
    %8204 = vmatpush1.msra.mxu0 0.0
    %8205 = vmatprep.subr.mxu0 0.0
    %8206 = vmatpush1.msra.mxu0 0.0
    %8207 = vmatprep.subr.mxu0 0.0
    %8208 = vmatpush1.msra.mxu0 0.0
    %8209 = vmatprep.mubr.f32.mxu0 0.0
    %8210 = vmatmul.mubr.f32.gmra.mrb[0].mxu0 %v8125
    %v8211 = vpop.f32.mrb[0].mxu0
    %v8212 = vadd.f32 0.0, %v8211
    %v8213 = vpop.f32.mrb[0].mxu0
    %8214 = vdwg.mxu0
    %v8215 = vadd.f32 %v8052, %v8212
    %s8216 = scalar_lea.vmem [#allocation8], 64
    %v8217 = vld [vmem:[%s8216] sm:$0xff]
    %v8219 = vsel %vm6916, %v8217, 0
    %8221 = vmatprep.subr.mxu0 0.0
    %8222 = vmatpush1.msra.mxu0 %v6911
    %8223 = vmatprep.subr.mxu0 0.0
    %8224 = vmatpush1.msra.mxu0 %v6912
    %8225 = vmatprep.subr.mxu0 0.0
    %8226 = vmatpush1.msra.mxu0 %v6913
    %8227 = vmatprep.subr.mxu0 0.0
    %8228 = vmatpush1.msra.mxu0 %v6914
    %8229 = vmatprep.subr.mxu0 0.0
    %8230 = vmatpush1.msra.mxu0 0.0
    %8231 = vmatprep.subr.mxu0 0.0
    %8232 = vmatpush1.msra.mxu0 0.0
    %8233 = vmatprep.subr.mxu0 0.0
    %8234 = vmatpush1.msra.mxu0 0.0
    %8235 = vmatprep.subr.mxu0 0.0
    %8236 = vmatpush1.msra.mxu0 0.0
    %8237 = vmatprep.subr.mxu0 0.0
    %8238 = vmatpush1.msra.mxu0 0.0
    %8239 = vmatprep.subr.mxu0 0.0
    %8240 = vmatpush1.msra.mxu0 0.0
    %8241 = vmatprep.subr.mxu0 0.0
    %8242 = vmatpush1.msra.mxu0 0.0
    %8243 = vmatprep.subr.mxu0 0.0
    %8244 = vmatpush1.msra.mxu0 0.0
    %8245 = vmatprep.subr.mxu0 0.0
    %8246 = vmatpush1.msra.mxu0 0.0
    %8247 = vmatprep.subr.mxu0 0.0
    %8248 = vmatpush1.msra.mxu0 0.0
    %8249 = vmatprep.subr.mxu0 0.0
    %8250 = vmatpush1.msra.mxu0 0.0
    %8251 = vmatprep.subr.mxu0 0.0
    %8252 = vmatpush1.msra.mxu0 0.0
    %8253 = vmatprep.subr.mxu0 0.0
    %8254 = vmatpush1.msra.mxu0 0.0
    %8255 = vmatprep.subr.mxu0 0.0
    %8256 = vmatpush1.msra.mxu0 0.0
    %8257 = vmatprep.subr.mxu0 0.0
    %8258 = vmatpush1.msra.mxu0 0.0
    %8259 = vmatprep.subr.mxu0 0.0
    %8260 = vmatpush1.msra.mxu0 0.0
    %8261 = vmatprep.subr.mxu0 0.0
    %8262 = vmatpush1.msra.mxu0 0.0
    %8263 = vmatprep.subr.mxu0 0.0
    %8264 = vmatpush1.msra.mxu0 0.0
    %8265 = vmatprep.subr.mxu0 0.0
    %8266 = vmatpush1.msra.mxu0 0.0
    %8267 = vmatprep.subr.mxu0 0.0
    %8268 = vmatpush1.msra.mxu0 0.0
    %8269 = vmatprep.subr.mxu0 0.0
    %8270 = vmatpush1.msra.mxu0 0.0
    %8271 = vmatprep.subr.mxu0 0.0
    %8272 = vmatpush1.msra.mxu0 0.0
    %8273 = vmatprep.subr.mxu0 0.0
    %8274 = vmatpush1.msra.mxu0 0.0
    %8275 = vmatprep.subr.mxu0 0.0
    %8276 = vmatpush1.msra.mxu0 0.0
    %8277 = vmatprep.subr.mxu0 0.0
    %8278 = vmatpush1.msra.mxu0 0.0
    %8279 = vmatprep.subr.mxu0 0.0
    %8280 = vmatpush1.msra.mxu0 0.0
    %8281 = vmatprep.subr.mxu0 0.0
    %8282 = vmatpush1.msra.mxu0 0.0
    %8283 = vmatprep.subr.mxu0 0.0
    %8284 = vmatpush1.msra.mxu0 0.0
    %8285 = vmatprep.mubr.f32.mxu0 0.0
    %8286 = vmatmul.mubr.f32.gmra.mrb[0].mxu0 %v8219
    %v8287 = vpop.f32.mrb[0].mxu0
    %v8288 = vadd.f32 0.0, %v8287
    %v8289 = vpop.f32.mrb[0].mxu0
    %8290 = vdwg.mxu0
    %s8291 = scalar_lea.vmem [#allocation13], 1024
    %v8292 = vld [vmem:[%s8291] sm:$0xff]
    %v8293 = vld [vmem:[%s8291 + $0x8] sm:$0xff]
    %v8294 = vld [vmem:[%s8291 + $0x10] sm:$0xff]
    %v8295 = vld [vmem:[%s8291 + $0x18] sm:$0xff]
    %v8296 = vld [vmem:[%s8291 + $0x20] sm:$0xff]
    %v8297 = vld [vmem:[%s8291 + $0x28] sm:$0xff]
    %v8298 = vld [vmem:[%s8291 + $0x30] sm:$0xff]
    %v8299 = vld [vmem:[%s8291 + $0x38] sm:$0xff]
    %v8300 = vld [vmem:[%s8291 + $0x40] sm:$0xff]
    %v8301 = vld [vmem:[%s8291 + $0x48] sm:$0xff]
    %v8302 = vld [vmem:[%s8291 + $0x50] sm:$0xff]
    %v8303 = vld [vmem:[%s8291 + $0x58] sm:$0xff]
    %v8304 = vld [vmem:[%s8291 + $0x60] sm:$0xff]
    %v8305 = vld [vmem:[%s8291 + $0x68] sm:$0xff]
    %v8306 = vld [vmem:[%s8291 + $0x70] sm:$0xff]
    %v8307 = vld [vmem:[%s8291 + $0x78] sm:$0xff]
    %8308 = vmatprep.subr.mxu0 0.0
    %8309 = vmatpush1.msra.mxu0 %v8292
    %8310 = vmatprep.subr.mxu0 0.0
    %8311 = vmatpush1.msra.mxu0 %v8293
    %8312 = vmatprep.subr.mxu0 0.0
    %8313 = vmatpush1.msra.mxu0 %v8294
    %8314 = vmatprep.subr.mxu0 0.0
    %8315 = vmatpush1.msra.mxu0 %v8295
    %8316 = vmatprep.subr.mxu0 0.0
    %8317 = vmatpush1.msra.mxu0 %v8296
    %8318 = vmatprep.subr.mxu0 0.0
    %8319 = vmatpush1.msra.mxu0 %v8297
    %8320 = vmatprep.subr.mxu0 0.0
    %8321 = vmatpush1.msra.mxu0 %v8298
    %8322 = vmatprep.subr.mxu0 0.0
    %8323 = vmatpush1.msra.mxu0 %v8299
    %8324 = vmatprep.subr.mxu0 0.0
    %8325 = vmatpush1.msra.mxu0 %v8300
    %8326 = vmatprep.subr.mxu0 0.0
    %8327 = vmatpush1.msra.mxu0 %v8301
    %8328 = vmatprep.subr.mxu0 0.0
    %8329 = vmatpush1.msra.mxu0 %v8302
    %8330 = vmatprep.subr.mxu0 0.0
    %8331 = vmatpush1.msra.mxu0 %v8303
    %8332 = vmatprep.subr.mxu0 0.0
    %8333 = vmatpush1.msra.mxu0 %v8304
    %8334 = vmatprep.subr.mxu0 0.0
    %8335 = vmatpush1.msra.mxu0 %v8305
    %8336 = vmatprep.subr.mxu0 0.0
    %8337 = vmatpush1.msra.mxu0 %v8306
    %8338 = vmatprep.subr.mxu0 0.0
    %8339 = vmatpush1.msra.mxu0 %v8307
    %8340 = vmatprep.subr.mxu0 0.0
    %8341 = vmatpush1.msra.mxu0 0.0
    %8342 = vmatprep.subr.mxu0 0.0
    %8343 = vmatpush1.msra.mxu0 0.0
    %8344 = vmatprep.subr.mxu0 0.0
    %8345 = vmatpush1.msra.mxu0 0.0
    %8346 = vmatprep.subr.mxu0 0.0
    %8347 = vmatpush1.msra.mxu0 0.0
    %8348 = vmatprep.subr.mxu0 0.0
    %8349 = vmatpush1.msra.mxu0 0.0
    %8350 = vmatprep.subr.mxu0 0.0
    %8351 = vmatpush1.msra.mxu0 0.0
    %8352 = vmatprep.subr.mxu0 0.0
    %8353 = vmatpush1.msra.mxu0 0.0
    %8354 = vmatprep.subr.mxu0 0.0
    %8355 = vmatpush1.msra.mxu0 0.0
    %8356 = vmatprep.subr.mxu0 0.0
    %8357 = vmatpush1.msra.mxu0 0.0
    %8358 = vmatprep.subr.mxu0 0.0
    %8359 = vmatpush1.msra.mxu0 0.0
    %8360 = vmatprep.subr.mxu0 0.0
    %8361 = vmatpush1.msra.mxu0 0.0
    %8362 = vmatprep.subr.mxu0 0.0
    %8363 = vmatpush1.msra.mxu0 0.0
    %8364 = vmatprep.subr.mxu0 0.0
    %8365 = vmatpush1.msra.mxu0 0.0
    %8366 = vmatprep.subr.mxu0 0.0
    %8367 = vmatpush1.msra.mxu0 0.0
    %8368 = vmatprep.subr.mxu0 0.0
    %8369 = vmatpush1.msra.mxu0 0.0
    %8370 = vmatprep.subr.mxu0 0.0
    %8371 = vmatpush1.msra.mxu0 0.0
    %8372 = vmatprep.mubr.f32.mxu0 0.0
    %8373 = vmatmul.mubr.f32.gmra.mrb[0].mxu0 %v8288
    %v8374 = vpop.f32.mrb[0].mxu0
    %v8375 = vadd.f32 0.0, %v8374
    %v8376 = vpop.f32.mrb[0].mxu0
    %8377 = vdwg.mxu0
    %v8378 = vadd.f32 %v8215, %v8375
    %v8379 = vld [vmem:[#allocation19] sm:$0x1]
    %v8381 = vlaneseq
    %v8382 = vshrl.u32 %v8381, 7
    %v8383 = vsub.s32 0, %v8382
    %v8384 = vrot.slane %v8379, %v8383
    %v8386 = vadd.f32 %v8378, %v8384
    %v8387 = vmul.f32 %v8386, 0.5
    %v8388 = vmul.f32 %v8386, 0.70710677
    %v8389 = verf.f32.pop %v8388
    %v8390 = vadd.f32 %v8389, 1.0
    %v8391 = vmul.f32 %v8387, %v8390
    %v8392 = vld [vmem:[%s4] sm:$0x3]
    %vm8393 = vcmask 64512
    %v8395 = vsel %vm8393, %v8392, 0
    %8397 = vmatprep.subr.mxu0 0.0
    %8398 = vmatpush1.msra.mxu0 %v8391
    %8399 = vmatprep.subr.mxu0 0.0
    %8400 = vmatpush1.msra.mxu0 0.0
    %8401 = vmatprep.subr.mxu0 0.0
    %8402 = vmatpush1.msra.mxu0 0.0
    %8403 = vmatprep.subr.mxu0 0.0
    %8404 = vmatpush1.msra.mxu0 0.0
    %8405 = vmatprep.subr.mxu0 0.0
    %8406 = vmatpush1.msra.mxu0 0.0
    %8407 = vmatprep.subr.mxu0 0.0
    %8408 = vmatpush1.msra.mxu0 0.0
    %8409 = vmatprep.subr.mxu0 0.0
    %8410 = vmatpush1.msra.mxu0 0.0
    %8411 = vmatprep.subr.mxu0 0.0
    %8412 = vmatpush1.msra.mxu0 0.0
    %8413 = vmatprep.subr.mxu0 0.0
    %8414 = vmatpush1.msra.mxu0 0.0
    %8415 = vmatprep.subr.mxu0 0.0
    %8416 = vmatpush1.msra.mxu0 0.0
    %8417 = vmatprep.subr.mxu0 0.0
    %8418 = vmatpush1.msra.mxu0 0.0
    %8419 = vmatprep.subr.mxu0 0.0
    %8420 = vmatpush1.msra.mxu0 0.0
    %8421 = vmatprep.subr.mxu0 0.0
    %8422 = vmatpush1.msra.mxu0 0.0
    %8423 = vmatprep.subr.mxu0 0.0
    %8424 = vmatpush1.msra.mxu0 0.0
    %8425 = vmatprep.subr.mxu0 0.0
    %8426 = vmatpush1.msra.mxu0 0.0
    %8427 = vmatprep.subr.mxu0 0.0
    %8428 = vmatpush1.msra.mxu0 0.0
    %8429 = vmatprep.subr.mxu0 0.0
    %8430 = vmatpush1.msra.mxu0 0.0
    %8431 = vmatprep.subr.mxu0 0.0
    %8432 = vmatpush1.msra.mxu0 0.0
    %8433 = vmatprep.subr.mxu0 0.0
    %8434 = vmatpush1.msra.mxu0 0.0
    %8435 = vmatprep.subr.mxu0 0.0
    %8436 = vmatpush1.msra.mxu0 0.0
    %8437 = vmatprep.subr.mxu0 0.0
    %8438 = vmatpush1.msra.mxu0 0.0
    %8439 = vmatprep.subr.mxu0 0.0
    %8440 = vmatpush1.msra.mxu0 0.0
    %8441 = vmatprep.subr.mxu0 0.0
    %8442 = vmatpush1.msra.mxu0 0.0
    %8443 = vmatprep.subr.mxu0 0.0
    %8444 = vmatpush1.msra.mxu0 0.0
    %8445 = vmatprep.subr.mxu0 0.0
    %8446 = vmatpush1.msra.mxu0 0.0
    %8447 = vmatprep.subr.mxu0 0.0
    %8448 = vmatpush1.msra.mxu0 0.0
    %8449 = vmatprep.subr.mxu0 0.0
    %8450 = vmatpush1.msra.mxu0 0.0
    %8451 = vmatprep.subr.mxu0 0.0
    %8452 = vmatpush1.msra.mxu0 0.0
    %8453 = vmatprep.subr.mxu0 0.0
    %8454 = vmatpush1.msra.mxu0 0.0
    %8455 = vmatprep.subr.mxu0 0.0
    %8456 = vmatpush1.msra.mxu0 0.0
    %8457 = vmatprep.subr.mxu0 0.0
    %8458 = vmatpush1.msra.mxu0 0.0
    %8459 = vmatprep.subr.mxu0 0.0
    %8460 = vmatpush1.msra.mxu0 0.0
    %8461 = vmatprep.mubr.f32.mxu0 0.0
    %8462 = vmatmul.mubr.f32.gmra.mrb[0].mxu0 %v8395
    %v8463 = vpop.f32.mrb[0].mxu0
    %v8464 = vadd.f32 0.0, %v8463
    %v8465 = vpop.f32.mrb[0].mxu0
    %8466 = vdwg.mxu0
    %v8467 = vld [vmem:[#allocation14] sm:$0xff]
    %v8468 = vld [vmem:[#allocation14 + $0x8] sm:$0xff]
    %v8469 = vld [vmem:[#allocation14 + $0x10] sm:$0xff]
    %v8470 = vld [vmem:[#allocation14 + $0x18] sm:$0xff]
    %v8471 = vld [vmem:[#allocation14 + $0x20] sm:$0xff]
    %v8472 = vld [vmem:[#allocation14 + $0x28] sm:$0xff]
    %v8473 = vld [vmem:[#allocation14 + $0x30] sm:$0xff]
    %v8474 = vld [vmem:[#allocation14 + $0x38] sm:$0xff]
    %v8475 = vld [vmem:[#allocation14 + $0x40] sm:$0xff]
    %v8476 = vld [vmem:[#allocation14 + $0x48] sm:$0xff]
    %v8477 = vld [vmem:[#allocation14 + $0x50] sm:$0xff]
    %v8478 = vld [vmem:[#allocation14 + $0x58] sm:$0xff]
    %v8479 = vld [vmem:[#allocation14 + $0x60] sm:$0xff]
    %v8480 = vld [vmem:[#allocation14 + $0x68] sm:$0xff]
    %v8481 = vld [vmem:[#allocation14 + $0x70] sm:$0xff]
    %v8482 = vld [vmem:[#allocation14 + $0x78] sm:$0xff]
    %s8483 = scalar_lea.vmem %s4, 2
    %v8484 = vld [vmem:[%s8483] sm:$0x3]
    %v8486 = vsel %vm8393, %v8484, 0
    %8488 = vmatprep.subr.mxu0 0.0
    %8489 = vmatpush1.msra.mxu0 %v8391
    %8490 = vmatprep.subr.mxu0 0.0
    %8491 = vmatpush1.msra.mxu0 0.0
    %8492 = vmatprep.subr.mxu0 0.0
    %8493 = vmatpush1.msra.mxu0 0.0
    %8494 = vmatprep.subr.mxu0 0.0
    %8495 = vmatpush1.msra.mxu0 0.0
    %8496 = vmatprep.subr.mxu0 0.0
    %8497 = vmatpush1.msra.mxu0 0.0
    %8498 = vmatprep.subr.mxu0 0.0
    %8499 = vmatpush1.msra.mxu0 0.0
    %8500 = vmatprep.subr.mxu0 0.0
    %8501 = vmatpush1.msra.mxu0 0.0
    %8502 = vmatprep.subr.mxu0 0.0
    %8503 = vmatpush1.msra.mxu0 0.0
    %8504 = vmatprep.subr.mxu0 0.0
    %8505 = vmatpush1.msra.mxu0 0.0
    %8506 = vmatprep.subr.mxu0 0.0
    %8507 = vmatpush1.msra.mxu0 0.0
    %8508 = vmatprep.subr.mxu0 0.0
    %8509 = vmatpush1.msra.mxu0 0.0
    %8510 = vmatprep.subr.mxu0 0.0
    %8511 = vmatpush1.msra.mxu0 0.0
    %8512 = vmatprep.subr.mxu0 0.0
    %8513 = vmatpush1.msra.mxu0 0.0
    %8514 = vmatprep.subr.mxu0 0.0
    %8515 = vmatpush1.msra.mxu0 0.0
    %8516 = vmatprep.subr.mxu0 0.0
    %8517 = vmatpush1.msra.mxu0 0.0
    %8518 = vmatprep.subr.mxu0 0.0
    %8519 = vmatpush1.msra.mxu0 0.0
    %8520 = vmatprep.subr.mxu0 0.0
    %8521 = vmatpush1.msra.mxu0 0.0
    %8522 = vmatprep.subr.mxu0 0.0
    %8523 = vmatpush1.msra.mxu0 0.0
    %8524 = vmatprep.subr.mxu0 0.0
    %8525 = vmatpush1.msra.mxu0 0.0
    %8526 = vmatprep.subr.mxu0 0.0
    %8527 = vmatpush1.msra.mxu0 0.0
    %8528 = vmatprep.subr.mxu0 0.0
    %8529 = vmatpush1.msra.mxu0 0.0
    %8530 = vmatprep.subr.mxu0 0.0
    %8531 = vmatpush1.msra.mxu0 0.0
    %8532 = vmatprep.subr.mxu0 0.0
    %8533 = vmatpush1.msra.mxu0 0.0
    %8534 = vmatprep.subr.mxu0 0.0
    %8535 = vmatpush1.msra.mxu0 0.0
    %8536 = vmatprep.subr.mxu0 0.0
    %8537 = vmatpush1.msra.mxu0 0.0
    %8538 = vmatprep.subr.mxu0 0.0
    %8539 = vmatpush1.msra.mxu0 0.0
    %8540 = vmatprep.subr.mxu0 0.0
    %8541 = vmatpush1.msra.mxu0 0.0
    %8542 = vmatprep.subr.mxu0 0.0
    %8543 = vmatpush1.msra.mxu0 0.0
    %8544 = vmatprep.subr.mxu0 0.0
    %8545 = vmatpush1.msra.mxu0 0.0
    %8546 = vmatprep.subr.mxu0 0.0
    %8547 = vmatpush1.msra.mxu0 0.0
    %8548 = vmatprep.subr.mxu0 0.0
    %8549 = vmatpush1.msra.mxu0 0.0
    %8550 = vmatprep.subr.mxu0 0.0
    %8551 = vmatpush1.msra.mxu0 0.0
    %8552 = vmatprep.mubr.f32.mxu0 0.0
    %8553 = vmatmul.mubr.f32.gmra.mrb[0].mxu0 %v8486
    %v8554 = vpop.f32.mrb[0].mxu0
    %v8555 = vadd.f32 0.0, %v8554
    %v8556 = vpop.f32.mrb[0].mxu0
    %8557 = vdwg.mxu0
    %s8558 = scalar_lea.vmem [#allocation14], 128
    %v8559 = vld [vmem:[%s8558] sm:$0xff]
    %v8560 = vld [vmem:[%s8558 + $0x8] sm:$0xff]
    %v8561 = vld [vmem:[%s8558 + $0x10] sm:$0xff]
    %v8562 = vld [vmem:[%s8558 + $0x18] sm:$0xff]
    %v8563 = vld [vmem:[%s8558 + $0x20] sm:$0xff]
    %v8564 = vld [vmem:[%s8558 + $0x28] sm:$0xff]
    %v8565 = vld [vmem:[%s8558 + $0x30] sm:$0xff]
    %v8566 = vld [vmem:[%s8558 + $0x38] sm:$0xff]
    %v8567 = vld [vmem:[%s8558 + $0x40] sm:$0xff]
    %v8568 = vld [vmem:[%s8558 + $0x48] sm:$0xff]
    %v8569 = vld [vmem:[%s8558 + $0x50] sm:$0xff]
    %v8570 = vld [vmem:[%s8558 + $0x58] sm:$0xff]
    %v8571 = vld [vmem:[%s8558 + $0x60] sm:$0xff]
    %v8572 = vld [vmem:[%s8558 + $0x68] sm:$0xff]
    %v8573 = vld [vmem:[%s8558 + $0x70] sm:$0xff]
    %v8574 = vld [vmem:[%s8558 + $0x78] sm:$0xff]
    %8575 = vmatprep.subr.mxu0 0.0
    %8576 = vmatpush1.msra.mxu0 %v8559
    %8577 = vmatprep.subr.mxu0 0.0
    %8578 = vmatpush1.msra.mxu0 %v8560
    %8579 = vmatprep.subr.mxu0 0.0
    %8580 = vmatpush1.msra.mxu0 %v8561
    %8581 = vmatprep.subr.mxu0 0.0
    %8582 = vmatpush1.msra.mxu0 %v8562
    %8583 = vmatprep.subr.mxu0 0.0
    %8584 = vmatpush1.msra.mxu0 %v8563
    %8585 = vmatprep.subr.mxu0 0.0
    %8586 = vmatpush1.msra.mxu0 %v8564
    %8587 = vmatprep.subr.mxu0 0.0
    %8588 = vmatpush1.msra.mxu0 %v8565
    %8589 = vmatprep.subr.mxu0 0.0
    %8590 = vmatpush1.msra.mxu0 %v8566
    %8591 = vmatprep.subr.mxu0 0.0
    %8592 = vmatpush1.msra.mxu0 %v8567
    %8593 = vmatprep.subr.mxu0 0.0
    %8594 = vmatpush1.msra.mxu0 %v8568
    %8595 = vmatprep.subr.mxu0 0.0
    %8596 = vmatpush1.msra.mxu0 %v8569
    %8597 = vmatprep.subr.mxu0 0.0
    %8598 = vmatpush1.msra.mxu0 %v8570
    %8599 = vmatprep.subr.mxu0 0.0
    %8600 = vmatpush1.msra.mxu0 %v8571
    %8601 = vmatprep.subr.mxu0 0.0
    %8602 = vmatpush1.msra.mxu0 %v8572
    %8603 = vmatprep.subr.mxu0 0.0
    %8604 = vmatpush1.msra.mxu0 %v8573
    %8605 = vmatprep.subr.mxu0 0.0
    %8606 = vmatpush1.msra.mxu0 %v8574
    %8607 = vmatprep.subr.mxu0 0.0
    %8608 = vmatpush1.msra.mxu0 0.0
    %8609 = vmatprep.subr.mxu0 0.0
    %8610 = vmatpush1.msra.mxu0 0.0
    %8611 = vmatprep.subr.mxu0 0.0
    %8612 = vmatpush1.msra.mxu0 0.0
    %8613 = vmatprep.subr.mxu0 0.0
    %8614 = vmatpush1.msra.mxu0 0.0
    %8615 = vmatprep.subr.mxu0 0.0
    %8616 = vmatpush1.msra.mxu0 0.0
    %8617 = vmatprep.subr.mxu0 0.0
    %8618 = vmatpush1.msra.mxu0 0.0
    %8619 = vmatprep.subr.mxu0 0.0
    %8620 = vmatpush1.msra.mxu0 0.0
    %8621 = vmatprep.subr.mxu0 0.0
    %8622 = vmatpush1.msra.mxu0 0.0
    %8623 = vmatprep.subr.mxu0 0.0
    %8624 = vmatpush1.msra.mxu0 0.0
    %8625 = vmatprep.subr.mxu0 0.0
    %8626 = vmatpush1.msra.mxu0 0.0
    %8627 = vmatprep.subr.mxu0 0.0
    %8628 = vmatpush1.msra.mxu0 0.0
    %8629 = vmatprep.subr.mxu0 0.0
    %8630 = vmatpush1.msra.mxu0 0.0
    %8631 = vmatprep.subr.mxu0 0.0
    %8632 = vmatpush1.msra.mxu0 0.0
    %8633 = vmatprep.subr.mxu0 0.0
    %8634 = vmatpush1.msra.mxu0 0.0
    %8635 = vmatprep.subr.mxu0 0.0
    %8636 = vmatpush1.msra.mxu0 0.0
    %8637 = vmatprep.subr.mxu0 0.0
    %8638 = vmatpush1.msra.mxu0 0.0
    %8639 = vmatprep.mubr.f32.mxu0 0.0
    %8640 = vmatmul.mubr.f32.gmra.mrb[0].mxu0 %v8555
    %v8641 = vpop.f32.mrb[0].mxu0
    %v8642 = vadd.f32 0.0, %v8641
    %v8643 = vpop.f32.mrb[0].mxu0
    %8644 = vdwg.mxu0
    %8645 = vmatprep.subr.mxu0 0.0
    %8646 = vmatpush1.msra.mxu0 %v8467
    %8647 = vmatprep.subr.mxu0 0.0
    %8648 = vmatpush1.msra.mxu0 %v8468
    %8649 = vmatprep.subr.mxu0 0.0
    %8650 = vmatpush1.msra.mxu0 %v8469
    %8651 = vmatprep.subr.mxu0 0.0
    %8652 = vmatpush1.msra.mxu0 %v8470
    %8653 = vmatprep.subr.mxu0 0.0
    %8654 = vmatpush1.msra.mxu0 %v8471
    %8655 = vmatprep.subr.mxu0 0.0
    %8656 = vmatpush1.msra.mxu0 %v8472
    %8657 = vmatprep.subr.mxu0 0.0
    %8658 = vmatpush1.msra.mxu0 %v8473
    %8659 = vmatprep.subr.mxu0 0.0
    %8660 = vmatpush1.msra.mxu0 %v8474
    %8661 = vmatprep.subr.mxu0 0.0
    %8662 = vmatpush1.msra.mxu0 %v8475
    %8663 = vmatprep.subr.mxu0 0.0
    %8664 = vmatpush1.msra.mxu0 %v8476
    %8665 = vmatprep.subr.mxu0 0.0
    %8666 = vmatpush1.msra.mxu0 %v8477
    %8667 = vmatprep.subr.mxu0 0.0
    %8668 = vmatpush1.msra.mxu0 %v8478
    %8669 = vmatprep.subr.mxu0 0.0
    %8670 = vmatpush1.msra.mxu0 %v8479
    %8671 = vmatprep.subr.mxu0 0.0
    %8672 = vmatpush1.msra.mxu0 %v8480
    %8673 = vmatprep.subr.mxu0 0.0
    %8674 = vmatpush1.msra.mxu0 %v8481
    %8675 = vmatprep.subr.mxu0 0.0
    %8676 = vmatpush1.msra.mxu0 %v8482
    %8677 = vmatprep.subr.mxu0 0.0
    %8678 = vmatpush1.msra.mxu0 0.0
    %8679 = vmatprep.subr.mxu0 0.0
    %8680 = vmatpush1.msra.mxu0 0.0
    %8681 = vmatprep.subr.mxu0 0.0
    %8682 = vmatpush1.msra.mxu0 0.0
    %8683 = vmatprep.subr.mxu0 0.0
    %8684 = vmatpush1.msra.mxu0 0.0
    %8685 = vmatprep.subr.mxu0 0.0
    %8686 = vmatpush1.msra.mxu0 0.0
    %8687 = vmatprep.subr.mxu0 0.0
    %8688 = vmatpush1.msra.mxu0 0.0
    %8689 = vmatprep.subr.mxu0 0.0
    %8690 = vmatpush1.msra.mxu0 0.0
    %8691 = vmatprep.subr.mxu0 0.0
    %8692 = vmatpush1.msra.mxu0 0.0
    %8693 = vmatprep.subr.mxu0 0.0
    %8694 = vmatpush1.msra.mxu0 0.0
    %8695 = vmatprep.subr.mxu0 0.0
    %8696 = vmatpush1.msra.mxu0 0.0
    %8697 = vmatprep.subr.mxu0 0.0
    %8698 = vmatpush1.msra.mxu0 0.0
    %8699 = vmatprep.subr.mxu0 0.0
    %8700 = vmatpush1.msra.mxu0 0.0
    %8701 = vmatprep.subr.mxu0 0.0
    %8702 = vmatpush1.msra.mxu0 0.0
    %8703 = vmatprep.subr.mxu0 0.0
    %8704 = vmatpush1.msra.mxu0 0.0
    %8705 = vmatprep.subr.mxu0 0.0
    %8706 = vmatpush1.msra.mxu0 0.0
    %8707 = vmatprep.subr.mxu0 0.0
    %8708 = vmatpush1.msra.mxu0 0.0
    %8709 = vmatprep.mubr.f32.mxu0 0.0
    %8710 = vmatmul.mubr.f32.gmra.mrb[0].mxu0 %v8464
    %v8711 = vpop.f32.mrb[0].mxu0
    %v8712 = vadd.f32 %v8642, %v8711
    %v8713 = vpop.f32.mrb[0].mxu0
    %8714 = vdwg.mxu0
    %s8715 = scalar_lea.vmem %s4, 4
    %v8716 = vld [vmem:[%s8715] sm:$0x3]
    %v8718 = vsel %vm8393, %v8716, 0
    %8720 = vmatprep.subr.mxu0 0.0
    %8721 = vmatpush1.msra.mxu0 %v8391
    %8722 = vmatprep.subr.mxu0 0.0
    %8723 = vmatpush1.msra.mxu0 0.0
    %8724 = vmatprep.subr.mxu0 0.0
    %8725 = vmatpush1.msra.mxu0 0.0
    %8726 = vmatprep.subr.mxu0 0.0
    %8727 = vmatpush1.msra.mxu0 0.0
    %8728 = vmatprep.subr.mxu0 0.0
    %8729 = vmatpush1.msra.mxu0 0.0
    %8730 = vmatprep.subr.mxu0 0.0
    %8731 = vmatpush1.msra.mxu0 0.0
    %8732 = vmatprep.subr.mxu0 0.0
    %8733 = vmatpush1.msra.mxu0 0.0
    %8734 = vmatprep.subr.mxu0 0.0
    %8735 = vmatpush1.msra.mxu0 0.0
    %8736 = vmatprep.subr.mxu0 0.0
    %8737 = vmatpush1.msra.mxu0 0.0
    %8738 = vmatprep.subr.mxu0 0.0
    %8739 = vmatpush1.msra.mxu0 0.0
    %8740 = vmatprep.subr.mxu0 0.0
    %8741 = vmatpush1.msra.mxu0 0.0
    %8742 = vmatprep.subr.mxu0 0.0
    %8743 = vmatpush1.msra.mxu0 0.0
    %8744 = vmatprep.subr.mxu0 0.0
    %8745 = vmatpush1.msra.mxu0 0.0
    %8746 = vmatprep.subr.mxu0 0.0
    %8747 = vmatpush1.msra.mxu0 0.0
    %8748 = vmatprep.subr.mxu0 0.0
    %8749 = vmatpush1.msra.mxu0 0.0
    %8750 = vmatprep.subr.mxu0 0.0
    %8751 = vmatpush1.msra.mxu0 0.0
    %8752 = vmatprep.subr.mxu0 0.0
    %8753 = vmatpush1.msra.mxu0 0.0
    %8754 = vmatprep.subr.mxu0 0.0
    %8755 = vmatpush1.msra.mxu0 0.0
    %8756 = vmatprep.subr.mxu0 0.0
    %8757 = vmatpush1.msra.mxu0 0.0
    %8758 = vmatprep.subr.mxu0 0.0
    %8759 = vmatpush1.msra.mxu0 0.0
    %8760 = vmatprep.subr.mxu0 0.0
    %8761 = vmatpush1.msra.mxu0 0.0
    %8762 = vmatprep.subr.mxu0 0.0
    %8763 = vmatpush1.msra.mxu0 0.0
    %8764 = vmatprep.subr.mxu0 0.0
    %8765 = vmatpush1.msra.mxu0 0.0
    %8766 = vmatprep.subr.mxu0 0.0
    %8767 = vmatpush1.msra.mxu0 0.0
    %8768 = vmatprep.subr.mxu0 0.0
    %8769 = vmatpush1.msra.mxu0 0.0
    %8770 = vmatprep.subr.mxu0 0.0
    %8771 = vmatpush1.msra.mxu0 0.0
    %8772 = vmatprep.subr.mxu0 0.0
    %8773 = vmatpush1.msra.mxu0 0.0
    %8774 = vmatprep.subr.mxu0 0.0
    %8775 = vmatpush1.msra.mxu0 0.0
    %8776 = vmatprep.subr.mxu0 0.0
    %8777 = vmatpush1.msra.mxu0 0.0
    %8778 = vmatprep.subr.mxu0 0.0
    %8779 = vmatpush1.msra.mxu0 0.0
    %8780 = vmatprep.subr.mxu0 0.0
    %8781 = vmatpush1.msra.mxu0 0.0
    %8782 = vmatprep.subr.mxu0 0.0
    %8783 = vmatpush1.msra.mxu0 0.0
    %8784 = vmatprep.mubr.f32.mxu0 0.0
    %8785 = vmatmul.mubr.f32.gmra.mrb[0].mxu0 %v8718
    %v8786 = vpop.f32.mrb[0].mxu0
    %v8787 = vadd.f32 0.0, %v8786
    %v8788 = vpop.f32.mrb[0].mxu0
    %8789 = vdwg.mxu0
    %s8790 = scalar_lea.vmem [#allocation14], 256
    %v8791 = vld [vmem:[%s8790] sm:$0xff]
    %v8792 = vld [vmem:[%s8790 + $0x8] sm:$0xff]
    %v8793 = vld [vmem:[%s8790 + $0x10] sm:$0xff]
    %v8794 = vld [vmem:[%s8790 + $0x18] sm:$0xff]
    %v8795 = vld [vmem:[%s8790 + $0x20] sm:$0xff]
    %v8796 = vld [vmem:[%s8790 + $0x28] sm:$0xff]
    %v8797 = vld [vmem:[%s8790 + $0x30] sm:$0xff]
    %v8798 = vld [vmem:[%s8790 + $0x38] sm:$0xff]
    %v8799 = vld [vmem:[%s8790 + $0x40] sm:$0xff]
    %v8800 = vld [vmem:[%s8790 + $0x48] sm:$0xff]
    %v8801 = vld [vmem:[%s8790 + $0x50] sm:$0xff]
    %v8802 = vld [vmem:[%s8790 + $0x58] sm:$0xff]
    %v8803 = vld [vmem:[%s8790 + $0x60] sm:$0xff]
    %v8804 = vld [vmem:[%s8790 + $0x68] sm:$0xff]
    %v8805 = vld [vmem:[%s8790 + $0x70] sm:$0xff]
    %v8806 = vld [vmem:[%s8790 + $0x78] sm:$0xff]
    %8807 = vmatprep.subr.mxu0 0.0
    %8808 = vmatpush1.msra.mxu0 %v8791
    %8809 = vmatprep.subr.mxu0 0.0
    %8810 = vmatpush1.msra.mxu0 %v8792
    %8811 = vmatprep.subr.mxu0 0.0
    %8812 = vmatpush1.msra.mxu0 %v8793
    %8813 = vmatprep.subr.mxu0 0.0
    %8814 = vmatpush1.msra.mxu0 %v8794
    %8815 = vmatprep.subr.mxu0 0.0
    %8816 = vmatpush1.msra.mxu0 %v8795
    %8817 = vmatprep.subr.mxu0 0.0
    %8818 = vmatpush1.msra.mxu0 %v8796
    %8819 = vmatprep.subr.mxu0 0.0
    %8820 = vmatpush1.msra.mxu0 %v8797
    %8821 = vmatprep.subr.mxu0 0.0
    %8822 = vmatpush1.msra.mxu0 %v8798
    %8823 = vmatprep.subr.mxu0 0.0
    %8824 = vmatpush1.msra.mxu0 %v8799
    %8825 = vmatprep.subr.mxu0 0.0
    %8826 = vmatpush1.msra.mxu0 %v8800
    %8827 = vmatprep.subr.mxu0 0.0
    %8828 = vmatpush1.msra.mxu0 %v8801
    %8829 = vmatprep.subr.mxu0 0.0
    %8830 = vmatpush1.msra.mxu0 %v8802
    %8831 = vmatprep.subr.mxu0 0.0
    %8832 = vmatpush1.msra.mxu0 %v8803
    %8833 = vmatprep.subr.mxu0 0.0
    %8834 = vmatpush1.msra.mxu0 %v8804
    %8835 = vmatprep.subr.mxu0 0.0
    %8836 = vmatpush1.msra.mxu0 %v8805
    %8837 = vmatprep.subr.mxu0 0.0
    %8838 = vmatpush1.msra.mxu0 %v8806
    %8839 = vmatprep.subr.mxu0 0.0
    %8840 = vmatpush1.msra.mxu0 0.0
    %8841 = vmatprep.subr.mxu0 0.0
    %8842 = vmatpush1.msra.mxu0 0.0
    %8843 = vmatprep.subr.mxu0 0.0
    %8844 = vmatpush1.msra.mxu0 0.0
    %8845 = vmatprep.subr.mxu0 0.0
    %8846 = vmatpush1.msra.mxu0 0.0
    %8847 = vmatprep.subr.mxu0 0.0
    %8848 = vmatpush1.msra.mxu0 0.0
    %8849 = vmatprep.subr.mxu0 0.0
    %8850 = vmatpush1.msra.mxu0 0.0
    %8851 = vmatprep.subr.mxu0 0.0
    %8852 = vmatpush1.msra.mxu0 0.0
    %8853 = vmatprep.subr.mxu0 0.0
    %8854 = vmatpush1.msra.mxu0 0.0
    %8855 = vmatprep.subr.mxu0 0.0
    %8856 = vmatpush1.msra.mxu0 0.0
    %8857 = vmatprep.subr.mxu0 0.0
    %8858 = vmatpush1.msra.mxu0 0.0
    %8859 = vmatprep.subr.mxu0 0.0
    %8860 = vmatpush1.msra.mxu0 0.0
    %8861 = vmatprep.subr.mxu0 0.0
    %8862 = vmatpush1.msra.mxu0 0.0
    %8863 = vmatprep.subr.mxu0 0.0
    %8864 = vmatpush1.msra.mxu0 0.0
    %8865 = vmatprep.subr.mxu0 0.0
    %8866 = vmatpush1.msra.mxu0 0.0
    %8867 = vmatprep.subr.mxu0 0.0
    %8868 = vmatpush1.msra.mxu0 0.0
    %8869 = vmatprep.subr.mxu0 0.0
    %8870 = vmatpush1.msra.mxu0 0.0
    %8871 = vmatprep.mubr.f32.mxu0 0.0
    %8872 = vmatmul.mubr.f32.gmra.mrb[0].mxu0 %v8787
    %v8873 = vpop.f32.mrb[0].mxu0
    %v8874 = vadd.f32 0.0, %v8873
    %v8875 = vpop.f32.mrb[0].mxu0
    %8876 = vdwg.mxu0
    %v8877 = vadd.f32 %v8712, %v8874
    %s8878 = scalar_lea.vmem %s4, 6
    %v8879 = vld [vmem:[%s8878] sm:$0x3]
    %v8881 = vsel %vm8393, %v8879, 0
    %8883 = vmatprep.subr.mxu0 0.0
    %8884 = vmatpush1.msra.mxu0 %v8391
    %8885 = vmatprep.subr.mxu0 0.0
    %8886 = vmatpush1.msra.mxu0 0.0
    %8887 = vmatprep.subr.mxu0 0.0
    %8888 = vmatpush1.msra.mxu0 0.0
    %8889 = vmatprep.subr.mxu0 0.0
    %8890 = vmatpush1.msra.mxu0 0.0
    %8891 = vmatprep.subr.mxu0 0.0
    %8892 = vmatpush1.msra.mxu0 0.0
    %8893 = vmatprep.subr.mxu0 0.0
    %8894 = vmatpush1.msra.mxu0 0.0
    %8895 = vmatprep.subr.mxu0 0.0
    %8896 = vmatpush1.msra.mxu0 0.0
    %8897 = vmatprep.subr.mxu0 0.0
    %8898 = vmatpush1.msra.mxu0 0.0
    %8899 = vmatprep.subr.mxu0 0.0
    %8900 = vmatpush1.msra.mxu0 0.0
    %8901 = vmatprep.subr.mxu0 0.0
    %8902 = vmatpush1.msra.mxu0 0.0
    %8903 = vmatprep.subr.mxu0 0.0
    %8904 = vmatpush1.msra.mxu0 0.0
    %8905 = vmatprep.subr.mxu0 0.0
    %8906 = vmatpush1.msra.mxu0 0.0
    %8907 = vmatprep.subr.mxu0 0.0
    %8908 = vmatpush1.msra.mxu0 0.0
    %8909 = vmatprep.subr.mxu0 0.0
    %8910 = vmatpush1.msra.mxu0 0.0
    %8911 = vmatprep.subr.mxu0 0.0
    %8912 = vmatpush1.msra.mxu0 0.0
    %8913 = vmatprep.subr.mxu0 0.0
    %8914 = vmatpush1.msra.mxu0 0.0
    %8915 = vmatprep.subr.mxu0 0.0
    %8916 = vmatpush1.msra.mxu0 0.0
    %8917 = vmatprep.subr.mxu0 0.0
    %8918 = vmatpush1.msra.mxu0 0.0
    %8919 = vmatprep.subr.mxu0 0.0
    %8920 = vmatpush1.msra.mxu0 0.0
    %8921 = vmatprep.subr.mxu0 0.0
    %8922 = vmatpush1.msra.mxu0 0.0
    %8923 = vmatprep.subr.mxu0 0.0
    %8924 = vmatpush1.msra.mxu0 0.0
    %8925 = vmatprep.subr.mxu0 0.0
    %8926 = vmatpush1.msra.mxu0 0.0
    %8927 = vmatprep.subr.mxu0 0.0
    %8928 = vmatpush1.msra.mxu0 0.0
    %8929 = vmatprep.subr.mxu0 0.0
    %8930 = vmatpush1.msra.mxu0 0.0
    %8931 = vmatprep.subr.mxu0 0.0
    %8932 = vmatpush1.msra.mxu0 0.0
    %8933 = vmatprep.subr.mxu0 0.0
    %8934 = vmatpush1.msra.mxu0 0.0
    %8935 = vmatprep.subr.mxu0 0.0
    %8936 = vmatpush1.msra.mxu0 0.0
    %8937 = vmatprep.subr.mxu0 0.0
    %8938 = vmatpush1.msra.mxu0 0.0
    %8939 = vmatprep.subr.mxu0 0.0
    %8940 = vmatpush1.msra.mxu0 0.0
    %8941 = vmatprep.subr.mxu0 0.0
    %8942 = vmatpush1.msra.mxu0 0.0
    %8943 = vmatprep.subr.mxu0 0.0
    %8944 = vmatpush1.msra.mxu0 0.0
    %8945 = vmatprep.subr.mxu0 0.0
    %8946 = vmatpush1.msra.mxu0 0.0
    %8947 = vmatprep.mubr.f32.mxu0 0.0
    %8948 = vmatmul.mubr.f32.gmra.mrb[0].mxu0 %v8881
    %v8949 = vpop.f32.mrb[0].mxu0
    %v8950 = vadd.f32 0.0, %v8949
    %v8951 = vpop.f32.mrb[0].mxu0
    %8952 = vdwg.mxu0
    %s8953 = scalar_lea.vmem [#allocation14], 384
    %v8954 = vld [vmem:[%s8953] sm:$0xff]
    %v8955 = vld [vmem:[%s8953 + $0x8] sm:$0xff]
    %v8956 = vld [vmem:[%s8953 + $0x10] sm:$0xff]
    %v8957 = vld [vmem:[%s8953 + $0x18] sm:$0xff]
    %v8958 = vld [vmem:[%s8953 + $0x20] sm:$0xff]
    %v8959 = vld [vmem:[%s8953 + $0x28] sm:$0xff]
    %v8960 = vld [vmem:[%s8953 + $0x30] sm:$0xff]
    %v8961 = vld [vmem:[%s8953 + $0x38] sm:$0xff]
    %v8962 = vld [vmem:[%s8953 + $0x40] sm:$0xff]
    %v8963 = vld [vmem:[%s8953 + $0x48] sm:$0xff]
    %v8964 = vld [vmem:[%s8953 + $0x50] sm:$0xff]
    %v8965 = vld [vmem:[%s8953 + $0x58] sm:$0xff]
    %v8966 = vld [vmem:[%s8953 + $0x60] sm:$0xff]
    %v8967 = vld [vmem:[%s8953 + $0x68] sm:$0xff]
    %v8968 = vld [vmem:[%s8953 + $0x70] sm:$0xff]
    %v8969 = vld [vmem:[%s8953 + $0x78] sm:$0xff]
    %8970 = vmatprep.subr.mxu0 0.0
    %8971 = vmatpush1.msra.mxu0 %v8954
    %8972 = vmatprep.subr.mxu0 0.0
    %8973 = vmatpush1.msra.mxu0 %v8955
    %8974 = vmatprep.subr.mxu0 0.0
    %8975 = vmatpush1.msra.mxu0 %v8956
    %8976 = vmatprep.subr.mxu0 0.0
    %8977 = vmatpush1.msra.mxu0 %v8957
    %8978 = vmatprep.subr.mxu0 0.0
    %8979 = vmatpush1.msra.mxu0 %v8958
    %8980 = vmatprep.subr.mxu0 0.0
    %8981 = vmatpush1.msra.mxu0 %v8959
    %8982 = vmatprep.subr.mxu0 0.0
    %8983 = vmatpush1.msra.mxu0 %v8960
    %8984 = vmatprep.subr.mxu0 0.0
    %8985 = vmatpush1.msra.mxu0 %v8961
    %8986 = vmatprep.subr.mxu0 0.0
    %8987 = vmatpush1.msra.mxu0 %v8962
    %8988 = vmatprep.subr.mxu0 0.0
    %8989 = vmatpush1.msra.mxu0 %v8963
    %8990 = vmatprep.subr.mxu0 0.0
    %8991 = vmatpush1.msra.mxu0 %v8964
    %8992 = vmatprep.subr.mxu0 0.0
    %8993 = vmatpush1.msra.mxu0 %v8965
    %8994 = vmatprep.subr.mxu0 0.0
    %8995 = vmatpush1.msra.mxu0 %v8966
    %8996 = vmatprep.subr.mxu0 0.0
    %8997 = vmatpush1.msra.mxu0 %v8967
    %8998 = vmatprep.subr.mxu0 0.0
    %8999 = vmatpush1.msra.mxu0 %v8968
    %9000 = vmatprep.subr.mxu0 0.0
    %9001 = vmatpush1.msra.mxu0 %v8969
    %9002 = vmatprep.subr.mxu0 0.0
    %9003 = vmatpush1.msra.mxu0 0.0
    %9004 = vmatprep.subr.mxu0 0.0
    %9005 = vmatpush1.msra.mxu0 0.0
    %9006 = vmatprep.subr.mxu0 0.0
    %9007 = vmatpush1.msra.mxu0 0.0
    %9008 = vmatprep.subr.mxu0 0.0
    %9009 = vmatpush1.msra.mxu0 0.0
    %9010 = vmatprep.subr.mxu0 0.0
    %9011 = vmatpush1.msra.mxu0 0.0
    %9012 = vmatprep.subr.mxu0 0.0
    %9013 = vmatpush1.msra.mxu0 0.0
    %9014 = vmatprep.subr.mxu0 0.0
    %9015 = vmatpush1.msra.mxu0 0.0
    %9016 = vmatprep.subr.mxu0 0.0
    %9017 = vmatpush1.msra.mxu0 0.0
    %9018 = vmatprep.subr.mxu0 0.0
    %9019 = vmatpush1.msra.mxu0 0.0
    %9020 = vmatprep.subr.mxu0 0.0
    %9021 = vmatpush1.msra.mxu0 0.0
    %9022 = vmatprep.subr.mxu0 0.0
    %9023 = vmatpush1.msra.mxu0 0.0
    %9024 = vmatprep.subr.mxu0 0.0
    %9025 = vmatpush1.msra.mxu0 0.0
    %9026 = vmatprep.subr.mxu0 0.0
    %9027 = vmatpush1.msra.mxu0 0.0
    %9028 = vmatprep.subr.mxu0 0.0
    %9029 = vmatpush1.msra.mxu0 0.0
    %9030 = vmatprep.subr.mxu0 0.0
    %9031 = vmatpush1.msra.mxu0 0.0
    %9032 = vmatprep.subr.mxu0 0.0
    %9033 = vmatpush1.msra.mxu0 0.0
    %9034 = vmatprep.mubr.f32.mxu0 0.0
    %9035 = vmatmul.mubr.f32.gmra.mrb[0].mxu0 %v8950
    %v9036 = vpop.f32.mrb[0].mxu0
    %v9037 = vadd.f32 0.0, %v9036
    %v9038 = vpop.f32.mrb[0].mxu0
    %9039 = vdwg.mxu0
    %v9040 = vadd.f32 %v8877, %v9037
    %s9041 = scalar_lea.vmem %s4, 8
    %v9042 = vld [vmem:[%s9041] sm:$0x3]
    %v9044 = vsel %vm8393, %v9042, 0
    %9046 = vmatprep.subr.mxu0 0.0
    %9047 = vmatpush1.msra.mxu0 %v8391
    %9048 = vmatprep.subr.mxu0 0.0
    %9049 = vmatpush1.msra.mxu0 0.0
    %9050 = vmatprep.subr.mxu0 0.0
    %9051 = vmatpush1.msra.mxu0 0.0
    %9052 = vmatprep.subr.mxu0 0.0
    %9053 = vmatpush1.msra.mxu0 0.0
    %9054 = vmatprep.subr.mxu0 0.0
    %9055 = vmatpush1.msra.mxu0 0.0
    %9056 = vmatprep.subr.mxu0 0.0
    %9057 = vmatpush1.msra.mxu0 0.0
    %9058 = vmatprep.subr.mxu0 0.0
    %9059 = vmatpush1.msra.mxu0 0.0
    %9060 = vmatprep.subr.mxu0 0.0
    %9061 = vmatpush1.msra.mxu0 0.0
    %9062 = vmatprep.subr.mxu0 0.0
    %9063 = vmatpush1.msra.mxu0 0.0
    %9064 = vmatprep.subr.mxu0 0.0
    %9065 = vmatpush1.msra.mxu0 0.0
    %9066 = vmatprep.subr.mxu0 0.0
    %9067 = vmatpush1.msra.mxu0 0.0
    %9068 = vmatprep.subr.mxu0 0.0
    %9069 = vmatpush1.msra.mxu0 0.0
    %9070 = vmatprep.subr.mxu0 0.0
    %9071 = vmatpush1.msra.mxu0 0.0
    %9072 = vmatprep.subr.mxu0 0.0
    %9073 = vmatpush1.msra.mxu0 0.0
    %9074 = vmatprep.subr.mxu0 0.0
    %9075 = vmatpush1.msra.mxu0 0.0
    %9076 = vmatprep.subr.mxu0 0.0
    %9077 = vmatpush1.msra.mxu0 0.0
    %9078 = vmatprep.subr.mxu0 0.0
    %9079 = vmatpush1.msra.mxu0 0.0
    %9080 = vmatprep.subr.mxu0 0.0
    %9081 = vmatpush1.msra.mxu0 0.0
    %9082 = vmatprep.subr.mxu0 0.0
    %9083 = vmatpush1.msra.mxu0 0.0
    %9084 = vmatprep.subr.mxu0 0.0
    %9085 = vmatpush1.msra.mxu0 0.0
    %9086 = vmatprep.subr.mxu0 0.0
    %9087 = vmatpush1.msra.mxu0 0.0
    %9088 = vmatprep.subr.mxu0 0.0
    %9089 = vmatpush1.msra.mxu0 0.0
    %9090 = vmatprep.subr.mxu0 0.0
    %9091 = vmatpush1.msra.mxu0 0.0
    %9092 = vmatprep.subr.mxu0 0.0
    %9093 = vmatpush1.msra.mxu0 0.0
    %9094 = vmatprep.subr.mxu0 0.0
    %9095 = vmatpush1.msra.mxu0 0.0
    %9096 = vmatprep.subr.mxu0 0.0
    %9097 = vmatpush1.msra.mxu0 0.0
    %9098 = vmatprep.subr.mxu0 0.0
    %9099 = vmatpush1.msra.mxu0 0.0
    %9100 = vmatprep.subr.mxu0 0.0
    %9101 = vmatpush1.msra.mxu0 0.0
    %9102 = vmatprep.subr.mxu0 0.0
    %9103 = vmatpush1.msra.mxu0 0.0
    %9104 = vmatprep.subr.mxu0 0.0
    %9105 = vmatpush1.msra.mxu0 0.0
    %9106 = vmatprep.subr.mxu0 0.0
    %9107 = vmatpush1.msra.mxu0 0.0
    %9108 = vmatprep.subr.mxu0 0.0
    %9109 = vmatpush1.msra.mxu0 0.0
    %9110 = vmatprep.mubr.f32.mxu0 0.0
    %9111 = vmatmul.mubr.f32.gmra.mrb[0].mxu0 %v9044
    %v9112 = vpop.f32.mrb[0].mxu0
    %v9113 = vadd.f32 0.0, %v9112
    %v9114 = vpop.f32.mrb[0].mxu0
    %9115 = vdwg.mxu0
    %s9116 = scalar_lea.vmem [#allocation14], 512
    %v9117 = vld [vmem:[%s9116] sm:$0xff]
    %v9118 = vld [vmem:[%s9116 + $0x8] sm:$0xff]
    %v9119 = vld [vmem:[%s9116 + $0x10] sm:$0xff]
    %v9120 = vld [vmem:[%s9116 + $0x18] sm:$0xff]
    %v9121 = vld [vmem:[%s9116 + $0x20] sm:$0xff]
    %v9122 = vld [vmem:[%s9116 + $0x28] sm:$0xff]
    %v9123 = vld [vmem:[%s9116 + $0x30] sm:$0xff]
    %v9124 = vld [vmem:[%s9116 + $0x38] sm:$0xff]
    %v9125 = vld [vmem:[%s9116 + $0x40] sm:$0xff]
    %v9126 = vld [vmem:[%s9116 + $0x48] sm:$0xff]
    %v9127 = vld [vmem:[%s9116 + $0x50] sm:$0xff]
    %v9128 = vld [vmem:[%s9116 + $0x58] sm:$0xff]
    %v9129 = vld [vmem:[%s9116 + $0x60] sm:$0xff]
    %v9130 = vld [vmem:[%s9116 + $0x68] sm:$0xff]
    %v9131 = vld [vmem:[%s9116 + $0x70] sm:$0xff]
    %v9132 = vld [vmem:[%s9116 + $0x78] sm:$0xff]
    %9133 = vmatprep.subr.mxu0 0.0
    %9134 = vmatpush1.msra.mxu0 %v9117
    %9135 = vmatprep.subr.mxu0 0.0
    %9136 = vmatpush1.msra.mxu0 %v9118
    %9137 = vmatprep.subr.mxu0 0.0
    %9138 = vmatpush1.msra.mxu0 %v9119
    %9139 = vmatprep.subr.mxu0 0.0
    %9140 = vmatpush1.msra.mxu0 %v9120
    %9141 = vmatprep.subr.mxu0 0.0
    %9142 = vmatpush1.msra.mxu0 %v9121
    %9143 = vmatprep.subr.mxu0 0.0
    %9144 = vmatpush1.msra.mxu0 %v9122
    %9145 = vmatprep.subr.mxu0 0.0
    %9146 = vmatpush1.msra.mxu0 %v9123
    %9147 = vmatprep.subr.mxu0 0.0
    %9148 = vmatpush1.msra.mxu0 %v9124
    %9149 = vmatprep.subr.mxu0 0.0
    %9150 = vmatpush1.msra.mxu0 %v9125
    %9151 = vmatprep.subr.mxu0 0.0
    %9152 = vmatpush1.msra.mxu0 %v9126
    %9153 = vmatprep.subr.mxu0 0.0
    %9154 = vmatpush1.msra.mxu0 %v9127
    %9155 = vmatprep.subr.mxu0 0.0
    %9156 = vmatpush1.msra.mxu0 %v9128
    %9157 = vmatprep.subr.mxu0 0.0
    %9158 = vmatpush1.msra.mxu0 %v9129
    %9159 = vmatprep.subr.mxu0 0.0
    %9160 = vmatpush1.msra.mxu0 %v9130
    %9161 = vmatprep.subr.mxu0 0.0
    %9162 = vmatpush1.msra.mxu0 %v9131
    %9163 = vmatprep.subr.mxu0 0.0
    %9164 = vmatpush1.msra.mxu0 %v9132
    %9165 = vmatprep.subr.mxu0 0.0
    %9166 = vmatpush1.msra.mxu0 0.0
    %9167 = vmatprep.subr.mxu0 0.0
    %9168 = vmatpush1.msra.mxu0 0.0
    %9169 = vmatprep.subr.mxu0 0.0
    %9170 = vmatpush1.msra.mxu0 0.0
    %9171 = vmatprep.subr.mxu0 0.0
    %9172 = vmatpush1.msra.mxu0 0.0
    %9173 = vmatprep.subr.mxu0 0.0
    %9174 = vmatpush1.msra.mxu0 0.0
    %9175 = vmatprep.subr.mxu0 0.0
    %9176 = vmatpush1.msra.mxu0 0.0
    %9177 = vmatprep.subr.mxu0 0.0
    %9178 = vmatpush1.msra.mxu0 0.0
    %9179 = vmatprep.subr.mxu0 0.0
    %9180 = vmatpush1.msra.mxu0 0.0
    %9181 = vmatprep.subr.mxu0 0.0
    %9182 = vmatpush1.msra.mxu0 0.0
    %9183 = vmatprep.subr.mxu0 0.0
    %9184 = vmatpush1.msra.mxu0 0.0
    %9185 = vmatprep.subr.mxu0 0.0
    %9186 = vmatpush1.msra.mxu0 0.0
    %9187 = vmatprep.subr.mxu0 0.0
    %9188 = vmatpush1.msra.mxu0 0.0
    %9189 = vmatprep.subr.mxu0 0.0
    %9190 = vmatpush1.msra.mxu0 0.0
    %9191 = vmatprep.subr.mxu0 0.0
    %9192 = vmatpush1.msra.mxu0 0.0
    %9193 = vmatprep.subr.mxu0 0.0
    %9194 = vmatpush1.msra.mxu0 0.0
    %9195 = vmatprep.subr.mxu0 0.0
    %9196 = vmatpush1.msra.mxu0 0.0
    %9197 = vmatprep.mubr.f32.mxu0 0.0
    %9198 = vmatmul.mubr.f32.gmra.mrb[0].mxu0 %v9113
    %v9199 = vpop.f32.mrb[0].mxu0
    %v9200 = vadd.f32 0.0, %v9199
    %v9201 = vpop.f32.mrb[0].mxu0
    %9202 = vdwg.mxu0
    %v9203 = vadd.f32 %v9040, %v9200
    %s9204 = scalar_lea.vmem %s4, 10
    %v9205 = vld [vmem:[%s9204] sm:$0x3]
    %v9207 = vsel %vm8393, %v9205, 0
    %9209 = vmatprep.subr.mxu0 0.0
    %9210 = vmatpush1.msra.mxu0 %v8391
    %9211 = vmatprep.subr.mxu0 0.0
    %9212 = vmatpush1.msra.mxu0 0.0
    %9213 = vmatprep.subr.mxu0 0.0
    %9214 = vmatpush1.msra.mxu0 0.0
    %9215 = vmatprep.subr.mxu0 0.0
    %9216 = vmatpush1.msra.mxu0 0.0
    %9217 = vmatprep.subr.mxu0 0.0
    %9218 = vmatpush1.msra.mxu0 0.0
    %9219 = vmatprep.subr.mxu0 0.0
    %9220 = vmatpush1.msra.mxu0 0.0
    %9221 = vmatprep.subr.mxu0 0.0
    %9222 = vmatpush1.msra.mxu0 0.0
    %9223 = vmatprep.subr.mxu0 0.0
    %9224 = vmatpush1.msra.mxu0 0.0
    %9225 = vmatprep.subr.mxu0 0.0
    %9226 = vmatpush1.msra.mxu0 0.0
    %9227 = vmatprep.subr.mxu0 0.0
    %9228 = vmatpush1.msra.mxu0 0.0
    %9229 = vmatprep.subr.mxu0 0.0
    %9230 = vmatpush1.msra.mxu0 0.0
    %9231 = vmatprep.subr.mxu0 0.0
    %9232 = vmatpush1.msra.mxu0 0.0
    %9233 = vmatprep.subr.mxu0 0.0
    %9234 = vmatpush1.msra.mxu0 0.0
    %9235 = vmatprep.subr.mxu0 0.0
    %9236 = vmatpush1.msra.mxu0 0.0
    %9237 = vmatprep.subr.mxu0 0.0
    %9238 = vmatpush1.msra.mxu0 0.0
    %9239 = vmatprep.subr.mxu0 0.0
    %9240 = vmatpush1.msra.mxu0 0.0
    %9241 = vmatprep.subr.mxu0 0.0
    %9242 = vmatpush1.msra.mxu0 0.0
    %9243 = vmatprep.subr.mxu0 0.0
    %9244 = vmatpush1.msra.mxu0 0.0
    %9245 = vmatprep.subr.mxu0 0.0
    %9246 = vmatpush1.msra.mxu0 0.0
    %9247 = vmatprep.subr.mxu0 0.0
    %9248 = vmatpush1.msra.mxu0 0.0
    %9249 = vmatprep.subr.mxu0 0.0
    %9250 = vmatpush1.msra.mxu0 0.0
    %9251 = vmatprep.subr.mxu0 0.0
    %9252 = vmatpush1.msra.mxu0 0.0
    %9253 = vmatprep.subr.mxu0 0.0
    %9254 = vmatpush1.msra.mxu0 0.0
    %9255 = vmatprep.subr.mxu0 0.0
    %9256 = vmatpush1.msra.mxu0 0.0
    %9257 = vmatprep.subr.mxu0 0.0
    %9258 = vmatpush1.msra.mxu0 0.0
    %9259 = vmatprep.subr.mxu0 0.0
    %9260 = vmatpush1.msra.mxu0 0.0
    %9261 = vmatprep.subr.mxu0 0.0
    %9262 = vmatpush1.msra.mxu0 0.0
    %9263 = vmatprep.subr.mxu0 0.0
    %9264 = vmatpush1.msra.mxu0 0.0
    %9265 = vmatprep.subr.mxu0 0.0
    %9266 = vmatpush1.msra.mxu0 0.0
    %9267 = vmatprep.subr.mxu0 0.0
    %9268 = vmatpush1.msra.mxu0 0.0
    %9269 = vmatprep.subr.mxu0 0.0
    %9270 = vmatpush1.msra.mxu0 0.0
    %9271 = vmatprep.subr.mxu0 0.0
    %9272 = vmatpush1.msra.mxu0 0.0
    %9273 = vmatprep.mubr.f32.mxu0 0.0
    %9274 = vmatmul.mubr.f32.gmra.mrb[0].mxu0 %v9207
    %v9275 = vpop.f32.mrb[0].mxu0
    %v9276 = vadd.f32 0.0, %v9275
    %v9277 = vpop.f32.mrb[0].mxu0
    %9278 = vdwg.mxu0
    %s9279 = scalar_lea.vmem [#allocation14], 640
    %v9280 = vld [vmem:[%s9279] sm:$0xff]
    %v9281 = vld [vmem:[%s9279 + $0x8] sm:$0xff]
    %v9282 = vld [vmem:[%s9279 + $0x10] sm:$0xff]
    %v9283 = vld [vmem:[%s9279 + $0x18] sm:$0xff]
    %v9284 = vld [vmem:[%s9279 + $0x20] sm:$0xff]
    %v9285 = vld [vmem:[%s9279 + $0x28] sm:$0xff]
    %v9286 = vld [vmem:[%s9279 + $0x30] sm:$0xff]
    %v9287 = vld [vmem:[%s9279 + $0x38] sm:$0xff]
    %v9288 = vld [vmem:[%s9279 + $0x40] sm:$0xff]
    %v9289 = vld [vmem:[%s9279 + $0x48] sm:$0xff]
    %v9290 = vld [vmem:[%s9279 + $0x50] sm:$0xff]
    %v9291 = vld [vmem:[%s9279 + $0x58] sm:$0xff]
    %v9292 = vld [vmem:[%s9279 + $0x60] sm:$0xff]
    %v9293 = vld [vmem:[%s9279 + $0x68] sm:$0xff]
    %v9294 = vld [vmem:[%s9279 + $0x70] sm:$0xff]
    %v9295 = vld [vmem:[%s9279 + $0x78] sm:$0xff]
    %9296 = vmatprep.subr.mxu0 0.0
    %9297 = vmatpush1.msra.mxu0 %v9280
    %9298 = vmatprep.subr.mxu0 0.0
    %9299 = vmatpush1.msra.mxu0 %v9281
    %9300 = vmatprep.subr.mxu0 0.0
    %9301 = vmatpush1.msra.mxu0 %v9282
    %9302 = vmatprep.subr.mxu0 0.0
    %9303 = vmatpush1.msra.mxu0 %v9283
    %9304 = vmatprep.subr.mxu0 0.0
    %9305 = vmatpush1.msra.mxu0 %v9284
    %9306 = vmatprep.subr.mxu0 0.0
    %9307 = vmatpush1.msra.mxu0 %v9285
    %9308 = vmatprep.subr.mxu0 0.0
    %9309 = vmatpush1.msra.mxu0 %v9286
    %9310 = vmatprep.subr.mxu0 0.0
    %9311 = vmatpush1.msra.mxu0 %v9287
    %9312 = vmatprep.subr.mxu0 0.0
    %9313 = vmatpush1.msra.mxu0 %v9288
    %9314 = vmatprep.subr.mxu0 0.0
    %9315 = vmatpush1.msra.mxu0 %v9289
    %9316 = vmatprep.subr.mxu0 0.0
    %9317 = vmatpush1.msra.mxu0 %v9290
    %9318 = vmatprep.subr.mxu0 0.0
    %9319 = vmatpush1.msra.mxu0 %v9291
    %9320 = vmatprep.subr.mxu0 0.0
    %9321 = vmatpush1.msra.mxu0 %v9292
    %9322 = vmatprep.subr.mxu0 0.0
    %9323 = vmatpush1.msra.mxu0 %v9293
    %9324 = vmatprep.subr.mxu0 0.0
    %9325 = vmatpush1.msra.mxu0 %v9294
    %9326 = vmatprep.subr.mxu0 0.0
    %9327 = vmatpush1.msra.mxu0 %v9295
    %9328 = vmatprep.subr.mxu0 0.0
    %9329 = vmatpush1.msra.mxu0 0.0
    %9330 = vmatprep.subr.mxu0 0.0
    %9331 = vmatpush1.msra.mxu0 0.0
    %9332 = vmatprep.subr.mxu0 0.0
    %9333 = vmatpush1.msra.mxu0 0.0
    %9334 = vmatprep.subr.mxu0 0.0
    %9335 = vmatpush1.msra.mxu0 0.0
    %9336 = vmatprep.subr.mxu0 0.0
    %9337 = vmatpush1.msra.mxu0 0.0
    %9338 = vmatprep.subr.mxu0 0.0
    %9339 = vmatpush1.msra.mxu0 0.0
    %9340 = vmatprep.subr.mxu0 0.0
    %9341 = vmatpush1.msra.mxu0 0.0
    %9342 = vmatprep.subr.mxu0 0.0
    %9343 = vmatpush1.msra.mxu0 0.0
    %9344 = vmatprep.subr.mxu0 0.0
    %9345 = vmatpush1.msra.mxu0 0.0
    %9346 = vmatprep.subr.mxu0 0.0
    %9347 = vmatpush1.msra.mxu0 0.0
    %9348 = vmatprep.subr.mxu0 0.0
    %9349 = vmatpush1.msra.mxu0 0.0
    %9350 = vmatprep.subr.mxu0 0.0
    %9351 = vmatpush1.msra.mxu0 0.0
    %9352 = vmatprep.subr.mxu0 0.0
    %9353 = vmatpush1.msra.mxu0 0.0
    %9354 = vmatprep.subr.mxu0 0.0
    %9355 = vmatpush1.msra.mxu0 0.0
    %9356 = vmatprep.subr.mxu0 0.0
    %9357 = vmatpush1.msra.mxu0 0.0
    %9358 = vmatprep.subr.mxu0 0.0
    %9359 = vmatpush1.msra.mxu0 0.0
    %9360 = vmatprep.mubr.f32.mxu0 0.0
    %9361 = vmatmul.mubr.f32.gmra.mrb[0].mxu0 %v9276
    %v9362 = vpop.f32.mrb[0].mxu0
    %v9363 = vadd.f32 0.0, %v9362
    %v9364 = vpop.f32.mrb[0].mxu0
    %9365 = vdwg.mxu0
    %v9366 = vadd.f32 %v9203, %v9363
    %s9367 = scalar_lea.vmem %s4, 12
    %v9368 = vld [vmem:[%s9367] sm:$0x3]
    %v9370 = vsel %vm8393, %v9368, 0
    %9372 = vmatprep.subr.mxu0 0.0
    %9373 = vmatpush1.msra.mxu0 %v8391
    %9374 = vmatprep.subr.mxu0 0.0
    %9375 = vmatpush1.msra.mxu0 0.0
    %9376 = vmatprep.subr.mxu0 0.0
    %9377 = vmatpush1.msra.mxu0 0.0
    %9378 = vmatprep.subr.mxu0 0.0
    %9379 = vmatpush1.msra.mxu0 0.0
    %9380 = vmatprep.subr.mxu0 0.0
    %9381 = vmatpush1.msra.mxu0 0.0
    %9382 = vmatprep.subr.mxu0 0.0
    %9383 = vmatpush1.msra.mxu0 0.0
    %9384 = vmatprep.subr.mxu0 0.0
    %9385 = vmatpush1.msra.mxu0 0.0
    %9386 = vmatprep.subr.mxu0 0.0
    %9387 = vmatpush1.msra.mxu0 0.0
    %9388 = vmatprep.subr.mxu0 0.0
    %9389 = vmatpush1.msra.mxu0 0.0
    %9390 = vmatprep.subr.mxu0 0.0
    %9391 = vmatpush1.msra.mxu0 0.0
    %9392 = vmatprep.subr.mxu0 0.0
    %9393 = vmatpush1.msra.mxu0 0.0
    %9394 = vmatprep.subr.mxu0 0.0
    %9395 = vmatpush1.msra.mxu0 0.0
    %9396 = vmatprep.subr.mxu0 0.0
    %9397 = vmatpush1.msra.mxu0 0.0
    %9398 = vmatprep.subr.mxu0 0.0
    %9399 = vmatpush1.msra.mxu0 0.0
    %9400 = vmatprep.subr.mxu0 0.0
    %9401 = vmatpush1.msra.mxu0 0.0
    %9402 = vmatprep.subr.mxu0 0.0
    %9403 = vmatpush1.msra.mxu0 0.0
    %9404 = vmatprep.subr.mxu0 0.0
    %9405 = vmatpush1.msra.mxu0 0.0
    %9406 = vmatprep.subr.mxu0 0.0
    %9407 = vmatpush1.msra.mxu0 0.0
    %9408 = vmatprep.subr.mxu0 0.0
    %9409 = vmatpush1.msra.mxu0 0.0
    %9410 = vmatprep.subr.mxu0 0.0
    %9411 = vmatpush1.msra.mxu0 0.0
    %9412 = vmatprep.subr.mxu0 0.0
    %9413 = vmatpush1.msra.mxu0 0.0
    %9414 = vmatprep.subr.mxu0 0.0
    %9415 = vmatpush1.msra.mxu0 0.0
    %9416 = vmatprep.subr.mxu0 0.0
    %9417 = vmatpush1.msra.mxu0 0.0
    %9418 = vmatprep.subr.mxu0 0.0
    %9419 = vmatpush1.msra.mxu0 0.0
    %9420 = vmatprep.subr.mxu0 0.0
    %9421 = vmatpush1.msra.mxu0 0.0
    %9422 = vmatprep.subr.mxu0 0.0
    %9423 = vmatpush1.msra.mxu0 0.0
    %9424 = vmatprep.subr.mxu0 0.0
    %9425 = vmatpush1.msra.mxu0 0.0
    %9426 = vmatprep.subr.mxu0 0.0
    %9427 = vmatpush1.msra.mxu0 0.0
    %9428 = vmatprep.subr.mxu0 0.0
    %9429 = vmatpush1.msra.mxu0 0.0
    %9430 = vmatprep.subr.mxu0 0.0
    %9431 = vmatpush1.msra.mxu0 0.0
    %9432 = vmatprep.subr.mxu0 0.0
    %9433 = vmatpush1.msra.mxu0 0.0
    %9434 = vmatprep.subr.mxu0 0.0
    %9435 = vmatpush1.msra.mxu0 0.0
    %9436 = vmatprep.mubr.f32.mxu0 0.0
    %9437 = vmatmul.mubr.f32.gmra.mrb[0].mxu0 %v9370
    %v9438 = vpop.f32.mrb[0].mxu0
    %v9439 = vadd.f32 0.0, %v9438
    %v9440 = vpop.f32.mrb[0].mxu0
    %9441 = vdwg.mxu0
    %s9442 = scalar_lea.vmem [#allocation14], 768
    %v9443 = vld [vmem:[%s9442] sm:$0xff]
    %v9444 = vld [vmem:[%s9442 + $0x8] sm:$0xff]
    %v9445 = vld [vmem:[%s9442 + $0x10] sm:$0xff]
    %v9446 = vld [vmem:[%s9442 + $0x18] sm:$0xff]
    %v9447 = vld [vmem:[%s9442 + $0x20] sm:$0xff]
    %v9448 = vld [vmem:[%s9442 + $0x28] sm:$0xff]
    %v9449 = vld [vmem:[%s9442 + $0x30] sm:$0xff]
    %v9450 = vld [vmem:[%s9442 + $0x38] sm:$0xff]
    %v9451 = vld [vmem:[%s9442 + $0x40] sm:$0xff]
    %v9452 = vld [vmem:[%s9442 + $0x48] sm:$0xff]
    %v9453 = vld [vmem:[%s9442 + $0x50] sm:$0xff]
    %v9454 = vld [vmem:[%s9442 + $0x58] sm:$0xff]
    %v9455 = vld [vmem:[%s9442 + $0x60] sm:$0xff]
    %v9456 = vld [vmem:[%s9442 + $0x68] sm:$0xff]
    %v9457 = vld [vmem:[%s9442 + $0x70] sm:$0xff]
    %v9458 = vld [vmem:[%s9442 + $0x78] sm:$0xff]
    %9459 = vmatprep.subr.mxu0 0.0
    %9460 = vmatpush1.msra.mxu0 %v9443
    %9461 = vmatprep.subr.mxu0 0.0
    %9462 = vmatpush1.msra.mxu0 %v9444
    %9463 = vmatprep.subr.mxu0 0.0
    %9464 = vmatpush1.msra.mxu0 %v9445
    %9465 = vmatprep.subr.mxu0 0.0
    %9466 = vmatpush1.msra.mxu0 %v9446
    %9467 = vmatprep.subr.mxu0 0.0
    %9468 = vmatpush1.msra.mxu0 %v9447
    %9469 = vmatprep.subr.mxu0 0.0
    %9470 = vmatpush1.msra.mxu0 %v9448
    %9471 = vmatprep.subr.mxu0 0.0
    %9472 = vmatpush1.msra.mxu0 %v9449
    %9473 = vmatprep.subr.mxu0 0.0
    %9474 = vmatpush1.msra.mxu0 %v9450
    %9475 = vmatprep.subr.mxu0 0.0
    %9476 = vmatpush1.msra.mxu0 %v9451
    %9477 = vmatprep.subr.mxu0 0.0
    %9478 = vmatpush1.msra.mxu0 %v9452
    %9479 = vmatprep.subr.mxu0 0.0
    %9480 = vmatpush1.msra.mxu0 %v9453
    %9481 = vmatprep.subr.mxu0 0.0
    %9482 = vmatpush1.msra.mxu0 %v9454
    %9483 = vmatprep.subr.mxu0 0.0
    %9484 = vmatpush1.msra.mxu0 %v9455
    %9485 = vmatprep.subr.mxu0 0.0
    %9486 = vmatpush1.msra.mxu0 %v9456
    %9487 = vmatprep.subr.mxu0 0.0
    %9488 = vmatpush1.msra.mxu0 %v9457
    %9489 = vmatprep.subr.mxu0 0.0
    %9490 = vmatpush1.msra.mxu0 %v9458
    %9491 = vmatprep.subr.mxu0 0.0
    %9492 = vmatpush1.msra.mxu0 0.0
    %9493 = vmatprep.subr.mxu0 0.0
    %9494 = vmatpush1.msra.mxu0 0.0
    %9495 = vmatprep.subr.mxu0 0.0
    %9496 = vmatpush1.msra.mxu0 0.0
    %9497 = vmatprep.subr.mxu0 0.0
    %9498 = vmatpush1.msra.mxu0 0.0
    %9499 = vmatprep.subr.mxu0 0.0
    %9500 = vmatpush1.msra.mxu0 0.0
    %9501 = vmatprep.subr.mxu0 0.0
    %9502 = vmatpush1.msra.mxu0 0.0
    %9503 = vmatprep.subr.mxu0 0.0
    %9504 = vmatpush1.msra.mxu0 0.0
    %9505 = vmatprep.subr.mxu0 0.0
    %9506 = vmatpush1.msra.mxu0 0.0
    %9507 = vmatprep.subr.mxu0 0.0
    %9508 = vmatpush1.msra.mxu0 0.0
    %9509 = vmatprep.subr.mxu0 0.0
    %9510 = vmatpush1.msra.mxu0 0.0
    %9511 = vmatprep.subr.mxu0 0.0
    %9512 = vmatpush1.msra.mxu0 0.0
    %9513 = vmatprep.subr.mxu0 0.0
    %9514 = vmatpush1.msra.mxu0 0.0
    %9515 = vmatprep.subr.mxu0 0.0
    %9516 = vmatpush1.msra.mxu0 0.0
    %9517 = vmatprep.subr.mxu0 0.0
    %9518 = vmatpush1.msra.mxu0 0.0
    %9519 = vmatprep.subr.mxu0 0.0
    %9520 = vmatpush1.msra.mxu0 0.0
    %9521 = vmatprep.subr.mxu0 0.0
    %9522 = vmatpush1.msra.mxu0 0.0
    %9523 = vmatprep.mubr.f32.mxu0 0.0
    %9524 = vmatmul.mubr.f32.gmra.mrb[0].mxu0 %v9439
    %v9525 = vpop.f32.mrb[0].mxu0
    %v9526 = vadd.f32 0.0, %v9525
    %v9527 = vpop.f32.mrb[0].mxu0
    %9528 = vdwg.mxu0
    %v9529 = vadd.f32 %v9366, %v9526
    %s9530 = scalar_lea.vmem %s4, 14
    %v9531 = vld [vmem:[%s9530] sm:$0x3]
    %v9533 = vsel %vm8393, %v9531, 0
    %9535 = vmatprep.subr.mxu0 0.0
    %9536 = vmatpush1.msra.mxu0 %v8391
    %9537 = vmatprep.subr.mxu0 0.0
    %9538 = vmatpush1.msra.mxu0 0.0
    %9539 = vmatprep.subr.mxu0 0.0
    %9540 = vmatpush1.msra.mxu0 0.0
    %9541 = vmatprep.subr.mxu0 0.0
    %9542 = vmatpush1.msra.mxu0 0.0
    %9543 = vmatprep.subr.mxu0 0.0
    %9544 = vmatpush1.msra.mxu0 0.0
    %9545 = vmatprep.subr.mxu0 0.0
    %9546 = vmatpush1.msra.mxu0 0.0
    %9547 = vmatprep.subr.mxu0 0.0
    %9548 = vmatpush1.msra.mxu0 0.0
    %9549 = vmatprep.subr.mxu0 0.0
    %9550 = vmatpush1.msra.mxu0 0.0
    %9551 = vmatprep.subr.mxu0 0.0
    %9552 = vmatpush1.msra.mxu0 0.0
    %9553 = vmatprep.subr.mxu0 0.0
    %9554 = vmatpush1.msra.mxu0 0.0
    %9555 = vmatprep.subr.mxu0 0.0
    %9556 = vmatpush1.msra.mxu0 0.0
    %9557 = vmatprep.subr.mxu0 0.0
    %9558 = vmatpush1.msra.mxu0 0.0
    %9559 = vmatprep.subr.mxu0 0.0
    %9560 = vmatpush1.msra.mxu0 0.0
    %9561 = vmatprep.subr.mxu0 0.0
    %9562 = vmatpush1.msra.mxu0 0.0
    %9563 = vmatprep.subr.mxu0 0.0
    %9564 = vmatpush1.msra.mxu0 0.0
    %9565 = vmatprep.subr.mxu0 0.0
    %9566 = vmatpush1.msra.mxu0 0.0
    %9567 = vmatprep.subr.mxu0 0.0
    %9568 = vmatpush1.msra.mxu0 0.0
    %9569 = vmatprep.subr.mxu0 0.0
    %9570 = vmatpush1.msra.mxu0 0.0
    %9571 = vmatprep.subr.mxu0 0.0
    %9572 = vmatpush1.msra.mxu0 0.0
    %9573 = vmatprep.subr.mxu0 0.0
    %9574 = vmatpush1.msra.mxu0 0.0
    %9575 = vmatprep.subr.mxu0 0.0
    %9576 = vmatpush1.msra.mxu0 0.0
    %9577 = vmatprep.subr.mxu0 0.0
    %9578 = vmatpush1.msra.mxu0 0.0
    %9579 = vmatprep.subr.mxu0 0.0
    %9580 = vmatpush1.msra.mxu0 0.0
    %9581 = vmatprep.subr.mxu0 0.0
    %9582 = vmatpush1.msra.mxu0 0.0
    %9583 = vmatprep.subr.mxu0 0.0
    %9584 = vmatpush1.msra.mxu0 0.0
    %9585 = vmatprep.subr.mxu0 0.0
    %9586 = vmatpush1.msra.mxu0 0.0
    %9587 = vmatprep.subr.mxu0 0.0
    %9588 = vmatpush1.msra.mxu0 0.0
    %9589 = vmatprep.subr.mxu0 0.0
    %9590 = vmatpush1.msra.mxu0 0.0
    %9591 = vmatprep.subr.mxu0 0.0
    %9592 = vmatpush1.msra.mxu0 0.0
    %9593 = vmatprep.subr.mxu0 0.0
    %9594 = vmatpush1.msra.mxu0 0.0
    %9595 = vmatprep.subr.mxu0 0.0
    %9596 = vmatpush1.msra.mxu0 0.0
    %9597 = vmatprep.subr.mxu0 0.0
    %9598 = vmatpush1.msra.mxu0 0.0
    %9599 = vmatprep.mubr.f32.mxu0 0.0
    %9600 = vmatmul.mubr.f32.gmra.mrb[0].mxu0 %v9533
    %v9601 = vpop.f32.mrb[0].mxu0
    %v9602 = vadd.f32 0.0, %v9601
    %v9603 = vpop.f32.mrb[0].mxu0
    %9604 = vdwg.mxu0
    %s9605 = scalar_lea.vmem [#allocation14], 896
    %v9606 = vld [vmem:[%s9605] sm:$0xff]
    %v9607 = vld [vmem:[%s9605 + $0x8] sm:$0xff]
    %v9608 = vld [vmem:[%s9605 + $0x10] sm:$0xff]
    %v9609 = vld [vmem:[%s9605 + $0x18] sm:$0xff]
    %v9610 = vld [vmem:[%s9605 + $0x20] sm:$0xff]
    %v9611 = vld [vmem:[%s9605 + $0x28] sm:$0xff]
    %v9612 = vld [vmem:[%s9605 + $0x30] sm:$0xff]
    %v9613 = vld [vmem:[%s9605 + $0x38] sm:$0xff]
    %v9614 = vld [vmem:[%s9605 + $0x40] sm:$0xff]
    %v9615 = vld [vmem:[%s9605 + $0x48] sm:$0xff]
    %v9616 = vld [vmem:[%s9605 + $0x50] sm:$0xff]
    %v9617 = vld [vmem:[%s9605 + $0x58] sm:$0xff]
    %v9618 = vld [vmem:[%s9605 + $0x60] sm:$0xff]
    %v9619 = vld [vmem:[%s9605 + $0x68] sm:$0xff]
    %v9620 = vld [vmem:[%s9605 + $0x70] sm:$0xff]
    %v9621 = vld [vmem:[%s9605 + $0x78] sm:$0xff]
    %9622 = vmatprep.subr.mxu0 0.0
    %9623 = vmatpush1.msra.mxu0 %v9606
    %9624 = vmatprep.subr.mxu0 0.0
    %9625 = vmatpush1.msra.mxu0 %v9607
    %9626 = vmatprep.subr.mxu0 0.0
    %9627 = vmatpush1.msra.mxu0 %v9608
    %9628 = vmatprep.subr.mxu0 0.0
    %9629 = vmatpush1.msra.mxu0 %v9609
    %9630 = vmatprep.subr.mxu0 0.0
    %9631 = vmatpush1.msra.mxu0 %v9610
    %9632 = vmatprep.subr.mxu0 0.0
    %9633 = vmatpush1.msra.mxu0 %v9611
    %9634 = vmatprep.subr.mxu0 0.0
    %9635 = vmatpush1.msra.mxu0 %v9612
    %9636 = vmatprep.subr.mxu0 0.0
    %9637 = vmatpush1.msra.mxu0 %v9613
    %9638 = vmatprep.subr.mxu0 0.0
    %9639 = vmatpush1.msra.mxu0 %v9614
    %9640 = vmatprep.subr.mxu0 0.0
    %9641 = vmatpush1.msra.mxu0 %v9615
    %9642 = vmatprep.subr.mxu0 0.0
    %9643 = vmatpush1.msra.mxu0 %v9616
    %9644 = vmatprep.subr.mxu0 0.0
    %9645 = vmatpush1.msra.mxu0 %v9617
    %9646 = vmatprep.subr.mxu0 0.0
    %9647 = vmatpush1.msra.mxu0 %v9618
    %9648 = vmatprep.subr.mxu0 0.0
    %9649 = vmatpush1.msra.mxu0 %v9619
    %9650 = vmatprep.subr.mxu0 0.0
    %9651 = vmatpush1.msra.mxu0 %v9620
    %9652 = vmatprep.subr.mxu0 0.0
    %9653 = vmatpush1.msra.mxu0 %v9621
    %9654 = vmatprep.subr.mxu0 0.0
    %9655 = vmatpush1.msra.mxu0 0.0
    %9656 = vmatprep.subr.mxu0 0.0
    %9657 = vmatpush1.msra.mxu0 0.0
    %9658 = vmatprep.subr.mxu0 0.0
    %9659 = vmatpush1.msra.mxu0 0.0
    %9660 = vmatprep.subr.mxu0 0.0
    %9661 = vmatpush1.msra.mxu0 0.0
    %9662 = vmatprep.subr.mxu0 0.0
    %9663 = vmatpush1.msra.mxu0 0.0
    %9664 = vmatprep.subr.mxu0 0.0
    %9665 = vmatpush1.msra.mxu0 0.0
    %9666 = vmatprep.subr.mxu0 0.0
    %9667 = vmatpush1.msra.mxu0 0.0
    %9668 = vmatprep.subr.mxu0 0.0
    %9669 = vmatpush1.msra.mxu0 0.0
    %9670 = vmatprep.subr.mxu0 0.0
    %9671 = vmatpush1.msra.mxu0 0.0
    %9672 = vmatprep.subr.mxu0 0.0
    %9673 = vmatpush1.msra.mxu0 0.0
    %9674 = vmatprep.subr.mxu0 0.0
    %9675 = vmatpush1.msra.mxu0 0.0
    %9676 = vmatprep.subr.mxu0 0.0
    %9677 = vmatpush1.msra.mxu0 0.0
    %9678 = vmatprep.subr.mxu0 0.0
    %9679 = vmatpush1.msra.mxu0 0.0
    %9680 = vmatprep.subr.mxu0 0.0
    %9681 = vmatpush1.msra.mxu0 0.0
    %9682 = vmatprep.subr.mxu0 0.0
    %9683 = vmatpush1.msra.mxu0 0.0
    %9684 = vmatprep.subr.mxu0 0.0
    %9685 = vmatpush1.msra.mxu0 0.0
    %9686 = vmatprep.mubr.f32.mxu0 0.0
    %9687 = vmatmul.mubr.f32.gmra.mrb[0].mxu0 %v9602
    %v9688 = vpop.f32.mrb[0].mxu0
    %v9689 = vadd.f32 0.0, %v9688
    %v9690 = vpop.f32.mrb[0].mxu0
    %9691 = vdwg.mxu0
    %v9692 = vadd.f32 %v9529, %v9689
    %s9693 = scalar_lea.vmem %s4, 16
    %v9694 = vld [vmem:[%s9693] sm:$0x3]
    %v9696 = vsel %vm8393, %v9694, 0
    %9698 = vmatprep.subr.mxu0 0.0
    %9699 = vmatpush1.msra.mxu0 %v8391
    %9700 = vmatprep.subr.mxu0 0.0
    %9701 = vmatpush1.msra.mxu0 0.0
    %9702 = vmatprep.subr.mxu0 0.0
    %9703 = vmatpush1.msra.mxu0 0.0
    %9704 = vmatprep.subr.mxu0 0.0
    %9705 = vmatpush1.msra.mxu0 0.0
    %9706 = vmatprep.subr.mxu0 0.0
    %9707 = vmatpush1.msra.mxu0 0.0
    %9708 = vmatprep.subr.mxu0 0.0
    %9709 = vmatpush1.msra.mxu0 0.0
    %9710 = vmatprep.subr.mxu0 0.0
    %9711 = vmatpush1.msra.mxu0 0.0
    %9712 = vmatprep.subr.mxu0 0.0
    %9713 = vmatpush1.msra.mxu0 0.0
    %9714 = vmatprep.subr.mxu0 0.0
    %9715 = vmatpush1.msra.mxu0 0.0
    %9716 = vmatprep.subr.mxu0 0.0
    %9717 = vmatpush1.msra.mxu0 0.0
    %9718 = vmatprep.subr.mxu0 0.0
    %9719 = vmatpush1.msra.mxu0 0.0
    %9720 = vmatprep.subr.mxu0 0.0
    %9721 = vmatpush1.msra.mxu0 0.0
    %9722 = vmatprep.subr.mxu0 0.0
    %9723 = vmatpush1.msra.mxu0 0.0
    %9724 = vmatprep.subr.mxu0 0.0
    %9725 = vmatpush1.msra.mxu0 0.0
    %9726 = vmatprep.subr.mxu0 0.0
    %9727 = vmatpush1.msra.mxu0 0.0
    %9728 = vmatprep.subr.mxu0 0.0
    %9729 = vmatpush1.msra.mxu0 0.0
    %9730 = vmatprep.subr.mxu0 0.0
    %9731 = vmatpush1.msra.mxu0 0.0
    %9732 = vmatprep.subr.mxu0 0.0
    %9733 = vmatpush1.msra.mxu0 0.0
    %9734 = vmatprep.subr.mxu0 0.0
    %9735 = vmatpush1.msra.mxu0 0.0
    %9736 = vmatprep.subr.mxu0 0.0
    %9737 = vmatpush1.msra.mxu0 0.0
    %9738 = vmatprep.subr.mxu0 0.0
    %9739 = vmatpush1.msra.mxu0 0.0
    %9740 = vmatprep.subr.mxu0 0.0
    %9741 = vmatpush1.msra.mxu0 0.0
    %9742 = vmatprep.subr.mxu0 0.0
    %9743 = vmatpush1.msra.mxu0 0.0
    %9744 = vmatprep.subr.mxu0 0.0
    %9745 = vmatpush1.msra.mxu0 0.0
    %9746 = vmatprep.subr.mxu0 0.0
    %9747 = vmatpush1.msra.mxu0 0.0
    %9748 = vmatprep.subr.mxu0 0.0
    %9749 = vmatpush1.msra.mxu0 0.0
    %9750 = vmatprep.subr.mxu0 0.0
    %9751 = vmatpush1.msra.mxu0 0.0
    %9752 = vmatprep.subr.mxu0 0.0
    %9753 = vmatpush1.msra.mxu0 0.0
    %9754 = vmatprep.subr.mxu0 0.0
    %9755 = vmatpush1.msra.mxu0 0.0
    %9756 = vmatprep.subr.mxu0 0.0
    %9757 = vmatpush1.msra.mxu0 0.0
    %9758 = vmatprep.subr.mxu0 0.0
    %9759 = vmatpush1.msra.mxu0 0.0
    %9760 = vmatprep.subr.mxu0 0.0
    %9761 = vmatpush1.msra.mxu0 0.0
    %9762 = vmatprep.mubr.f32.mxu0 0.0
    %9763 = vmatmul.mubr.f32.gmra.mrb[0].mxu0 %v9696
    %v9764 = vpop.f32.mrb[0].mxu0
    %v9765 = vadd.f32 0.0, %v9764
    %v9766 = vpop.f32.mrb[0].mxu0
    %9767 = vdwg.mxu0
    %s9768 = scalar_lea.vmem [#allocation14], 1024
    %v9769 = vld [vmem:[%s9768] sm:$0xff]
    %v9770 = vld [vmem:[%s9768 + $0x8] sm:$0xff]
    %v9771 = vld [vmem:[%s9768 + $0x10] sm:$0xff]
    %v9772 = vld [vmem:[%s9768 + $0x18] sm:$0xff]
    %v9773 = vld [vmem:[%s9768 + $0x20] sm:$0xff]
    %v9774 = vld [vmem:[%s9768 + $0x28] sm:$0xff]
    %v9775 = vld [vmem:[%s9768 + $0x30] sm:$0xff]
    %v9776 = vld [vmem:[%s9768 + $0x38] sm:$0xff]
    %v9777 = vld [vmem:[%s9768 + $0x40] sm:$0xff]
    %v9778 = vld [vmem:[%s9768 + $0x48] sm:$0xff]
    %v9779 = vld [vmem:[%s9768 + $0x50] sm:$0xff]
    %v9780 = vld [vmem:[%s9768 + $0x58] sm:$0xff]
    %v9781 = vld [vmem:[%s9768 + $0x60] sm:$0xff]
    %v9782 = vld [vmem:[%s9768 + $0x68] sm:$0xff]
    %v9783 = vld [vmem:[%s9768 + $0x70] sm:$0xff]
    %v9784 = vld [vmem:[%s9768 + $0x78] sm:$0xff]
    %9785 = vmatprep.subr.mxu0 0.0
    %9786 = vmatpush1.msra.mxu0 %v9769
    %9787 = vmatprep.subr.mxu0 0.0
    %9788 = vmatpush1.msra.mxu0 %v9770
    %9789 = vmatprep.subr.mxu0 0.0
    %9790 = vmatpush1.msra.mxu0 %v9771
    %9791 = vmatprep.subr.mxu0 0.0
    %9792 = vmatpush1.msra.mxu0 %v9772
    %9793 = vmatprep.subr.mxu0 0.0
    %9794 = vmatpush1.msra.mxu0 %v9773
    %9795 = vmatprep.subr.mxu0 0.0
    %9796 = vmatpush1.msra.mxu0 %v9774
    %9797 = vmatprep.subr.mxu0 0.0
    %9798 = vmatpush1.msra.mxu0 %v9775
    %9799 = vmatprep.subr.mxu0 0.0
    %9800 = vmatpush1.msra.mxu0 %v9776
    %9801 = vmatprep.subr.mxu0 0.0
    %9802 = vmatpush1.msra.mxu0 %v9777
    %9803 = vmatprep.subr.mxu0 0.0
    %9804 = vmatpush1.msra.mxu0 %v9778
    %9805 = vmatprep.subr.mxu0 0.0
    %9806 = vmatpush1.msra.mxu0 %v9779
    %9807 = vmatprep.subr.mxu0 0.0
    %9808 = vmatpush1.msra.mxu0 %v9780
    %9809 = vmatprep.subr.mxu0 0.0
    %9810 = vmatpush1.msra.mxu0 %v9781
    %9811 = vmatprep.subr.mxu0 0.0
    %9812 = vmatpush1.msra.mxu0 %v9782
    %9813 = vmatprep.subr.mxu0 0.0
    %9814 = vmatpush1.msra.mxu0 %v9783
    %9815 = vmatprep.subr.mxu0 0.0
    %9816 = vmatpush1.msra.mxu0 %v9784
    %9817 = vmatprep.subr.mxu0 0.0
    %9818 = vmatpush1.msra.mxu0 0.0
    %9819 = vmatprep.subr.mxu0 0.0
    %9820 = vmatpush1.msra.mxu0 0.0
    %9821 = vmatprep.subr.mxu0 0.0
    %9822 = vmatpush1.msra.mxu0 0.0
    %9823 = vmatprep.subr.mxu0 0.0
    %9824 = vmatpush1.msra.mxu0 0.0
    %9825 = vmatprep.subr.mxu0 0.0
    %9826 = vmatpush1.msra.mxu0 0.0
    %9827 = vmatprep.subr.mxu0 0.0
    %9828 = vmatpush1.msra.mxu0 0.0
    %9829 = vmatprep.subr.mxu0 0.0
    %9830 = vmatpush1.msra.mxu0 0.0
    %9831 = vmatprep.subr.mxu0 0.0
    %9832 = vmatpush1.msra.mxu0 0.0
    %9833 = vmatprep.subr.mxu0 0.0
    %9834 = vmatpush1.msra.mxu0 0.0
    %9835 = vmatprep.subr.mxu0 0.0
    %9836 = vmatpush1.msra.mxu0 0.0
    %9837 = vmatprep.subr.mxu0 0.0
    %9838 = vmatpush1.msra.mxu0 0.0
    %9839 = vmatprep.subr.mxu0 0.0
    %9840 = vmatpush1.msra.mxu0 0.0
    %9841 = vmatprep.subr.mxu0 0.0
    %9842 = vmatpush1.msra.mxu0 0.0
    %9843 = vmatprep.subr.mxu0 0.0
    %9844 = vmatpush1.msra.mxu0 0.0
    %9845 = vmatprep.subr.mxu0 0.0
    %9846 = vmatpush1.msra.mxu0 0.0
    %9847 = vmatprep.subr.mxu0 0.0
    %9848 = vmatpush1.msra.mxu0 0.0
    %9849 = vmatprep.mubr.f32.mxu0 0.0
    %9850 = vmatmul.mubr.f32.gmra.mrb[0].mxu0 %v9765
    %v9851 = vpop.f32.mrb[0].mxu0
    %v9852 = vadd.f32 0.0, %v9851
    %v9853 = vpop.f32.mrb[0].mxu0
    %9854 = vdwg.mxu0
    %v9855 = vadd.f32 %v9692, %v9852
    %v9856 = vld [vmem:[#allocation20] sm:$0x1]
    %v9858 = vlaneseq
    %v9859 = vshrl.u32 %v9858, 7
    %v9860 = vsub.s32 0, %v9859
    %v9861 = vrot.slane %v9856, %v9860
    %v9863 = vadd.f32 %v9855, %v9861
    %9864 = vst [vmem:[#allocation22] sm:$0x3] %v9863
    // Predicated region
    $region102: #{tpu_custom_call.1} parent=1 // pred_check
      _
    $region103: #{tpu_custom_call.1} parent=1 // pred_check_branch
      %9866 = sbr.rel (0) target = $region105
    $region104: #{tpu_custom_call.1} parent=1 // pred_region
      %s9868 = ssub.s32 32, 32
      %9869 = vsyncadd [#allocation4], %s9868
      %s9871 = sshll.u32 [#allocation22], 4
      %s9872 = int_to_ptr.vmem [resolvable:$true] %s9871
      %9874 = dma.vmem_to_hbm [thread:$0]  %s9872, 32, %s13, [#allocation4]
    $region105: #{tpu_custom_call.1} parent=1 // pred_fallthru
      _
    // Predicated region
    $region106: #{tpu_custom_call.1} parent=1 // pred_check
      _
    $region107: #{tpu_custom_call.1} parent=1 // pred_check_branch
      %9876 = sbr.rel (0) target = $region109
    $region108: #{tpu_custom_call.1} parent=1 // pred_region
      %9877 = dma.done [#allocation4], 32
    $region109: #{tpu_custom_call.1} parent=1 // pred_fallthru
      _
    %9878 = vsyncpa [#allocation3], 1
    %9879 = vsyncpa [#allocation6], 1
    %9880 = vsyncpa [#allocation9], 1
    %9881 = vsyncpa [#allocation12], 1
    %9882 = vsyncpa [#allocation15], 1
    %9883 = vsyncpa [#allocation18], 1
    %9884 = vsyncpa [#allocation21], 1
    %9885 = vsyncpa [#allocation4], 1

</llo_original>
